<compile_context>
chip_gen: v6e
topology: v6e:2x2x1
jax: 0.10.0
libtpu: 0.0.40
codegen_flags: <defaults>
</compile_context>

<pallas_src>
import math

import numpy as np
import jax
import jax.numpy as jnp
from jax.experimental import pallas as pl
from jax.experimental.pallas import tpu as pltpu

_BN_EPS = 1e-5


def _round_up(x, m):
    return ((x + m - 1) // m) * m


# ----------------------------------------------------------------------------
# Pallas kernels
# ----------------------------------------------------------------------------
def _conv_bn_relu_kernel(p_ref, w_ref, b_ref, o_ref, acc_ref):
    """out[n] = relu(W_folded @ P[n] + bias), K-tiled with f32 accumulator.

    p_ref : (1, tk, thw)   bf16 im2col patches (K x HW slab of batch n)
    w_ref : (Cout, tk)     bf16 conv weight with BN scale folded in
    b_ref : (Cout, 1)      f32 folded-BN bias
    o_ref : (1, Cout, thw) bf16 output
    acc   : (Cout, thw)    f32 scratch accumulator
    """
    kk = pl.program_id(2)
    prod = jnp.dot(w_ref[...], p_ref[0], preferred_element_type=jnp.float32)

    @pl.when(kk == 0)
    def _():
        acc_ref[...] = prod          # first tile: store directly (no zero+add)

    @pl.when(kk > 0)
    def _():
        acc_ref[...] += prod

    @pl.when(kk == pl.num_programs(2) - 1)
    def _():
        o_ref[0] = jnp.maximum(acc_ref[...] + b_ref[...], 0.0).astype(o_ref.dtype)


def _upsample_add_kernel(small_ref, big_ref, up_ref, o_ref):
    """out tile = big tile + small @ UP[:, tile]  (bilinear, align_corners=True)."""
    up = jnp.dot(small_ref[0], up_ref[...], preferred_element_type=jnp.float32)
    o_ref[0] = (big_ref[0].astype(jnp.float32) + up).astype(o_ref.dtype)


def _final_kernel(x_ref, d1_ref, g_ref, w1_ref, b_ref, up_ref, o_ref):
    """Fused tail of FPA_V2 for one (batch, hw-tile):
         y   = relu(conv1_1x1(x) + bias)          (BN scale folded into w1)
         d1u = bilinear_up(d1)                    (align_corners=True)
         out = y * d1u + g                        (g = glob branch, broadcast)
    """
    xv = x_ref[0]                                                  # (Cin, thw) bf16
    y = jnp.dot(w1_ref[...], xv, preferred_element_type=jnp.float32)
    y = jnp.maximum(y + b_ref[...], 0.0)                           # (Cout, thw)
    d1u = jnp.dot(d1_ref[0], up_ref[...], preferred_element_type=jnp.float32)
    o_ref[0] = (y * d1u + g_ref[0]).astype(o_ref.dtype)


# ----------------------------------------------------------------------------
# Plain-JAX glue: NCHW im2col and bilinear (align_corners=True) operators
# ----------------------------------------------------------------------------
def _im2col_nchw(x, k, s, pad):
    n, c, h, w = x.shape
    oh = (h + 2 * pad - k) // s + 1
    ow = (w + 2 * pad - k) // s + 1
    xp = jnp.pad(x, ((0, 0), (0, 0), (pad, pad), (pad, pad)))
    cols = []
    for dy in range(k):
        for dx in range(k):
            cols.append(xp[:, :, dy:dy + (oh - 1) * s + 1:s,
                           dx:dx + (ow - 1) * s + 1:s])
    p = jnp.stack(cols, axis=2)                    # (N, C, k*k, oh, ow)
    return p.reshape(n, c * k * k, oh * ow), oh, ow


def _interp_matrix(n_out, n_in):
    m = np.zeros((n_out, n_in), np.float32)
    for i in range(n_out):
        src = 0.0 if n_out == 1 else i * (n_in - 1) / (n_out - 1)
        lo = int(math.floor(src))
        hi = min(lo + 1, n_in - 1)
        f = src - lo
        m[i, lo] += 1.0 - f
        m[i, hi] += f
    return m


def _bilinear_kron(h_in, w_in, h_out, w_out):
    rh = _interp_matrix(h_out, h_in)
    rw = _interp_matrix(w_out, w_in)
    return np.kron(rh, rw).T.astype(np.float32)    # (h_in*w_in, h_out*w_out)


# ----------------------------------------------------------------------------
# Kernel wrappers
# ----------------------------------------------------------------------------
def conv_bn_relu(x, w2d, scale, bias, k, stride, pad):
    """x: (N, Cin, H, W) f32/bf16, w2d: (Cout, Cin*k*k) f32 -> (N, Cout, oh, ow) bf16."""
    n, cin, h, w = x.shape
    cout = w2d.shape[0]
    x = x.astype(jnp.bfloat16)                       # bf16 BEFORE im2col
    patches, oh, ow = _im2col_nchw(x, k, stride, pad)    # (N, K, HW) bf16
    kdim = patches.shape[1]
    hw = oh * ow

    kp128 = _round_up(kdim, 128)
    tk = kp128 if kp128 <= 2048 else 1024
    kp = _round_up(kdim, tk)
    thw = min(_round_up(hw, 128), 512)
    hwp = _round_up(hw, thw)

    pp = jnp.pad(patches, ((0, 0), (0, kp - kdim), (0, hwp - hw)))
    wf = w2d * scale                                 # fold BN scale (f32, exact)
    wp = jnp.pad(wf, ((0, 0), (0, kp - kdim))).astype(jnp.bfloat16)

    grid = (n, hwp // thw, kp // tk)
    out = pl.pallas_call(
        _conv_bn_relu_kernel,
        out_shape=jax.ShapeDtypeStruct((n, cout, hwp), jnp.bfloat16),
        grid_spec=pltpu.PrefetchScalarGridSpec(
            num_scalar_prefetch=0,
            grid=grid,
            in_specs=[
                pl.BlockSpec((1, tk, thw), lambda b, j, kk: (b, kk, j)),
                pl.BlockSpec((cout, tk), lambda b, j, kk: (0, kk)),
                pl.BlockSpec((cout, 1), lambda b, j, kk: (0, 0)),
            ],
            out_specs=pl.BlockSpec((1, cout, thw), lambda b, j, kk: (b, 0, j)),
            scratch_shapes=[pltpu.VMEM((cout, thw), jnp.float32)],
        ),
        compiler_params=pltpu.CompilerParams(
            dimension_semantics=("parallel", "parallel", "arbitrary"),
            vmem_limit_bytes=64 * 1024 * 1024,
        ),
    )(pp, wp, bias)
    return out[:, :, :hw].reshape(n, cout, oh, ow)


def upsample_add(small, big):
    """big + bilinear_upsample(small, size=big.spatial), align_corners=True. bf16 out."""
    n, c, hs, ws = small.shape
    _, _, hb, wb = big.shape
    hws, hwb = hs * ws, hb * wb
    hwsp = _round_up(hws, 128)
    thwb = min(_round_up(hwb, 128), 512)
    hwbp = _round_up(hwb, thwb)

    sm = jnp.pad(small.reshape(n, c, hws).astype(jnp.bfloat16),
                 ((0, 0), (0, 0), (0, hwsp - hws)))
    bg = jnp.pad(big.reshape(n, c, hwb).astype(jnp.bfloat16),
                 ((0, 0), (0, 0), (0, hwbp - hwb)))
    up = np.zeros((hwsp, hwbp), np.float32)
    up[:hws, :hwb] = _bilinear_kron(hs, ws, hb, wb)
    up = jnp.asarray(up, dtype=jnp.bfloat16)

    out = pl.pallas_call(
        _upsample_add_kernel,
        out_shape=jax.ShapeDtypeStruct((n, c, hwbp), jnp.bfloat16),
        grid_spec=pltpu.PrefetchScalarGridSpec(
            num_scalar_prefetch=0,
            grid=(n, hwbp // thwb),
            in_specs=[
                pl.BlockSpec((1, c, hwsp), lambda b, j: (b, 0, 0)),
                pl.BlockSpec((1, c, thwb), lambda b, j: (b, 0, j)),
                pl.BlockSpec((hwsp, thwb), lambda b, j: (0, j)),
            ],
            out_specs=pl.BlockSpec((1, c, thwb), lambda b, j: (b, 0, j)),
        ),
        compiler_params=pltpu.CompilerParams(
            dimension_semantics=("parallel", "parallel"),
            vmem_limit_bytes=32 * 1024 * 1024,
        ),
    )(sm, bg, up)
    return out[:, :, :hwb].reshape(n, c, hb, wb)


def final_combine(x, d1_small, w1, wg, scale, bias):
    """Fused: relu(conv1_folded(x)+bias) * up(d1_small) + broadcast(glob(x))."""
    n, cin, h, w = x.shape
    _, cout, h1, wd1 = d1_small.shape
    hw, hw1 = h * w, h1 * wd1
    thw = min(_round_up(hw, 128), 512)
    hwp = _round_up(hw, thw)
    hw1p = _round_up(hw1, 128)

    xf = jnp.pad(x.reshape(n, cin, hw).astype(jnp.bfloat16),
                 ((0, 0), (0, 0), (0, hwp - hw)))
    df = jnp.pad(d1_small.reshape(n, cout, hw1).astype(jnp.bfloat16),
                 ((0, 0), (0, 0), (0, hw1p - hw1)))
    up = np.zeros((hw1p, hwp), np.float32)
    up[:hw1, :hw] = _bilinear_kron(h1, wd1, h, w)
    up = jnp.asarray(up, dtype=jnp.bfloat16)

    w1f = (w1 * scale).astype(jnp.bfloat16)            # (Cout, Cin), BN scale folded

    # Global branch: reduce over HW FIRST (tiny), then 1x1 conv of the mean.
    # This removes a Cout x Cin x HW matmul from the fused tail kernel.
    xm = jnp.mean(x.astype(jnp.float32), axis=(2, 3))  # (N, Cin)
    g = (xm @ wg.T)[:, :, None]                        # (N, Cout, 1) f32

    out = pl.pallas_call(
        _final_kernel,
        out_shape=jax.ShapeDtypeStruct((n, cout, hwp), jnp.float32),
        grid_spec=pltpu.PrefetchScalarGridSpec(
            num_scalar_prefetch=0,
            grid=(n, hwp // thw),
            in_specs=[
                pl.BlockSpec((1, cin, thw), lambda b, j: (b, 0, j)),
                pl.BlockSpec((1, cout, hw1p), lambda b, j: (b, 0, 0)),
                pl.BlockSpec((1, cout, 1), lambda b, j: (b, 0, 0)),
                pl.BlockSpec((cout, cin), lambda b, j: (0, 0)),
                pl.BlockSpec((cout, 1), lambda b, j: (0, 0)),
                pl.BlockSpec((hw1p, thw), lambda b, j: (0, j)),
            ],
            out_specs=pl.BlockSpec((1, cout, thw), lambda b, j: (b, 0, j)),
        ),
        compiler_params=pltpu.CompilerParams(
            dimension_semantics=("parallel", "parallel"),
            vmem_limit_bytes=32 * 1024 * 1024,
        ),
    )(xf, df, g, w1f, bias, up)
    return out[:, :, :hw].reshape(n, cout, h, w)


# ----------------------------------------------------------------------------
# Parameters (synthetic, kaiming-normal convs; BN folded in eval mode)
# ----------------------------------------------------------------------------
def make_params(input_dim, output_dim, seed=0):
    # TODO(synk): train-mode BatchNorm (batch statistics) is a training-only
    # path; this implements the eval-mode folded-BN forward.
    keys = jax.random.split(jax.random.PRNGKey(seed), 8)
    bn_scale = 1.0 / math.sqrt(1.0 + _BN_EPS)

    def conv_w(k_, cout, cin, ksz):
        std = math.sqrt(2.0 / (cin * ksz * ksz))
        return std * jax.random.normal(k_, (cout, cin * ksz * ksz), jnp.float32)

    def bn(cout):
        return (jnp.full((cout, 1), bn_scale, jnp.float32),
                jnp.zeros((cout, 1), jnp.float32))

    p = {}
    p["d11_w"] = conv_w(keys[0], input_dim, input_dim, 7)
    p["d11_s"], p["d11_b"] = bn(input_dim)
    p["d12_w"] = conv_w(keys[1], output_dim, input_dim, 7)
    p["d12_s"], p["d12_b"] = bn(output_dim)
    p["d21_w"] = conv_w(keys[2], input_dim, input_dim, 5)
    p["d21_s"], p["d21_b"] = bn(input_dim)
    p["d22_w"] = conv_w(keys[3], output_dim, input_dim, 5)
    p["d22_s"], p["d22_b"] = bn(output_dim)
    p["d31_w"] = conv_w(keys[4], input_dim, input_dim, 3)
    p["d31_s"], p["d31_b"] = bn(input_dim)
    p["d32_w"] = conv_w(keys[5], output_dim, input_dim, 3)
    p["d32_s"], p["d32_b"] = bn(output_dim)
    p["conv1_w"] = conv_w(keys[6], output_dim, input_dim, 1)
    p["conv1_s"], p["conv1_b"] = bn(output_dim)
    p["glob_w"] = conv_w(keys[7], output_dim, input_dim, 1)   # no BN on glob
    return p


# ----------------------------------------------------------------------------
# Forward pass (matches FPA_V2.forward, eval mode)
# ----------------------------------------------------------------------------
def fpa_v2_forward(x, params):
    """x: (N, input_dim, H, W) float32 (NCHW) -> (N, output_dim, H, W) f32."""
    d1_1 = conv_bn_relu(x, params["d11_w"], params["d11_s"], params["d11_b"], 7, 2, 3)
    d1_2 = conv_bn_relu(d1_1, params["d12_w"], params["d12_s"], params["d12_b"], 7, 1, 3)
    d2_1 = conv_bn_relu(d1_1, params["d21_w"], params["d21_s"], params["d21_b"], 5, 2, 2)
    d2_2 = conv_bn_relu(d2_1, params["d22_w"], params["d22_s"], params["d22_b"], 5, 1, 2)
    d3_1 = conv_bn_relu(d2_1, params["d31_w"], params["d31_s"], params["d31_b"], 3, 2, 1)
    d3_2 = conv_bn_relu(d3_1, params["d32_w"], params["d32_s"], params["d32_b"], 3, 1, 1)
    d2 = upsample_add(d3_2, d2_2)          # d2_2 + up(d3_2)
    d1 = upsample_add(d2, d1_2)            # d1_2 + up(d2)
    return final_combine(x, d1, params["conv1_w"], params["glob_w"],
                         params["conv1_s"], params["conv1_b"])


# ----------------------------------------------------------------------------
# Pure-JAX reference (for a numerical sanity check)
# ----------------------------------------------------------------------------
def _reference_forward(x, params):
    def conv(y, w2d, ksz, stride, pad):
        cout = w2d.shape[0]
        cin = y.shape[1]
        w_ = w2d.reshape(cout, cin, ksz, ksz)
        return jax.lax.conv_general_dilated(
            y, w_, window_strides=(stride, stride),
            padding=[(pad, pad), (pad, pad)],
            dimension_numbers=("NCHW", "OIHW", "NCHW"))

    def bnrelu(y, s, b):
        return jnp.maximum(
            y * s.reshape(1, -1, 1, 1) + b.reshape(1, -1, 1, 1), 0.0)

    def up(d, ho, wo):
        _, _, hi, wi = d.shape
        rh = jnp.asarray(_interp_matrix(ho, hi))
        rw = jnp.asarray(_interp_matrix(wo, wi))
        return jnp.einsum('ip,jq,ncpq->ncij', rh, rw, d)

    n, cin, h, w = x.shape
    d1_1 = bnrelu(conv(x, params["d11_w"], 7, 2, 3), params["d11_s"], params["d11_b"])
    d1_2 = bnrelu(conv(d1_1, params["d12_w"], 7, 1, 3), params["d12_s"], params["d12_b"])
    d2_1 = bnrelu(conv(d1_1, params["d21_w"], 5, 2, 2), params["d21_s"], params["d21_b"])
    d2_2 = bnrelu(conv(d2_1, params["d22_w"], 5, 1, 2), params["d22_s"], params["d22_b"])
    d3_1 = bnrelu(conv(d2_1, params["d31_w"], 3, 2, 1), params["d31_s"], params["d31_b"])
    d3_2 = bnrelu(conv(d3_1, params["d32_w"], 3, 1, 1), params["d32_s"], params["d32_b"])
    d2 = d2_2 + up(d3_2, d2_2.shape[2], d2_2.shape[3])
    d1 = d1_2 + up(d2, d1_2.shape[2], d1_2.shape[3])
    d1u = up(d1, h, w)
    y = bnrelu(conv(x, params["conv1_w"], 1, 1, 0),
               params["conv1_s"], params["conv1_b"])
    pooled = jnp.mean(x, axis=(2, 3), keepdims=True)
    g = conv(pooled, params["glob_w"], 1, 1, 0)     # (N, Cout, 1, 1), broadcast
    return y * d1u + g


# ----------------------------------------------------------------------------
if __name__ == "__main__":
    INPUT_DIM, OUTPUT_DIM = 32, 16
    N, H, W = 2, 16, 16

    x = jax.random.normal(jax.random.PRNGKey(0), (N, INPUT_DIM, H, W),
                          jnp.float32)
    params = make_params(INPUT_DIM, OUTPUT_DIM, seed=0)

    out = jax.jit(fpa_v2_forward)(x, params)
    out = jax.block_until_ready(out)

    assert out.shape == (N, OUTPUT_DIM, H, W), out.shape
    assert bool(jnp.all(jnp.isfinite(out)))

    ref = _reference_forward(x, params)
    rel_err = float(jnp.max(jnp.abs(out - ref)) /
                    (jnp.max(jnp.abs(ref)) + 1e-6))
    assert rel_err < 0.1, f"mismatch vs reference: rel-max-err={rel_err:.4f}"
    print("KERNEL_OK")
</pallas_src>

<mosaic_0001>
module attributes {stable_mosaic.version = 11 : i64} {
  func.func @_conv_bn_relu_kernel(%arg0: i32, %arg1: i32, %arg2: i32, %arg3: memref<1x1664x128xbf16, #tpu.memory_space<vmem>>, %arg4: memref<32x1664xbf16, #tpu.memory_space<vmem>>, %arg5: memref<32x1xf32, #tpu.memory_space<vmem>>, %arg6: memref<1x32x128xbf16, #tpu.memory_space<vmem>>, %arg7: memref<32x128xf32, #tpu.memory_space<vmem>>) attributes {dimension_semantics = [#tpu.dimension_semantics<parallel>, #tpu.dimension_semantics<parallel>, #tpu.dimension_semantics<arbitrary>], iteration_bounds = array<i64: 2, 1, 1>, scalar_prefetch = 0 : i64, scratch_operands = 1 : i64, tpu.core_type = #tpu.core_type<tc>, window_params = [{transform_indices = @transform_0, window_bounds = array<i64: 1, 1664, 128>}, {transform_indices = @transform_1, window_bounds = array<i64: 32, 1664>}, {pipeline_mode = #tpu.pipeline_mode<synchronous>, transform_indices = @transform_2, window_bounds = array<i64: 32, 1>}, {transform_indices = @transform_3, window_bounds = array<i64: 1, 32, 128>}]} {
    %c0 = arith.constant 0 : index
    %c0_0 = arith.constant 0 : index
    %0 = vector.load %arg4[%c0, %c0_0] : memref<32x1664xbf16, #tpu.memory_space<vmem>>, vector<32x1664xbf16>
    %c0_1 = arith.constant 0 : index
    %c0_2 = arith.constant 0 : index
    %c0_3 = arith.constant 0 : index
    %1 = vector.load %arg3[%c0_1, %c0_2, %c0_3] : memref<1x1664x128xbf16, #tpu.memory_space<vmem>>, vector<1x1664x128xbf16>
    %2 = vector.shape_cast %1 : vector<1x1664x128xbf16> to vector<1664x128xbf16>
    %cst = arith.constant dense<0.000000e+00> : vector<32x128xf32>
    %3 = tpu.matmul %0, %2, %cst {dimension_numbers = #tpu.dot_dimension_numbers<[1], [0], [0], [1], [0, 0, 1, 1], [], []>} : vector<32x1664xbf16>, vector<1664x128xbf16>, vector<32x128xf32> -> vector<32x128xf32>
    %c0_i32 = arith.constant 0 : i32
    %4 = arith.cmpi eq, %arg2, %c0_i32 : i32
    %5 = arith.extui %4 : i1 to i32
    %c0_i32_4 = arith.constant 0 : i32
    %6 = arith.cmpi ne, %5, %c0_i32_4 : i32
    scf.if %6 {
      %c0_9 = arith.constant 0 : index
      %c0_10 = arith.constant 0 : index
      %13 = vector.load %arg7[%c0_9, %c0_10] : memref<32x128xf32, #tpu.memory_space<vmem>>, vector<32x128xf32>
      tpu.vector_store %arg7[%c0_9, %c0_10], %3 {strides = array<i32>} : memref<32x128xf32, #tpu.memory_space<vmem>>, vector<32x128xf32>,
    } else {
    }
    %c0_i32_5 = arith.constant 0 : i32
    %7 = arith.cmpi sgt, %arg2, %c0_i32_5 : i32
    %8 = arith.extui %7 : i1 to i32
    %c0_i32_6 = arith.constant 0 : i32
    %9 = arith.cmpi ne, %8, %c0_i32_6 : i32
    scf.if %9 {
      %c0_9 = arith.constant 0 : index
      %c0_10 = arith.constant 0 : index
      %13 = vector.load %arg7[%c0_9, %c0_10] : memref<32x128xf32, #tpu.memory_space<vmem>>, vector<32x128xf32>
      %14 = arith.addf %13, %3 : vector<32x128xf32>
      %c0_11 = arith.constant 0 : index
      %c0_12 = arith.constant 0 : index
      %15 = vector.load %arg7[%c0_11, %c0_12] : memref<32x128xf32, #tpu.memory_space<vmem>>, vector<32x128xf32>
      tpu.vector_store %arg7[%c0_11, %c0_12], %14 {strides = array<i32>} : memref<32x128xf32, #tpu.memory_space<vmem>>, vector<32x128xf32>,
    } else {
    }
    %c0_i32_7 = arith.constant 0 : i32
    %10 = arith.cmpi eq, %arg2, %c0_i32_7 : i32
    %11 = arith.extui %10 : i1 to i32
    %c0_i32_8 = arith.constant 0 : i32
    %12 = arith.cmpi ne, %11, %c0_i32_8 : i32
    scf.if %12 {
      %c0_9 = arith.constant 0 : index
      %c0_10 = arith.constant 0 : index
      %13 = vector.load %arg7[%c0_9, %c0_10] : memref<32x128xf32, #tpu.memory_space<vmem>>, vector<32x128xf32>
      %c0_11 = arith.constant 0 : index
      %c0_12 = arith.constant 0 : index
      %14 = vector.load %arg5[%c0_11, %c0_12] : memref<32x1xf32, #tpu.memory_space<vmem>>, vector<32x1xf32>
      %15 = vector.broadcast %14 : vector<32x1xf32> to vector<32x128xf32>
      %16 = arith.addf %13, %15 : vector<32x128xf32>
      %cst_13 = arith.constant 0.000000e+00 : f32
      %17 = vector.broadcast %cst_13 : f32 to vector<32x128xf32>
      %18 = arith.maximumf %16, %17 : vector<32x128xf32>
      %19 = arith.truncf %18 : vector<32x128xf32> to vector<32x128xbf16>
      %c0_14 = arith.constant 0 : index
      %c0_15 = arith.constant 0 : index
      %c0_16 = arith.constant 0 : index
      %20 = vector.load %arg6[%c0_14, %c0_15, %c0_16] : memref<1x32x128xbf16, #tpu.memory_space<vmem>>, vector<1x32x128xbf16>
      %21 = vector.shape_cast %20 : vector<1x32x128xbf16> to vector<32x128xbf16>
      %22 = vector.shape_cast %19 : vector<32x128xbf16> to vector<1x32x128xbf16>
      tpu.vector_store %arg6[%c0_14, %c0_15, %c0_16], %22 {strides = array<i32>} : memref<1x32x128xbf16, #tpu.memory_space<vmem>>, vector<1x32x128xbf16>,
    } else {
    }
    return
  }
  func.func @transform_0(%arg0: i32, %arg1: i32, %arg2: i32) -> (i32, i32, i32) {
    %c0_i32 = arith.constant 0 : i32
    return %arg0, %arg2, %arg1 : i32, i32, i32
  }
  func.func @transform_1(%arg0: i32, %arg1: i32, %arg2: i32) -> (i32, i32) {
    %c0_i32 = arith.constant 0 : i32
    %c0_i32_0 = arith.constant 0 : i32
    return %c0_i32, %arg2 : i32, i32
  }
  func.func @transform_2(%arg0: i32, %arg1: i32, %arg2: i32) -> (i32, i32) {
    %c0_i32 = arith.constant 0 : i32
    %c0_i32_0 = arith.constant 0 : i32
    %c0_i32_1 = arith.constant 0 : i32
    return %c0_i32, %c0_i32_0 : i32, i32
  }
  func.func @transform_3(%arg0: i32, %arg1: i32, %arg2: i32) -> (i32, i32, i32) {
    %c0_i32 = arith.constant 0 : i32
    %c0_i32_0 = arith.constant 0 : i32
    return %arg0, %c0_i32, %arg1 : i32, i32, i32
  }
}

module attributes {stable_mosaic.version = 11 : i64} {
  func.func @_conv_bn_relu_kernel(%arg0: i32, %arg1: i32, %arg2: i32, %arg3: memref<1x896x128xbf16, #tpu.memory_space<vmem>>, %arg4: memref<32x896xbf16, #tpu.memory_space<vmem>>, %arg5: memref<32x1xf32, #tpu.memory_space<vmem>>, %arg6: memref<1x32x128xbf16, #tpu.memory_space<vmem>>, %arg7: memref<32x128xf32, #tpu.memory_space<vmem>>) attributes {dimension_semantics = [#tpu.dimension_semantics<parallel>, #tpu.dimension_semantics<parallel>, #tpu.dimension_semantics<arbitrary>], iteration_bounds = array<i64: 2, 1, 1>, scalar_prefetch = 0 : i64, scratch_operands = 1 : i64, tpu.core_type = #tpu.core_type<tc>, window_params = [{transform_indices = @transform_0, window_bounds = array<i64: 1, 896, 128>}, {transform_indices = @transform_1, window_bounds = array<i64: 32, 896>}, {pipeline_mode = #tpu.pipeline_mode<synchronous>, transform_indices = @transform_2, window_bounds = array<i64: 32, 1>}, {transform_indices = @transform_3, window_bounds = array<i64: 1, 32, 128>}]} {
    %c0 = arith.constant 0 : index
    %c0_0 = arith.constant 0 : index
    %0 = vector.load %arg4[%c0, %c0_0] : memref<32x896xbf16, #tpu.memory_space<vmem>>, vector<32x896xbf16>
    %c0_1 = arith.constant 0 : index
    %c0_2 = arith.constant 0 : index
    %c0_3 = arith.constant 0 : index
    %1 = vector.load %arg3[%c0_1, %c0_2, %c0_3] : memref<1x896x128xbf16, #tpu.memory_space<vmem>>, vector<1x896x128xbf16>
    %2 = vector.shape_cast %1 : vector<1x896x128xbf16> to vector<896x128xbf16>
    %cst = arith.constant dense<0.000000e+00> : vector<32x128xf32>
    %3 = tpu.matmul %0, %2, %cst {dimension_numbers = #tpu.dot_dimension_numbers<[1], [0], [0], [1], [0, 0, 1, 1], [], []>} : vector<32x896xbf16>, vector<896x128xbf16>, vector<32x128xf32> -> vector<32x128xf32>
    %c0_i32 = arith.constant 0 : i32
    %4 = arith.cmpi eq, %arg2, %c0_i32 : i32
    %5 = arith.extui %4 : i1 to i32
    %c0_i32_4 = arith.constant 0 : i32
    %6 = arith.cmpi ne, %5, %c0_i32_4 : i32
    scf.if %6 {
      %c0_9 = arith.constant 0 : index
      %c0_10 = arith.constant 0 : index
      %13 = vector.load %arg7[%c0_9, %c0_10] : memref<32x128xf32, #tpu.memory_space<vmem>>, vector<32x128xf32>
      tpu.vector_store %arg7[%c0_9, %c0_10], %3 {strides = array<i32>} : memref<32x128xf32, #tpu.memory_space<vmem>>, vector<32x128xf32>,
    } else {
    }
    %c0_i32_5 = arith.constant 0 : i32
    %7 = arith.cmpi sgt, %arg2, %c0_i32_5 : i32
    %8 = arith.extui %7 : i1 to i32
    %c0_i32_6 = arith.constant 0 : i32
    %9 = arith.cmpi ne, %8, %c0_i32_6 : i32
    scf.if %9 {
      %c0_9 = arith.constant 0 : index
      %c0_10 = arith.constant 0 : index
      %13 = vector.load %arg7[%c0_9, %c0_10] : memref<32x128xf32, #tpu.memory_space<vmem>>, vector<32x128xf32>
      %14 = arith.addf %13, %3 : vector<32x128xf32>
      %c0_11 = arith.constant 0 : index
      %c0_12 = arith.constant 0 : index
      %15 = vector.load %arg7[%c0_11, %c0_12] : memref<32x128xf32, #tpu.memory_space<vmem>>, vector<32x128xf32>
      tpu.vector_store %arg7[%c0_11, %c0_12], %14 {strides = array<i32>} : memref<32x128xf32, #tpu.memory_space<vmem>>, vector<32x128xf32>,
    } else {
    }
    %c0_i32_7 = arith.constant 0 : i32
    %10 = arith.cmpi eq, %arg2, %c0_i32_7 : i32
    %11 = arith.extui %10 : i1 to i32
    %c0_i32_8 = arith.constant 0 : i32
    %12 = arith.cmpi ne, %11, %c0_i32_8 : i32
    scf.if %12 {
      %c0_9 = arith.constant 0 : index
      %c0_10 = arith.constant 0 : index
      %13 = vector.load %arg7[%c0_9, %c0_10] : memref<32x128xf32, #tpu.memory_space<vmem>>, vector<32x128xf32>
      %c0_11 = arith.constant 0 : index
      %c0_12 = arith.constant 0 : index
      %14 = vector.load %arg5[%c0_11, %c0_12] : memref<32x1xf32, #tpu.memory_space<vmem>>, vector<32x1xf32>
      %15 = vector.broadcast %14 : vector<32x1xf32> to vector<32x128xf32>
      %16 = arith.addf %13, %15 : vector<32x128xf32>
      %cst_13 = arith.constant 0.000000e+00 : f32
      %17 = vector.broadcast %cst_13 : f32 to vector<32x128xf32>
      %18 = arith.maximumf %16, %17 : vector<32x128xf32>
      %19 = arith.truncf %18 : vector<32x128xf32> to vector<32x128xbf16>
      %c0_14 = arith.constant 0 : index
      %c0_15 = arith.constant 0 : index
      %c0_16 = arith.constant 0 : index
      %20 = vector.load %arg6[%c0_14, %c0_15, %c0_16] : memref<1x32x128xbf16, #tpu.memory_space<vmem>>, vector<1x32x128xbf16>
      %21 = vector.shape_cast %20 : vector<1x32x128xbf16> to vector<32x128xbf16>
      %22 = vector.shape_cast %19 : vector<32x128xbf16> to vector<1x32x128xbf16>
      tpu.vector_store %arg6[%c0_14, %c0_15, %c0_16], %22 {strides = array<i32>} : memref<1x32x128xbf16, #tpu.memory_space<vmem>>, vector<1x32x128xbf16>,
    } else {
    }
    return
  }
  func.func @transform_0(%arg0: i32, %arg1: i32, %arg2: i32) -> (i32, i32, i32) {
    %c0_i32 = arith.constant 0 : i32
    return %arg0, %arg2, %arg1 : i32, i32, i32
  }
  func.func @transform_1(%arg0: i32, %arg1: i32, %arg2: i32) -> (i32, i32) {
    %c0_i32 = arith.constant 0 : i32
    %c0_i32_0 = arith.constant 0 : i32
    return %c0_i32, %arg2 : i32, i32
  }
  func.func @transform_2(%arg0: i32, %arg1: i32, %arg2: i32) -> (i32, i32) {
    %c0_i32 = arith.constant 0 : i32
    %c0_i32_0 = arith.constant 0 : i32
    %c0_i32_1 = arith.constant 0 : i32
    return %c0_i32, %c0_i32_0 : i32, i32
  }
  func.func @transform_3(%arg0: i32, %arg1: i32, %arg2: i32) -> (i32, i32, i32) {
    %c0_i32 = arith.constant 0 : i32
    %c0_i32_0 = arith.constant 0 : i32
    return %arg0, %c0_i32, %arg1 : i32, i32, i32
  }
}

module attributes {stable_mosaic.version = 11 : i64} {
  func.func @_conv_bn_relu_kernel(%arg0: i32, %arg1: i32, %arg2: i32, %arg3: memref<1x896x128xbf16, #tpu.memory_space<vmem>>, %arg4: memref<16x896xbf16, #tpu.memory_space<vmem>>, %arg5: memref<16x1xf32, #tpu.memory_space<vmem>>, %arg6: memref<1x16x128xbf16, #tpu.memory_space<vmem>>, %arg7: memref<16x128xf32, #tpu.memory_space<vmem>>) attributes {dimension_semantics = [#tpu.dimension_semantics<parallel>, #tpu.dimension_semantics<parallel>, #tpu.dimension_semantics<arbitrary>], iteration_bounds = array<i64: 2, 1, 1>, scalar_prefetch = 0 : i64, scratch_operands = 1 : i64, tpu.core_type = #tpu.core_type<tc>, window_params = [{transform_indices = @transform_0, window_bounds = array<i64: 1, 896, 128>}, {transform_indices = @transform_1, window_bounds = array<i64: 16, 896>}, {pipeline_mode = #tpu.pipeline_mode<synchronous>, transform_indices = @transform_2, window_bounds = array<i64: 16, 1>}, {transform_indices = @transform_3, window_bounds = array<i64: 1, 16, 128>}]} {
    %c0 = arith.constant 0 : index
    %c0_0 = arith.constant 0 : index
    %0 = vector.load %arg4[%c0, %c0_0] : memref<16x896xbf16, #tpu.memory_space<vmem>>, vector<16x896xbf16>
    %c0_1 = arith.constant 0 : index
    %c0_2 = arith.constant 0 : index
    %c0_3 = arith.constant 0 : index
    %1 = vector.load %arg3[%c0_1, %c0_2, %c0_3] : memref<1x896x128xbf16, #tpu.memory_space<vmem>>, vector<1x896x128xbf16>
    %2 = vector.shape_cast %1 : vector<1x896x128xbf16> to vector<896x128xbf16>
    %cst = arith.constant dense<0.000000e+00> : vector<16x128xf32>
    %3 = tpu.matmul %0, %2, %cst {dimension_numbers = #tpu.dot_dimension_numbers<[1], [0], [0], [1], [0, 0, 1, 1], [], []>} : vector<16x896xbf16>, vector<896x128xbf16>, vector<16x128xf32> -> vector<16x128xf32>
    %c0_i32 = arith.constant 0 : i32
    %4 = arith.cmpi eq, %arg2, %c0_i32 : i32
    %5 = arith.extui %4 : i1 to i32
    %c0_i32_4 = arith.constant 0 : i32
    %6 = arith.cmpi ne, %5, %c0_i32_4 : i32
    scf.if %6 {
      %c0_9 = arith.constant 0 : index
      %c0_10 = arith.constant 0 : index
      %13 = vector.load %arg7[%c0_9, %c0_10] : memref<16x128xf32, #tpu.memory_space<vmem>>, vector<16x128xf32>
      tpu.vector_store %arg7[%c0_9, %c0_10], %3 {strides = array<i32>} : memref<16x128xf32, #tpu.memory_space<vmem>>, vector<16x128xf32>,
    } else {
    }
    %c0_i32_5 = arith.constant 0 : i32
    %7 = arith.cmpi sgt, %arg2, %c0_i32_5 : i32
    %8 = arith.extui %7 : i1 to i32
    %c0_i32_6 = arith.constant 0 : i32
    %9 = arith.cmpi ne, %8, %c0_i32_6 : i32
    scf.if %9 {
      %c0_9 = arith.constant 0 : index
      %c0_10 = arith.constant 0 : index
      %13 = vector.load %arg7[%c0_9, %c0_10] : memref<16x128xf32, #tpu.memory_space<vmem>>, vector<16x128xf32>
      %14 = arith.addf %13, %3 : vector<16x128xf32>
      %c0_11 = arith.constant 0 : index
      %c0_12 = arith.constant 0 : index
      %15 = vector.load %arg7[%c0_11, %c0_12] : memref<16x128xf32, #tpu.memory_space<vmem>>, vector<16x128xf32>
      tpu.vector_store %arg7[%c0_11, %c0_12], %14 {strides = array<i32>} : memref<16x128xf32, #tpu.memory_space<vmem>>, vector<16x128xf32>,
    } else {
    }
    %c0_i32_7 = arith.constant 0 : i32
    %10 = arith.cmpi eq, %arg2, %c0_i32_7 : i32
    %11 = arith.extui %10 : i1 to i32
    %c0_i32_8 = arith.constant 0 : i32
    %12 = arith.cmpi ne, %11, %c0_i32_8 : i32
    scf.if %12 {
      %c0_9 = arith.constant 0 : index
      %c0_10 = arith.constant 0 : index
      %13 = vector.load %arg7[%c0_9, %c0_10] : memref<16x128xf32, #tpu.memory_space<vmem>>, vector<16x128xf32>
      %c0_11 = arith.constant 0 : index
      %c0_12 = arith.constant 0 : index
      %14 = vector.load %arg5[%c0_11, %c0_12] : memref<16x1xf32, #tpu.memory_space<vmem>>, vector<16x1xf32>
      %15 = vector.broadcast %14 : vector<16x1xf32> to vector<16x128xf32>
      %16 = arith.addf %13, %15 : vector<16x128xf32>
      %cst_13 = arith.constant 0.000000e+00 : f32
      %17 = vector.broadcast %cst_13 : f32 to vector<16x128xf32>
      %18 = arith.maximumf %16, %17 : vector<16x128xf32>
      %19 = arith.truncf %18 : vector<16x128xf32> to vector<16x128xbf16>
      %c0_14 = arith.constant 0 : index
      %c0_15 = arith.constant 0 : index
      %c0_16 = arith.constant 0 : index
      %20 = vector.load %arg6[%c0_14, %c0_15, %c0_16] : memref<1x16x128xbf16, #tpu.memory_space<vmem>>, vector<1x16x128xbf16>
      %21 = vector.shape_cast %20 : vector<1x16x128xbf16> to vector<16x128xbf16>
      %22 = vector.shape_cast %19 : vector<16x128xbf16> to vector<1x16x128xbf16>
      tpu.vector_store %arg6[%c0_14, %c0_15, %c0_16], %22 {strides = array<i32>} : memref<1x16x128xbf16, #tpu.memory_space<vmem>>, vector<1x16x128xbf16>,
    } else {
    }
    return
  }
  func.func @transform_0(%arg0: i32, %arg1: i32, %arg2: i32) -> (i32, i32, i32) {
    %c0_i32 = arith.constant 0 : i32
    return %arg0, %arg2, %arg1 : i32, i32, i32
  }
  func.func @transform_1(%arg0: i32, %arg1: i32, %arg2: i32) -> (i32, i32) {
    %c0_i32 = arith.constant 0 : i32
    %c0_i32_0 = arith.constant 0 : i32
    return %c0_i32, %arg2 : i32, i32
  }
  func.func @transform_2(%arg0: i32, %arg1: i32, %arg2: i32) -> (i32, i32) {
    %c0_i32 = arith.constant 0 : i32
    %c0_i32_0 = arith.constant 0 : i32
    %c0_i32_1 = arith.constant 0 : i32
    return %c0_i32, %c0_i32_0 : i32, i32
  }
  func.func @transform_3(%arg0: i32, %arg1: i32, %arg2: i32) -> (i32, i32, i32) {
    %c0_i32 = arith.constant 0 : i32
    %c0_i32_0 = arith.constant 0 : i32
    return %arg0, %c0_i32, %arg1 : i32, i32, i32
  }
}

module attributes {stable_mosaic.version = 11 : i64} {
  func.func @_conv_bn_relu_kernel(%arg0: i32, %arg1: i32, %arg2: i32, %arg3: memref<1x384x128xbf16, #tpu.memory_space<vmem>>, %arg4: memref<32x384xbf16, #tpu.memory_space<vmem>>, %arg5: memref<32x1xf32, #tpu.memory_space<vmem>>, %arg6: memref<1x32x128xbf16, #tpu.memory_space<vmem>>, %arg7: memref<32x128xf32, #tpu.memory_space<vmem>>) attributes {dimension_semantics = [#tpu.dimension_semantics<parallel>, #tpu.dimension_semantics<parallel>, #tpu.dimension_semantics<arbitrary>], iteration_bounds = array<i64: 2, 1, 1>, scalar_prefetch = 0 : i64, scratch_operands = 1 : i64, tpu.core_type = #tpu.core_type<tc>, window_params = [{transform_indices = @transform_0, window_bounds = array<i64: 1, 384, 128>}, {transform_indices = @transform_1, window_bounds = array<i64: 32, 384>}, {pipeline_mode = #tpu.pipeline_mode<synchronous>, transform_indices = @transform_2, window_bounds = array<i64: 32, 1>}, {transform_indices = @transform_3, window_bounds = array<i64: 1, 32, 128>}]} {
    %c0 = arith.constant 0 : index
    %c0_0 = arith.constant 0 : index
    %0 = vector.load %arg4[%c0, %c0_0] : memref<32x384xbf16, #tpu.memory_space<vmem>>, vector<32x384xbf16>
    %c0_1 = arith.constant 0 : index
    %c0_2 = arith.constant 0 : index
    %c0_3 = arith.constant 0 : index
    %1 = vector.load %arg3[%c0_1, %c0_2, %c0_3] : memref<1x384x128xbf16, #tpu.memory_space<vmem>>, vector<1x384x128xbf16>
    %2 = vector.shape_cast %1 : vector<1x384x128xbf16> to vector<384x128xbf16>
    %cst = arith.constant dense<0.000000e+00> : vector<32x128xf32>
    %3 = tpu.matmul %0, %2, %cst {dimension_numbers = #tpu.dot_dimension_numbers<[1], [0], [0], [1], [0, 0, 1, 1], [], []>} : vector<32x384xbf16>, vector<384x128xbf16>, vector<32x128xf32> -> vector<32x128xf32>
    %c0_i32 = arith.constant 0 : i32
    %4 = arith.cmpi eq, %arg2, %c0_i32 : i32
    %5 = arith.extui %4 : i1 to i32
    %c0_i32_4 = arith.constant 0 : i32
    %6 = arith.cmpi ne, %5, %c0_i32_4 : i32
    scf.if %6 {
      %c0_9 = arith.constant 0 : index
      %c0_10 = arith.constant 0 : index
      %13 = vector.load %arg7[%c0_9, %c0_10] : memref<32x128xf32, #tpu.memory_space<vmem>>, vector<32x128xf32>
      tpu.vector_store %arg7[%c0_9, %c0_10], %3 {strides = array<i32>} : memref<32x128xf32, #tpu.memory_space<vmem>>, vector<32x128xf32>,
    } else {
    }
    %c0_i32_5 = arith.constant 0 : i32
    %7 = arith.cmpi sgt, %arg2, %c0_i32_5 : i32
    %8 = arith.extui %7 : i1 to i32
    %c0_i32_6 = arith.constant 0 : i32
    %9 = arith.cmpi ne, %8, %c0_i32_6 : i32
    scf.if %9 {
      %c0_9 = arith.constant 0 : index
      %c0_10 = arith.constant 0 : index
      %13 = vector.load %arg7[%c0_9, %c0_10] : memref<32x128xf32, #tpu.memory_space<vmem>>, vector<32x128xf32>
      %14 = arith.addf %13, %3 : vector<32x128xf32>
      %c0_11 = arith.constant 0 : index
      %c0_12 = arith.constant 0 : index
      %15 = vector.load %arg7[%c0_11, %c0_12] : memref<32x128xf32, #tpu.memory_space<vmem>>, vector<32x128xf32>
      tpu.vector_store %arg7[%c0_11, %c0_12], %14 {strides = array<i32>} : memref<32x128xf32, #tpu.memory_space<vmem>>, vector<32x128xf32>,
    } else {
    }
    %c0_i32_7 = arith.constant 0 : i32
    %10 = arith.cmpi eq, %arg2, %c0_i32_7 : i32
    %11 = arith.extui %10 : i1 to i32
    %c0_i32_8 = arith.constant 0 : i32
    %12 = arith.cmpi ne, %11, %c0_i32_8 : i32
    scf.if %12 {
      %c0_9 = arith.constant 0 : index
      %c0_10 = arith.constant 0 : index
      %13 = vector.load %arg7[%c0_9, %c0_10] : memref<32x128xf32, #tpu.memory_space<vmem>>, vector<32x128xf32>
      %c0_11 = arith.constant 0 : index
      %c0_12 = arith.constant 0 : index
      %14 = vector.load %arg5[%c0_11, %c0_12] : memref<32x1xf32, #tpu.memory_space<vmem>>, vector<32x1xf32>
      %15 = vector.broadcast %14 : vector<32x1xf32> to vector<32x128xf32>
      %16 = arith.addf %13, %15 : vector<32x128xf32>
      %cst_13 = arith.constant 0.000000e+00 : f32
      %17 = vector.broadcast %cst_13 : f32 to vector<32x128xf32>
      %18 = arith.maximumf %16, %17 : vector<32x128xf32>
      %19 = arith.truncf %18 : vector<32x128xf32> to vector<32x128xbf16>
      %c0_14 = arith.constant 0 : index
      %c0_15 = arith.constant 0 : index
      %c0_16 = arith.constant 0 : index
      %20 = vector.load %arg6[%c0_14, %c0_15, %c0_16] : memref<1x32x128xbf16, #tpu.memory_space<vmem>>, vector<1x32x128xbf16>
      %21 = vector.shape_cast %20 : vector<1x32x128xbf16> to vector<32x128xbf16>
      %22 = vector.shape_cast %19 : vector<32x128xbf16> to vector<1x32x128xbf16>
      tpu.vector_store %arg6[%c0_14, %c0_15, %c0_16], %22 {strides = array<i32>} : memref<1x32x128xbf16, #tpu.memory_space<vmem>>, vector<1x32x128xbf16>,
    } else {
    }
    return
  }
  func.func @transform_0(%arg0: i32, %arg1: i32, %arg2: i32) -> (i32, i32, i32) {
    %c0_i32 = arith.constant 0 : i32
    return %arg0, %arg2, %arg1 : i32, i32, i32
  }
  func.func @transform_1(%arg0: i32, %arg1: i32, %arg2: i32) -> (i32, i32) {
    %c0_i32 = arith.constant 0 : i32
    %c0_i32_0 = arith.constant 0 : i32
    return %c0_i32, %arg2 : i32, i32
  }
  func.func @transform_2(%arg0: i32, %arg1: i32, %arg2: i32) -> (i32, i32) {
    %c0_i32 = arith.constant 0 : i32
    %c0_i32_0 = arith.constant 0 : i32
    %c0_i32_1 = arith.constant 0 : i32
    return %c0_i32, %c0_i32_0 : i32, i32
  }
  func.func @transform_3(%arg0: i32, %arg1: i32, %arg2: i32) -> (i32, i32, i32) {
    %c0_i32 = arith.constant 0 : i32
    %c0_i32_0 = arith.constant 0 : i32
    return %arg0, %c0_i32, %arg1 : i32, i32, i32
  }
}

module attributes {stable_mosaic.version = 11 : i64} {
  func.func @_conv_bn_relu_kernel(%arg0: i32, %arg1: i32, %arg2: i32, %arg3: memref<1x384x128xbf16, #tpu.memory_space<vmem>>, %arg4: memref<16x384xbf16, #tpu.memory_space<vmem>>, %arg5: memref<16x1xf32, #tpu.memory_space<vmem>>, %arg6: memref<1x16x128xbf16, #tpu.memory_space<vmem>>, %arg7: memref<16x128xf32, #tpu.memory_space<vmem>>) attributes {dimension_semantics = [#tpu.dimension_semantics<parallel>, #tpu.dimension_semantics<parallel>, #tpu.dimension_semantics<arbitrary>], iteration_bounds = array<i64: 2, 1, 1>, scalar_prefetch = 0 : i64, scratch_operands = 1 : i64, tpu.core_type = #tpu.core_type<tc>, window_params = [{transform_indices = @transform_0, window_bounds = array<i64: 1, 384, 128>}, {transform_indices = @transform_1, window_bounds = array<i64: 16, 384>}, {pipeline_mode = #tpu.pipeline_mode<synchronous>, transform_indices = @transform_2, window_bounds = array<i64: 16, 1>}, {transform_indices = @transform_3, window_bounds = array<i64: 1, 16, 128>}]} {
    %c0 = arith.constant 0 : index
    %c0_0 = arith.constant 0 : index
    %0 = vector.load %arg4[%c0, %c0_0] : memref<16x384xbf16, #tpu.memory_space<vmem>>, vector<16x384xbf16>
    %c0_1 = arith.constant 0 : index
    %c0_2 = arith.constant 0 : index
    %c0_3 = arith.constant 0 : index
    %1 = vector.load %arg3[%c0_1, %c0_2, %c0_3] : memref<1x384x128xbf16, #tpu.memory_space<vmem>>, vector<1x384x128xbf16>
    %2 = vector.shape_cast %1 : vector<1x384x128xbf16> to vector<384x128xbf16>
    %cst = arith.constant dense<0.000000e+00> : vector<16x128xf32>
    %3 = tpu.matmul %0, %2, %cst {dimension_numbers = #tpu.dot_dimension_numbers<[1], [0], [0], [1], [0, 0, 1, 1], [], []>} : vector<16x384xbf16>, vector<384x128xbf16>, vector<16x128xf32> -> vector<16x128xf32>
    %c0_i32 = arith.constant 0 : i32
    %4 = arith.cmpi eq, %arg2, %c0_i32 : i32
    %5 = arith.extui %4 : i1 to i32
    %c0_i32_4 = arith.constant 0 : i32
    %6 = arith.cmpi ne, %5, %c0_i32_4 : i32
    scf.if %6 {
      %c0_9 = arith.constant 0 : index
      %c0_10 = arith.constant 0 : index
      %13 = vector.load %arg7[%c0_9, %c0_10] : memref<16x128xf32, #tpu.memory_space<vmem>>, vector<16x128xf32>
      tpu.vector_store %arg7[%c0_9, %c0_10], %3 {strides = array<i32>} : memref<16x128xf32, #tpu.memory_space<vmem>>, vector<16x128xf32>,
    } else {
    }
    %c0_i32_5 = arith.constant 0 : i32
    %7 = arith.cmpi sgt, %arg2, %c0_i32_5 : i32
    %8 = arith.extui %7 : i1 to i32
    %c0_i32_6 = arith.constant 0 : i32
    %9 = arith.cmpi ne, %8, %c0_i32_6 : i32
    scf.if %9 {
      %c0_9 = arith.constant 0 : index
      %c0_10 = arith.constant 0 : index
      %13 = vector.load %arg7[%c0_9, %c0_10] : memref<16x128xf32, #tpu.memory_space<vmem>>, vector<16x128xf32>
      %14 = arith.addf %13, %3 : vector<16x128xf32>
      %c0_11 = arith.constant 0 : index
      %c0_12 = arith.constant 0 : index
      %15 = vector.load %arg7[%c0_11, %c0_12] : memref<16x128xf32, #tpu.memory_space<vmem>>, vector<16x128xf32>
      tpu.vector_store %arg7[%c0_11, %c0_12], %14 {strides = array<i32>} : memref<16x128xf32, #tpu.memory_space<vmem>>, vector<16x128xf32>,
    } else {
    }
    %c0_i32_7 = arith.constant 0 : i32
    %10 = arith.cmpi eq, %arg2, %c0_i32_7 : i32
    %11 = arith.extui %10 : i1 to i32
    %c0_i32_8 = arith.constant 0 : i32
    %12 = arith.cmpi ne, %11, %c0_i32_8 : i32
    scf.if %12 {
      %c0_9 = arith.constant 0 : index
      %c0_10 = arith.constant 0 : index
      %13 = vector.load %arg7[%c0_9, %c0_10] : memref<16x128xf32, #tpu.memory_space<vmem>>, vector<16x128xf32>
      %c0_11 = arith.constant 0 : index
      %c0_12 = arith.constant 0 : index
      %14 = vector.load %arg5[%c0_11, %c0_12] : memref<16x1xf32, #tpu.memory_space<vmem>>, vector<16x1xf32>
      %15 = vector.broadcast %14 : vector<16x1xf32> to vector<16x128xf32>
      %16 = arith.addf %13, %15 : vector<16x128xf32>
      %cst_13 = arith.constant 0.000000e+00 : f32
      %17 = vector.broadcast %cst_13 : f32 to vector<16x128xf32>
      %18 = arith.maximumf %16, %17 : vector<16x128xf32>
      %19 = arith.truncf %18 : vector<16x128xf32> to vector<16x128xbf16>
      %c0_14 = arith.constant 0 : index
      %c0_15 = arith.constant 0 : index
      %c0_16 = arith.constant 0 : index
      %20 = vector.load %arg6[%c0_14, %c0_15, %c0_16] : memref<1x16x128xbf16, #tpu.memory_space<vmem>>, vector<1x16x128xbf16>
      %21 = vector.shape_cast %20 : vector<1x16x128xbf16> to vector<16x128xbf16>
      %22 = vector.shape_cast %19 : vector<16x128xbf16> to vector<1x16x128xbf16>
      tpu.vector_store %arg6[%c0_14, %c0_15, %c0_16], %22 {strides = array<i32>} : memref<1x16x128xbf16, #tpu.memory_space<vmem>>, vector<1x16x128xbf16>,
    } else {
    }
    return
  }
  func.func @transform_0(%arg0: i32, %arg1: i32, %arg2: i32) -> (i32, i32, i32) {
    %c0_i32 = arith.constant 0 : i32
    return %arg0, %arg2, %arg1 : i32, i32, i32
  }
  func.func @transform_1(%arg0: i32, %arg1: i32, %arg2: i32) -> (i32, i32) {
    %c0_i32 = arith.constant 0 : i32
    %c0_i32_0 = arith.constant 0 : i32
    return %c0_i32, %arg2 : i32, i32
  }
  func.func @transform_2(%arg0: i32, %arg1: i32, %arg2: i32) -> (i32, i32) {
    %c0_i32 = arith.constant 0 : i32
    %c0_i32_0 = arith.constant 0 : i32
    %c0_i32_1 = arith.constant 0 : i32
    return %c0_i32, %c0_i32_0 : i32, i32
  }
  func.func @transform_3(%arg0: i32, %arg1: i32, %arg2: i32) -> (i32, i32, i32) {
    %c0_i32 = arith.constant 0 : i32
    %c0_i32_0 = arith.constant 0 : i32
    return %arg0, %c0_i32, %arg1 : i32, i32, i32
  }
}

module attributes {stable_mosaic.version = 11 : i64} {
  func.func @_upsample_add_kernel(%arg0: i32, %arg1: i32, %arg2: memref<1x16x128xbf16, #tpu.memory_space<vmem>>, %arg3: memref<1x16x128xbf16, #tpu.memory_space<vmem>>, %arg4: memref<128x128xbf16, #tpu.memory_space<vmem>>, %arg5: memref<1x16x128xbf16, #tpu.memory_space<vmem>>) attributes {dimension_semantics = [#tpu.dimension_semantics<parallel>, #tpu.dimension_semantics<parallel>], iteration_bounds = array<i64: 2, 1>, scalar_prefetch = 0 : i64, scratch_operands = 0 : i64, tpu.core_type = #tpu.core_type<tc>, window_params = [{transform_indices = @transform_0, window_bounds = array<i64: 1, 16, 128>}, {transform_indices = @transform_1, window_bounds = array<i64: 1, 16, 128>}, {transform_indices = @transform_2, window_bounds = array<i64: 128, 128>}, {transform_indices = @transform_3, window_bounds = array<i64: 1, 16, 128>}]} {
    %c0 = arith.constant 0 : index
    %c0_0 = arith.constant 0 : index
    %c0_1 = arith.constant 0 : index
    %0 = vector.load %arg2[%c0, %c0_0, %c0_1] : memref<1x16x128xbf16, #tpu.memory_space<vmem>>, vector<1x16x128xbf16>
    %1 = vector.shape_cast %0 : vector<1x16x128xbf16> to vector<16x128xbf16>
    %c0_2 = arith.constant 0 : index
    %c0_3 = arith.constant 0 : index
    %2 = vector.load %arg4[%c0_2, %c0_3] : memref<128x128xbf16, #tpu.memory_space<vmem>>, vector<128x128xbf16>
    %cst = arith.constant dense<0.000000e+00> : vector<16x128xf32>
    %3 = tpu.matmul %1, %2, %cst {dimension_numbers = #tpu.dot_dimension_numbers<[1], [0], [0], [1], [0, 0, 1, 1], [], []>} : vector<16x128xbf16>, vector<128x128xbf16>, vector<16x128xf32> -> vector<16x128xf32>
    %c0_4 = arith.constant 0 : index
    %c0_5 = arith.constant 0 : index
    %c0_6 = arith.constant 0 : index
    %4 = vector.load %arg3[%c0_4, %c0_5, %c0_6] : memref<1x16x128xbf16, #tpu.memory_space<vmem>>, vector<1x16x128xbf16>
    %5 = vector.shape_cast %4 : vector<1x16x128xbf16> to vector<16x128xbf16>
    %6 = arith.extf %5 : vector<16x128xbf16> to vector<16x128xf32>
    %7 = arith.addf %6, %3 : vector<16x128xf32>
    %8 = arith.truncf %7 : vector<16x128xf32> to vector<16x128xbf16>
    %c0_7 = arith.constant 0 : index
    %c0_8 = arith.constant 0 : index
    %c0_9 = arith.constant 0 : index
    %9 = vector.load %arg5[%c0_7, %c0_8, %c0_9] : memref<1x16x128xbf16, #tpu.memory_space<vmem>>, vector<1x16x128xbf16>
    %10 = vector.shape_cast %9 : vector<1x16x128xbf16> to vector<16x128xbf16>
    %11 = vector.shape_cast %8 : vector<16x128xbf16> to vector<1x16x128xbf16>
    tpu.vector_store %arg5[%c0_7, %c0_8, %c0_9], %11 {strides = array<i32>} : memref<1x16x128xbf16, #tpu.memory_space<vmem>>, vector<1x16x128xbf16>,
    return
  }
  func.func @transform_0(%arg0: i32, %arg1: i32) -> (i32, i32, i32) {
    %c0_i32 = arith.constant 0 : i32
    %c0_i32_0 = arith.constant 0 : i32
    %c0_i32_1 = arith.constant 0 : i32
    return %arg0, %c0_i32, %c0_i32_0 : i32, i32, i32
  }
  func.func @transform_1(%arg0: i32, %arg1: i32) -> (i32, i32, i32) {
    %c0_i32 = arith.constant 0 : i32
    %c0_i32_0 = arith.constant 0 : i32
    return %arg0, %c0_i32, %arg1 : i32, i32, i32
  }
  func.func @transform_2(%arg0: i32, %arg1: i32) -> (i32, i32) {
    %c0_i32 = arith.constant 0 : i32
    %c0_i32_0 = arith.constant 0 : i32
    return %c0_i32, %arg1 : i32, i32
  }
  func.func @transform_3(%arg0: i32, %arg1: i32) -> (i32, i32, i32) {
    %c0_i32 = arith.constant 0 : i32
    %c0_i32_0 = arith.constant 0 : i32
    return %arg0, %c0_i32, %arg1 : i32, i32, i32
  }
}

module attributes {stable_mosaic.version = 11 : i64} {
  func.func @_conv_bn_relu_kernel(%arg0: i32, %arg1: i32, %arg2: i32, %arg3: memref<1x1664x128xbf16, #tpu.memory_space<vmem>>, %arg4: memref<16x1664xbf16, #tpu.memory_space<vmem>>, %arg5: memref<16x1xf32, #tpu.memory_space<vmem>>, %arg6: memref<1x16x128xbf16, #tpu.memory_space<vmem>>, %arg7: memref<16x128xf32, #tpu.memory_space<vmem>>) attributes {dimension_semantics = [#tpu.dimension_semantics<parallel>, #tpu.dimension_semantics<parallel>, #tpu.dimension_semantics<arbitrary>], iteration_bounds = array<i64: 2, 1, 1>, scalar_prefetch = 0 : i64, scratch_operands = 1 : i64, tpu.core_type = #tpu.core_type<tc>, window_params = [{transform_indices = @transform_0, window_bounds = array<i64: 1, 1664, 128>}, {transform_indices = @transform_1, window_bounds = array<i64: 16, 1664>}, {pipeline_mode = #tpu.pipeline_mode<synchronous>, transform_indices = @transform_2, window_bounds = array<i64: 16, 1>}, {transform_indices = @transform_3, window_bounds = array<i64: 1, 16, 128>}]} {
    %c0 = arith.constant 0 : index
    %c0_0 = arith.constant 0 : index
    %0 = vector.load %arg4[%c0, %c0_0] : memref<16x1664xbf16, #tpu.memory_space<vmem>>, vector<16x1664xbf16>
    %c0_1 = arith.constant 0 : index
    %c0_2 = arith.constant 0 : index
    %c0_3 = arith.constant 0 : index
    %1 = vector.load %arg3[%c0_1, %c0_2, %c0_3] : memref<1x1664x128xbf16, #tpu.memory_space<vmem>>, vector<1x1664x128xbf16>
    %2 = vector.shape_cast %1 : vector<1x1664x128xbf16> to vector<1664x128xbf16>
    %cst = arith.constant dense<0.000000e+00> : vector<16x128xf32>
    %3 = tpu.matmul %0, %2, %cst {dimension_numbers = #tpu.dot_dimension_numbers<[1], [0], [0], [1], [0, 0, 1, 1], [], []>} : vector<16x1664xbf16>, vector<1664x128xbf16>, vector<16x128xf32> -> vector<16x128xf32>
    %c0_i32 = arith.constant 0 : i32
    %4 = arith.cmpi eq, %arg2, %c0_i32 : i32
    %5 = arith.extui %4 : i1 to i32
    %c0_i32_4 = arith.constant 0 : i32
    %6 = arith.cmpi ne, %5, %c0_i32_4 : i32
    scf.if %6 {
      %c0_9 = arith.constant 0 : index
      %c0_10 = arith.constant 0 : index
      %13 = vector.load %arg7[%c0_9, %c0_10] : memref<16x128xf32, #tpu.memory_space<vmem>>, vector<16x128xf32>
      tpu.vector_store %arg7[%c0_9, %c0_10], %3 {strides = array<i32>} : memref<16x128xf32, #tpu.memory_space<vmem>>, vector<16x128xf32>,
    } else {
    }
    %c0_i32_5 = arith.constant 0 : i32
    %7 = arith.cmpi sgt, %arg2, %c0_i32_5 : i32
    %8 = arith.extui %7 : i1 to i32
    %c0_i32_6 = arith.constant 0 : i32
    %9 = arith.cmpi ne, %8, %c0_i32_6 : i32
    scf.if %9 {
      %c0_9 = arith.constant 0 : index
      %c0_10 = arith.constant 0 : index
      %13 = vector.load %arg7[%c0_9, %c0_10] : memref<16x128xf32, #tpu.memory_space<vmem>>, vector<16x128xf32>
      %14 = arith.addf %13, %3 : vector<16x128xf32>
      %c0_11 = arith.constant 0 : index
      %c0_12 = arith.constant 0 : index
      %15 = vector.load %arg7[%c0_11, %c0_12] : memref<16x128xf32, #tpu.memory_space<vmem>>, vector<16x128xf32>
      tpu.vector_store %arg7[%c0_11, %c0_12], %14 {strides = array<i32>} : memref<16x128xf32, #tpu.memory_space<vmem>>, vector<16x128xf32>,
    } else {
    }
    %c0_i32_7 = arith.constant 0 : i32
    %10 = arith.cmpi eq, %arg2, %c0_i32_7 : i32
    %11 = arith.extui %10 : i1 to i32
    %c0_i32_8 = arith.constant 0 : i32
    %12 = arith.cmpi ne, %11, %c0_i32_8 : i32
    scf.if %12 {
      %c0_9 = arith.constant 0 : index
      %c0_10 = arith.constant 0 : index
      %13 = vector.load %arg7[%c0_9, %c0_10] : memref<16x128xf32, #tpu.memory_space<vmem>>, vector<16x128xf32>
      %c0_11 = arith.constant 0 : index
      %c0_12 = arith.constant 0 : index
      %14 = vector.load %arg5[%c0_11, %c0_12] : memref<16x1xf32, #tpu.memory_space<vmem>>, vector<16x1xf32>
      %15 = vector.broadcast %14 : vector<16x1xf32> to vector<16x128xf32>
      %16 = arith.addf %13, %15 : vector<16x128xf32>
      %cst_13 = arith.constant 0.000000e+00 : f32
      %17 = vector.broadcast %cst_13 : f32 to vector<16x128xf32>
      %18 = arith.maximumf %16, %17 : vector<16x128xf32>
      %19 = arith.truncf %18 : vector<16x128xf32> to vector<16x128xbf16>
      %c0_14 = arith.constant 0 : index
      %c0_15 = arith.constant 0 : index
      %c0_16 = arith.constant 0 : index
      %20 = vector.load %arg6[%c0_14, %c0_15, %c0_16] : memref<1x16x128xbf16, #tpu.memory_space<vmem>>, vector<1x16x128xbf16>
      %21 = vector.shape_cast %20 : vector<1x16x128xbf16> to vector<16x128xbf16>
      %22 = vector.shape_cast %19 : vector<16x128xbf16> to vector<1x16x128xbf16>
      tpu.vector_store %arg6[%c0_14, %c0_15, %c0_16], %22 {strides = array<i32>} : memref<1x16x128xbf16, #tpu.memory_space<vmem>>, vector<1x16x128xbf16>,
    } else {
    }
    return
  }
  func.func @transform_0(%arg0: i32, %arg1: i32, %arg2: i32) -> (i32, i32, i32) {
    %c0_i32 = arith.constant 0 : i32
    return %arg0, %arg2, %arg1 : i32, i32, i32
  }
  func.func @transform_1(%arg0: i32, %arg1: i32, %arg2: i32) -> (i32, i32) {
    %c0_i32 = arith.constant 0 : i32
    %c0_i32_0 = arith.constant 0 : i32
    return %c0_i32, %arg2 : i32, i32
  }
  func.func @transform_2(%arg0: i32, %arg1: i32, %arg2: i32) -> (i32, i32) {
    %c0_i32 = arith.constant 0 : i32
    %c0_i32_0 = arith.constant 0 : i32
    %c0_i32_1 = arith.constant 0 : i32
    return %c0_i32, %c0_i32_0 : i32, i32
  }
  func.func @transform_3(%arg0: i32, %arg1: i32, %arg2: i32) -> (i32, i32, i32) {
    %c0_i32 = arith.constant 0 : i32
    %c0_i32_0 = arith.constant 0 : i32
    return %arg0, %c0_i32, %arg1 : i32, i32, i32
  }
}

module attributes {stable_mosaic.version = 11 : i64} {
  func.func @_final_kernel(%arg0: i32, %arg1: i32, %arg2: memref<1x32x256xbf16, #tpu.memory_space<vmem>>, %arg3: memref<1x16x128xbf16, #tpu.memory_space<vmem>>, %arg4: memref<1x16x1xf32, #tpu.memory_space<vmem>>, %arg5: memref<16x32xbf16, #tpu.memory_space<vmem>>, %arg6: memref<16x1xf32, #tpu.memory_space<vmem>>, %arg7: memref<128x256xbf16, #tpu.memory_space<vmem>>, %arg8: memref<1x16x256xf32, #tpu.memory_space<vmem>>) attributes {dimension_semantics = [#tpu.dimension_semantics<parallel>, #tpu.dimension_semantics<parallel>], iteration_bounds = array<i64: 2, 1>, scalar_prefetch = 0 : i64, scratch_operands = 0 : i64, tpu.core_type = #tpu.core_type<tc>, window_params = [{transform_indices = @transform_0, window_bounds = array<i64: 1, 32, 256>}, {transform_indices = @transform_1, window_bounds = array<i64: 1, 16, 128>}, {transform_indices = @transform_2, window_bounds = array<i64: 1, 16, 1>}, {pipeline_mode = #tpu.pipeline_mode<synchronous>, transform_indices = @transform_3, window_bounds = array<i64: 16, 32>}, {pipeline_mode = #tpu.pipeline_mode<synchronous>, transform_indices = @transform_4, window_bounds = array<i64: 16, 1>}, {transform_indices = @transform_5, window_bounds = array<i64: 128, 256>}, {transform_indices = @transform_6, window_bounds = array<i64: 1, 16, 256>}]} {
    %c0 = arith.constant 0 : index
    %c0_0 = arith.constant 0 : index
    %c0_1 = arith.constant 0 : index
    %0 = vector.load %arg2[%c0, %c0_0, %c0_1] : memref<1x32x256xbf16, #tpu.memory_space<vmem>>, vector<1x32x256xbf16>
    %1 = vector.shape_cast %0 : vector<1x32x256xbf16> to vector<32x256xbf16>
    %c0_2 = arith.constant 0 : index
    %c0_3 = arith.constant 0 : index
    %2 = vector.load %arg5[%c0_2, %c0_3] : memref<16x32xbf16, #tpu.memory_space<vmem>>, vector<16x32xbf16>
    %cst = arith.constant dense<0.000000e+00> : vector<16x256xf32>
    %3 = tpu.matmul %2, %1, %cst {dimension_numbers = #tpu.dot_dimension_numbers<[1], [0], [0], [1], [0, 0, 1, 1], [], []>} : vector<16x32xbf16>, vector<32x256xbf16>, vector<16x256xf32> -> vector<16x256xf32>
    %c0_4 = arith.constant 0 : index
    %c0_5 = arith.constant 0 : index
    %4 = vector.load %arg6[%c0_4, %c0_5] : memref<16x1xf32, #tpu.memory_space<vmem>>, vector<16x1xf32>
    %5 = vector.broadcast %4 : vector<16x1xf32> to vector<16x256xf32>
    %6 = arith.addf %3, %5 : vector<16x256xf32>
    %cst_6 = arith.constant 0.000000e+00 : f32
    %7 = vector.broadcast %cst_6 : f32 to vector<16x256xf32>
    %8 = arith.maximumf %6, %7 : vector<16x256xf32>
    %c0_7 = arith.constant 0 : index
    %c0_8 = arith.constant 0 : index
    %c0_9 = arith.constant 0 : index
    %9 = vector.load %arg3[%c0_7, %c0_8, %c0_9] : memref<1x16x128xbf16, #tpu.memory_space<vmem>>, vector<1x16x128xbf16>
    %10 = vector.shape_cast %9 : vector<1x16x128xbf16> to vector<16x128xbf16>
    %c0_10 = arith.constant 0 : index
    %c0_11 = arith.constant 0 : index
    %11 = vector.load %arg7[%c0_10, %c0_11] : memref<128x256xbf16, #tpu.memory_space<vmem>>, vector<128x256xbf16>
    %cst_12 = arith.constant dense<0.000000e+00> : vector<16x256xf32>
    %12 = tpu.matmul %10, %11, %cst_12 {dimension_numbers = #tpu.dot_dimension_numbers<[1], [0], [0], [1], [0, 0, 1, 1], [], []>} : vector<16x128xbf16>, vector<128x256xbf16>, vector<16x256xf32> -> vector<16x256xf32>
    %13 = arith.mulf %8, %12 : vector<16x256xf32>
    %c0_13 = arith.constant 0 : index
    %c0_14 = arith.constant 0 : index
    %c0_15 = arith.constant 0 : index
    %14 = vector.load %arg4[%c0_13, %c0_14, %c0_15] : memref<1x16x1xf32, #tpu.memory_space<vmem>>, vector<1x16x1xf32>
    %15 = vector.shape_cast %14 : vector<1x16x1xf32> to vector<16x1xf32>
    %16 = vector.broadcast %15 : vector<16x1xf32> to vector<16x256xf32>
    %17 = arith.addf %13, %16 : vector<16x256xf32>
    %c0_16 = arith.constant 0 : index
    %c0_17 = arith.constant 0 : index
    %c0_18 = arith.constant 0 : index
    %18 = vector.load %arg8[%c0_16, %c0_17, %c0_18] : memref<1x16x256xf32, #tpu.memory_space<vmem>>, vector<1x16x256xf32>
    %19 = vector.shape_cast %18 : vector<1x16x256xf32> to vector<16x256xf32>
    %20 = vector.shape_cast %17 : vector<16x256xf32> to vector<1x16x256xf32>
    tpu.vector_store %arg8[%c0_16, %c0_17, %c0_18], %20 {strides = array<i32>} : memref<1x16x256xf32, #tpu.memory_space<vmem>>, vector<1x16x256xf32>,
    return
  }
  func.func @transform_0(%arg0: i32, %arg1: i32) -> (i32, i32, i32) {
    %c0_i32 = arith.constant 0 : i32
    %c0_i32_0 = arith.constant 0 : i32
    return %arg0, %c0_i32, %arg1 : i32, i32, i32
  }
  func.func @transform_1(%arg0: i32, %arg1: i32) -> (i32, i32, i32) {
    %c0_i32 = arith.constant 0 : i32
    %c0_i32_0 = arith.constant 0 : i32
    %c0_i32_1 = arith.constant 0 : i32
    return %arg0, %c0_i32, %c0_i32_0 : i32, i32, i32
  }
  func.func @transform_2(%arg0: i32, %arg1: i32) -> (i32, i32, i32) {
    %c0_i32 = arith.constant 0 : i32
    %c0_i32_0 = arith.constant 0 : i32
    %c0_i32_1 = arith.constant 0 : i32
    return %arg0, %c0_i32, %c0_i32_0 : i32, i32, i32
  }
  func.func @transform_3(%arg0: i32, %arg1: i32) -> (i32, i32) {
    %c0_i32 = arith.constant 0 : i32
    %c0_i32_0 = arith.constant 0 : i32
    %c0_i32_1 = arith.constant 0 : i32
    return %c0_i32, %c0_i32_0 : i32, i32
  }
  func.func @transform_4(%arg0: i32, %arg1: i32) -> (i32, i32) {
    %c0_i32 = arith.constant 0 : i32
    %c0_i32_0 = arith.constant 0 : i32
    %c0_i32_1 = arith.constant 0 : i32
    return %c0_i32, %c0_i32_0 : i32, i32
  }
  func.func @transform_5(%arg0: i32, %arg1: i32) -> (i32, i32) {
    %c0_i32 = arith.constant 0 : i32
    %c0_i32_0 = arith.constant 0 : i32
    return %c0_i32, %arg1 : i32, i32
  }
  func.func @transform_6(%arg0: i32, %arg1: i32) -> (i32, i32, i32) {
    %c0_i32 = arith.constant 0 : i32
    %c0_i32_0 = arith.constant 0 : i32
    return %arg0, %c0_i32, %arg1 : i32, i32, i32
  }
}

</mosaic_0001>

<llo_original>
// kernel: fpa_v2_forward.9
$region0: #{fpa_v2_forward.9}
  #allocation0 [shape = 'u32[]', space=smem, size = 0x4, offset = 0x4, fixed_abs, tag = 'smem constant byte address 0x4 - core index']
  #allocation1 [shape = 'u32[144,128]{1,0:T(1,128)}', space=vmem, size = 0x12000, scoped, tag = 'internal scratch']
  #allocation2 [shape = 'f32[32,128]{1,0:T(8,128)}', space=vmem, size = 0x4000, scoped, tag = 'scratch operand']
  %s0 = inlined_call_operand.vmem [shape: bf16[2,1664,128], index: 0, kind: input, shape index: {}]
  %s1 = inlined_call_operand.vmem [shape: bf16[32,1664], index: 1, kind: input, shape index: {}]
  %s2 = inlined_call_operand.vmem [shape: f32[32,1], index: 2, kind: input, shape index: {}]
  %s3 = inlined_call_operand.vmem [shape: bf16[2,32,128], index: 3, kind: output, shape index: {}]
  %s4 = sld [smem:[#allocation0]]
  $region57: #{fpa_v2_forward.9} parent=0
    _
  %s6 = ssub.s32 1, %s4
  %s7 = scalar_select 0, %s6, %s4
  loop: start=0, step=1, limit=4
  $region2: #{fpa_v2_forward.9} parent=0 // loop_pre_header
    _
  $region3: #{fpa_v2_forward.9} parent=0 // loop_header
    %s9 = sphi 0, %s13
    %p10 = scmp.ge.s32.totalorder %s9, 4
    %s16 = sphi 0, %s35
    %s17 = sphi 0, %s31
    %s18 = sphi 0, %s27
    %s19 = sphi 0, %s16
    %s20 = sphi 0, %s17
    %s21 = sphi 0, %s18
    %s22 = sphi 0, %s19
    %s23 = sphi 0, %s20
    %s24 = sphi 0, %s21
    %s42 = sphi 0, %s44
    %s45 = sphi 0, %s42
    %s46 = sphi 0, %s45
    %s62 = sphi 0, %s46
    %s68 = sphi 0, %s70
    %s71 = sphi 0, %s68
    %s72 = sphi 0, %s71
    %s88 = sphi 0, %s72
    %s92 = sphi 0, %s92
    %s94 = sphi 0, %s92
    %s95 = sphi 0, %s94
    %s109 = sphi 0, %s95
    %s117 = sphi 0, %s119
    %s120 = sphi 0, %s117
    %s121 = sphi 0, %s120
    %s137 = sphi 0, %s121
  $region4: #{fpa_v2_forward.9} parent=0 // loop_header_branch
    %12 = sbr.rel (%p10) target = $region8
  $region5: #{fpa_v2_forward.9} parent=0 // loop_body
    %s14 = ssub.s32 %s9, 1
    %s15 = ssub.s32 %s9, 2
    %s25 = sadd.s32 1, %s18
    %p26 = scmp.ge.s32.totalorder %s25, 1
    %s27 = scalar_select %p26, 0, %s25
    %s28 = sadd.s32 1, %s17
    %s29 = scalar_select %p26, %s28, %s17
    %p30 = scmp.ge.s32.totalorder %s29, 1
    %s31 = scalar_select %p30, 0, %s29
    %s32 = sadd.s32 1, %s16
    %s33 = scalar_select %p30, %s32, %s16
    %p34 = scmp.ge.s32.totalorder %s33, 2
    %s35 = scalar_select %p34, 0, %s33
    %s36 = ssub.s32 %s16, %s35
    %s37 = ssub.s32 %s18, %s27
    %s38 = sor.u32 %s36, %s37
    %s39 = ssub.s32 %s17, %s31
    %s40 = sor.u32 %s38, %s39
    %p41 = scmp.eq.s32.totalorder %s40, 0
    %s43 = sadd.s32 %s42, 1
    %s44 = scalar_select %p41, %s42, %s43
    %p47 = pneg %p41
    %p48 = scmp.eq.s32.totalorder %s9, 1
    %p49 = por %p47, %p48
    %p50 = scmp.ne.s32.totalorder %s42, %s45
    %p51 = scmp.eq.s32.totalorder %s9, 0
    %p52 = por %p50, %p51
    %p53 = scmp.ne.s32.totalorder %s42, %s45
    %p54 = scmp.eq.s32.totalorder %s14, 1
    %p55 = por %p53, %p54
    %p56 = scmp.ne.s32.totalorder %s45, %s46
    %p57 = scmp.eq.s32.totalorder %s14, 0
    %p58 = por %p56, %p57
    %p59 = scmp.ne.s32.totalorder %s45, %s46
    %p60 = scmp.eq.s32.totalorder %s15, 1
    %p61 = por %p59, %p60
    %p63 = scmp.ne.s32.totalorder %s46, %s62
    %p64 = scmp.eq.s32.totalorder %s15, 0
    %p65 = por %p63, %p64
    %s66 = ssub.s32 %s18, %s27
    %p67 = scmp.eq.s32.totalorder %s66, 0
    %s69 = sadd.s32 %s68, 1
    %s70 = scalar_select %p67, %s68, %s69
    %p73 = pneg %p67
    %p74 = scmp.eq.s32.totalorder %s9, 1
    %p75 = por %p73, %p74
    %p76 = scmp.ne.s32.totalorder %s68, %s71
    %p77 = scmp.eq.s32.totalorder %s9, 0
    %p78 = por %p76, %p77
    %p79 = scmp.ne.s32.totalorder %s68, %s71
    %p80 = scmp.eq.s32.totalorder %s14, 1
    %p81 = por %p79, %p80
    %p82 = scmp.ne.s32.totalorder %s71, %s72
    %p83 = scmp.eq.s32.totalorder %s14, 0
    %p84 = por %p82, %p83
    %p85 = scmp.ne.s32.totalorder %s71, %s72
    %p86 = scmp.eq.s32.totalorder %s15, 1
    %p87 = por %p85, %p86
    %p89 = scmp.ne.s32.totalorder %s72, %s88
    %p90 = scmp.eq.s32.totalorder %s15, 0
    %p91 = por %p89, %p90
    %s93 = sadd.s32 %s92, 1
    %p96 = scmp.eq.s32.totalorder %s9, 1
    %p97 = scmp.ne.s32.totalorder %s92, %s94
    %p98 = scmp.eq.s32.totalorder %s9, 0
    %p99 = por %p97, %p98
    %p100 = scmp.ne.s32.totalorder %s92, %s94
    %p101 = scmp.eq.s32.totalorder %s14, 1
    %p102 = por %p100, %p101
    %p103 = scmp.ne.s32.totalorder %s94, %s95
    %p104 = scmp.eq.s32.totalorder %s14, 0
    %p105 = por %p103, %p104
    %p106 = scmp.ne.s32.totalorder %s94, %s95
    %p107 = scmp.eq.s32.totalorder %s15, 1
    %p108 = por %p106, %p107
    %p110 = scmp.ne.s32.totalorder %s95, %s109
    %p111 = scmp.eq.s32.totalorder %s15, 0
    %p112 = por %p110, %p111
    %s113 = ssub.s32 %s16, %s35
    %s114 = ssub.s32 %s17, %s31
    %s115 = sor.u32 %s113, %s114
    %p116 = scmp.eq.s32.totalorder %s115, 0
    %s118 = sadd.s32 %s117, 1
    %s119 = scalar_select %p116, %s117, %s118
    %p122 = pneg %p116
    %p123 = scmp.eq.s32.totalorder %s9, 1
    %p124 = por %p122, %p123
    %p125 = scmp.ne.s32.totalorder %s117, %s120
    %p126 = scmp.eq.s32.totalorder %s9, 0
    %p127 = por %p125, %p126
    %p128 = scmp.ne.s32.totalorder %s117, %s120
    %p129 = scmp.eq.s32.totalorder %s14, 1
    %p130 = por %p128, %p129
    %p131 = scmp.ne.s32.totalorder %s120, %s121
    %p132 = scmp.eq.s32.totalorder %s14, 0
    %p133 = por %p131, %p132
    %p134 = scmp.ne.s32.totalorder %s120, %s121
    %p135 = scmp.eq.s32.totalorder %s15, 1
    %p136 = por %p134, %p135
    %p138 = scmp.ne.s32.totalorder %s121, %s137
    %p139 = scmp.eq.s32.totalorder %s15, 0
    %p140 = por %p138, %p139
    %p141 = scmp.le.s32.totalorder 1, %s9
    %p142 = scmp.lt.s32.totalorder %s9, 3
    %p143 = pnand %p141, %p142
    %p144 = pneg %p143
    // Predicated region
    $region9: #{fpa_v2_forward.9} parent=5 // pred_check
      _
    $region10: #{fpa_v2_forward.9} parent=5 // pred_check_branch
      %146 = sbr.rel (%p143) target = $region12
    $region11: #{fpa_v2_forward.9} parent=5 // pred_region
      %s147 = ssub.s32 %s9, 1
      // Predicated region
      $region13: #{fpa_v2_forward.9} parent=11 // pred_check
        %p148 = pneg %p84
      $region14: #{fpa_v2_forward.9} parent=11 // pred_check_branch
        %150 = sbr.rel (%p148) target = $region16
      $region15: #{fpa_v2_forward.9} parent=11 // pred_region
        %s151 = smul.u32 13, %s21
        %p152 = scmp.lt.s32.totalorder %s151, 12
        %s153 = scalar_select %p152, %s151, 12
        %s154 = smul.addr %s153, 4
        %s155 = scalar_lea.vmem %s1, %s154
        %s156 = smul.u32 13, %s21
      $region16: #{fpa_v2_forward.9} parent=11 // pred_fallthru
        _
      // Predicated region
      $region17: #{fpa_v2_forward.9} parent=11 // pred_check
        %p157 = pneg %p105
      $region18: #{fpa_v2_forward.9} parent=11 // pred_check_branch
        %159 = sbr.rel (%p157) target = $region20
      $region19: #{fpa_v2_forward.9} parent=11 // pred_region
        _
      $region20: #{fpa_v2_forward.9} parent=11 // pred_fallthru
        _
    $region12: #{fpa_v2_forward.9} parent=5 // pred_fallthru
      _
    %p160 = scmp.lt.s32.totalorder %s9, 2
    // Predicated region
    $region21: #{fpa_v2_forward.9} parent=5 // pred_check
      %p161 = pneg %p160
    $region22: #{fpa_v2_forward.9} parent=5 // pred_check_branch
      %163 = sbr.rel (%p161) target = $region24
    $region23: #{fpa_v2_forward.9} parent=5 // pred_region
      // Predicated region
      $region25: #{fpa_v2_forward.9} parent=23 // pred_check
        %p164 = pneg %p52
      $region26: #{fpa_v2_forward.9} parent=23 // pred_check_branch
        %166 = sbr.rel (%p164) target = $region28
      $region27: #{fpa_v2_forward.9} parent=23 // pred_region
        %s167 = smul.u32 208, %s18
        %p168 = scmp.lt.s32.totalorder %s16, 1
        %s169 = scalar_select %p168, %s16, 1
        %p170 = scmp.lt.s32.totalorder %s167, 207
        %s171 = scalar_select %p170, %s167, 207
        %p172 = scmp.lt.s32.totalorder %s17, 0
        %s173 = scalar_select %p172, %s17, 0
        %s174 = sadd.s32 %s173, %s171
        %s175 = smul.addr %s169, 208
        %s176 = sadd.s32 %s174, %s175
        %s177 = smul.addr %s176, 4
        %s178 = scalar_lea.vmem %s0, %s177
        %s179 = smul.u32 208, %s18
      $region28: #{fpa_v2_forward.9} parent=23 // pred_fallthru
        _
    $region24: #{fpa_v2_forward.9} parent=5 // pred_fallthru
      _
    %p180 = scmp.le.s32.totalorder 1, %s9
    %p181 = scmp.lt.s32.totalorder %s9, 3
    %p182 = pnand %p180, %p181
    %p183 = pneg %p182
    // Predicated region
    $region29: #{fpa_v2_forward.9} parent=5 // pred_check
      _
    $region30: #{fpa_v2_forward.9} parent=5 // pred_check_branch
      %185 = sbr.rel (%p182) target = $region32
    $region31: #{fpa_v2_forward.9} parent=5 // pred_region
      %s186 = ssub.s32 %s9, 1
      %s187 = smul.u32 208, %s21
      %p188 = scmp.lt.s32.totalorder %s19, 1
      %s189 = scalar_select %p188, %s19, 1
      %p190 = scmp.lt.s32.totalorder %s187, 207
      %s191 = scalar_select %p190, %s187, 207
      %p192 = scmp.lt.s32.totalorder %s20, 0
      %s193 = scalar_select %p192, %s20, 0
      %s194 = sadd.s32 %s193, %s191
      %s195 = smul.addr %s189, 208
      %s196 = sadd.s32 %s194, %s195
      %s197 = smul.addr %s196, 4
      %s198 = scalar_lea.vmem %s0, %s197
      %p199 = pneg %p58
      %p200 = pneg %p55
      %s201 = smul.u32 13, %s21
      %p202 = scmp.lt.s32.totalorder %s201, 12
      %s203 = scalar_select %p202, %s201, 12
      %s204 = smul.addr %s203, 4
      %s205 = scalar_lea.vmem %s1, %s204
      %p206 = pneg %p84
      %p207 = pneg %p81
      %p208 = pneg %p105
      %p209 = pneg %p102
      %p210 = pneg %p133
      %p211 = pneg %p130
      %p212 = scmp.lt.s32.totalorder %s19, 1
      %s213 = scalar_select %p212, %s19, 1
      %p214 = scmp.lt.s32.totalorder %s20, 0
      %s215 = scalar_select %p214, %s20, 0
      %s216 = smul.addr %s213, 4
      %s217 = sadd.s32 %s215, %s216
      %s218 = smul.addr %s217, 4
      %s219 = scalar_lea.vmem %s3, %s218
      %s220 = smul.u32 208, %s21
      %p221 = scmp.lt.s32.totalorder %s19, 1
      %s222 = scalar_select %p221, %s19, 1
      %p223 = scmp.lt.s32.totalorder %s220, 207
      %s224 = scalar_select %p223, %s220, 207
      %p225 = scmp.lt.s32.totalorder %s20, 0
      %s226 = scalar_select %p225, %s20, 0
      %s227 = sadd.s32 %s226, %s224
      %s228 = smul.addr %s222, 208
      %s229 = sadd.s32 %s227, %s228
      %s230 = smul.addr %s229, 4
      %s231 = scalar_lea.vmem %s0, %s230
      %s232 = smul.u32 208, %s21
      %s233 = smul.u32 13, %s21
      %p234 = scmp.lt.s32.totalorder %s233, 12
      %s235 = scalar_select %p234, %s233, 12
      %s236 = smul.addr %s235, 4
      %s237 = scalar_lea.vmem %s1, %s236
      %s238 = smul.u32 13, %s21
      %p239 = scmp.lt.s32.totalorder %s19, 1
      %s240 = scalar_select %p239, %s19, 1
      %p241 = scmp.lt.s32.totalorder %s20, 0
      %s242 = scalar_select %p241, %s20, 0
      %s243 = smul.addr %s240, 4
      %s244 = sadd.s32 %s242, %s243
      %s245 = smul.addr %s244, 4
      %s246 = scalar_lea.vmem %s3, %s245
      %v248 = vld [vmem:[%s237] sm:$0xff]
      %v249 = vld [vmem:[%s237 + $0x8] sm:$0xff]
      %v250 = vld [vmem:[%s237 + $0x10] sm:$0xff]
      %v251 = vld [vmem:[%s237 + $0x18] sm:$0xff]
      %v252 = vld [vmem:[%s237 + $0x20] sm:$0xff]
      %v253 = vld [vmem:[%s237 + $0x28] sm:$0xff]
      %v254 = vld [vmem:[%s237 + $0x30] sm:$0xf]
      %v255 = vld [vmem:[%s237 + $0x34] sm:$0xff]
      %v256 = vld [vmem:[%s237 + $0x3c] sm:$0xff]
      %v257 = vld [vmem:[%s237 + $0x44] sm:$0xff]
      %v258 = vld [vmem:[%s237 + $0x4c] sm:$0xff]
      %v259 = vld [vmem:[%s237 + $0x54] sm:$0xff]
      %v260 = vld [vmem:[%s237 + $0x5c] sm:$0xff]
      %v261 = vld [vmem:[%s237 + $0x64] sm:$0xf]
      %v262 = vld [vmem:[%s237 + $0x68] sm:$0xff]
      %v263 = vld [vmem:[%s237 + $0x70] sm:$0xff]
      %v264 = vld [vmem:[%s237 + $0x78] sm:$0xff]
      %v265 = vld [vmem:[%s237 + $0x80] sm:$0xff]
      %v266 = vld [vmem:[%s237 + $0x88] sm:$0xff]
      %v267 = vld [vmem:[%s237 + $0x90] sm:$0xff]
      %v268 = vld [vmem:[%s237 + $0x98] sm:$0xf]
      %v269 = vld [vmem:[%s237 + $0x9c] sm:$0xff]
      %v270 = vld [vmem:[%s237 + $0xa4] sm:$0xff]
      %v271 = vld [vmem:[%s237 + $0xac] sm:$0xff]
      %v272 = vld [vmem:[%s237 + $0xb4] sm:$0xff]
      %v273 = vld [vmem:[%s237 + $0xbc] sm:$0xff]
      %v274 = vld [vmem:[%s237 + $0xc4] sm:$0xff]
      %v275 = vld [vmem:[%s237 + $0xcc] sm:$0xf]
      %v276 = vld [vmem:[%s231] sm:$0xf]
      %v277 = vld [vmem:[%s231 + $0x4] sm:$0xf]
      %v278 = vld [vmem:[%s231 + $0x8] sm:$0xf]
      %v279 = vld [vmem:[%s231 + $0xc] sm:$0xf]
      %v280 = vld [vmem:[%s231 + $0x10] sm:$0xf]
      %v281 = vld [vmem:[%s231 + $0x14] sm:$0xf]
      %v282 = vld [vmem:[%s231 + $0x18] sm:$0xf]
      %v283 = vld [vmem:[%s231 + $0x1c] sm:$0xf]
      %v284 = vld [vmem:[%s231 + $0x20] sm:$0xf]
      %v285 = vld [vmem:[%s231 + $0x24] sm:$0xf]
      %v286 = vld [vmem:[%s231 + $0x28] sm:$0xf]
      %v287 = vld [vmem:[%s231 + $0x2c] sm:$0xf]
      %v288 = vld [vmem:[%s231 + $0x30] sm:$0xf]
      %v289 = vld [vmem:[%s231 + $0x34] sm:$0xf]
      %v290 = vld [vmem:[%s231 + $0x38] sm:$0xf]
      %v291 = vld [vmem:[%s231 + $0x3c] sm:$0xf]
      %v292 = vld [vmem:[%s231 + $0x40] sm:$0xf]
      %v293 = vld [vmem:[%s231 + $0x44] sm:$0xf]
      %v294 = vld [vmem:[%s231 + $0x48] sm:$0xf]
      %v295 = vld [vmem:[%s231 + $0x4c] sm:$0xf]
      %v296 = vld [vmem:[%s231 + $0x50] sm:$0xf]
      %v297 = vld [vmem:[%s231 + $0x54] sm:$0xf]
      %v298 = vld [vmem:[%s231 + $0x58] sm:$0xf]
      %v299 = vld [vmem:[%s231 + $0x5c] sm:$0xf]
      %v300 = vld [vmem:[%s231 + $0x60] sm:$0xf]
      %v301 = vld [vmem:[%s231 + $0x64] sm:$0xf]
      %v302 = vld [vmem:[%s231 + $0x68] sm:$0xf]
      %v303 = vld [vmem:[%s231 + $0x6c] sm:$0xf]
      %v304 = vld [vmem:[%s231 + $0x70] sm:$0xf]
      %v305 = vld [vmem:[%s231 + $0x74] sm:$0xf]
      %v306 = vld [vmem:[%s231 + $0x78] sm:$0xf]
      %v307 = vld [vmem:[%s231 + $0x7c] sm:$0xf]
      %v308 = vld [vmem:[%s231 + $0x80] sm:$0xf]
      %v309 = vld [vmem:[%s231 + $0x84] sm:$0xf]
      %v310 = vld [vmem:[%s231 + $0x88] sm:$0xf]
      %v311 = vld [vmem:[%s231 + $0x8c] sm:$0xf]
      %v312 = vld [vmem:[%s231 + $0x90] sm:$0xf]
      %v313 = vld [vmem:[%s231 + $0x94] sm:$0xf]
      %v314 = vld [vmem:[%s231 + $0x98] sm:$0xf]
      %v315 = vld [vmem:[%s231 + $0x9c] sm:$0xf]
      %v316 = vld [vmem:[%s231 + $0xa0] sm:$0xf]
      %v317 = vld [vmem:[%s231 + $0xa4] sm:$0xf]
      %v318 = vld [vmem:[%s231 + $0xa8] sm:$0xf]
      %v319 = vld [vmem:[%s231 + $0xac] sm:$0xf]
      %v320 = vld [vmem:[%s231 + $0xb0] sm:$0xf]
      %v321 = vld [vmem:[%s231 + $0xb4] sm:$0xf]
      %v322 = vld [vmem:[%s231 + $0xb8] sm:$0xf]
      %v323 = vld [vmem:[%s231 + $0xbc] sm:$0xf]
      %v324 = vld [vmem:[%s231 + $0xc0] sm:$0xf]
      %v325 = vld [vmem:[%s231 + $0xc4] sm:$0xf]
      %v326 = vld [vmem:[%s231 + $0xc8] sm:$0xf]
      %v327 = vld [vmem:[%s231 + $0xcc] sm:$0xf]
      %v328 = vld [vmem:[%s231 + $0xd0] sm:$0xf]
      %v329 = vld [vmem:[%s231 + $0xd4] sm:$0xf]
      %v330 = vld [vmem:[%s231 + $0xd8] sm:$0xf]
      %v331 = vld [vmem:[%s231 + $0xdc] sm:$0xf]
      %v332 = vld [vmem:[%s231 + $0xe0] sm:$0xf]
      %v333 = vld [vmem:[%s231 + $0xe4] sm:$0xf]
      %v334 = vld [vmem:[%s231 + $0xe8] sm:$0xf]
      %v335 = vld [vmem:[%s231 + $0xec] sm:$0xf]
      %v336 = vld [vmem:[%s231 + $0xf0] sm:$0xf]
      %v337 = vld [vmem:[%s231 + $0xf4] sm:$0xf]
      %v338 = vld [vmem:[%s231 + $0xf8] sm:$0xf]
      %v339 = vld [vmem:[%s231 + $0xfc] sm:$0xf]
      %v340 = vld [vmem:[%s231 + $0x100] sm:$0xf]
      %v341 = vld [vmem:[%s231 + $0x104] sm:$0xf]
      %v342 = vld [vmem:[%s231 + $0x108] sm:$0xf]
      %v343 = vld [vmem:[%s231 + $0x10c] sm:$0xf]
      %v344 = vld [vmem:[%s231 + $0x110] sm:$0xf]
      %v345 = vld [vmem:[%s231 + $0x114] sm:$0xf]
      %v346 = vld [vmem:[%s231 + $0x118] sm:$0xf]
      %v347 = vld [vmem:[%s231 + $0x11c] sm:$0xf]
      %v348 = vld [vmem:[%s231 + $0x120] sm:$0xf]
      %v349 = vld [vmem:[%s231 + $0x124] sm:$0xf]
      %v350 = vld [vmem:[%s231 + $0x128] sm:$0xf]
      %v351 = vld [vmem:[%s231 + $0x12c] sm:$0xf]
      %v352 = vld [vmem:[%s231 + $0x130] sm:$0xf]
      %v353 = vld [vmem:[%s231 + $0x134] sm:$0xf]
      %v354 = vld [vmem:[%s231 + $0x138] sm:$0xf]
      %v355 = vld [vmem:[%s231 + $0x13c] sm:$0xf]
      %v356 = vld [vmem:[%s231 + $0x140] sm:$0xf]
      %v357 = vld [vmem:[%s231 + $0x144] sm:$0xf]
      %v358 = vld [vmem:[%s231 + $0x148] sm:$0xf]
      %v359 = vld [vmem:[%s231 + $0x14c] sm:$0xf]
      %v360 = vld [vmem:[%s231 + $0x150] sm:$0xf]
      %v361 = vld [vmem:[%s231 + $0x154] sm:$0xf]
      %v362 = vld [vmem:[%s231 + $0x158] sm:$0xf]
      %v363 = vld [vmem:[%s231 + $0x15c] sm:$0xf]
      %v364 = vld [vmem:[%s231 + $0x160] sm:$0xf]
      %v365 = vld [vmem:[%s231 + $0x164] sm:$0xf]
      %v366 = vld [vmem:[%s231 + $0x168] sm:$0xf]
      %v367 = vld [vmem:[%s231 + $0x16c] sm:$0xf]
      %v368 = vld [vmem:[%s231 + $0x170] sm:$0xf]
      %v369 = vld [vmem:[%s231 + $0x174] sm:$0xf]
      %v370 = vld [vmem:[%s231 + $0x178] sm:$0xf]
      %v371 = vld [vmem:[%s231 + $0x17c] sm:$0xf]
      %v372 = vld [vmem:[%s231 + $0x180] sm:$0xf]
      %v373 = vld [vmem:[%s231 + $0x184] sm:$0xf]
      %v374 = vld [vmem:[%s231 + $0x188] sm:$0xf]
      %v375 = vld [vmem:[%s231 + $0x18c] sm:$0xf]
      %v376 = vld [vmem:[%s231 + $0x190] sm:$0xf]
      %v377 = vld [vmem:[%s231 + $0x194] sm:$0xf]
      %v378 = vld [vmem:[%s231 + $0x198] sm:$0xf]
      %v379 = vld [vmem:[%s231 + $0x19c] sm:$0xf]
      %v380 = vld [vmem:[%s231 + $0x1a0] sm:$0xf]
      %v381 = vld [vmem:[%s231 + $0x1a4] sm:$0xf]
      %v382 = vld [vmem:[%s231 + $0x1a8] sm:$0xf]
      %v383 = vld [vmem:[%s231 + $0x1ac] sm:$0xf]
      %v384 = vld [vmem:[%s231 + $0x1b0] sm:$0xf]
      %v385 = vld [vmem:[%s231 + $0x1b4] sm:$0xf]
      %v386 = vld [vmem:[%s231 + $0x1b8] sm:$0xf]
      %v387 = vld [vmem:[%s231 + $0x1bc] sm:$0xf]
      %v388 = vld [vmem:[%s231 + $0x1c0] sm:$0xf]
      %v389 = vld [vmem:[%s231 + $0x1c4] sm:$0xf]
      %v390 = vld [vmem:[%s231 + $0x1c8] sm:$0xf]
      %v391 = vld [vmem:[%s231 + $0x1cc] sm:$0xf]
      %v392 = vld [vmem:[%s231 + $0x1d0] sm:$0xf]
      %v393 = vld [vmem:[%s231 + $0x1d4] sm:$0xf]
      %v394 = vld [vmem:[%s231 + $0x1d8] sm:$0xf]
      %v395 = vld [vmem:[%s231 + $0x1dc] sm:$0xf]
      %v396 = vld [vmem:[%s231 + $0x1e0] sm:$0xf]
      %v397 = vld [vmem:[%s231 + $0x1e4] sm:$0xf]
      %v398 = vld [vmem:[%s231 + $0x1e8] sm:$0xf]
      %v399 = vld [vmem:[%s231 + $0x1ec] sm:$0xf]
      %v400 = vld [vmem:[%s231 + $0x1f0] sm:$0xf]
      %v401 = vld [vmem:[%s231 + $0x1f4] sm:$0xf]
      %v402 = vld [vmem:[%s231 + $0x1f8] sm:$0xf]
      %v403 = vld [vmem:[%s231 + $0x1fc] sm:$0xf]
      %v404 = vld [vmem:[%s231 + $0x200] sm:$0xf]
      %v405 = vld [vmem:[%s231 + $0x204] sm:$0xf]
      %v406 = vld [vmem:[%s231 + $0x208] sm:$0xf]
      %v407 = vld [vmem:[%s231 + $0x20c] sm:$0xf]
      %v408 = vld [vmem:[%s231 + $0x210] sm:$0xf]
      %v409 = vld [vmem:[%s231 + $0x214] sm:$0xf]
      %v410 = vld [vmem:[%s231 + $0x218] sm:$0xf]
      %v411 = vld [vmem:[%s231 + $0x21c] sm:$0xf]
      %v412 = vld [vmem:[%s231 + $0x220] sm:$0xf]
      %v413 = vld [vmem:[%s231 + $0x224] sm:$0xf]
      %v414 = vld [vmem:[%s231 + $0x228] sm:$0xf]
      %v415 = vld [vmem:[%s231 + $0x22c] sm:$0xf]
      %v416 = vld [vmem:[%s231 + $0x230] sm:$0xf]
      %v417 = vld [vmem:[%s231 + $0x234] sm:$0xf]
      %v418 = vld [vmem:[%s231 + $0x238] sm:$0xf]
      %v419 = vld [vmem:[%s231 + $0x23c] sm:$0xf]
      %v420 = vld [vmem:[%s231 + $0x240] sm:$0xf]
      %v421 = vld [vmem:[%s231 + $0x244] sm:$0xf]
      %v422 = vld [vmem:[%s231 + $0x248] sm:$0xf]
      %v423 = vld [vmem:[%s231 + $0x24c] sm:$0xf]
      %v424 = vld [vmem:[%s231 + $0x250] sm:$0xf]
      %v425 = vld [vmem:[%s231 + $0x254] sm:$0xf]
      %v426 = vld [vmem:[%s231 + $0x258] sm:$0xf]
      %v427 = vld [vmem:[%s231 + $0x25c] sm:$0xf]
      %v428 = vld [vmem:[%s231 + $0x260] sm:$0xf]
      %v429 = vld [vmem:[%s231 + $0x264] sm:$0xf]
      %v430 = vld [vmem:[%s231 + $0x268] sm:$0xf]
      %v431 = vld [vmem:[%s231 + $0x26c] sm:$0xf]
      %v432 = vld [vmem:[%s231 + $0x270] sm:$0xf]
      %v433 = vld [vmem:[%s231 + $0x274] sm:$0xf]
      %v434 = vld [vmem:[%s231 + $0x278] sm:$0xf]
      %v435 = vld [vmem:[%s231 + $0x27c] sm:$0xf]
      %v436 = vld [vmem:[%s231 + $0x280] sm:$0xf]
      %v437 = vld [vmem:[%s231 + $0x284] sm:$0xf]
      %v438 = vld [vmem:[%s231 + $0x288] sm:$0xf]
      %v439 = vld [vmem:[%s231 + $0x28c] sm:$0xf]
      %v440 = vld [vmem:[%s231 + $0x290] sm:$0xf]
      %v441 = vld [vmem:[%s231 + $0x294] sm:$0xf]
      %v442 = vld [vmem:[%s231 + $0x298] sm:$0xf]
      %v443 = vld [vmem:[%s231 + $0x29c] sm:$0xf]
      %v444 = vld [vmem:[%s231 + $0x2a0] sm:$0xf]
      %v445 = vld [vmem:[%s231 + $0x2a4] sm:$0xf]
      %v446 = vld [vmem:[%s231 + $0x2a8] sm:$0xf]
      %v447 = vld [vmem:[%s231 + $0x2ac] sm:$0xf]
      %v448 = vld [vmem:[%s231 + $0x2b0] sm:$0xf]
      %v449 = vld [vmem:[%s231 + $0x2b4] sm:$0xf]
      %v450 = vld [vmem:[%s231 + $0x2b8] sm:$0xf]
      %v451 = vld [vmem:[%s231 + $0x2bc] sm:$0xf]
      %v452 = vld [vmem:[%s231 + $0x2c0] sm:$0xf]
      %v453 = vld [vmem:[%s231 + $0x2c4] sm:$0xf]
      %v454 = vld [vmem:[%s231 + $0x2c8] sm:$0xf]
      %v455 = vld [vmem:[%s231 + $0x2cc] sm:$0xf]
      %v456 = vld [vmem:[%s231 + $0x2d0] sm:$0xf]
      %v457 = vld [vmem:[%s231 + $0x2d4] sm:$0xf]
      %v458 = vld [vmem:[%s231 + $0x2d8] sm:$0xf]
      %v459 = vld [vmem:[%s231 + $0x2dc] sm:$0xf]
      %v460 = vld [vmem:[%s231 + $0x2e0] sm:$0xf]
      %v461 = vld [vmem:[%s231 + $0x2e4] sm:$0xf]
      %v462 = vld [vmem:[%s231 + $0x2e8] sm:$0xf]
      %v463 = vld [vmem:[%s231 + $0x2ec] sm:$0xf]
      %v464 = vld [vmem:[%s231 + $0x2f0] sm:$0xf]
      %v465 = vld [vmem:[%s231 + $0x2f4] sm:$0xf]
      %v466 = vld [vmem:[%s231 + $0x2f8] sm:$0xf]
      %v467 = vld [vmem:[%s231 + $0x2fc] sm:$0xf]
      %v468 = vld [vmem:[%s231 + $0x300] sm:$0xf]
      %v469 = vld [vmem:[%s231 + $0x304] sm:$0xf]
      %v470 = vld [vmem:[%s231 + $0x308] sm:$0xf]
      %v471 = vld [vmem:[%s231 + $0x30c] sm:$0xf]
      %v472 = vld [vmem:[%s231 + $0x310] sm:$0xf]
      %v473 = vld [vmem:[%s231 + $0x314] sm:$0xf]
      %v474 = vld [vmem:[%s231 + $0x318] sm:$0xf]
      %v475 = vld [vmem:[%s231 + $0x31c] sm:$0xf]
      %v476 = vld [vmem:[%s231 + $0x320] sm:$0xf]
      %v477 = vld [vmem:[%s231 + $0x324] sm:$0xf]
      %v478 = vld [vmem:[%s231 + $0x328] sm:$0xf]
      %v479 = vld [vmem:[%s231 + $0x32c] sm:$0xf]
      %v480 = vld [vmem:[%s231 + $0x330] sm:$0xf]
      %v481 = vld [vmem:[%s231 + $0x334] sm:$0xf]
      %v482 = vld [vmem:[%s231 + $0x338] sm:$0xf]
      %v483 = vld [vmem:[%s231 + $0x33c] sm:$0xf]
      %v512 = vunpack.c.l.b16 %v248
      %v513 = vunpack.c.h.b16 %v248
      %v514 = vunpack.c.l.b16 %v249
      %v515 = vunpack.c.h.b16 %v249
      %v516 = vunpack.c.l.b16 %v250
      %v517 = vunpack.c.h.b16 %v250
      %v518 = vunpack.c.l.b16 %v251
      %v519 = vunpack.c.h.b16 %v251
      %v520 = vunpack.c.l.b16 %v252
      %v521 = vunpack.c.h.b16 %v252
      %v522 = vunpack.c.l.b16 %v253
      %v523 = vunpack.c.h.b16 %v253
      %v524 = vunpack.c.l.b16 %v254
      %v525 = vunpack.c.l.b16 %v255
      %v526 = vunpack.c.h.b16 %v255
      %v527 = vunpack.c.l.b16 %v256
      %v528 = vunpack.c.h.b16 %v256
      %v529 = vunpack.c.l.b16 %v257
      %v530 = vunpack.c.h.b16 %v257
      %v531 = vunpack.c.l.b16 %v258
      %v532 = vunpack.c.h.b16 %v258
      %v533 = vunpack.c.l.b16 %v259
      %v534 = vunpack.c.h.b16 %v259
      %v535 = vunpack.c.l.b16 %v260
      %v536 = vunpack.c.h.b16 %v260
      %v537 = vunpack.c.l.b16 %v261
      %v538 = vunpack.c.l.b16 %v262
      %v539 = vunpack.c.h.b16 %v262
      %v540 = vunpack.c.l.b16 %v263
      %v541 = vunpack.c.h.b16 %v263
      %v542 = vunpack.c.l.b16 %v264
      %v543 = vunpack.c.h.b16 %v264
      %v544 = vunpack.c.l.b16 %v265
      %v545 = vunpack.c.h.b16 %v265
      %v546 = vunpack.c.l.b16 %v266
      %v547 = vunpack.c.h.b16 %v266
      %v548 = vunpack.c.l.b16 %v267
      %v549 = vunpack.c.h.b16 %v267
      %v550 = vunpack.c.l.b16 %v268
      %v551 = vunpack.c.l.b16 %v269
      %v552 = vunpack.c.h.b16 %v269
      %v553 = vunpack.c.l.b16 %v270
      %v554 = vunpack.c.h.b16 %v270
      %v555 = vunpack.c.l.b16 %v271
      %v556 = vunpack.c.h.b16 %v271
      %v557 = vunpack.c.l.b16 %v272
      %v558 = vunpack.c.h.b16 %v272
      %v559 = vunpack.c.l.b16 %v273
      %v560 = vunpack.c.h.b16 %v273
      %v561 = vunpack.c.l.b16 %v274
      %v562 = vunpack.c.h.b16 %v274
      %v563 = vunpack.c.l.b16 %v275
      %v564 = vpack.c.b16 %v525, %v512
      %v565 = vpack.c.b16 %v526, %v513
      %v566 = vpack.c.b16 %v527, %v514
      %v567 = vpack.c.b16 %v528, %v515
      %v568 = vpack.c.b16 %v529, %v516
      %v569 = vpack.c.b16 %v530, %v517
      %v570 = vpack.c.b16 %v531, %v518
      %v571 = vpack.c.b16 %v532, %v519
      %v572 = vpack.c.b16 %v533, %v520
      %v573 = vpack.c.b16 %v534, %v521
      %v574 = vpack.c.b16 %v535, %v522
      %v575 = vpack.c.b16 %v536, %v523
      %v576 = vpack.c.b16 %v537, %v524
      %v577 = vpack.c.b16 %v551, %v538
      %v578 = vpack.c.b16 %v552, %v539
      %v579 = vpack.c.b16 %v553, %v540
      %v580 = vpack.c.b16 %v554, %v541
      %v581 = vpack.c.b16 %v555, %v542
      %v582 = vpack.c.b16 %v556, %v543
      %v583 = vpack.c.b16 %v557, %v544
      %v584 = vpack.c.b16 %v558, %v545
      %v585 = vpack.c.b16 %v559, %v546
      %v586 = vpack.c.b16 %v560, %v547
      %v587 = vpack.c.b16 %v561, %v548
      %v588 = vpack.c.b16 %v562, %v549
      %v589 = vpack.c.b16 %v563, %v550
      %v824 = vunpack.c.l.b16 %v276
      %v825 = vunpack.c.l.b16 %v277
      %v826 = vunpack.c.l.b16 %v278
      %v827 = vunpack.c.l.b16 %v279
      %v828 = vunpack.c.l.b16 %v280
      %v829 = vunpack.c.l.b16 %v281
      %v830 = vunpack.c.l.b16 %v282
      %v831 = vunpack.c.l.b16 %v283
      %v832 = vunpack.c.l.b16 %v284
      %v833 = vunpack.c.l.b16 %v285
      %v834 = vunpack.c.l.b16 %v286
      %v835 = vunpack.c.l.b16 %v287
      %v836 = vunpack.c.l.b16 %v288
      %v837 = vunpack.c.l.b16 %v289
      %v838 = vunpack.c.l.b16 %v290
      %v839 = vunpack.c.l.b16 %v291
      %v840 = vunpack.c.l.b16 %v292
      %v841 = vunpack.c.l.b16 %v293
      %v842 = vunpack.c.l.b16 %v294
      %v843 = vunpack.c.l.b16 %v295
      %v844 = vunpack.c.l.b16 %v296
      %v845 = vunpack.c.l.b16 %v297
      %v846 = vunpack.c.l.b16 %v298
      %v847 = vunpack.c.l.b16 %v299
      %v848 = vunpack.c.l.b16 %v300
      %v849 = vunpack.c.l.b16 %v301
      %v850 = vunpack.c.l.b16 %v302
      %v851 = vunpack.c.l.b16 %v303
      %v852 = vunpack.c.l.b16 %v304
      %v853 = vunpack.c.l.b16 %v305
      %v854 = vunpack.c.l.b16 %v306
      %v855 = vunpack.c.l.b16 %v307
      %v856 = vunpack.c.l.b16 %v308
      %v857 = vunpack.c.l.b16 %v309
      %v858 = vunpack.c.l.b16 %v310
      %v859 = vunpack.c.l.b16 %v311
      %v860 = vunpack.c.l.b16 %v312
      %v861 = vunpack.c.l.b16 %v313
      %v862 = vunpack.c.l.b16 %v314
      %v863 = vunpack.c.l.b16 %v315
      %v864 = vunpack.c.l.b16 %v316
      %v865 = vunpack.c.l.b16 %v317
      %v866 = vunpack.c.l.b16 %v318
      %v867 = vunpack.c.l.b16 %v319
      %v868 = vunpack.c.l.b16 %v320
      %v869 = vunpack.c.l.b16 %v321
      %v870 = vunpack.c.l.b16 %v322
      %v871 = vunpack.c.l.b16 %v323
      %v872 = vunpack.c.l.b16 %v324
      %v873 = vunpack.c.l.b16 %v325
      %v874 = vunpack.c.l.b16 %v326
      %v875 = vunpack.c.l.b16 %v327
      %v876 = vunpack.c.l.b16 %v328
      %v877 = vunpack.c.l.b16 %v329
      %v878 = vunpack.c.l.b16 %v330
      %v879 = vunpack.c.l.b16 %v331
      %v880 = vunpack.c.l.b16 %v332
      %v881 = vunpack.c.l.b16 %v333
      %v882 = vunpack.c.l.b16 %v334
      %v883 = vunpack.c.l.b16 %v335
      %v884 = vunpack.c.l.b16 %v336
      %v885 = vunpack.c.l.b16 %v337
      %v886 = vunpack.c.l.b16 %v338
      %v887 = vunpack.c.l.b16 %v339
      %v888 = vunpack.c.l.b16 %v340
      %v889 = vunpack.c.l.b16 %v341
      %v890 = vunpack.c.l.b16 %v342
      %v891 = vunpack.c.l.b16 %v343
      %v892 = vunpack.c.l.b16 %v344
      %v893 = vunpack.c.l.b16 %v345
      %v894 = vunpack.c.l.b16 %v346
      %v895 = vunpack.c.l.b16 %v347
      %v896 = vunpack.c.l.b16 %v348
      %v897 = vunpack.c.l.b16 %v349
      %v898 = vunpack.c.l.b16 %v350
      %v899 = vunpack.c.l.b16 %v351
      %v900 = vunpack.c.l.b16 %v352
      %v901 = vunpack.c.l.b16 %v353
      %v902 = vunpack.c.l.b16 %v354
      %v903 = vunpack.c.l.b16 %v355
      %v904 = vunpack.c.l.b16 %v356
      %v905 = vunpack.c.l.b16 %v357
      %v906 = vunpack.c.l.b16 %v358
      %v907 = vunpack.c.l.b16 %v359
      %v908 = vunpack.c.l.b16 %v360
      %v909 = vunpack.c.l.b16 %v361
      %v910 = vunpack.c.l.b16 %v362
      %v911 = vunpack.c.l.b16 %v363
      %v912 = vunpack.c.l.b16 %v364
      %v913 = vunpack.c.l.b16 %v365
      %v914 = vunpack.c.l.b16 %v366
      %v915 = vunpack.c.l.b16 %v367
      %v916 = vunpack.c.l.b16 %v368
      %v917 = vunpack.c.l.b16 %v369
      %v918 = vunpack.c.l.b16 %v370
      %v919 = vunpack.c.l.b16 %v371
      %v920 = vunpack.c.l.b16 %v372
      %v921 = vunpack.c.l.b16 %v373
      %v922 = vunpack.c.l.b16 %v374
      %v923 = vunpack.c.l.b16 %v375
      %v924 = vunpack.c.l.b16 %v376
      %v925 = vunpack.c.l.b16 %v377
      %v926 = vunpack.c.l.b16 %v378
      %v927 = vunpack.c.l.b16 %v379
      %v928 = vunpack.c.l.b16 %v380
      %v929 = vunpack.c.l.b16 %v381
      %v930 = vunpack.c.l.b16 %v382
      %v931 = vunpack.c.l.b16 %v383
      %v932 = vunpack.c.l.b16 %v384
      %v933 = vunpack.c.l.b16 %v385
      %v934 = vunpack.c.l.b16 %v386
      %v935 = vunpack.c.l.b16 %v387
      %v936 = vunpack.c.l.b16 %v388
      %v937 = vunpack.c.l.b16 %v389
      %v938 = vunpack.c.l.b16 %v390
      %v939 = vunpack.c.l.b16 %v391
      %v940 = vunpack.c.l.b16 %v392
      %v941 = vunpack.c.l.b16 %v393
      %v942 = vunpack.c.l.b16 %v394
      %v943 = vunpack.c.l.b16 %v395
      %v944 = vunpack.c.l.b16 %v396
      %v945 = vunpack.c.l.b16 %v397
      %v946 = vunpack.c.l.b16 %v398
      %v947 = vunpack.c.l.b16 %v399
      %v948 = vunpack.c.l.b16 %v400
      %v949 = vunpack.c.l.b16 %v401
      %v950 = vunpack.c.l.b16 %v402
      %v951 = vunpack.c.l.b16 %v403
      %v952 = vunpack.c.l.b16 %v404
      %v953 = vunpack.c.l.b16 %v405
      %v954 = vunpack.c.l.b16 %v406
      %v955 = vunpack.c.l.b16 %v407
      %v956 = vunpack.c.l.b16 %v408
      %v957 = vunpack.c.l.b16 %v409
      %v958 = vunpack.c.l.b16 %v410
      %v959 = vunpack.c.l.b16 %v411
      %v960 = vunpack.c.l.b16 %v412
      %v961 = vunpack.c.l.b16 %v413
      %v962 = vunpack.c.l.b16 %v414
      %v963 = vunpack.c.l.b16 %v415
      %v964 = vunpack.c.l.b16 %v416
      %v965 = vunpack.c.l.b16 %v417
      %v966 = vunpack.c.l.b16 %v418
      %v967 = vunpack.c.l.b16 %v419
      %v968 = vunpack.c.l.b16 %v420
      %v969 = vunpack.c.l.b16 %v421
      %v970 = vunpack.c.l.b16 %v422
      %v971 = vunpack.c.l.b16 %v423
      %v972 = vunpack.c.l.b16 %v424
      %v973 = vunpack.c.l.b16 %v425
      %v974 = vunpack.c.l.b16 %v426
      %v975 = vunpack.c.l.b16 %v427
      %v976 = vunpack.c.l.b16 %v428
      %v977 = vunpack.c.l.b16 %v429
      %v978 = vunpack.c.l.b16 %v430
      %v979 = vunpack.c.l.b16 %v431
      %v980 = vunpack.c.l.b16 %v432
      %v981 = vunpack.c.l.b16 %v433
      %v982 = vunpack.c.l.b16 %v434
      %v983 = vunpack.c.l.b16 %v435
      %v984 = vunpack.c.l.b16 %v436
      %v985 = vunpack.c.l.b16 %v437
      %v986 = vunpack.c.l.b16 %v438
      %v987 = vunpack.c.l.b16 %v439
      %v988 = vunpack.c.l.b16 %v440
      %v989 = vunpack.c.l.b16 %v441
      %v990 = vunpack.c.l.b16 %v442
      %v991 = vunpack.c.l.b16 %v443
      %v992 = vunpack.c.l.b16 %v444
      %v993 = vunpack.c.l.b16 %v445
      %v994 = vunpack.c.l.b16 %v446
      %v995 = vunpack.c.l.b16 %v447
      %v996 = vunpack.c.l.b16 %v448
      %v997 = vunpack.c.l.b16 %v449
      %v998 = vunpack.c.l.b16 %v450
      %v999 = vunpack.c.l.b16 %v451
      %v1000 = vunpack.c.l.b16 %v452
      %v1001 = vunpack.c.l.b16 %v453
      %v1002 = vunpack.c.l.b16 %v454
      %v1003 = vunpack.c.l.b16 %v455
      %v1004 = vunpack.c.l.b16 %v456
      %v1005 = vunpack.c.l.b16 %v457
      %v1006 = vunpack.c.l.b16 %v458
      %v1007 = vunpack.c.l.b16 %v459
      %v1008 = vunpack.c.l.b16 %v460
      %v1009 = vunpack.c.l.b16 %v461
      %v1010 = vunpack.c.l.b16 %v462
      %v1011 = vunpack.c.l.b16 %v463
      %v1012 = vunpack.c.l.b16 %v464
      %v1013 = vunpack.c.l.b16 %v465
      %v1014 = vunpack.c.l.b16 %v466
      %v1015 = vunpack.c.l.b16 %v467
      %v1016 = vunpack.c.l.b16 %v468
      %v1017 = vunpack.c.l.b16 %v469
      %v1018 = vunpack.c.l.b16 %v470
      %v1019 = vunpack.c.l.b16 %v471
      %v1020 = vunpack.c.l.b16 %v472
      %v1021 = vunpack.c.l.b16 %v473
      %v1022 = vunpack.c.l.b16 %v474
      %v1023 = vunpack.c.l.b16 %v475
      %v1024 = vunpack.c.l.b16 %v476
      %v1025 = vunpack.c.l.b16 %v477
      %v1026 = vunpack.c.l.b16 %v478
      %v1027 = vunpack.c.l.b16 %v479
      %v1028 = vunpack.c.l.b16 %v480
      %v1029 = vunpack.c.l.b16 %v481
      %v1030 = vunpack.c.l.b16 %v482
      %v1031 = vunpack.c.l.b16 %v483
      %v1032 = vpack.c.b16 %v825, %v824
      %v1033 = vpack.c.b16 %v827, %v826
      %v1034 = vpack.c.b16 %v829, %v828
      %v1035 = vpack.c.b16 %v831, %v830
      %v1036 = vpack.c.b16 %v833, %v832
      %v1037 = vpack.c.b16 %v835, %v834
      %v1038 = vpack.c.b16 %v837, %v836
      %v1039 = vpack.c.b16 %v839, %v838
      %v1040 = vpack.c.b16 %v841, %v840
      %v1041 = vpack.c.b16 %v843, %v842
      %v1042 = vpack.c.b16 %v845, %v844
      %v1043 = vpack.c.b16 %v847, %v846
      %v1044 = vpack.c.b16 %v849, %v848
      %v1045 = vpack.c.b16 %v851, %v850
      %v1046 = vpack.c.b16 %v853, %v852
      %v1047 = vpack.c.b16 %v855, %v854
      %v1048 = vpack.c.b16 %v857, %v856
      %v1049 = vpack.c.b16 %v859, %v858
      %v1050 = vpack.c.b16 %v861, %v860
      %v1051 = vpack.c.b16 %v863, %v862
      %v1052 = vpack.c.b16 %v865, %v864
      %v1053 = vpack.c.b16 %v867, %v866
      %v1054 = vpack.c.b16 %v869, %v868
      %v1055 = vpack.c.b16 %v871, %v870
      %v1056 = vpack.c.b16 %v873, %v872
      %v1057 = vpack.c.b16 %v875, %v874
      %v1058 = vpack.c.b16 %v877, %v876
      %v1059 = vpack.c.b16 %v879, %v878
      %v1060 = vpack.c.b16 %v881, %v880
      %v1061 = vpack.c.b16 %v883, %v882
      %v1062 = vpack.c.b16 %v885, %v884
      %v1063 = vpack.c.b16 %v887, %v886
      %v1064 = vpack.c.b16 %v889, %v888
      %v1065 = vpack.c.b16 %v891, %v890
      %v1066 = vpack.c.b16 %v893, %v892
      %v1067 = vpack.c.b16 %v895, %v894
      %v1068 = vpack.c.b16 %v897, %v896
      %v1069 = vpack.c.b16 %v899, %v898
      %v1070 = vpack.c.b16 %v901, %v900
      %v1071 = vpack.c.b16 %v903, %v902
      %v1072 = vpack.c.b16 %v905, %v904
      %v1073 = vpack.c.b16 %v907, %v906
      %v1074 = vpack.c.b16 %v909, %v908
      %v1075 = vpack.c.b16 %v911, %v910
      %v1076 = vpack.c.b16 %v913, %v912
      %v1077 = vpack.c.b16 %v915, %v914
      %v1078 = vpack.c.b16 %v917, %v916
      %v1079 = vpack.c.b16 %v919, %v918
      %v1080 = vpack.c.b16 %v921, %v920
      %v1081 = vpack.c.b16 %v923, %v922
      %v1082 = vpack.c.b16 %v925, %v924
      %v1083 = vpack.c.b16 %v927, %v926
      %v1084 = vpack.c.b16 %v929, %v928
      %v1085 = vpack.c.b16 %v931, %v930
      %v1086 = vpack.c.b16 %v933, %v932
      %v1087 = vpack.c.b16 %v935, %v934
      %v1088 = vpack.c.b16 %v937, %v936
      %v1089 = vpack.c.b16 %v939, %v938
      %v1090 = vpack.c.b16 %v941, %v940
      %v1091 = vpack.c.b16 %v943, %v942
      %v1092 = vpack.c.b16 %v945, %v944
      %v1093 = vpack.c.b16 %v947, %v946
      %v1094 = vpack.c.b16 %v949, %v948
      %v1095 = vpack.c.b16 %v951, %v950
      %v1096 = vpack.c.b16 %v953, %v952
      %v1097 = vpack.c.b16 %v955, %v954
      %v1098 = vpack.c.b16 %v957, %v956
      %v1099 = vpack.c.b16 %v959, %v958
      %v1100 = vpack.c.b16 %v961, %v960
      %v1101 = vpack.c.b16 %v963, %v962
      %v1102 = vpack.c.b16 %v965, %v964
      %v1103 = vpack.c.b16 %v967, %v966
      %v1104 = vpack.c.b16 %v969, %v968
      %v1105 = vpack.c.b16 %v971, %v970
      %v1106 = vpack.c.b16 %v973, %v972
      %v1107 = vpack.c.b16 %v975, %v974
      %v1108 = vpack.c.b16 %v977, %v976
      %v1109 = vpack.c.b16 %v979, %v978
      %v1110 = vpack.c.b16 %v981, %v980
      %v1111 = vpack.c.b16 %v983, %v982
      %v1112 = vpack.c.b16 %v985, %v984
      %v1113 = vpack.c.b16 %v987, %v986
      %v1114 = vpack.c.b16 %v989, %v988
      %v1115 = vpack.c.b16 %v991, %v990
      %v1116 = vpack.c.b16 %v993, %v992
      %v1117 = vpack.c.b16 %v995, %v994
      %v1118 = vpack.c.b16 %v997, %v996
      %v1119 = vpack.c.b16 %v999, %v998
      %v1120 = vpack.c.b16 %v1001, %v1000
      %v1121 = vpack.c.b16 %v1003, %v1002
      %v1122 = vpack.c.b16 %v1005, %v1004
      %v1123 = vpack.c.b16 %v1007, %v1006
      %v1124 = vpack.c.b16 %v1009, %v1008
      %v1125 = vpack.c.b16 %v1011, %v1010
      %v1126 = vpack.c.b16 %v1013, %v1012
      %v1127 = vpack.c.b16 %v1015, %v1014
      %v1128 = vpack.c.b16 %v1017, %v1016
      %v1129 = vpack.c.b16 %v1019, %v1018
      %v1130 = vpack.c.b16 %v1021, %v1020
      %v1131 = vpack.c.b16 %v1023, %v1022
      %v1132 = vpack.c.b16 %v1025, %v1024
      %v1133 = vpack.c.b16 %v1027, %v1026
      %v1134 = vpack.c.b16 %v1029, %v1028
      %v1135 = vpack.c.b16 %v1031, %v1030
      %1240 = vmatprep.subr.bf16.mxu0 0
      %1241 = vmatpush1.bf16.msra.mxu0 %v1039
      %1242 = vmatprep.subr.bf16.mxu0 0
      %1243 = vmatpush1.bf16.msra.mxu0 %v1038
      %1244 = vmatprep.subr.bf16.mxu0 0
      %1245 = vmatpush1.bf16.msra.mxu0 %v1037
      %1246 = vmatprep.subr.bf16.mxu0 0
      %1247 = vmatpush1.bf16.msra.mxu0 %v1036
      %1248 = vmatprep.subr.bf16.mxu0 0
      %1249 = vmatpush1.bf16.msra.mxu0 %v1035
      %1250 = vmatprep.subr.bf16.mxu0 0
      %1251 = vmatpush1.bf16.msra.mxu0 %v1034
      %1252 = vmatprep.subr.bf16.mxu0 0
      %1253 = vmatpush1.bf16.msra.mxu0 %v1033
      %1254 = vmatprep.subr.bf16.mxu0 0
      %1255 = vmatpush1.bf16.msra.mxu0 %v1032
      %1256 = vmatprep.subr.bf16.mxu0 0
      %1257 = vmatpush2.bf16.msra.mxu0 %v1047
      %1258 = vmatprep.subr.bf16.mxu0 0
      %1259 = vmatpush2.bf16.msra.mxu0 %v1046
      %1260 = vmatprep.subr.bf16.mxu0 0
      %1261 = vmatpush2.bf16.msra.mxu0 %v1045
      %1262 = vmatprep.subr.bf16.mxu0 0
      %1263 = vmatpush2.bf16.msra.mxu0 %v1044
      %1264 = vmatprep.subr.bf16.mxu0 0
      %1265 = vmatpush2.bf16.msra.mxu0 %v1043
      %1266 = vmatprep.subr.bf16.mxu0 0
      %1267 = vmatpush2.bf16.msra.mxu0 %v1042
      %1268 = vmatprep.subr.bf16.mxu0 0
      %1269 = vmatpush2.bf16.msra.mxu0 %v1041
      %1270 = vmatprep.subr.bf16.mxu0 0
      %1271 = vmatpush2.bf16.msra.mxu0 %v1040
      %1272 = vmatprep.mubr.bf16.mxu0 %v565
      %1273 = vmatmul.mubr.bf16.gmra.mxu0 %v564
      %v1274 = vpop.f32.mrf.mxu0
      %v1275 = vadd.f32 0.0, %v1274
      %v1276 = vpop.f32.mrf.mxu0
      %v1277 = vpop.f32.mrf.mxu0
      %v1278 = vadd.f32 0.0, %v1277
      %v1279 = vpop.f32.mrf.mxu0
      %1280 = vmatprep.mubr.bf16.mxu0 %v578
      %1281 = vmatmul.mubr.bf16.gmra.mxu0 %v577
      %v1282 = vpop.f32.mrf.mxu0
      %v1283 = vadd.f32 0.0, %v1282
      %v1284 = vpop.f32.mrf.mxu0
      %v1285 = vpop.f32.mrf.mxu0
      %v1286 = vadd.f32 0.0, %v1285
      %v1287 = vpop.f32.mrf.mxu0
      %1288 = vdwg.mxu0
      %1289 = vmatprep.subr.bf16.mxu0 0
      %1290 = vmatpush1.bf16.msra.mxu0 %v1055
      %1291 = vmatprep.subr.bf16.mxu0 0
      %1292 = vmatpush1.bf16.msra.mxu0 %v1054
      %1293 = vmatprep.subr.bf16.mxu0 0
      %1294 = vmatpush1.bf16.msra.mxu0 %v1053
      %1295 = vmatprep.subr.bf16.mxu0 0
      %1296 = vmatpush1.bf16.msra.mxu0 %v1052
      %1297 = vmatprep.subr.bf16.mxu0 0
      %1298 = vmatpush1.bf16.msra.mxu0 %v1051
      %1299 = vmatprep.subr.bf16.mxu0 0
      %1300 = vmatpush1.bf16.msra.mxu0 %v1050
      %1301 = vmatprep.subr.bf16.mxu0 0
      %1302 = vmatpush1.bf16.msra.mxu0 %v1049
      %1303 = vmatprep.subr.bf16.mxu0 0
      %1304 = vmatpush1.bf16.msra.mxu0 %v1048
      %1305 = vmatprep.subr.bf16.mxu0 0
      %1306 = vmatpush2.bf16.msra.mxu0 %v1063
      %1307 = vmatprep.subr.bf16.mxu0 0
      %1308 = vmatpush2.bf16.msra.mxu0 %v1062
      %1309 = vmatprep.subr.bf16.mxu0 0
      %1310 = vmatpush2.bf16.msra.mxu0 %v1061
      %1311 = vmatprep.subr.bf16.mxu0 0
      %1312 = vmatpush2.bf16.msra.mxu0 %v1060
      %1313 = vmatprep.subr.bf16.mxu0 0
      %1314 = vmatpush2.bf16.msra.mxu0 %v1059
      %1315 = vmatprep.subr.bf16.mxu0 0
      %1316 = vmatpush2.bf16.msra.mxu0 %v1058
      %1317 = vmatprep.subr.bf16.mxu0 0
      %1318 = vmatpush2.bf16.msra.mxu0 %v1057
      %1319 = vmatprep.subr.bf16.mxu0 0
      %1320 = vmatpush2.bf16.msra.mxu0 %v1056
      %1321 = vmatprep.mubr.bf16.mxu0 %v567
      %1322 = vmatmul.mubr.bf16.gmra.mxu0 %v566
      %v1323 = vpop.f32.mrf.mxu0
      %v1324 = vadd.f32 %v1275, %v1323
      %v1325 = vpop.f32.mrf.mxu0
      %v1326 = vpop.f32.mrf.mxu0
      %v1327 = vadd.f32 %v1278, %v1326
      %v1328 = vpop.f32.mrf.mxu0
      %1329 = vmatprep.mubr.bf16.mxu0 %v580
      %1330 = vmatmul.mubr.bf16.gmra.mxu0 %v579
      %v1331 = vpop.f32.mrf.mxu0
      %v1332 = vadd.f32 %v1283, %v1331
      %v1333 = vpop.f32.mrf.mxu0
      %v1334 = vpop.f32.mrf.mxu0
      %v1335 = vadd.f32 %v1286, %v1334
      %v1336 = vpop.f32.mrf.mxu0
      %1337 = vdwg.mxu0
      %1338 = vmatprep.subr.bf16.mxu0 0
      %1339 = vmatpush1.bf16.msra.mxu0 %v1071
      %1340 = vmatprep.subr.bf16.mxu0 0
      %1341 = vmatpush1.bf16.msra.mxu0 %v1070
      %1342 = vmatprep.subr.bf16.mxu0 0
      %1343 = vmatpush1.bf16.msra.mxu0 %v1069
      %1344 = vmatprep.subr.bf16.mxu0 0
      %1345 = vmatpush1.bf16.msra.mxu0 %v1068
      %1346 = vmatprep.subr.bf16.mxu0 0
      %1347 = vmatpush1.bf16.msra.mxu0 %v1067
      %1348 = vmatprep.subr.bf16.mxu0 0
      %1349 = vmatpush1.bf16.msra.mxu0 %v1066
      %1350 = vmatprep.subr.bf16.mxu0 0
      %1351 = vmatpush1.bf16.msra.mxu0 %v1065
      %1352 = vmatprep.subr.bf16.mxu0 0
      %1353 = vmatpush1.bf16.msra.mxu0 %v1064
      %1354 = vmatprep.subr.bf16.mxu0 0
      %1355 = vmatpush2.bf16.msra.mxu0 %v1079
      %1356 = vmatprep.subr.bf16.mxu0 0
      %1357 = vmatpush2.bf16.msra.mxu0 %v1078
      %1358 = vmatprep.subr.bf16.mxu0 0
      %1359 = vmatpush2.bf16.msra.mxu0 %v1077
      %1360 = vmatprep.subr.bf16.mxu0 0
      %1361 = vmatpush2.bf16.msra.mxu0 %v1076
      %1362 = vmatprep.subr.bf16.mxu0 0
      %1363 = vmatpush2.bf16.msra.mxu0 %v1075
      %1364 = vmatprep.subr.bf16.mxu0 0
      %1365 = vmatpush2.bf16.msra.mxu0 %v1074
      %1366 = vmatprep.subr.bf16.mxu0 0
      %1367 = vmatpush2.bf16.msra.mxu0 %v1073
      %1368 = vmatprep.subr.bf16.mxu0 0
      %1369 = vmatpush2.bf16.msra.mxu0 %v1072
      %1370 = vmatprep.mubr.bf16.mxu0 %v569
      %1371 = vmatmul.mubr.bf16.gmra.mxu0 %v568
      %v1372 = vpop.f32.mrf.mxu0
      %v1373 = vadd.f32 %v1324, %v1372
      %v1374 = vpop.f32.mrf.mxu0
      %v1375 = vpop.f32.mrf.mxu0
      %v1376 = vadd.f32 %v1327, %v1375
      %v1377 = vpop.f32.mrf.mxu0
      %1378 = vmatprep.mubr.bf16.mxu0 %v582
      %1379 = vmatmul.mubr.bf16.gmra.mxu0 %v581
      %v1380 = vpop.f32.mrf.mxu0
      %v1381 = vadd.f32 %v1332, %v1380
      %v1382 = vpop.f32.mrf.mxu0
      %v1383 = vpop.f32.mrf.mxu0
      %v1384 = vadd.f32 %v1335, %v1383
      %v1385 = vpop.f32.mrf.mxu0
      %1386 = vdwg.mxu0
      %1387 = vmatprep.subr.bf16.mxu0 0
      %1388 = vmatpush1.bf16.msra.mxu0 %v1087
      %1389 = vmatprep.subr.bf16.mxu0 0
      %1390 = vmatpush1.bf16.msra.mxu0 %v1086
      %1391 = vmatprep.subr.bf16.mxu0 0
      %1392 = vmatpush1.bf16.msra.mxu0 %v1085
      %1393 = vmatprep.subr.bf16.mxu0 0
      %1394 = vmatpush1.bf16.msra.mxu0 %v1084
      %1395 = vmatprep.subr.bf16.mxu0 0
      %1396 = vmatpush1.bf16.msra.mxu0 %v1083
      %1397 = vmatprep.subr.bf16.mxu0 0
      %1398 = vmatpush1.bf16.msra.mxu0 %v1082
      %1399 = vmatprep.subr.bf16.mxu0 0
      %1400 = vmatpush1.bf16.msra.mxu0 %v1081
      %1401 = vmatprep.subr.bf16.mxu0 0
      %1402 = vmatpush1.bf16.msra.mxu0 %v1080
      %1403 = vmatprep.subr.bf16.mxu0 0
      %1404 = vmatpush2.bf16.msra.mxu0 %v1095
      %1405 = vmatprep.subr.bf16.mxu0 0
      %1406 = vmatpush2.bf16.msra.mxu0 %v1094
      %1407 = vmatprep.subr.bf16.mxu0 0
      %1408 = vmatpush2.bf16.msra.mxu0 %v1093
      %1409 = vmatprep.subr.bf16.mxu0 0
      %1410 = vmatpush2.bf16.msra.mxu0 %v1092
      %1411 = vmatprep.subr.bf16.mxu0 0
      %1412 = vmatpush2.bf16.msra.mxu0 %v1091
      %1413 = vmatprep.subr.bf16.mxu0 0
      %1414 = vmatpush2.bf16.msra.mxu0 %v1090
      %1415 = vmatprep.subr.bf16.mxu0 0
      %1416 = vmatpush2.bf16.msra.mxu0 %v1089
      %1417 = vmatprep.subr.bf16.mxu0 0
      %1418 = vmatpush2.bf16.msra.mxu0 %v1088
      %1419 = vmatprep.mubr.bf16.mxu0 %v571
      %1420 = vmatmul.mubr.bf16.gmra.mxu0 %v570
      %v1421 = vpop.f32.mrf.mxu0
      %v1422 = vadd.f32 %v1373, %v1421
      %v1423 = vpop.f32.mrf.mxu0
      %v1424 = vpop.f32.mrf.mxu0
      %v1425 = vadd.f32 %v1376, %v1424
      %v1426 = vpop.f32.mrf.mxu0
      %1427 = vmatprep.mubr.bf16.mxu0 %v584
      %1428 = vmatmul.mubr.bf16.gmra.mxu0 %v583
      %v1429 = vpop.f32.mrf.mxu0
      %v1430 = vadd.f32 %v1381, %v1429
      %v1431 = vpop.f32.mrf.mxu0
      %v1432 = vpop.f32.mrf.mxu0
      %v1433 = vadd.f32 %v1384, %v1432
      %v1434 = vpop.f32.mrf.mxu0
      %1435 = vdwg.mxu0
      %1436 = vmatprep.subr.bf16.mxu0 0
      %1437 = vmatpush1.bf16.msra.mxu0 %v1103
      %1438 = vmatprep.subr.bf16.mxu0 0
      %1439 = vmatpush1.bf16.msra.mxu0 %v1102
      %1440 = vmatprep.subr.bf16.mxu0 0
      %1441 = vmatpush1.bf16.msra.mxu0 %v1101
      %1442 = vmatprep.subr.bf16.mxu0 0
      %1443 = vmatpush1.bf16.msra.mxu0 %v1100
      %1444 = vmatprep.subr.bf16.mxu0 0
      %1445 = vmatpush1.bf16.msra.mxu0 %v1099
      %1446 = vmatprep.subr.bf16.mxu0 0
      %1447 = vmatpush1.bf16.msra.mxu0 %v1098
      %1448 = vmatprep.subr.bf16.mxu0 0
      %1449 = vmatpush1.bf16.msra.mxu0 %v1097
      %1450 = vmatprep.subr.bf16.mxu0 0
      %1451 = vmatpush1.bf16.msra.mxu0 %v1096
      %1452 = vmatprep.subr.bf16.mxu0 0
      %1453 = vmatpush2.bf16.msra.mxu0 %v1111
      %1454 = vmatprep.subr.bf16.mxu0 0
      %1455 = vmatpush2.bf16.msra.mxu0 %v1110
      %1456 = vmatprep.subr.bf16.mxu0 0
      %1457 = vmatpush2.bf16.msra.mxu0 %v1109
      %1458 = vmatprep.subr.bf16.mxu0 0
      %1459 = vmatpush2.bf16.msra.mxu0 %v1108
      %1460 = vmatprep.subr.bf16.mxu0 0
      %1461 = vmatpush2.bf16.msra.mxu0 %v1107
      %1462 = vmatprep.subr.bf16.mxu0 0
      %1463 = vmatpush2.bf16.msra.mxu0 %v1106
      %1464 = vmatprep.subr.bf16.mxu0 0
      %1465 = vmatpush2.bf16.msra.mxu0 %v1105
      %1466 = vmatprep.subr.bf16.mxu0 0
      %1467 = vmatpush2.bf16.msra.mxu0 %v1104
      %1468 = vmatprep.mubr.bf16.mxu0 %v573
      %1469 = vmatmul.mubr.bf16.gmra.mxu0 %v572
      %v1470 = vpop.f32.mrf.mxu0
      %v1471 = vadd.f32 %v1422, %v1470
      %v1472 = vpop.f32.mrf.mxu0
      %v1473 = vpop.f32.mrf.mxu0
      %v1474 = vadd.f32 %v1425, %v1473
      %v1475 = vpop.f32.mrf.mxu0
      %1476 = vmatprep.mubr.bf16.mxu0 %v586
      %1477 = vmatmul.mubr.bf16.gmra.mxu0 %v585
      %v1478 = vpop.f32.mrf.mxu0
      %v1479 = vadd.f32 %v1430, %v1478
      %v1480 = vpop.f32.mrf.mxu0
      %v1481 = vpop.f32.mrf.mxu0
      %v1482 = vadd.f32 %v1433, %v1481
      %v1483 = vpop.f32.mrf.mxu0
      %1484 = vdwg.mxu0
      %1485 = vmatprep.subr.bf16.mxu0 0
      %1486 = vmatpush1.bf16.msra.mxu0 %v1119
      %1487 = vmatprep.subr.bf16.mxu0 0
      %1488 = vmatpush1.bf16.msra.mxu0 %v1118
      %1489 = vmatprep.subr.bf16.mxu0 0
      %1490 = vmatpush1.bf16.msra.mxu0 %v1117
      %1491 = vmatprep.subr.bf16.mxu0 0
      %1492 = vmatpush1.bf16.msra.mxu0 %v1116
      %1493 = vmatprep.subr.bf16.mxu0 0
      %1494 = vmatpush1.bf16.msra.mxu0 %v1115
      %1495 = vmatprep.subr.bf16.mxu0 0
      %1496 = vmatpush1.bf16.msra.mxu0 %v1114
      %1497 = vmatprep.subr.bf16.mxu0 0
      %1498 = vmatpush1.bf16.msra.mxu0 %v1113
      %1499 = vmatprep.subr.bf16.mxu0 0
      %1500 = vmatpush1.bf16.msra.mxu0 %v1112
      %1501 = vmatprep.subr.bf16.mxu0 0
      %1502 = vmatpush2.bf16.msra.mxu0 %v1127
      %1503 = vmatprep.subr.bf16.mxu0 0
      %1504 = vmatpush2.bf16.msra.mxu0 %v1126
      %1505 = vmatprep.subr.bf16.mxu0 0
      %1506 = vmatpush2.bf16.msra.mxu0 %v1125
      %1507 = vmatprep.subr.bf16.mxu0 0
      %1508 = vmatpush2.bf16.msra.mxu0 %v1124
      %1509 = vmatprep.subr.bf16.mxu0 0
      %1510 = vmatpush2.bf16.msra.mxu0 %v1123
      %1511 = vmatprep.subr.bf16.mxu0 0
      %1512 = vmatpush2.bf16.msra.mxu0 %v1122
      %1513 = vmatprep.subr.bf16.mxu0 0
      %1514 = vmatpush2.bf16.msra.mxu0 %v1121
      %1515 = vmatprep.subr.bf16.mxu0 0
      %1516 = vmatpush2.bf16.msra.mxu0 %v1120
      %1517 = vmatprep.mubr.bf16.mxu0 %v575
      %1518 = vmatmul.mubr.bf16.gmra.mxu0 %v574
      %v1519 = vpop.f32.mrf.mxu0
      %v1520 = vadd.f32 %v1471, %v1519
      %v1521 = vpop.f32.mrf.mxu0
      %v1522 = vpop.f32.mrf.mxu0
      %v1523 = vadd.f32 %v1474, %v1522
      %v1524 = vpop.f32.mrf.mxu0
      %1525 = vmatprep.mubr.bf16.mxu0 %v588
      %1526 = vmatmul.mubr.bf16.gmra.mxu0 %v587
      %v1527 = vpop.f32.mrf.mxu0
      %v1528 = vadd.f32 %v1479, %v1527
      %v1529 = vpop.f32.mrf.mxu0
      %v1530 = vpop.f32.mrf.mxu0
      %v1531 = vadd.f32 %v1482, %v1530
      %v1532 = vpop.f32.mrf.mxu0
      %1533 = vdwg.mxu0
      %1534 = vmatprep.subr.bf16.mxu0 0
      %1535 = vmatpush1.bf16.msra.mxu0 %v1135
      %1536 = vmatprep.subr.bf16.mxu0 0
      %1537 = vmatpush1.bf16.msra.mxu0 %v1134
      %1538 = vmatprep.subr.bf16.mxu0 0
      %1539 = vmatpush1.bf16.msra.mxu0 %v1133
      %1540 = vmatprep.subr.bf16.mxu0 0
      %1541 = vmatpush1.bf16.msra.mxu0 %v1132
      %1542 = vmatprep.subr.bf16.mxu0 0
      %1543 = vmatpush1.bf16.msra.mxu0 %v1131
      %1544 = vmatprep.subr.bf16.mxu0 0
      %1545 = vmatpush1.bf16.msra.mxu0 %v1130
      %1546 = vmatprep.subr.bf16.mxu0 0
      %1547 = vmatpush1.bf16.msra.mxu0 %v1129
      %1548 = vmatprep.subr.bf16.mxu0 0
      %1549 = vmatpush1.bf16.msra.mxu0 %v1128
      %1550 = vmatprep.subr.bf16.mxu0 0
      %1551 = vmatpush2.bf16.msra.mxu0 0
      %1552 = vmatprep.subr.bf16.mxu0 0
      %1553 = vmatpush2.bf16.msra.mxu0 0
      %1554 = vmatprep.subr.bf16.mxu0 0
      %1555 = vmatpush2.bf16.msra.mxu0 0
      %1556 = vmatprep.subr.bf16.mxu0 0
      %1557 = vmatpush2.bf16.msra.mxu0 0
      %1558 = vmatprep.subr.bf16.mxu0 0
      %1559 = vmatpush2.bf16.msra.mxu0 0
      %1560 = vmatprep.subr.bf16.mxu0 0
      %1561 = vmatpush2.bf16.msra.mxu0 0
      %1562 = vmatprep.subr.bf16.mxu0 0
      %1563 = vmatpush2.bf16.msra.mxu0 0
      %1564 = vmatprep.subr.bf16.mxu0 0
      %1565 = vmatpush2.bf16.msra.mxu0 0
      %1566 = vmatprep.mubr.bf16.mxu0 0
      %1567 = vmatmul.mubr.bf16.gmra.mxu0 %v576
      %v1568 = vpop.f32.mrf.mxu0
      %v1569 = vadd.f32 %v1520, %v1568
      %v1570 = vpop.f32.mrf.mxu0
      %v1571 = vpop.f32.mrf.mxu0
      %v1572 = vadd.f32 %v1523, %v1571
      %v1573 = vpop.f32.mrf.mxu0
      %1574 = vmatprep.mubr.bf16.mxu0 0
      %1575 = vmatmul.mubr.bf16.gmra.mxu0 %v589
      %v1576 = vpop.f32.mrf.mxu0
      %v1577 = vadd.f32 %v1528, %v1576
      %v1578 = vpop.f32.mrf.mxu0
      %v1579 = vpop.f32.mrf.mxu0
      %v1580 = vadd.f32 %v1531, %v1579
      %v1581 = vpop.f32.mrf.mxu0
      %1582 = vdwg.mxu0
      %p1583 = scmp.eq.s32.totalorder %s21, 0
      // Predicated region
      $region33: #{fpa_v2_forward.9} parent=31 // pred_check
        %p1584 = pneg %p1583
      $region34: #{fpa_v2_forward.9} parent=31 // pred_check_branch
        %1586 = sbr.rel (%p1584) target = $region36
      $region35: #{fpa_v2_forward.9} parent=31 // pred_region
        %1587 = vst [vmem:[#allocation2] sm:$0xff] %v1569
        %1588 = vst [vmem:[#allocation2 + $0x8] sm:$0xff] %v1572
        %1589 = vst [vmem:[#allocation2 + $0x10] sm:$0xff] %v1577
        %1590 = vst [vmem:[#allocation2 + $0x18] sm:$0xff] %v1580
      $region36: #{fpa_v2_forward.9} parent=31 // pred_fallthru
        _
      %p1591 = scmp.gt.s32.totalorder %s21, 0
      // Predicated region
      $region37: #{fpa_v2_forward.9} parent=31 // pred_check
        %p1592 = pneg %p1591
      $region38: #{fpa_v2_forward.9} parent=31 // pred_check_branch
        %1594 = sbr.rel (%p1592) target = $region40
      $region39: #{fpa_v2_forward.9} parent=31 // pred_region
        %v1595 = vld [vmem:[#allocation2] sm:$0xff]
        %v1596 = vld [vmem:[#allocation2 + $0x8] sm:$0xff]
        %v1597 = vld [vmem:[#allocation2 + $0x10] sm:$0xff]
        %v1598 = vld [vmem:[#allocation2 + $0x18] sm:$0xff]
        %v1599 = vadd.f32 %v1595, %v1569
        %v1600 = vadd.f32 %v1596, %v1572
        %v1601 = vadd.f32 %v1597, %v1577
        %v1602 = vadd.f32 %v1598, %v1580
        %1603 = vst [vmem:[#allocation2] sm:$0xff] %v1599
        %1604 = vst [vmem:[#allocation2 + $0x8] sm:$0xff] %v1600
        %1605 = vst [vmem:[#allocation2 + $0x10] sm:$0xff] %v1601
        %1606 = vst [vmem:[#allocation2 + $0x18] sm:$0xff] %v1602
      $region40: #{fpa_v2_forward.9} parent=31 // pred_fallthru
        _
      // Predicated region
      $region41: #{fpa_v2_forward.9} parent=31 // pred_check
        %p1607 = pneg %p1583
      $region42: #{fpa_v2_forward.9} parent=31 // pred_check_branch
        %1609 = sbr.rel (%p1607) target = $region44
      $region43: #{fpa_v2_forward.9} parent=31 // pred_region
        %v1610 = vld [vmem:[#allocation2] sm:$0xff]
        %v1611 = vld [vmem:[#allocation2 + $0x8] sm:$0xff]
        %v1612 = vld [vmem:[#allocation2 + $0x10] sm:$0xff]
        %v1613 = vld [vmem:[#allocation2 + $0x18] sm:$0xff]
        %v1614 = vld [vmem:[%s2] sm:$0xff]
        %v1615 = vld [vmem:[%s2 + $0x8] sm:$0xff]
        %v1616 = vld [vmem:[%s2 + $0x10] sm:$0xff]
        %v1617 = vld [vmem:[%s2 + $0x18] sm:$0xff]
        %1619 = vset.pattern.permute.xlu0 0
        %1620 = vperm.xlu0 %1619, %v1614
        %v1621 = vpop.permute.xlu0 %1620
        %1624 = vset.pattern.permute.xlu0 0
        %1625 = vperm.xlu0 %1624, %v1615
        %v1626 = vpop.permute.xlu0 %1625
        %1629 = vset.pattern.permute.xlu0 0
        %1630 = vperm.xlu0 %1629, %v1616
        %v1631 = vpop.permute.xlu0 %1630
        %1634 = vset.pattern.permute.xlu0 0
        %1635 = vperm.xlu0 %1634, %v1617
        %v1636 = vpop.permute.xlu0 %1635
        %v1638 = vadd.f32 %v1610, %v1621
        %v1639 = vadd.f32 %v1611, %v1626
        %v1640 = vadd.f32 %v1612, %v1631
        %v1641 = vadd.f32 %v1613, %v1636
        %v1642 = vmax.f32 %v1638, 0.0
        %v1643 = vmax.f32 %v1639, 0.0
        %v1644 = vmax.f32 %v1640, 0.0
        %v1645 = vmax.f32 %v1641, 0.0
        %v1646 = vpack.c.bf16 %v1643, %v1642
        %v1647 = vpack.c.bf16 %v1645, %v1644
        %v1650 = vunpack.c.l.b16 %v1646
        %v1651 = vunpack.c.h.b16 %v1646
        %v1652 = vunpack.c.l.b16 %v1647
        %v1653 = vunpack.c.h.b16 %v1647
        %v1654 = vpack.c.b16 %v1650, %v1650
        %v1655 = vpack.c.b16 %v1651, %v1651
        %v1656 = vpack.c.b16 %v1652, %v1652
        %v1657 = vpack.c.b16 %v1653, %v1653
        %1662 = vst [vmem:[%s246] sm:$0xf] %v1654
        %1663 = vst [vmem:[%s246 + $0x4] sm:$0xf] %v1655
        %1664 = vst [vmem:[%s246 + $0x8] sm:$0xf] %v1656
        %1665 = vst [vmem:[%s246 + $0xc] sm:$0xf] %v1657
      $region44: #{fpa_v2_forward.9} parent=31 // pred_fallthru
        _
      %p1666 = scmp.lt.s32.totalorder %s19, 1
      %s1667 = scalar_select %p1666, %s19, 1
      %p1668 = scmp.lt.s32.totalorder %s20, 0
      %s1669 = scalar_select %p1668, %s20, 0
      %s1670 = smul.addr %s1667, 4
      %s1671 = sadd.s32 %s1669, %s1670
      %s1672 = smul.addr %s1671, 4
      %s1673 = scalar_lea.vmem %s3, %s1672
      // Predicated region
      $region45: #{fpa_v2_forward.9} parent=31 // pred_check
        %p1674 = pneg %p130
      $region46: #{fpa_v2_forward.9} parent=31 // pred_check_branch
        %1676 = sbr.rel (%p1674) target = $region48
      $region47: #{fpa_v2_forward.9} parent=31 // pred_region
        _
      $region48: #{fpa_v2_forward.9} parent=31 // pred_fallthru
        _
    $region32: #{fpa_v2_forward.9} parent=5 // pred_fallthru
      _
    %p1677 = scmp.le.s32.totalorder 2, %s9
    // Predicated region
    $region49: #{fpa_v2_forward.9} parent=5 // pred_check
      %p1678 = pneg %p1677
    $region50: #{fpa_v2_forward.9} parent=5 // pred_check_branch
      %1680 = sbr.rel (%p1678) target = $region52
    $region51: #{fpa_v2_forward.9} parent=5 // pred_region
      %s1681 = ssub.s32 %s9, 2
      // Predicated region
      $region53: #{fpa_v2_forward.9} parent=51 // pred_check
        %p1682 = pneg %p136
      $region54: #{fpa_v2_forward.9} parent=51 // pred_check_branch
        %1684 = sbr.rel (%p1682) target = $region56
      $region55: #{fpa_v2_forward.9} parent=51 // pred_region
        %p1685 = scmp.lt.s32.totalorder %s22, 1
        %s1686 = scalar_select %p1685, %s22, 1
        %p1687 = scmp.lt.s32.totalorder %s23, 0
        %s1688 = scalar_select %p1687, %s23, 0
        %s1689 = smul.addr %s1686, 4
        %s1690 = sadd.s32 %s1688, %s1689
        %s1691 = smul.addr %s1690, 4
        %s1692 = scalar_lea.vmem %s3, %s1691
      $region56: #{fpa_v2_forward.9} parent=51 // pred_fallthru
        _
    $region52: #{fpa_v2_forward.9} parent=5 // pred_fallthru
      _
  $region6: #{fpa_v2_forward.9} parent=0 // loop_footer
    %s13 = sadd.s32 1, %s9
  $region7: #{fpa_v2_forward.9} parent=0 // loop_footer_branch
    %8 = sbr.rel target = $region3
  $region8: #{fpa_v2_forward.9} parent=0 // loop_exit
    _

// kernel: fpa_v2_forward.11
$region0: #{fpa_v2_forward.11}
  #allocation0 [shape = 'u32[]', space=smem, size = 0x4, offset = 0x4, fixed_abs, tag = 'smem constant byte address 0x4 - core index']
  #allocation1 [shape = 'u32[144,128]{1,0:T(1,128)}', space=vmem, size = 0x12000, scoped, tag = 'internal scratch']
  #allocation2 [shape = 'f32[32,128]{1,0:T(8,128)}', space=vmem, size = 0x4000, scoped, tag = 'scratch operand']
  %s0 = inlined_call_operand.vmem [shape: bf16[2,896,128], index: 0, kind: input, shape index: {}]
  %s1 = inlined_call_operand.vmem [shape: bf16[32,896], index: 1, kind: input, shape index: {}]
  %s2 = inlined_call_operand.vmem [shape: f32[32,1], index: 2, kind: input, shape index: {}]
  %s3 = inlined_call_operand.vmem [shape: bf16[2,32,128], index: 3, kind: output, shape index: {}]
  %s4 = sld [smem:[#allocation0]]
  $region57: #{fpa_v2_forward.11} parent=0
    _
  %s6 = ssub.s32 1, %s4
  %s7 = scalar_select 0, %s6, %s4
  loop: start=0, step=1, limit=4
  $region2: #{fpa_v2_forward.11} parent=0 // loop_pre_header
    _
  $region3: #{fpa_v2_forward.11} parent=0 // loop_header
    %s9 = sphi 0, %s13
    %p10 = scmp.ge.s32.totalorder %s9, 4
    %s16 = sphi 0, %s35
    %s17 = sphi 0, %s31
    %s18 = sphi 0, %s27
    %s19 = sphi 0, %s16
    %s20 = sphi 0, %s17
    %s21 = sphi 0, %s18
    %s22 = sphi 0, %s19
    %s23 = sphi 0, %s20
    %s24 = sphi 0, %s21
    %s42 = sphi 0, %s44
    %s45 = sphi 0, %s42
    %s46 = sphi 0, %s45
    %s62 = sphi 0, %s46
    %s68 = sphi 0, %s70
    %s71 = sphi 0, %s68
    %s72 = sphi 0, %s71
    %s88 = sphi 0, %s72
    %s92 = sphi 0, %s92
    %s94 = sphi 0, %s92
    %s95 = sphi 0, %s94
    %s109 = sphi 0, %s95
    %s117 = sphi 0, %s119
    %s120 = sphi 0, %s117
    %s121 = sphi 0, %s120
    %s137 = sphi 0, %s121
  $region4: #{fpa_v2_forward.11} parent=0 // loop_header_branch
    %12 = sbr.rel (%p10) target = $region8
  $region5: #{fpa_v2_forward.11} parent=0 // loop_body
    %s14 = ssub.s32 %s9, 1
    %s15 = ssub.s32 %s9, 2
    %s25 = sadd.s32 1, %s18
    %p26 = scmp.ge.s32.totalorder %s25, 1
    %s27 = scalar_select %p26, 0, %s25
    %s28 = sadd.s32 1, %s17
    %s29 = scalar_select %p26, %s28, %s17
    %p30 = scmp.ge.s32.totalorder %s29, 1
    %s31 = scalar_select %p30, 0, %s29
    %s32 = sadd.s32 1, %s16
    %s33 = scalar_select %p30, %s32, %s16
    %p34 = scmp.ge.s32.totalorder %s33, 2
    %s35 = scalar_select %p34, 0, %s33
    %s36 = ssub.s32 %s16, %s35
    %s37 = ssub.s32 %s18, %s27
    %s38 = sor.u32 %s36, %s37
    %s39 = ssub.s32 %s17, %s31
    %s40 = sor.u32 %s38, %s39
    %p41 = scmp.eq.s32.totalorder %s40, 0
    %s43 = sadd.s32 %s42, 1
    %s44 = scalar_select %p41, %s42, %s43
    %p47 = pneg %p41
    %p48 = scmp.eq.s32.totalorder %s9, 1
    %p49 = por %p47, %p48
    %p50 = scmp.ne.s32.totalorder %s42, %s45
    %p51 = scmp.eq.s32.totalorder %s9, 0
    %p52 = por %p50, %p51
    %p53 = scmp.ne.s32.totalorder %s42, %s45
    %p54 = scmp.eq.s32.totalorder %s14, 1
    %p55 = por %p53, %p54
    %p56 = scmp.ne.s32.totalorder %s45, %s46
    %p57 = scmp.eq.s32.totalorder %s14, 0
    %p58 = por %p56, %p57
    %p59 = scmp.ne.s32.totalorder %s45, %s46
    %p60 = scmp.eq.s32.totalorder %s15, 1
    %p61 = por %p59, %p60
    %p63 = scmp.ne.s32.totalorder %s46, %s62
    %p64 = scmp.eq.s32.totalorder %s15, 0
    %p65 = por %p63, %p64
    %s66 = ssub.s32 %s18, %s27
    %p67 = scmp.eq.s32.totalorder %s66, 0
    %s69 = sadd.s32 %s68, 1
    %s70 = scalar_select %p67, %s68, %s69
    %p73 = pneg %p67
    %p74 = scmp.eq.s32.totalorder %s9, 1
    %p75 = por %p73, %p74
    %p76 = scmp.ne.s32.totalorder %s68, %s71
    %p77 = scmp.eq.s32.totalorder %s9, 0
    %p78 = por %p76, %p77
    %p79 = scmp.ne.s32.totalorder %s68, %s71
    %p80 = scmp.eq.s32.totalorder %s14, 1
    %p81 = por %p79, %p80
    %p82 = scmp.ne.s32.totalorder %s71, %s72
    %p83 = scmp.eq.s32.totalorder %s14, 0
    %p84 = por %p82, %p83
    %p85 = scmp.ne.s32.totalorder %s71, %s72
    %p86 = scmp.eq.s32.totalorder %s15, 1
    %p87 = por %p85, %p86
    %p89 = scmp.ne.s32.totalorder %s72, %s88
    %p90 = scmp.eq.s32.totalorder %s15, 0
    %p91 = por %p89, %p90
    %s93 = sadd.s32 %s92, 1
    %p96 = scmp.eq.s32.totalorder %s9, 1
    %p97 = scmp.ne.s32.totalorder %s92, %s94
    %p98 = scmp.eq.s32.totalorder %s9, 0
    %p99 = por %p97, %p98
    %p100 = scmp.ne.s32.totalorder %s92, %s94
    %p101 = scmp.eq.s32.totalorder %s14, 1
    %p102 = por %p100, %p101
    %p103 = scmp.ne.s32.totalorder %s94, %s95
    %p104 = scmp.eq.s32.totalorder %s14, 0
    %p105 = por %p103, %p104
    %p106 = scmp.ne.s32.totalorder %s94, %s95
    %p107 = scmp.eq.s32.totalorder %s15, 1
    %p108 = por %p106, %p107
    %p110 = scmp.ne.s32.totalorder %s95, %s109
    %p111 = scmp.eq.s32.totalorder %s15, 0
    %p112 = por %p110, %p111
    %s113 = ssub.s32 %s16, %s35
    %s114 = ssub.s32 %s17, %s31
    %s115 = sor.u32 %s113, %s114
    %p116 = scmp.eq.s32.totalorder %s115, 0
    %s118 = sadd.s32 %s117, 1
    %s119 = scalar_select %p116, %s117, %s118
    %p122 = pneg %p116
    %p123 = scmp.eq.s32.totalorder %s9, 1
    %p124 = por %p122, %p123
    %p125 = scmp.ne.s32.totalorder %s117, %s120
    %p126 = scmp.eq.s32.totalorder %s9, 0
    %p127 = por %p125, %p126
    %p128 = scmp.ne.s32.totalorder %s117, %s120
    %p129 = scmp.eq.s32.totalorder %s14, 1
    %p130 = por %p128, %p129
    %p131 = scmp.ne.s32.totalorder %s120, %s121
    %p132 = scmp.eq.s32.totalorder %s14, 0
    %p133 = por %p131, %p132
    %p134 = scmp.ne.s32.totalorder %s120, %s121
    %p135 = scmp.eq.s32.totalorder %s15, 1
    %p136 = por %p134, %p135
    %p138 = scmp.ne.s32.totalorder %s121, %s137
    %p139 = scmp.eq.s32.totalorder %s15, 0
    %p140 = por %p138, %p139
    %p141 = scmp.le.s32.totalorder 1, %s9
    %p142 = scmp.lt.s32.totalorder %s9, 3
    %p143 = pnand %p141, %p142
    %p144 = pneg %p143
    // Predicated region
    $region9: #{fpa_v2_forward.11} parent=5 // pred_check
      _
    $region10: #{fpa_v2_forward.11} parent=5 // pred_check_branch
      %146 = sbr.rel (%p143) target = $region12
    $region11: #{fpa_v2_forward.11} parent=5 // pred_region
      %s147 = ssub.s32 %s9, 1
      // Predicated region
      $region13: #{fpa_v2_forward.11} parent=11 // pred_check
        %p148 = pneg %p84
      $region14: #{fpa_v2_forward.11} parent=11 // pred_check_branch
        %150 = sbr.rel (%p148) target = $region16
      $region15: #{fpa_v2_forward.11} parent=11 // pred_region
        %s151 = smul.u32 7, %s21
        %p152 = scmp.lt.s32.totalorder %s151, 6
        %s153 = scalar_select %p152, %s151, 6
        %s154 = smul.addr %s153, 4
        %s155 = scalar_lea.vmem %s1, %s154
        %s156 = smul.u32 7, %s21
      $region16: #{fpa_v2_forward.11} parent=11 // pred_fallthru
        _
      // Predicated region
      $region17: #{fpa_v2_forward.11} parent=11 // pred_check
        %p157 = pneg %p105
      $region18: #{fpa_v2_forward.11} parent=11 // pred_check_branch
        %159 = sbr.rel (%p157) target = $region20
      $region19: #{fpa_v2_forward.11} parent=11 // pred_region
        _
      $region20: #{fpa_v2_forward.11} parent=11 // pred_fallthru
        _
    $region12: #{fpa_v2_forward.11} parent=5 // pred_fallthru
      _
    %p160 = scmp.lt.s32.totalorder %s9, 2
    // Predicated region
    $region21: #{fpa_v2_forward.11} parent=5 // pred_check
      %p161 = pneg %p160
    $region22: #{fpa_v2_forward.11} parent=5 // pred_check_branch
      %163 = sbr.rel (%p161) target = $region24
    $region23: #{fpa_v2_forward.11} parent=5 // pred_region
      // Predicated region
      $region25: #{fpa_v2_forward.11} parent=23 // pred_check
        %p164 = pneg %p52
      $region26: #{fpa_v2_forward.11} parent=23 // pred_check_branch
        %166 = sbr.rel (%p164) target = $region28
      $region27: #{fpa_v2_forward.11} parent=23 // pred_region
        %s167 = smul.u32 112, %s18
        %p168 = scmp.lt.s32.totalorder %s16, 1
        %s169 = scalar_select %p168, %s16, 1
        %p170 = scmp.lt.s32.totalorder %s167, 111
        %s171 = scalar_select %p170, %s167, 111
        %p172 = scmp.lt.s32.totalorder %s17, 0
        %s173 = scalar_select %p172, %s17, 0
        %s174 = sadd.s32 %s173, %s171
        %s175 = smul.addr %s169, 112
        %s176 = sadd.s32 %s174, %s175
        %s177 = smul.addr %s176, 4
        %s178 = scalar_lea.vmem %s0, %s177
        %s179 = smul.u32 112, %s18
      $region28: #{fpa_v2_forward.11} parent=23 // pred_fallthru
        _
    $region24: #{fpa_v2_forward.11} parent=5 // pred_fallthru
      _
    %p180 = scmp.le.s32.totalorder 1, %s9
    %p181 = scmp.lt.s32.totalorder %s9, 3
    %p182 = pnand %p180, %p181
    %p183 = pneg %p182
    // Predicated region
    $region29: #{fpa_v2_forward.11} parent=5 // pred_check
      _
    $region30: #{fpa_v2_forward.11} parent=5 // pred_check_branch
      %185 = sbr.rel (%p182) target = $region32
    $region31: #{fpa_v2_forward.11} parent=5 // pred_region
      %s186 = ssub.s32 %s9, 1
      %s187 = smul.u32 112, %s21
      %p188 = scmp.lt.s32.totalorder %s19, 1
      %s189 = scalar_select %p188, %s19, 1
      %p190 = scmp.lt.s32.totalorder %s187, 111
      %s191 = scalar_select %p190, %s187, 111
      %p192 = scmp.lt.s32.totalorder %s20, 0
      %s193 = scalar_select %p192, %s20, 0
      %s194 = sadd.s32 %s193, %s191
      %s195 = smul.addr %s189, 112
      %s196 = sadd.s32 %s194, %s195
      %s197 = smul.addr %s196, 4
      %s198 = scalar_lea.vmem %s0, %s197
      %p199 = pneg %p58
      %p200 = pneg %p55
      %s201 = smul.u32 7, %s21
      %p202 = scmp.lt.s32.totalorder %s201, 6
      %s203 = scalar_select %p202, %s201, 6
      %s204 = smul.addr %s203, 4
      %s205 = scalar_lea.vmem %s1, %s204
      %p206 = pneg %p84
      %p207 = pneg %p81
      %p208 = pneg %p105
      %p209 = pneg %p102
      %p210 = pneg %p133
      %p211 = pneg %p130
      %p212 = scmp.lt.s32.totalorder %s19, 1
      %s213 = scalar_select %p212, %s19, 1
      %p214 = scmp.lt.s32.totalorder %s20, 0
      %s215 = scalar_select %p214, %s20, 0
      %s216 = smul.addr %s213, 4
      %s217 = sadd.s32 %s215, %s216
      %s218 = smul.addr %s217, 4
      %s219 = scalar_lea.vmem %s3, %s218
      %s220 = smul.u32 112, %s21
      %p221 = scmp.lt.s32.totalorder %s19, 1
      %s222 = scalar_select %p221, %s19, 1
      %p223 = scmp.lt.s32.totalorder %s220, 111
      %s224 = scalar_select %p223, %s220, 111
      %p225 = scmp.lt.s32.totalorder %s20, 0
      %s226 = scalar_select %p225, %s20, 0
      %s227 = sadd.s32 %s226, %s224
      %s228 = smul.addr %s222, 112
      %s229 = sadd.s32 %s227, %s228
      %s230 = smul.addr %s229, 4
      %s231 = scalar_lea.vmem %s0, %s230
      %s232 = smul.u32 112, %s21
      %s233 = smul.u32 7, %s21
      %p234 = scmp.lt.s32.totalorder %s233, 6
      %s235 = scalar_select %p234, %s233, 6
      %s236 = smul.addr %s235, 4
      %s237 = scalar_lea.vmem %s1, %s236
      %s238 = smul.u32 7, %s21
      %p239 = scmp.lt.s32.totalorder %s19, 1
      %s240 = scalar_select %p239, %s19, 1
      %p241 = scmp.lt.s32.totalorder %s20, 0
      %s242 = scalar_select %p241, %s20, 0
      %s243 = smul.addr %s240, 4
      %s244 = sadd.s32 %s242, %s243
      %s245 = smul.addr %s244, 4
      %s246 = scalar_lea.vmem %s3, %s245
      %v248 = vld [vmem:[%s237] sm:$0xff]
      %v249 = vld [vmem:[%s237 + $0x8] sm:$0xff]
      %v250 = vld [vmem:[%s237 + $0x10] sm:$0xff]
      %v251 = vld [vmem:[%s237 + $0x18] sm:$0xf]
      %v252 = vld [vmem:[%s237 + $0x1c] sm:$0xff]
      %v253 = vld [vmem:[%s237 + $0x24] sm:$0xff]
      %v254 = vld [vmem:[%s237 + $0x2c] sm:$0xff]
      %v255 = vld [vmem:[%s237 + $0x34] sm:$0xf]
      %v256 = vld [vmem:[%s237 + $0x38] sm:$0xff]
      %v257 = vld [vmem:[%s237 + $0x40] sm:$0xff]
      %v258 = vld [vmem:[%s237 + $0x48] sm:$0xff]
      %v259 = vld [vmem:[%s237 + $0x50] sm:$0xf]
      %v260 = vld [vmem:[%s237 + $0x54] sm:$0xff]
      %v261 = vld [vmem:[%s237 + $0x5c] sm:$0xff]
      %v262 = vld [vmem:[%s237 + $0x64] sm:$0xff]
      %v263 = vld [vmem:[%s237 + $0x6c] sm:$0xf]
      %v264 = vld [vmem:[%s231] sm:$0xf]
      %v265 = vld [vmem:[%s231 + $0x4] sm:$0xf]
      %v266 = vld [vmem:[%s231 + $0x8] sm:$0xf]
      %v267 = vld [vmem:[%s231 + $0xc] sm:$0xf]
      %v268 = vld [vmem:[%s231 + $0x10] sm:$0xf]
      %v269 = vld [vmem:[%s231 + $0x14] sm:$0xf]
      %v270 = vld [vmem:[%s231 + $0x18] sm:$0xf]
      %v271 = vld [vmem:[%s231 + $0x1c] sm:$0xf]
      %v272 = vld [vmem:[%s231 + $0x20] sm:$0xf]
      %v273 = vld [vmem:[%s231 + $0x24] sm:$0xf]
      %v274 = vld [vmem:[%s231 + $0x28] sm:$0xf]
      %v275 = vld [vmem:[%s231 + $0x2c] sm:$0xf]
      %v276 = vld [vmem:[%s231 + $0x30] sm:$0xf]
      %v277 = vld [vmem:[%s231 + $0x34] sm:$0xf]
      %v278 = vld [vmem:[%s231 + $0x38] sm:$0xf]
      %v279 = vld [vmem:[%s231 + $0x3c] sm:$0xf]
      %v280 = vld [vmem:[%s231 + $0x40] sm:$0xf]
      %v281 = vld [vmem:[%s231 + $0x44] sm:$0xf]
      %v282 = vld [vmem:[%s231 + $0x48] sm:$0xf]
      %v283 = vld [vmem:[%s231 + $0x4c] sm:$0xf]
      %v284 = vld [vmem:[%s231 + $0x50] sm:$0xf]
      %v285 = vld [vmem:[%s231 + $0x54] sm:$0xf]
      %v286 = vld [vmem:[%s231 + $0x58] sm:$0xf]
      %v287 = vld [vmem:[%s231 + $0x5c] sm:$0xf]
      %v288 = vld [vmem:[%s231 + $0x60] sm:$0xf]
      %v289 = vld [vmem:[%s231 + $0x64] sm:$0xf]
      %v290 = vld [vmem:[%s231 + $0x68] sm:$0xf]
      %v291 = vld [vmem:[%s231 + $0x6c] sm:$0xf]
      %v292 = vld [vmem:[%s231 + $0x70] sm:$0xf]
      %v293 = vld [vmem:[%s231 + $0x74] sm:$0xf]
      %v294 = vld [vmem:[%s231 + $0x78] sm:$0xf]
      %v295 = vld [vmem:[%s231 + $0x7c] sm:$0xf]
      %v296 = vld [vmem:[%s231 + $0x80] sm:$0xf]
      %v297 = vld [vmem:[%s231 + $0x84] sm:$0xf]
      %v298 = vld [vmem:[%s231 + $0x88] sm:$0xf]
      %v299 = vld [vmem:[%s231 + $0x8c] sm:$0xf]
      %v300 = vld [vmem:[%s231 + $0x90] sm:$0xf]
      %v301 = vld [vmem:[%s231 + $0x94] sm:$0xf]
      %v302 = vld [vmem:[%s231 + $0x98] sm:$0xf]
      %v303 = vld [vmem:[%s231 + $0x9c] sm:$0xf]
      %v304 = vld [vmem:[%s231 + $0xa0] sm:$0xf]
      %v305 = vld [vmem:[%s231 + $0xa4] sm:$0xf]
      %v306 = vld [vmem:[%s231 + $0xa8] sm:$0xf]
      %v307 = vld [vmem:[%s231 + $0xac] sm:$0xf]
      %v308 = vld [vmem:[%s231 + $0xb0] sm:$0xf]
      %v309 = vld [vmem:[%s231 + $0xb4] sm:$0xf]
      %v310 = vld [vmem:[%s231 + $0xb8] sm:$0xf]
      %v311 = vld [vmem:[%s231 + $0xbc] sm:$0xf]
      %v312 = vld [vmem:[%s231 + $0xc0] sm:$0xf]
      %v313 = vld [vmem:[%s231 + $0xc4] sm:$0xf]
      %v314 = vld [vmem:[%s231 + $0xc8] sm:$0xf]
      %v315 = vld [vmem:[%s231 + $0xcc] sm:$0xf]
      %v316 = vld [vmem:[%s231 + $0xd0] sm:$0xf]
      %v317 = vld [vmem:[%s231 + $0xd4] sm:$0xf]
      %v318 = vld [vmem:[%s231 + $0xd8] sm:$0xf]
      %v319 = vld [vmem:[%s231 + $0xdc] sm:$0xf]
      %v320 = vld [vmem:[%s231 + $0xe0] sm:$0xf]
      %v321 = vld [vmem:[%s231 + $0xe4] sm:$0xf]
      %v322 = vld [vmem:[%s231 + $0xe8] sm:$0xf]
      %v323 = vld [vmem:[%s231 + $0xec] sm:$0xf]
      %v324 = vld [vmem:[%s231 + $0xf0] sm:$0xf]
      %v325 = vld [vmem:[%s231 + $0xf4] sm:$0xf]
      %v326 = vld [vmem:[%s231 + $0xf8] sm:$0xf]
      %v327 = vld [vmem:[%s231 + $0xfc] sm:$0xf]
      %v328 = vld [vmem:[%s231 + $0x100] sm:$0xf]
      %v329 = vld [vmem:[%s231 + $0x104] sm:$0xf]
      %v330 = vld [vmem:[%s231 + $0x108] sm:$0xf]
      %v331 = vld [vmem:[%s231 + $0x10c] sm:$0xf]
      %v332 = vld [vmem:[%s231 + $0x110] sm:$0xf]
      %v333 = vld [vmem:[%s231 + $0x114] sm:$0xf]
      %v334 = vld [vmem:[%s231 + $0x118] sm:$0xf]
      %v335 = vld [vmem:[%s231 + $0x11c] sm:$0xf]
      %v336 = vld [vmem:[%s231 + $0x120] sm:$0xf]
      %v337 = vld [vmem:[%s231 + $0x124] sm:$0xf]
      %v338 = vld [vmem:[%s231 + $0x128] sm:$0xf]
      %v339 = vld [vmem:[%s231 + $0x12c] sm:$0xf]
      %v340 = vld [vmem:[%s231 + $0x130] sm:$0xf]
      %v341 = vld [vmem:[%s231 + $0x134] sm:$0xf]
      %v342 = vld [vmem:[%s231 + $0x138] sm:$0xf]
      %v343 = vld [vmem:[%s231 + $0x13c] sm:$0xf]
      %v344 = vld [vmem:[%s231 + $0x140] sm:$0xf]
      %v345 = vld [vmem:[%s231 + $0x144] sm:$0xf]
      %v346 = vld [vmem:[%s231 + $0x148] sm:$0xf]
      %v347 = vld [vmem:[%s231 + $0x14c] sm:$0xf]
      %v348 = vld [vmem:[%s231 + $0x150] sm:$0xf]
      %v349 = vld [vmem:[%s231 + $0x154] sm:$0xf]
      %v350 = vld [vmem:[%s231 + $0x158] sm:$0xf]
      %v351 = vld [vmem:[%s231 + $0x15c] sm:$0xf]
      %v352 = vld [vmem:[%s231 + $0x160] sm:$0xf]
      %v353 = vld [vmem:[%s231 + $0x164] sm:$0xf]
      %v354 = vld [vmem:[%s231 + $0x168] sm:$0xf]
      %v355 = vld [vmem:[%s231 + $0x16c] sm:$0xf]
      %v356 = vld [vmem:[%s231 + $0x170] sm:$0xf]
      %v357 = vld [vmem:[%s231 + $0x174] sm:$0xf]
      %v358 = vld [vmem:[%s231 + $0x178] sm:$0xf]
      %v359 = vld [vmem:[%s231 + $0x17c] sm:$0xf]
      %v360 = vld [vmem:[%s231 + $0x180] sm:$0xf]
      %v361 = vld [vmem:[%s231 + $0x184] sm:$0xf]
      %v362 = vld [vmem:[%s231 + $0x188] sm:$0xf]
      %v363 = vld [vmem:[%s231 + $0x18c] sm:$0xf]
      %v364 = vld [vmem:[%s231 + $0x190] sm:$0xf]
      %v365 = vld [vmem:[%s231 + $0x194] sm:$0xf]
      %v366 = vld [vmem:[%s231 + $0x198] sm:$0xf]
      %v367 = vld [vmem:[%s231 + $0x19c] sm:$0xf]
      %v368 = vld [vmem:[%s231 + $0x1a0] sm:$0xf]
      %v369 = vld [vmem:[%s231 + $0x1a4] sm:$0xf]
      %v370 = vld [vmem:[%s231 + $0x1a8] sm:$0xf]
      %v371 = vld [vmem:[%s231 + $0x1ac] sm:$0xf]
      %v372 = vld [vmem:[%s231 + $0x1b0] sm:$0xf]
      %v373 = vld [vmem:[%s231 + $0x1b4] sm:$0xf]
      %v374 = vld [vmem:[%s231 + $0x1b8] sm:$0xf]
      %v375 = vld [vmem:[%s231 + $0x1bc] sm:$0xf]
      %v392 = vunpack.c.l.b16 %v248
      %v393 = vunpack.c.h.b16 %v248
      %v394 = vunpack.c.l.b16 %v249
      %v395 = vunpack.c.h.b16 %v249
      %v396 = vunpack.c.l.b16 %v250
      %v397 = vunpack.c.h.b16 %v250
      %v398 = vunpack.c.l.b16 %v251
      %v399 = vunpack.c.l.b16 %v252
      %v400 = vunpack.c.h.b16 %v252
      %v401 = vunpack.c.l.b16 %v253
      %v402 = vunpack.c.h.b16 %v253
      %v403 = vunpack.c.l.b16 %v254
      %v404 = vunpack.c.h.b16 %v254
      %v405 = vunpack.c.l.b16 %v255
      %v406 = vunpack.c.l.b16 %v256
      %v407 = vunpack.c.h.b16 %v256
      %v408 = vunpack.c.l.b16 %v257
      %v409 = vunpack.c.h.b16 %v257
      %v410 = vunpack.c.l.b16 %v258
      %v411 = vunpack.c.h.b16 %v258
      %v412 = vunpack.c.l.b16 %v259
      %v413 = vunpack.c.l.b16 %v260
      %v414 = vunpack.c.h.b16 %v260
      %v415 = vunpack.c.l.b16 %v261
      %v416 = vunpack.c.h.b16 %v261
      %v417 = vunpack.c.l.b16 %v262
      %v418 = vunpack.c.h.b16 %v262
      %v419 = vunpack.c.l.b16 %v263
      %v420 = vpack.c.b16 %v399, %v392
      %v421 = vpack.c.b16 %v400, %v393
      %v422 = vpack.c.b16 %v401, %v394
      %v423 = vpack.c.b16 %v402, %v395
      %v424 = vpack.c.b16 %v403, %v396
      %v425 = vpack.c.b16 %v404, %v397
      %v426 = vpack.c.b16 %v405, %v398
      %v427 = vpack.c.b16 %v413, %v406
      %v428 = vpack.c.b16 %v414, %v407
      %v429 = vpack.c.b16 %v415, %v408
      %v430 = vpack.c.b16 %v416, %v409
      %v431 = vpack.c.b16 %v417, %v410
      %v432 = vpack.c.b16 %v418, %v411
      %v433 = vpack.c.b16 %v419, %v412
      %v560 = vunpack.c.l.b16 %v264
      %v561 = vunpack.c.l.b16 %v265
      %v562 = vunpack.c.l.b16 %v266
      %v563 = vunpack.c.l.b16 %v267
      %v564 = vunpack.c.l.b16 %v268
      %v565 = vunpack.c.l.b16 %v269
      %v566 = vunpack.c.l.b16 %v270
      %v567 = vunpack.c.l.b16 %v271
      %v568 = vunpack.c.l.b16 %v272
      %v569 = vunpack.c.l.b16 %v273
      %v570 = vunpack.c.l.b16 %v274
      %v571 = vunpack.c.l.b16 %v275
      %v572 = vunpack.c.l.b16 %v276
      %v573 = vunpack.c.l.b16 %v277
      %v574 = vunpack.c.l.b16 %v278
      %v575 = vunpack.c.l.b16 %v279
      %v576 = vunpack.c.l.b16 %v280
      %v577 = vunpack.c.l.b16 %v281
      %v578 = vunpack.c.l.b16 %v282
      %v579 = vunpack.c.l.b16 %v283
      %v580 = vunpack.c.l.b16 %v284
      %v581 = vunpack.c.l.b16 %v285
      %v582 = vunpack.c.l.b16 %v286
      %v583 = vunpack.c.l.b16 %v287
      %v584 = vunpack.c.l.b16 %v288
      %v585 = vunpack.c.l.b16 %v289
      %v586 = vunpack.c.l.b16 %v290
      %v587 = vunpack.c.l.b16 %v291
      %v588 = vunpack.c.l.b16 %v292
      %v589 = vunpack.c.l.b16 %v293
      %v590 = vunpack.c.l.b16 %v294
      %v591 = vunpack.c.l.b16 %v295
      %v592 = vunpack.c.l.b16 %v296
      %v593 = vunpack.c.l.b16 %v297
      %v594 = vunpack.c.l.b16 %v298
      %v595 = vunpack.c.l.b16 %v299
      %v596 = vunpack.c.l.b16 %v300
      %v597 = vunpack.c.l.b16 %v301
      %v598 = vunpack.c.l.b16 %v302
      %v599 = vunpack.c.l.b16 %v303
      %v600 = vunpack.c.l.b16 %v304
      %v601 = vunpack.c.l.b16 %v305
      %v602 = vunpack.c.l.b16 %v306
      %v603 = vunpack.c.l.b16 %v307
      %v604 = vunpack.c.l.b16 %v308
      %v605 = vunpack.c.l.b16 %v309
      %v606 = vunpack.c.l.b16 %v310
      %v607 = vunpack.c.l.b16 %v311
      %v608 = vunpack.c.l.b16 %v312
      %v609 = vunpack.c.l.b16 %v313
      %v610 = vunpack.c.l.b16 %v314
      %v611 = vunpack.c.l.b16 %v315
      %v612 = vunpack.c.l.b16 %v316
      %v613 = vunpack.c.l.b16 %v317
      %v614 = vunpack.c.l.b16 %v318
      %v615 = vunpack.c.l.b16 %v319
      %v616 = vunpack.c.l.b16 %v320
      %v617 = vunpack.c.l.b16 %v321
      %v618 = vunpack.c.l.b16 %v322
      %v619 = vunpack.c.l.b16 %v323
      %v620 = vunpack.c.l.b16 %v324
      %v621 = vunpack.c.l.b16 %v325
      %v622 = vunpack.c.l.b16 %v326
      %v623 = vunpack.c.l.b16 %v327
      %v624 = vunpack.c.l.b16 %v328
      %v625 = vunpack.c.l.b16 %v329
      %v626 = vunpack.c.l.b16 %v330
      %v627 = vunpack.c.l.b16 %v331
      %v628 = vunpack.c.l.b16 %v332
      %v629 = vunpack.c.l.b16 %v333
      %v630 = vunpack.c.l.b16 %v334
      %v631 = vunpack.c.l.b16 %v335
      %v632 = vunpack.c.l.b16 %v336
      %v633 = vunpack.c.l.b16 %v337
      %v634 = vunpack.c.l.b16 %v338
      %v635 = vunpack.c.l.b16 %v339
      %v636 = vunpack.c.l.b16 %v340
      %v637 = vunpack.c.l.b16 %v341
      %v638 = vunpack.c.l.b16 %v342
      %v639 = vunpack.c.l.b16 %v343
      %v640 = vunpack.c.l.b16 %v344
      %v641 = vunpack.c.l.b16 %v345
      %v642 = vunpack.c.l.b16 %v346
      %v643 = vunpack.c.l.b16 %v347
      %v644 = vunpack.c.l.b16 %v348
      %v645 = vunpack.c.l.b16 %v349
      %v646 = vunpack.c.l.b16 %v350
      %v647 = vunpack.c.l.b16 %v351
      %v648 = vunpack.c.l.b16 %v352
      %v649 = vunpack.c.l.b16 %v353
      %v650 = vunpack.c.l.b16 %v354
      %v651 = vunpack.c.l.b16 %v355
      %v652 = vunpack.c.l.b16 %v356
      %v653 = vunpack.c.l.b16 %v357
      %v654 = vunpack.c.l.b16 %v358
      %v655 = vunpack.c.l.b16 %v359
      %v656 = vunpack.c.l.b16 %v360
      %v657 = vunpack.c.l.b16 %v361
      %v658 = vunpack.c.l.b16 %v362
      %v659 = vunpack.c.l.b16 %v363
      %v660 = vunpack.c.l.b16 %v364
      %v661 = vunpack.c.l.b16 %v365
      %v662 = vunpack.c.l.b16 %v366
      %v663 = vunpack.c.l.b16 %v367
      %v664 = vunpack.c.l.b16 %v368
      %v665 = vunpack.c.l.b16 %v369
      %v666 = vunpack.c.l.b16 %v370
      %v667 = vunpack.c.l.b16 %v371
      %v668 = vunpack.c.l.b16 %v372
      %v669 = vunpack.c.l.b16 %v373
      %v670 = vunpack.c.l.b16 %v374
      %v671 = vunpack.c.l.b16 %v375
      %v672 = vpack.c.b16 %v561, %v560
      %v673 = vpack.c.b16 %v563, %v562
      %v674 = vpack.c.b16 %v565, %v564
      %v675 = vpack.c.b16 %v567, %v566
      %v676 = vpack.c.b16 %v569, %v568
      %v677 = vpack.c.b16 %v571, %v570
      %v678 = vpack.c.b16 %v573, %v572
      %v679 = vpack.c.b16 %v575, %v574
      %v680 = vpack.c.b16 %v577, %v576
      %v681 = vpack.c.b16 %v579, %v578
      %v682 = vpack.c.b16 %v581, %v580
      %v683 = vpack.c.b16 %v583, %v582
      %v684 = vpack.c.b16 %v585, %v584
      %v685 = vpack.c.b16 %v587, %v586
      %v686 = vpack.c.b16 %v589, %v588
      %v687 = vpack.c.b16 %v591, %v590
      %v688 = vpack.c.b16 %v593, %v592
      %v689 = vpack.c.b16 %v595, %v594
      %v690 = vpack.c.b16 %v597, %v596
      %v691 = vpack.c.b16 %v599, %v598
      %v692 = vpack.c.b16 %v601, %v600
      %v693 = vpack.c.b16 %v603, %v602
      %v694 = vpack.c.b16 %v605, %v604
      %v695 = vpack.c.b16 %v607, %v606
      %v696 = vpack.c.b16 %v609, %v608
      %v697 = vpack.c.b16 %v611, %v610
      %v698 = vpack.c.b16 %v613, %v612
      %v699 = vpack.c.b16 %v615, %v614
      %v700 = vpack.c.b16 %v617, %v616
      %v701 = vpack.c.b16 %v619, %v618
      %v702 = vpack.c.b16 %v621, %v620
      %v703 = vpack.c.b16 %v623, %v622
      %v704 = vpack.c.b16 %v625, %v624
      %v705 = vpack.c.b16 %v627, %v626
      %v706 = vpack.c.b16 %v629, %v628
      %v707 = vpack.c.b16 %v631, %v630
      %v708 = vpack.c.b16 %v633, %v632
      %v709 = vpack.c.b16 %v635, %v634
      %v710 = vpack.c.b16 %v637, %v636
      %v711 = vpack.c.b16 %v639, %v638
      %v712 = vpack.c.b16 %v641, %v640
      %v713 = vpack.c.b16 %v643, %v642
      %v714 = vpack.c.b16 %v645, %v644
      %v715 = vpack.c.b16 %v647, %v646
      %v716 = vpack.c.b16 %v649, %v648
      %v717 = vpack.c.b16 %v651, %v650
      %v718 = vpack.c.b16 %v653, %v652
      %v719 = vpack.c.b16 %v655, %v654
      %v720 = vpack.c.b16 %v657, %v656
      %v721 = vpack.c.b16 %v659, %v658
      %v722 = vpack.c.b16 %v661, %v660
      %v723 = vpack.c.b16 %v663, %v662
      %v724 = vpack.c.b16 %v665, %v664
      %v725 = vpack.c.b16 %v667, %v666
      %v726 = vpack.c.b16 %v669, %v668
      %v727 = vpack.c.b16 %v671, %v670
      %784 = vmatprep.subr.bf16.mxu0 0
      %785 = vmatpush1.bf16.msra.mxu0 %v679
      %786 = vmatprep.subr.bf16.mxu0 0
      %787 = vmatpush1.bf16.msra.mxu0 %v678
      %788 = vmatprep.subr.bf16.mxu0 0
      %789 = vmatpush1.bf16.msra.mxu0 %v677
      %790 = vmatprep.subr.bf16.mxu0 0
      %791 = vmatpush1.bf16.msra.mxu0 %v676
      %792 = vmatprep.subr.bf16.mxu0 0
      %793 = vmatpush1.bf16.msra.mxu0 %v675
      %794 = vmatprep.subr.bf16.mxu0 0
      %795 = vmatpush1.bf16.msra.mxu0 %v674
      %796 = vmatprep.subr.bf16.mxu0 0
      %797 = vmatpush1.bf16.msra.mxu0 %v673
      %798 = vmatprep.subr.bf16.mxu0 0
      %799 = vmatpush1.bf16.msra.mxu0 %v672
      %800 = vmatprep.subr.bf16.mxu0 0
      %801 = vmatpush2.bf16.msra.mxu0 %v687
      %802 = vmatprep.subr.bf16.mxu0 0
      %803 = vmatpush2.bf16.msra.mxu0 %v686
      %804 = vmatprep.subr.bf16.mxu0 0
      %805 = vmatpush2.bf16.msra.mxu0 %v685
      %806 = vmatprep.subr.bf16.mxu0 0
      %807 = vmatpush2.bf16.msra.mxu0 %v684
      %808 = vmatprep.subr.bf16.mxu0 0
      %809 = vmatpush2.bf16.msra.mxu0 %v683
      %810 = vmatprep.subr.bf16.mxu0 0
      %811 = vmatpush2.bf16.msra.mxu0 %v682
      %812 = vmatprep.subr.bf16.mxu0 0
      %813 = vmatpush2.bf16.msra.mxu0 %v681
      %814 = vmatprep.subr.bf16.mxu0 0
      %815 = vmatpush2.bf16.msra.mxu0 %v680
      %816 = vmatprep.mubr.bf16.mxu0 %v421
      %817 = vmatmul.mubr.bf16.gmra.mxu0 %v420
      %v818 = vpop.f32.mrf.mxu0
      %v819 = vadd.f32 0.0, %v818
      %v820 = vpop.f32.mrf.mxu0
      %v821 = vpop.f32.mrf.mxu0
      %v822 = vadd.f32 0.0, %v821
      %v823 = vpop.f32.mrf.mxu0
      %824 = vmatprep.mubr.bf16.mxu0 %v428
      %825 = vmatmul.mubr.bf16.gmra.mxu0 %v427
      %v826 = vpop.f32.mrf.mxu0
      %v827 = vadd.f32 0.0, %v826
      %v828 = vpop.f32.mrf.mxu0
      %v829 = vpop.f32.mrf.mxu0
      %v830 = vadd.f32 0.0, %v829
      %v831 = vpop.f32.mrf.mxu0
      %832 = vdwg.mxu0
      %833 = vmatprep.subr.bf16.mxu0 0
      %834 = vmatpush1.bf16.msra.mxu0 %v695
      %835 = vmatprep.subr.bf16.mxu0 0
      %836 = vmatpush1.bf16.msra.mxu0 %v694
      %837 = vmatprep.subr.bf16.mxu0 0
      %838 = vmatpush1.bf16.msra.mxu0 %v693
      %839 = vmatprep.subr.bf16.mxu0 0
      %840 = vmatpush1.bf16.msra.mxu0 %v692
      %841 = vmatprep.subr.bf16.mxu0 0
      %842 = vmatpush1.bf16.msra.mxu0 %v691
      %843 = vmatprep.subr.bf16.mxu0 0
      %844 = vmatpush1.bf16.msra.mxu0 %v690
      %845 = vmatprep.subr.bf16.mxu0 0
      %846 = vmatpush1.bf16.msra.mxu0 %v689
      %847 = vmatprep.subr.bf16.mxu0 0
      %848 = vmatpush1.bf16.msra.mxu0 %v688
      %849 = vmatprep.subr.bf16.mxu0 0
      %850 = vmatpush2.bf16.msra.mxu0 %v703
      %851 = vmatprep.subr.bf16.mxu0 0
      %852 = vmatpush2.bf16.msra.mxu0 %v702
      %853 = vmatprep.subr.bf16.mxu0 0
      %854 = vmatpush2.bf16.msra.mxu0 %v701
      %855 = vmatprep.subr.bf16.mxu0 0
      %856 = vmatpush2.bf16.msra.mxu0 %v700
      %857 = vmatprep.subr.bf16.mxu0 0
      %858 = vmatpush2.bf16.msra.mxu0 %v699
      %859 = vmatprep.subr.bf16.mxu0 0
      %860 = vmatpush2.bf16.msra.mxu0 %v698
      %861 = vmatprep.subr.bf16.mxu0 0
      %862 = vmatpush2.bf16.msra.mxu0 %v697
      %863 = vmatprep.subr.bf16.mxu0 0
      %864 = vmatpush2.bf16.msra.mxu0 %v696
      %865 = vmatprep.mubr.bf16.mxu0 %v423
      %866 = vmatmul.mubr.bf16.gmra.mxu0 %v422
      %v867 = vpop.f32.mrf.mxu0
      %v868 = vadd.f32 %v819, %v867
      %v869 = vpop.f32.mrf.mxu0
      %v870 = vpop.f32.mrf.mxu0
      %v871 = vadd.f32 %v822, %v870
      %v872 = vpop.f32.mrf.mxu0
      %873 = vmatprep.mubr.bf16.mxu0 %v430
      %874 = vmatmul.mubr.bf16.gmra.mxu0 %v429
      %v875 = vpop.f32.mrf.mxu0
      %v876 = vadd.f32 %v827, %v875
      %v877 = vpop.f32.mrf.mxu0
      %v878 = vpop.f32.mrf.mxu0
      %v879 = vadd.f32 %v830, %v878
      %v880 = vpop.f32.mrf.mxu0
      %881 = vdwg.mxu0
      %882 = vmatprep.subr.bf16.mxu0 0
      %883 = vmatpush1.bf16.msra.mxu0 %v711
      %884 = vmatprep.subr.bf16.mxu0 0
      %885 = vmatpush1.bf16.msra.mxu0 %v710
      %886 = vmatprep.subr.bf16.mxu0 0
      %887 = vmatpush1.bf16.msra.mxu0 %v709
      %888 = vmatprep.subr.bf16.mxu0 0
      %889 = vmatpush1.bf16.msra.mxu0 %v708
      %890 = vmatprep.subr.bf16.mxu0 0
      %891 = vmatpush1.bf16.msra.mxu0 %v707
      %892 = vmatprep.subr.bf16.mxu0 0
      %893 = vmatpush1.bf16.msra.mxu0 %v706
      %894 = vmatprep.subr.bf16.mxu0 0
      %895 = vmatpush1.bf16.msra.mxu0 %v705
      %896 = vmatprep.subr.bf16.mxu0 0
      %897 = vmatpush1.bf16.msra.mxu0 %v704
      %898 = vmatprep.subr.bf16.mxu0 0
      %899 = vmatpush2.bf16.msra.mxu0 %v719
      %900 = vmatprep.subr.bf16.mxu0 0
      %901 = vmatpush2.bf16.msra.mxu0 %v718
      %902 = vmatprep.subr.bf16.mxu0 0
      %903 = vmatpush2.bf16.msra.mxu0 %v717
      %904 = vmatprep.subr.bf16.mxu0 0
      %905 = vmatpush2.bf16.msra.mxu0 %v716
      %906 = vmatprep.subr.bf16.mxu0 0
      %907 = vmatpush2.bf16.msra.mxu0 %v715
      %908 = vmatprep.subr.bf16.mxu0 0
      %909 = vmatpush2.bf16.msra.mxu0 %v714
      %910 = vmatprep.subr.bf16.mxu0 0
      %911 = vmatpush2.bf16.msra.mxu0 %v713
      %912 = vmatprep.subr.bf16.mxu0 0
      %913 = vmatpush2.bf16.msra.mxu0 %v712
      %914 = vmatprep.mubr.bf16.mxu0 %v425
      %915 = vmatmul.mubr.bf16.gmra.mxu0 %v424
      %v916 = vpop.f32.mrf.mxu0
      %v917 = vadd.f32 %v868, %v916
      %v918 = vpop.f32.mrf.mxu0
      %v919 = vpop.f32.mrf.mxu0
      %v920 = vadd.f32 %v871, %v919
      %v921 = vpop.f32.mrf.mxu0
      %922 = vmatprep.mubr.bf16.mxu0 %v432
      %923 = vmatmul.mubr.bf16.gmra.mxu0 %v431
      %v924 = vpop.f32.mrf.mxu0
      %v925 = vadd.f32 %v876, %v924
      %v926 = vpop.f32.mrf.mxu0
      %v927 = vpop.f32.mrf.mxu0
      %v928 = vadd.f32 %v879, %v927
      %v929 = vpop.f32.mrf.mxu0
      %930 = vdwg.mxu0
      %931 = vmatprep.subr.bf16.mxu0 0
      %932 = vmatpush1.bf16.msra.mxu0 %v727
      %933 = vmatprep.subr.bf16.mxu0 0
      %934 = vmatpush1.bf16.msra.mxu0 %v726
      %935 = vmatprep.subr.bf16.mxu0 0
      %936 = vmatpush1.bf16.msra.mxu0 %v725
      %937 = vmatprep.subr.bf16.mxu0 0
      %938 = vmatpush1.bf16.msra.mxu0 %v724
      %939 = vmatprep.subr.bf16.mxu0 0
      %940 = vmatpush1.bf16.msra.mxu0 %v723
      %941 = vmatprep.subr.bf16.mxu0 0
      %942 = vmatpush1.bf16.msra.mxu0 %v722
      %943 = vmatprep.subr.bf16.mxu0 0
      %944 = vmatpush1.bf16.msra.mxu0 %v721
      %945 = vmatprep.subr.bf16.mxu0 0
      %946 = vmatpush1.bf16.msra.mxu0 %v720
      %947 = vmatprep.subr.bf16.mxu0 0
      %948 = vmatpush2.bf16.msra.mxu0 0
      %949 = vmatprep.subr.bf16.mxu0 0
      %950 = vmatpush2.bf16.msra.mxu0 0
      %951 = vmatprep.subr.bf16.mxu0 0
      %952 = vmatpush2.bf16.msra.mxu0 0
      %953 = vmatprep.subr.bf16.mxu0 0
      %954 = vmatpush2.bf16.msra.mxu0 0
      %955 = vmatprep.subr.bf16.mxu0 0
      %956 = vmatpush2.bf16.msra.mxu0 0
      %957 = vmatprep.subr.bf16.mxu0 0
      %958 = vmatpush2.bf16.msra.mxu0 0
      %959 = vmatprep.subr.bf16.mxu0 0
      %960 = vmatpush2.bf16.msra.mxu0 0
      %961 = vmatprep.subr.bf16.mxu0 0
      %962 = vmatpush2.bf16.msra.mxu0 0
      %963 = vmatprep.mubr.bf16.mxu0 0
      %964 = vmatmul.mubr.bf16.gmra.mxu0 %v426
      %v965 = vpop.f32.mrf.mxu0
      %v966 = vadd.f32 %v917, %v965
      %v967 = vpop.f32.mrf.mxu0
      %v968 = vpop.f32.mrf.mxu0
      %v969 = vadd.f32 %v920, %v968
      %v970 = vpop.f32.mrf.mxu0
      %971 = vmatprep.mubr.bf16.mxu0 0
      %972 = vmatmul.mubr.bf16.gmra.mxu0 %v433
      %v973 = vpop.f32.mrf.mxu0
      %v974 = vadd.f32 %v925, %v973
      %v975 = vpop.f32.mrf.mxu0
      %v976 = vpop.f32.mrf.mxu0
      %v977 = vadd.f32 %v928, %v976
      %v978 = vpop.f32.mrf.mxu0
      %979 = vdwg.mxu0
      %p980 = scmp.eq.s32.totalorder %s21, 0
      // Predicated region
      $region33: #{fpa_v2_forward.11} parent=31 // pred_check
        %p981 = pneg %p980
      $region34: #{fpa_v2_forward.11} parent=31 // pred_check_branch
        %983 = sbr.rel (%p981) target = $region36
      $region35: #{fpa_v2_forward.11} parent=31 // pred_region
        %984 = vst [vmem:[#allocation2] sm:$0xff] %v966
        %985 = vst [vmem:[#allocation2 + $0x8] sm:$0xff] %v969
        %986 = vst [vmem:[#allocation2 + $0x10] sm:$0xff] %v974
        %987 = vst [vmem:[#allocation2 + $0x18] sm:$0xff] %v977
      $region36: #{fpa_v2_forward.11} parent=31 // pred_fallthru
        _
      %p988 = scmp.gt.s32.totalorder %s21, 0
      // Predicated region
      $region37: #{fpa_v2_forward.11} parent=31 // pred_check
        %p989 = pneg %p988
      $region38: #{fpa_v2_forward.11} parent=31 // pred_check_branch
        %991 = sbr.rel (%p989) target = $region40
      $region39: #{fpa_v2_forward.11} parent=31 // pred_region
        %v992 = vld [vmem:[#allocation2] sm:$0xff]
        %v993 = vld [vmem:[#allocation2 + $0x8] sm:$0xff]
        %v994 = vld [vmem:[#allocation2 + $0x10] sm:$0xff]
        %v995 = vld [vmem:[#allocation2 + $0x18] sm:$0xff]
        %v996 = vadd.f32 %v992, %v966
        %v997 = vadd.f32 %v993, %v969
        %v998 = vadd.f32 %v994, %v974
        %v999 = vadd.f32 %v995, %v977
        %1000 = vst [vmem:[#allocation2] sm:$0xff] %v996
        %1001 = vst [vmem:[#allocation2 + $0x8] sm:$0xff] %v997
        %1002 = vst [vmem:[#allocation2 + $0x10] sm:$0xff] %v998
        %1003 = vst [vmem:[#allocation2 + $0x18] sm:$0xff] %v999
      $region40: #{fpa_v2_forward.11} parent=31 // pred_fallthru
        _
      // Predicated region
      $region41: #{fpa_v2_forward.11} parent=31 // pred_check
        %p1004 = pneg %p980
      $region42: #{fpa_v2_forward.11} parent=31 // pred_check_branch
        %1006 = sbr.rel (%p1004) target = $region44
      $region43: #{fpa_v2_forward.11} parent=31 // pred_region
        %v1007 = vld [vmem:[#allocation2] sm:$0xff]
        %v1008 = vld [vmem:[#allocation2 + $0x8] sm:$0xff]
        %v1009 = vld [vmem:[#allocation2 + $0x10] sm:$0xff]
        %v1010 = vld [vmem:[#allocation2 + $0x18] sm:$0xff]
        %v1011 = vld [vmem:[%s2] sm:$0xff]
        %v1012 = vld [vmem:[%s2 + $0x8] sm:$0xff]
        %v1013 = vld [vmem:[%s2 + $0x10] sm:$0xff]
        %v1014 = vld [vmem:[%s2 + $0x18] sm:$0xff]
        %1016 = vset.pattern.permute.xlu0 0
        %1017 = vperm.xlu0 %1016, %v1011
        %v1018 = vpop.permute.xlu0 %1017
        %1021 = vset.pattern.permute.xlu0 0
        %1022 = vperm.xlu0 %1021, %v1012
        %v1023 = vpop.permute.xlu0 %1022
        %1026 = vset.pattern.permute.xlu0 0
        %1027 = vperm.xlu0 %1026, %v1013
        %v1028 = vpop.permute.xlu0 %1027
        %1031 = vset.pattern.permute.xlu0 0
        %1032 = vperm.xlu0 %1031, %v1014
        %v1033 = vpop.permute.xlu0 %1032
        %v1035 = vadd.f32 %v1007, %v1018
        %v1036 = vadd.f32 %v1008, %v1023
        %v1037 = vadd.f32 %v1009, %v1028
        %v1038 = vadd.f32 %v1010, %v1033
        %v1039 = vmax.f32 %v1035, 0.0
        %v1040 = vmax.f32 %v1036, 0.0
        %v1041 = vmax.f32 %v1037, 0.0
        %v1042 = vmax.f32 %v1038, 0.0
        %v1043 = vpack.c.bf16 %v1040, %v1039
        %v1044 = vpack.c.bf16 %v1042, %v1041
        %v1047 = vunpack.c.l.b16 %v1043
        %v1048 = vunpack.c.h.b16 %v1043
        %v1049 = vunpack.c.l.b16 %v1044
        %v1050 = vunpack.c.h.b16 %v1044
        %v1051 = vpack.c.b16 %v1047, %v1047
        %v1052 = vpack.c.b16 %v1048, %v1048
        %v1053 = vpack.c.b16 %v1049, %v1049
        %v1054 = vpack.c.b16 %v1050, %v1050
        %1059 = vst [vmem:[%s246] sm:$0xf] %v1051
        %1060 = vst [vmem:[%s246 + $0x4] sm:$0xf] %v1052
        %1061 = vst [vmem:[%s246 + $0x8] sm:$0xf] %v1053
        %1062 = vst [vmem:[%s246 + $0xc] sm:$0xf] %v1054
      $region44: #{fpa_v2_forward.11} parent=31 // pred_fallthru
        _
      %p1063 = scmp.lt.s32.totalorder %s19, 1
      %s1064 = scalar_select %p1063, %s19, 1
      %p1065 = scmp.lt.s32.totalorder %s20, 0
      %s1066 = scalar_select %p1065, %s20, 0
      %s1067 = smul.addr %s1064, 4
      %s1068 = sadd.s32 %s1066, %s1067
      %s1069 = smul.addr %s1068, 4
      %s1070 = scalar_lea.vmem %s3, %s1069
      // Predicated region
      $region45: #{fpa_v2_forward.11} parent=31 // pred_check
        %p1071 = pneg %p130
      $region46: #{fpa_v2_forward.11} parent=31 // pred_check_branch
        %1073 = sbr.rel (%p1071) target = $region48
      $region47: #{fpa_v2_forward.11} parent=31 // pred_region
        _
      $region48: #{fpa_v2_forward.11} parent=31 // pred_fallthru
        _
    $region32: #{fpa_v2_forward.11} parent=5 // pred_fallthru
      _
    %p1074 = scmp.le.s32.totalorder 2, %s9
    // Predicated region
    $region49: #{fpa_v2_forward.11} parent=5 // pred_check
      %p1075 = pneg %p1074
    $region50: #{fpa_v2_forward.11} parent=5 // pred_check_branch
      %1077 = sbr.rel (%p1075) target = $region52
    $region51: #{fpa_v2_forward.11} parent=5 // pred_region
      %s1078 = ssub.s32 %s9, 2
      // Predicated region
      $region53: #{fpa_v2_forward.11} parent=51 // pred_check
        %p1079 = pneg %p136
      $region54: #{fpa_v2_forward.11} parent=51 // pred_check_branch
        %1081 = sbr.rel (%p1079) target = $region56
      $region55: #{fpa_v2_forward.11} parent=51 // pred_region
        %p1082 = scmp.lt.s32.totalorder %s22, 1
        %s1083 = scalar_select %p1082, %s22, 1
        %p1084 = scmp.lt.s32.totalorder %s23, 0
        %s1085 = scalar_select %p1084, %s23, 0
        %s1086 = smul.addr %s1083, 4
        %s1087 = sadd.s32 %s1085, %s1086
        %s1088 = smul.addr %s1087, 4
        %s1089 = scalar_lea.vmem %s3, %s1088
      $region56: #{fpa_v2_forward.11} parent=51 // pred_fallthru
        _
    $region52: #{fpa_v2_forward.11} parent=5 // pred_fallthru
      _
  $region6: #{fpa_v2_forward.11} parent=0 // loop_footer
    %s13 = sadd.s32 1, %s9
  $region7: #{fpa_v2_forward.11} parent=0 // loop_footer_branch
    %8 = sbr.rel target = $region3
  $region8: #{fpa_v2_forward.11} parent=0 // loop_exit
    _

// kernel: fpa_v2_forward.12
$region0: #{fpa_v2_forward.12}
  #allocation0 [shape = 'u32[]', space=smem, size = 0x4, offset = 0x4, fixed_abs, tag = 'smem constant byte address 0x4 - core index']
  #allocation1 [shape = 'u32[144,128]{1,0:T(1,128)}', space=vmem, size = 0x12000, scoped, tag = 'internal scratch']
  #allocation2 [shape = 'f32[16,128]{1,0:T(8,128)}', space=vmem, size = 0x2000, scoped, tag = 'scratch operand']
  %s0 = inlined_call_operand.vmem [shape: bf16[2,896,128], index: 0, kind: input, shape index: {}]
  %s1 = inlined_call_operand.vmem [shape: bf16[16,896], index: 1, kind: input, shape index: {}]
  %s2 = inlined_call_operand.vmem [shape: f32[16,1], index: 2, kind: input, shape index: {}]
  %s3 = inlined_call_operand.vmem [shape: bf16[2,16,128], index: 3, kind: output, shape index: {}]
  %s4 = sld [smem:[#allocation0]]
  $region57: #{fpa_v2_forward.12} parent=0
    _
  %s6 = ssub.s32 1, %s4
  %s7 = scalar_select 0, %s6, %s4
  loop: start=0, step=1, limit=4
  $region2: #{fpa_v2_forward.12} parent=0 // loop_pre_header
    _
  $region3: #{fpa_v2_forward.12} parent=0 // loop_header
    %s9 = sphi 0, %s13
    %p10 = scmp.ge.s32.totalorder %s9, 4
    %s16 = sphi 0, %s35
    %s17 = sphi 0, %s31
    %s18 = sphi 0, %s27
    %s19 = sphi 0, %s16
    %s20 = sphi 0, %s17
    %s21 = sphi 0, %s18
    %s22 = sphi 0, %s19
    %s23 = sphi 0, %s20
    %s24 = sphi 0, %s21
    %s42 = sphi 0, %s44
    %s45 = sphi 0, %s42
    %s46 = sphi 0, %s45
    %s62 = sphi 0, %s46
    %s68 = sphi 0, %s70
    %s71 = sphi 0, %s68
    %s72 = sphi 0, %s71
    %s88 = sphi 0, %s72
    %s92 = sphi 0, %s92
    %s94 = sphi 0, %s92
    %s95 = sphi 0, %s94
    %s109 = sphi 0, %s95
    %s117 = sphi 0, %s119
    %s120 = sphi 0, %s117
    %s121 = sphi 0, %s120
    %s137 = sphi 0, %s121
  $region4: #{fpa_v2_forward.12} parent=0 // loop_header_branch
    %12 = sbr.rel (%p10) target = $region8
  $region5: #{fpa_v2_forward.12} parent=0 // loop_body
    %s14 = ssub.s32 %s9, 1
    %s15 = ssub.s32 %s9, 2
    %s25 = sadd.s32 1, %s18
    %p26 = scmp.ge.s32.totalorder %s25, 1
    %s27 = scalar_select %p26, 0, %s25
    %s28 = sadd.s32 1, %s17
    %s29 = scalar_select %p26, %s28, %s17
    %p30 = scmp.ge.s32.totalorder %s29, 1
    %s31 = scalar_select %p30, 0, %s29
    %s32 = sadd.s32 1, %s16
    %s33 = scalar_select %p30, %s32, %s16
    %p34 = scmp.ge.s32.totalorder %s33, 2
    %s35 = scalar_select %p34, 0, %s33
    %s36 = ssub.s32 %s16, %s35
    %s37 = ssub.s32 %s18, %s27
    %s38 = sor.u32 %s36, %s37
    %s39 = ssub.s32 %s17, %s31
    %s40 = sor.u32 %s38, %s39
    %p41 = scmp.eq.s32.totalorder %s40, 0
    %s43 = sadd.s32 %s42, 1
    %s44 = scalar_select %p41, %s42, %s43
    %p47 = pneg %p41
    %p48 = scmp.eq.s32.totalorder %s9, 1
    %p49 = por %p47, %p48
    %p50 = scmp.ne.s32.totalorder %s42, %s45
    %p51 = scmp.eq.s32.totalorder %s9, 0
    %p52 = por %p50, %p51
    %p53 = scmp.ne.s32.totalorder %s42, %s45
    %p54 = scmp.eq.s32.totalorder %s14, 1
    %p55 = por %p53, %p54
    %p56 = scmp.ne.s32.totalorder %s45, %s46
    %p57 = scmp.eq.s32.totalorder %s14, 0
    %p58 = por %p56, %p57
    %p59 = scmp.ne.s32.totalorder %s45, %s46
    %p60 = scmp.eq.s32.totalorder %s15, 1
    %p61 = por %p59, %p60
    %p63 = scmp.ne.s32.totalorder %s46, %s62
    %p64 = scmp.eq.s32.totalorder %s15, 0
    %p65 = por %p63, %p64
    %s66 = ssub.s32 %s18, %s27
    %p67 = scmp.eq.s32.totalorder %s66, 0
    %s69 = sadd.s32 %s68, 1
    %s70 = scalar_select %p67, %s68, %s69
    %p73 = pneg %p67
    %p74 = scmp.eq.s32.totalorder %s9, 1
    %p75 = por %p73, %p74
    %p76 = scmp.ne.s32.totalorder %s68, %s71
    %p77 = scmp.eq.s32.totalorder %s9, 0
    %p78 = por %p76, %p77
    %p79 = scmp.ne.s32.totalorder %s68, %s71
    %p80 = scmp.eq.s32.totalorder %s14, 1
    %p81 = por %p79, %p80
    %p82 = scmp.ne.s32.totalorder %s71, %s72
    %p83 = scmp.eq.s32.totalorder %s14, 0
    %p84 = por %p82, %p83
    %p85 = scmp.ne.s32.totalorder %s71, %s72
    %p86 = scmp.eq.s32.totalorder %s15, 1
    %p87 = por %p85, %p86
    %p89 = scmp.ne.s32.totalorder %s72, %s88
    %p90 = scmp.eq.s32.totalorder %s15, 0
    %p91 = por %p89, %p90
    %s93 = sadd.s32 %s92, 1
    %p96 = scmp.eq.s32.totalorder %s9, 1
    %p97 = scmp.ne.s32.totalorder %s92, %s94
    %p98 = scmp.eq.s32.totalorder %s9, 0
    %p99 = por %p97, %p98
    %p100 = scmp.ne.s32.totalorder %s92, %s94
    %p101 = scmp.eq.s32.totalorder %s14, 1
    %p102 = por %p100, %p101
    %p103 = scmp.ne.s32.totalorder %s94, %s95
    %p104 = scmp.eq.s32.totalorder %s14, 0
    %p105 = por %p103, %p104
    %p106 = scmp.ne.s32.totalorder %s94, %s95
    %p107 = scmp.eq.s32.totalorder %s15, 1
    %p108 = por %p106, %p107
    %p110 = scmp.ne.s32.totalorder %s95, %s109
    %p111 = scmp.eq.s32.totalorder %s15, 0
    %p112 = por %p110, %p111
    %s113 = ssub.s32 %s16, %s35
    %s114 = ssub.s32 %s17, %s31
    %s115 = sor.u32 %s113, %s114
    %p116 = scmp.eq.s32.totalorder %s115, 0
    %s118 = sadd.s32 %s117, 1
    %s119 = scalar_select %p116, %s117, %s118
    %p122 = pneg %p116
    %p123 = scmp.eq.s32.totalorder %s9, 1
    %p124 = por %p122, %p123
    %p125 = scmp.ne.s32.totalorder %s117, %s120
    %p126 = scmp.eq.s32.totalorder %s9, 0
    %p127 = por %p125, %p126
    %p128 = scmp.ne.s32.totalorder %s117, %s120
    %p129 = scmp.eq.s32.totalorder %s14, 1
    %p130 = por %p128, %p129
    %p131 = scmp.ne.s32.totalorder %s120, %s121
    %p132 = scmp.eq.s32.totalorder %s14, 0
    %p133 = por %p131, %p132
    %p134 = scmp.ne.s32.totalorder %s120, %s121
    %p135 = scmp.eq.s32.totalorder %s15, 1
    %p136 = por %p134, %p135
    %p138 = scmp.ne.s32.totalorder %s121, %s137
    %p139 = scmp.eq.s32.totalorder %s15, 0
    %p140 = por %p138, %p139
    %p141 = scmp.le.s32.totalorder 1, %s9
    %p142 = scmp.lt.s32.totalorder %s9, 3
    %p143 = pnand %p141, %p142
    %p144 = pneg %p143
    // Predicated region
    $region9: #{fpa_v2_forward.12} parent=5 // pred_check
      _
    $region10: #{fpa_v2_forward.12} parent=5 // pred_check_branch
      %146 = sbr.rel (%p143) target = $region12
    $region11: #{fpa_v2_forward.12} parent=5 // pred_region
      %s147 = ssub.s32 %s9, 1
      // Predicated region
      $region13: #{fpa_v2_forward.12} parent=11 // pred_check
        %p148 = pneg %p84
      $region14: #{fpa_v2_forward.12} parent=11 // pred_check_branch
        %150 = sbr.rel (%p148) target = $region16
      $region15: #{fpa_v2_forward.12} parent=11 // pred_region
        %s151 = smul.u32 7, %s21
        %p152 = scmp.lt.s32.totalorder %s151, 6
        %s153 = scalar_select %p152, %s151, 6
        %s154 = smul.addr %s153, 4
        %s155 = scalar_lea.vmem %s1, %s154
        %s156 = smul.u32 7, %s21
      $region16: #{fpa_v2_forward.12} parent=11 // pred_fallthru
        _
      // Predicated region
      $region17: #{fpa_v2_forward.12} parent=11 // pred_check
        %p157 = pneg %p105
      $region18: #{fpa_v2_forward.12} parent=11 // pred_check_branch
        %159 = sbr.rel (%p157) target = $region20
      $region19: #{fpa_v2_forward.12} parent=11 // pred_region
        _
      $region20: #{fpa_v2_forward.12} parent=11 // pred_fallthru
        _
    $region12: #{fpa_v2_forward.12} parent=5 // pred_fallthru
      _
    %p160 = scmp.lt.s32.totalorder %s9, 2
    // Predicated region
    $region21: #{fpa_v2_forward.12} parent=5 // pred_check
      %p161 = pneg %p160
    $region22: #{fpa_v2_forward.12} parent=5 // pred_check_branch
      %163 = sbr.rel (%p161) target = $region24
    $region23: #{fpa_v2_forward.12} parent=5 // pred_region
      // Predicated region
      $region25: #{fpa_v2_forward.12} parent=23 // pred_check
        %p164 = pneg %p52
      $region26: #{fpa_v2_forward.12} parent=23 // pred_check_branch
        %166 = sbr.rel (%p164) target = $region28
      $region27: #{fpa_v2_forward.12} parent=23 // pred_region
        %s167 = smul.u32 112, %s18
        %p168 = scmp.lt.s32.totalorder %s16, 1
        %s169 = scalar_select %p168, %s16, 1
        %p170 = scmp.lt.s32.totalorder %s167, 111
        %s171 = scalar_select %p170, %s167, 111
        %p172 = scmp.lt.s32.totalorder %s17, 0
        %s173 = scalar_select %p172, %s17, 0
        %s174 = sadd.s32 %s173, %s171
        %s175 = smul.addr %s169, 112
        %s176 = sadd.s32 %s174, %s175
        %s177 = smul.addr %s176, 4
        %s178 = scalar_lea.vmem %s0, %s177
        %s179 = smul.u32 112, %s18
      $region28: #{fpa_v2_forward.12} parent=23 // pred_fallthru
        _
    $region24: #{fpa_v2_forward.12} parent=5 // pred_fallthru
      _
    %p180 = scmp.le.s32.totalorder 1, %s9
    %p181 = scmp.lt.s32.totalorder %s9, 3
    %p182 = pnand %p180, %p181
    %p183 = pneg %p182
    // Predicated region
    $region29: #{fpa_v2_forward.12} parent=5 // pred_check
      _
    $region30: #{fpa_v2_forward.12} parent=5 // pred_check_branch
      %185 = sbr.rel (%p182) target = $region32
    $region31: #{fpa_v2_forward.12} parent=5 // pred_region
      %s186 = ssub.s32 %s9, 1
      %s187 = smul.u32 112, %s21
      %p188 = scmp.lt.s32.totalorder %s19, 1
      %s189 = scalar_select %p188, %s19, 1
      %p190 = scmp.lt.s32.totalorder %s187, 111
      %s191 = scalar_select %p190, %s187, 111
      %p192 = scmp.lt.s32.totalorder %s20, 0
      %s193 = scalar_select %p192, %s20, 0
      %s194 = sadd.s32 %s193, %s191
      %s195 = smul.addr %s189, 112
      %s196 = sadd.s32 %s194, %s195
      %s197 = smul.addr %s196, 4
      %s198 = scalar_lea.vmem %s0, %s197
      %p199 = pneg %p58
      %p200 = pneg %p55
      %s201 = smul.u32 7, %s21
      %p202 = scmp.lt.s32.totalorder %s201, 6
      %s203 = scalar_select %p202, %s201, 6
      %s204 = smul.addr %s203, 4
      %s205 = scalar_lea.vmem %s1, %s204
      %p206 = pneg %p84
      %p207 = pneg %p81
      %p208 = pneg %p105
      %p209 = pneg %p102
      %p210 = pneg %p133
      %p211 = pneg %p130
      %p212 = scmp.lt.s32.totalorder %s19, 1
      %s213 = scalar_select %p212, %s19, 1
      %p214 = scmp.lt.s32.totalorder %s20, 0
      %s215 = scalar_select %p214, %s20, 0
      %s216 = smul.addr %s213, 2
      %s217 = sadd.s32 %s215, %s216
      %s218 = smul.addr %s217, 4
      %s219 = scalar_lea.vmem %s3, %s218
      %s220 = smul.u32 112, %s21
      %p221 = scmp.lt.s32.totalorder %s19, 1
      %s222 = scalar_select %p221, %s19, 1
      %p223 = scmp.lt.s32.totalorder %s220, 111
      %s224 = scalar_select %p223, %s220, 111
      %p225 = scmp.lt.s32.totalorder %s20, 0
      %s226 = scalar_select %p225, %s20, 0
      %s227 = sadd.s32 %s226, %s224
      %s228 = smul.addr %s222, 112
      %s229 = sadd.s32 %s227, %s228
      %s230 = smul.addr %s229, 4
      %s231 = scalar_lea.vmem %s0, %s230
      %s232 = smul.u32 112, %s21
      %s233 = smul.u32 7, %s21
      %p234 = scmp.lt.s32.totalorder %s233, 6
      %s235 = scalar_select %p234, %s233, 6
      %s236 = smul.addr %s235, 4
      %s237 = scalar_lea.vmem %s1, %s236
      %s238 = smul.u32 7, %s21
      %p239 = scmp.lt.s32.totalorder %s19, 1
      %s240 = scalar_select %p239, %s19, 1
      %p241 = scmp.lt.s32.totalorder %s20, 0
      %s242 = scalar_select %p241, %s20, 0
      %s243 = smul.addr %s240, 2
      %s244 = sadd.s32 %s242, %s243
      %s245 = smul.addr %s244, 4
      %s246 = scalar_lea.vmem %s3, %s245
      %v248 = vld [vmem:[%s237] sm:$0xff]
      %v249 = vld [vmem:[%s237 + $0x8] sm:$0xff]
      %v250 = vld [vmem:[%s237 + $0x10] sm:$0xff]
      %v251 = vld [vmem:[%s237 + $0x18] sm:$0xf]
      %v252 = vld [vmem:[%s237 + $0x1c] sm:$0xff]
      %v253 = vld [vmem:[%s237 + $0x24] sm:$0xff]
      %v254 = vld [vmem:[%s237 + $0x2c] sm:$0xff]
      %v255 = vld [vmem:[%s237 + $0x34] sm:$0xf]
      %v256 = vld [vmem:[%s231] sm:$0xf]
      %v257 = vld [vmem:[%s231 + $0x4] sm:$0xf]
      %v258 = vld [vmem:[%s231 + $0x8] sm:$0xf]
      %v259 = vld [vmem:[%s231 + $0xc] sm:$0xf]
      %v260 = vld [vmem:[%s231 + $0x10] sm:$0xf]
      %v261 = vld [vmem:[%s231 + $0x14] sm:$0xf]
      %v262 = vld [vmem:[%s231 + $0x18] sm:$0xf]
      %v263 = vld [vmem:[%s231 + $0x1c] sm:$0xf]
      %v264 = vld [vmem:[%s231 + $0x20] sm:$0xf]
      %v265 = vld [vmem:[%s231 + $0x24] sm:$0xf]
      %v266 = vld [vmem:[%s231 + $0x28] sm:$0xf]
      %v267 = vld [vmem:[%s231 + $0x2c] sm:$0xf]
      %v268 = vld [vmem:[%s231 + $0x30] sm:$0xf]
      %v269 = vld [vmem:[%s231 + $0x34] sm:$0xf]
      %v270 = vld [vmem:[%s231 + $0x38] sm:$0xf]
      %v271 = vld [vmem:[%s231 + $0x3c] sm:$0xf]
      %v272 = vld [vmem:[%s231 + $0x40] sm:$0xf]
      %v273 = vld [vmem:[%s231 + $0x44] sm:$0xf]
      %v274 = vld [vmem:[%s231 + $0x48] sm:$0xf]
      %v275 = vld [vmem:[%s231 + $0x4c] sm:$0xf]
      %v276 = vld [vmem:[%s231 + $0x50] sm:$0xf]
      %v277 = vld [vmem:[%s231 + $0x54] sm:$0xf]
      %v278 = vld [vmem:[%s231 + $0x58] sm:$0xf]
      %v279 = vld [vmem:[%s231 + $0x5c] sm:$0xf]
      %v280 = vld [vmem:[%s231 + $0x60] sm:$0xf]
      %v281 = vld [vmem:[%s231 + $0x64] sm:$0xf]
      %v282 = vld [vmem:[%s231 + $0x68] sm:$0xf]
      %v283 = vld [vmem:[%s231 + $0x6c] sm:$0xf]
      %v284 = vld [vmem:[%s231 + $0x70] sm:$0xf]
      %v285 = vld [vmem:[%s231 + $0x74] sm:$0xf]
      %v286 = vld [vmem:[%s231 + $0x78] sm:$0xf]
      %v287 = vld [vmem:[%s231 + $0x7c] sm:$0xf]
      %v288 = vld [vmem:[%s231 + $0x80] sm:$0xf]
      %v289 = vld [vmem:[%s231 + $0x84] sm:$0xf]
      %v290 = vld [vmem:[%s231 + $0x88] sm:$0xf]
      %v291 = vld [vmem:[%s231 + $0x8c] sm:$0xf]
      %v292 = vld [vmem:[%s231 + $0x90] sm:$0xf]
      %v293 = vld [vmem:[%s231 + $0x94] sm:$0xf]
      %v294 = vld [vmem:[%s231 + $0x98] sm:$0xf]
      %v295 = vld [vmem:[%s231 + $0x9c] sm:$0xf]
      %v296 = vld [vmem:[%s231 + $0xa0] sm:$0xf]
      %v297 = vld [vmem:[%s231 + $0xa4] sm:$0xf]
      %v298 = vld [vmem:[%s231 + $0xa8] sm:$0xf]
      %v299 = vld [vmem:[%s231 + $0xac] sm:$0xf]
      %v300 = vld [vmem:[%s231 + $0xb0] sm:$0xf]
      %v301 = vld [vmem:[%s231 + $0xb4] sm:$0xf]
      %v302 = vld [vmem:[%s231 + $0xb8] sm:$0xf]
      %v303 = vld [vmem:[%s231 + $0xbc] sm:$0xf]
      %v304 = vld [vmem:[%s231 + $0xc0] sm:$0xf]
      %v305 = vld [vmem:[%s231 + $0xc4] sm:$0xf]
      %v306 = vld [vmem:[%s231 + $0xc8] sm:$0xf]
      %v307 = vld [vmem:[%s231 + $0xcc] sm:$0xf]
      %v308 = vld [vmem:[%s231 + $0xd0] sm:$0xf]
      %v309 = vld [vmem:[%s231 + $0xd4] sm:$0xf]
      %v310 = vld [vmem:[%s231 + $0xd8] sm:$0xf]
      %v311 = vld [vmem:[%s231 + $0xdc] sm:$0xf]
      %v312 = vld [vmem:[%s231 + $0xe0] sm:$0xf]
      %v313 = vld [vmem:[%s231 + $0xe4] sm:$0xf]
      %v314 = vld [vmem:[%s231 + $0xe8] sm:$0xf]
      %v315 = vld [vmem:[%s231 + $0xec] sm:$0xf]
      %v316 = vld [vmem:[%s231 + $0xf0] sm:$0xf]
      %v317 = vld [vmem:[%s231 + $0xf4] sm:$0xf]
      %v318 = vld [vmem:[%s231 + $0xf8] sm:$0xf]
      %v319 = vld [vmem:[%s231 + $0xfc] sm:$0xf]
      %v320 = vld [vmem:[%s231 + $0x100] sm:$0xf]
      %v321 = vld [vmem:[%s231 + $0x104] sm:$0xf]
      %v322 = vld [vmem:[%s231 + $0x108] sm:$0xf]
      %v323 = vld [vmem:[%s231 + $0x10c] sm:$0xf]
      %v324 = vld [vmem:[%s231 + $0x110] sm:$0xf]
      %v325 = vld [vmem:[%s231 + $0x114] sm:$0xf]
      %v326 = vld [vmem:[%s231 + $0x118] sm:$0xf]
      %v327 = vld [vmem:[%s231 + $0x11c] sm:$0xf]
      %v328 = vld [vmem:[%s231 + $0x120] sm:$0xf]
      %v329 = vld [vmem:[%s231 + $0x124] sm:$0xf]
      %v330 = vld [vmem:[%s231 + $0x128] sm:$0xf]
      %v331 = vld [vmem:[%s231 + $0x12c] sm:$0xf]
      %v332 = vld [vmem:[%s231 + $0x130] sm:$0xf]
      %v333 = vld [vmem:[%s231 + $0x134] sm:$0xf]
      %v334 = vld [vmem:[%s231 + $0x138] sm:$0xf]
      %v335 = vld [vmem:[%s231 + $0x13c] sm:$0xf]
      %v336 = vld [vmem:[%s231 + $0x140] sm:$0xf]
      %v337 = vld [vmem:[%s231 + $0x144] sm:$0xf]
      %v338 = vld [vmem:[%s231 + $0x148] sm:$0xf]
      %v339 = vld [vmem:[%s231 + $0x14c] sm:$0xf]
      %v340 = vld [vmem:[%s231 + $0x150] sm:$0xf]
      %v341 = vld [vmem:[%s231 + $0x154] sm:$0xf]
      %v342 = vld [vmem:[%s231 + $0x158] sm:$0xf]
      %v343 = vld [vmem:[%s231 + $0x15c] sm:$0xf]
      %v344 = vld [vmem:[%s231 + $0x160] sm:$0xf]
      %v345 = vld [vmem:[%s231 + $0x164] sm:$0xf]
      %v346 = vld [vmem:[%s231 + $0x168] sm:$0xf]
      %v347 = vld [vmem:[%s231 + $0x16c] sm:$0xf]
      %v348 = vld [vmem:[%s231 + $0x170] sm:$0xf]
      %v349 = vld [vmem:[%s231 + $0x174] sm:$0xf]
      %v350 = vld [vmem:[%s231 + $0x178] sm:$0xf]
      %v351 = vld [vmem:[%s231 + $0x17c] sm:$0xf]
      %v352 = vld [vmem:[%s231 + $0x180] sm:$0xf]
      %v353 = vld [vmem:[%s231 + $0x184] sm:$0xf]
      %v354 = vld [vmem:[%s231 + $0x188] sm:$0xf]
      %v355 = vld [vmem:[%s231 + $0x18c] sm:$0xf]
      %v356 = vld [vmem:[%s231 + $0x190] sm:$0xf]
      %v357 = vld [vmem:[%s231 + $0x194] sm:$0xf]
      %v358 = vld [vmem:[%s231 + $0x198] sm:$0xf]
      %v359 = vld [vmem:[%s231 + $0x19c] sm:$0xf]
      %v360 = vld [vmem:[%s231 + $0x1a0] sm:$0xf]
      %v361 = vld [vmem:[%s231 + $0x1a4] sm:$0xf]
      %v362 = vld [vmem:[%s231 + $0x1a8] sm:$0xf]
      %v363 = vld [vmem:[%s231 + $0x1ac] sm:$0xf]
      %v364 = vld [vmem:[%s231 + $0x1b0] sm:$0xf]
      %v365 = vld [vmem:[%s231 + $0x1b4] sm:$0xf]
      %v366 = vld [vmem:[%s231 + $0x1b8] sm:$0xf]
      %v367 = vld [vmem:[%s231 + $0x1bc] sm:$0xf]
      %v376 = vunpack.c.l.b16 %v248
      %v377 = vunpack.c.h.b16 %v248
      %v378 = vunpack.c.l.b16 %v249
      %v379 = vunpack.c.h.b16 %v249
      %v380 = vunpack.c.l.b16 %v250
      %v381 = vunpack.c.h.b16 %v250
      %v382 = vunpack.c.l.b16 %v251
      %v383 = vunpack.c.l.b16 %v252
      %v384 = vunpack.c.h.b16 %v252
      %v385 = vunpack.c.l.b16 %v253
      %v386 = vunpack.c.h.b16 %v253
      %v387 = vunpack.c.l.b16 %v254
      %v388 = vunpack.c.h.b16 %v254
      %v389 = vunpack.c.l.b16 %v255
      %v390 = vpack.c.b16 %v383, %v376
      %v391 = vpack.c.b16 %v384, %v377
      %v392 = vpack.c.b16 %v385, %v378
      %v393 = vpack.c.b16 %v386, %v379
      %v394 = vpack.c.b16 %v387, %v380
      %v395 = vpack.c.b16 %v388, %v381
      %v396 = vpack.c.b16 %v389, %v382
      %v516 = vunpack.c.l.b16 %v256
      %v517 = vunpack.c.l.b16 %v257
      %v518 = vunpack.c.l.b16 %v258
      %v519 = vunpack.c.l.b16 %v259
      %v520 = vunpack.c.l.b16 %v260
      %v521 = vunpack.c.l.b16 %v261
      %v522 = vunpack.c.l.b16 %v262
      %v523 = vunpack.c.l.b16 %v263
      %v524 = vunpack.c.l.b16 %v264
      %v525 = vunpack.c.l.b16 %v265
      %v526 = vunpack.c.l.b16 %v266
      %v527 = vunpack.c.l.b16 %v267
      %v528 = vunpack.c.l.b16 %v268
      %v529 = vunpack.c.l.b16 %v269
      %v530 = vunpack.c.l.b16 %v270
      %v531 = vunpack.c.l.b16 %v271
      %v532 = vunpack.c.l.b16 %v272
      %v533 = vunpack.c.l.b16 %v273
      %v534 = vunpack.c.l.b16 %v274
      %v535 = vunpack.c.l.b16 %v275
      %v536 = vunpack.c.l.b16 %v276
      %v537 = vunpack.c.l.b16 %v277
      %v538 = vunpack.c.l.b16 %v278
      %v539 = vunpack.c.l.b16 %v279
      %v540 = vunpack.c.l.b16 %v280
      %v541 = vunpack.c.l.b16 %v281
      %v542 = vunpack.c.l.b16 %v282
      %v543 = vunpack.c.l.b16 %v283
      %v544 = vunpack.c.l.b16 %v284
      %v545 = vunpack.c.l.b16 %v285
      %v546 = vunpack.c.l.b16 %v286
      %v547 = vunpack.c.l.b16 %v287
      %v548 = vunpack.c.l.b16 %v288
      %v549 = vunpack.c.l.b16 %v289
      %v550 = vunpack.c.l.b16 %v290
      %v551 = vunpack.c.l.b16 %v291
      %v552 = vunpack.c.l.b16 %v292
      %v553 = vunpack.c.l.b16 %v293
      %v554 = vunpack.c.l.b16 %v294
      %v555 = vunpack.c.l.b16 %v295
      %v556 = vunpack.c.l.b16 %v296
      %v557 = vunpack.c.l.b16 %v297
      %v558 = vunpack.c.l.b16 %v298
      %v559 = vunpack.c.l.b16 %v299
      %v560 = vunpack.c.l.b16 %v300
      %v561 = vunpack.c.l.b16 %v301
      %v562 = vunpack.c.l.b16 %v302
      %v563 = vunpack.c.l.b16 %v303
      %v564 = vunpack.c.l.b16 %v304
      %v565 = vunpack.c.l.b16 %v305
      %v566 = vunpack.c.l.b16 %v306
      %v567 = vunpack.c.l.b16 %v307
      %v568 = vunpack.c.l.b16 %v308
      %v569 = vunpack.c.l.b16 %v309
      %v570 = vunpack.c.l.b16 %v310
      %v571 = vunpack.c.l.b16 %v311
      %v572 = vunpack.c.l.b16 %v312
      %v573 = vunpack.c.l.b16 %v313
      %v574 = vunpack.c.l.b16 %v314
      %v575 = vunpack.c.l.b16 %v315
      %v576 = vunpack.c.l.b16 %v316
      %v577 = vunpack.c.l.b16 %v317
      %v578 = vunpack.c.l.b16 %v318
      %v579 = vunpack.c.l.b16 %v319
      %v580 = vunpack.c.l.b16 %v320
      %v581 = vunpack.c.l.b16 %v321
      %v582 = vunpack.c.l.b16 %v322
      %v583 = vunpack.c.l.b16 %v323
      %v584 = vunpack.c.l.b16 %v324
      %v585 = vunpack.c.l.b16 %v325
      %v586 = vunpack.c.l.b16 %v326
      %v587 = vunpack.c.l.b16 %v327
      %v588 = vunpack.c.l.b16 %v328
      %v589 = vunpack.c.l.b16 %v329
      %v590 = vunpack.c.l.b16 %v330
      %v591 = vunpack.c.l.b16 %v331
      %v592 = vunpack.c.l.b16 %v332
      %v593 = vunpack.c.l.b16 %v333
      %v594 = vunpack.c.l.b16 %v334
      %v595 = vunpack.c.l.b16 %v335
      %v596 = vunpack.c.l.b16 %v336
      %v597 = vunpack.c.l.b16 %v337
      %v598 = vunpack.c.l.b16 %v338
      %v599 = vunpack.c.l.b16 %v339
      %v600 = vunpack.c.l.b16 %v340
      %v601 = vunpack.c.l.b16 %v341
      %v602 = vunpack.c.l.b16 %v342
      %v603 = vunpack.c.l.b16 %v343
      %v604 = vunpack.c.l.b16 %v344
      %v605 = vunpack.c.l.b16 %v345
      %v606 = vunpack.c.l.b16 %v346
      %v607 = vunpack.c.l.b16 %v347
      %v608 = vunpack.c.l.b16 %v348
      %v609 = vunpack.c.l.b16 %v349
      %v610 = vunpack.c.l.b16 %v350
      %v611 = vunpack.c.l.b16 %v351
      %v612 = vunpack.c.l.b16 %v352
      %v613 = vunpack.c.l.b16 %v353
      %v614 = vunpack.c.l.b16 %v354
      %v615 = vunpack.c.l.b16 %v355
      %v616 = vunpack.c.l.b16 %v356
      %v617 = vunpack.c.l.b16 %v357
      %v618 = vunpack.c.l.b16 %v358
      %v619 = vunpack.c.l.b16 %v359
      %v620 = vunpack.c.l.b16 %v360
      %v621 = vunpack.c.l.b16 %v361
      %v622 = vunpack.c.l.b16 %v362
      %v623 = vunpack.c.l.b16 %v363
      %v624 = vunpack.c.l.b16 %v364
      %v625 = vunpack.c.l.b16 %v365
      %v626 = vunpack.c.l.b16 %v366
      %v627 = vunpack.c.l.b16 %v367
      %v628 = vpack.c.b16 %v517, %v516
      %v629 = vpack.c.b16 %v519, %v518
      %v630 = vpack.c.b16 %v521, %v520
      %v631 = vpack.c.b16 %v523, %v522
      %v632 = vpack.c.b16 %v525, %v524
      %v633 = vpack.c.b16 %v527, %v526
      %v634 = vpack.c.b16 %v529, %v528
      %v635 = vpack.c.b16 %v531, %v530
      %v636 = vpack.c.b16 %v533, %v532
      %v637 = vpack.c.b16 %v535, %v534
      %v638 = vpack.c.b16 %v537, %v536
      %v639 = vpack.c.b16 %v539, %v538
      %v640 = vpack.c.b16 %v541, %v540
      %v641 = vpack.c.b16 %v543, %v542
      %v642 = vpack.c.b16 %v545, %v544
      %v643 = vpack.c.b16 %v547, %v546
      %v644 = vpack.c.b16 %v549, %v548
      %v645 = vpack.c.b16 %v551, %v550
      %v646 = vpack.c.b16 %v553, %v552
      %v647 = vpack.c.b16 %v555, %v554
      %v648 = vpack.c.b16 %v557, %v556
      %v649 = vpack.c.b16 %v559, %v558
      %v650 = vpack.c.b16 %v561, %v560
      %v651 = vpack.c.b16 %v563, %v562
      %v652 = vpack.c.b16 %v565, %v564
      %v653 = vpack.c.b16 %v567, %v566
      %v654 = vpack.c.b16 %v569, %v568
      %v655 = vpack.c.b16 %v571, %v570
      %v656 = vpack.c.b16 %v573, %v572
      %v657 = vpack.c.b16 %v575, %v574
      %v658 = vpack.c.b16 %v577, %v576
      %v659 = vpack.c.b16 %v579, %v578
      %v660 = vpack.c.b16 %v581, %v580
      %v661 = vpack.c.b16 %v583, %v582
      %v662 = vpack.c.b16 %v585, %v584
      %v663 = vpack.c.b16 %v587, %v586
      %v664 = vpack.c.b16 %v589, %v588
      %v665 = vpack.c.b16 %v591, %v590
      %v666 = vpack.c.b16 %v593, %v592
      %v667 = vpack.c.b16 %v595, %v594
      %v668 = vpack.c.b16 %v597, %v596
      %v669 = vpack.c.b16 %v599, %v598
      %v670 = vpack.c.b16 %v601, %v600
      %v671 = vpack.c.b16 %v603, %v602
      %v672 = vpack.c.b16 %v605, %v604
      %v673 = vpack.c.b16 %v607, %v606
      %v674 = vpack.c.b16 %v609, %v608
      %v675 = vpack.c.b16 %v611, %v610
      %v676 = vpack.c.b16 %v613, %v612
      %v677 = vpack.c.b16 %v615, %v614
      %v678 = vpack.c.b16 %v617, %v616
      %v679 = vpack.c.b16 %v619, %v618
      %v680 = vpack.c.b16 %v621, %v620
      %v681 = vpack.c.b16 %v623, %v622
      %v682 = vpack.c.b16 %v625, %v624
      %v683 = vpack.c.b16 %v627, %v626
      %740 = vmatprep.subr.bf16.mxu0 0
      %741 = vmatpush1.bf16.msra.mxu0 %v635
      %742 = vmatprep.subr.bf16.mxu0 0
      %743 = vmatpush1.bf16.msra.mxu0 %v634
      %744 = vmatprep.subr.bf16.mxu0 0
      %745 = vmatpush1.bf16.msra.mxu0 %v633
      %746 = vmatprep.subr.bf16.mxu0 0
      %747 = vmatpush1.bf16.msra.mxu0 %v632
      %748 = vmatprep.subr.bf16.mxu0 0
      %749 = vmatpush1.bf16.msra.mxu0 %v631
      %750 = vmatprep.subr.bf16.mxu0 0
      %751 = vmatpush1.bf16.msra.mxu0 %v630
      %752 = vmatprep.subr.bf16.mxu0 0
      %753 = vmatpush1.bf16.msra.mxu0 %v629
      %754 = vmatprep.subr.bf16.mxu0 0
      %755 = vmatpush1.bf16.msra.mxu0 %v628
      %756 = vmatprep.subr.bf16.mxu0 0
      %757 = vmatpush2.bf16.msra.mxu0 %v643
      %758 = vmatprep.subr.bf16.mxu0 0
      %759 = vmatpush2.bf16.msra.mxu0 %v642
      %760 = vmatprep.subr.bf16.mxu0 0
      %761 = vmatpush2.bf16.msra.mxu0 %v641
      %762 = vmatprep.subr.bf16.mxu0 0
      %763 = vmatpush2.bf16.msra.mxu0 %v640
      %764 = vmatprep.subr.bf16.mxu0 0
      %765 = vmatpush2.bf16.msra.mxu0 %v639
      %766 = vmatprep.subr.bf16.mxu0 0
      %767 = vmatpush2.bf16.msra.mxu0 %v638
      %768 = vmatprep.subr.bf16.mxu0 0
      %769 = vmatpush2.bf16.msra.mxu0 %v637
      %770 = vmatprep.subr.bf16.mxu0 0
      %771 = vmatpush2.bf16.msra.mxu0 %v636
      %772 = vmatprep.mubr.bf16.mxu0 %v391
      %773 = vmatmul.mubr.bf16.gmra.mxu0 %v390
      %v774 = vpop.f32.mrf.mxu0
      %v775 = vadd.f32 0.0, %v774
      %v776 = vpop.f32.mrf.mxu0
      %v777 = vpop.f32.mrf.mxu0
      %v778 = vadd.f32 0.0, %v777
      %v779 = vpop.f32.mrf.mxu0
      %780 = vdwg.mxu0
      %781 = vmatprep.subr.bf16.mxu0 0
      %782 = vmatpush1.bf16.msra.mxu0 %v651
      %783 = vmatprep.subr.bf16.mxu0 0
      %784 = vmatpush1.bf16.msra.mxu0 %v650
      %785 = vmatprep.subr.bf16.mxu0 0
      %786 = vmatpush1.bf16.msra.mxu0 %v649
      %787 = vmatprep.subr.bf16.mxu0 0
      %788 = vmatpush1.bf16.msra.mxu0 %v648
      %789 = vmatprep.subr.bf16.mxu0 0
      %790 = vmatpush1.bf16.msra.mxu0 %v647
      %791 = vmatprep.subr.bf16.mxu0 0
      %792 = vmatpush1.bf16.msra.mxu0 %v646
      %793 = vmatprep.subr.bf16.mxu0 0
      %794 = vmatpush1.bf16.msra.mxu0 %v645
      %795 = vmatprep.subr.bf16.mxu0 0
      %796 = vmatpush1.bf16.msra.mxu0 %v644
      %797 = vmatprep.subr.bf16.mxu0 0
      %798 = vmatpush2.bf16.msra.mxu0 %v659
      %799 = vmatprep.subr.bf16.mxu0 0
      %800 = vmatpush2.bf16.msra.mxu0 %v658
      %801 = vmatprep.subr.bf16.mxu0 0
      %802 = vmatpush2.bf16.msra.mxu0 %v657
      %803 = vmatprep.subr.bf16.mxu0 0
      %804 = vmatpush2.bf16.msra.mxu0 %v656
      %805 = vmatprep.subr.bf16.mxu0 0
      %806 = vmatpush2.bf16.msra.mxu0 %v655
      %807 = vmatprep.subr.bf16.mxu0 0
      %808 = vmatpush2.bf16.msra.mxu0 %v654
      %809 = vmatprep.subr.bf16.mxu0 0
      %810 = vmatpush2.bf16.msra.mxu0 %v653
      %811 = vmatprep.subr.bf16.mxu0 0
      %812 = vmatpush2.bf16.msra.mxu0 %v652
      %813 = vmatprep.mubr.bf16.mxu0 %v393
      %814 = vmatmul.mubr.bf16.gmra.mxu0 %v392
      %v815 = vpop.f32.mrf.mxu0
      %v816 = vadd.f32 %v775, %v815
      %v817 = vpop.f32.mrf.mxu0
      %v818 = vpop.f32.mrf.mxu0
      %v819 = vadd.f32 %v778, %v818
      %v820 = vpop.f32.mrf.mxu0
      %821 = vdwg.mxu0
      %822 = vmatprep.subr.bf16.mxu0 0
      %823 = vmatpush1.bf16.msra.mxu0 %v667
      %824 = vmatprep.subr.bf16.mxu0 0
      %825 = vmatpush1.bf16.msra.mxu0 %v666
      %826 = vmatprep.subr.bf16.mxu0 0
      %827 = vmatpush1.bf16.msra.mxu0 %v665
      %828 = vmatprep.subr.bf16.mxu0 0
      %829 = vmatpush1.bf16.msra.mxu0 %v664
      %830 = vmatprep.subr.bf16.mxu0 0
      %831 = vmatpush1.bf16.msra.mxu0 %v663
      %832 = vmatprep.subr.bf16.mxu0 0
      %833 = vmatpush1.bf16.msra.mxu0 %v662
      %834 = vmatprep.subr.bf16.mxu0 0
      %835 = vmatpush1.bf16.msra.mxu0 %v661
      %836 = vmatprep.subr.bf16.mxu0 0
      %837 = vmatpush1.bf16.msra.mxu0 %v660
      %838 = vmatprep.subr.bf16.mxu0 0
      %839 = vmatpush2.bf16.msra.mxu0 %v675
      %840 = vmatprep.subr.bf16.mxu0 0
      %841 = vmatpush2.bf16.msra.mxu0 %v674
      %842 = vmatprep.subr.bf16.mxu0 0
      %843 = vmatpush2.bf16.msra.mxu0 %v673
      %844 = vmatprep.subr.bf16.mxu0 0
      %845 = vmatpush2.bf16.msra.mxu0 %v672
      %846 = vmatprep.subr.bf16.mxu0 0
      %847 = vmatpush2.bf16.msra.mxu0 %v671
      %848 = vmatprep.subr.bf16.mxu0 0
      %849 = vmatpush2.bf16.msra.mxu0 %v670
      %850 = vmatprep.subr.bf16.mxu0 0
      %851 = vmatpush2.bf16.msra.mxu0 %v669
      %852 = vmatprep.subr.bf16.mxu0 0
      %853 = vmatpush2.bf16.msra.mxu0 %v668
      %854 = vmatprep.mubr.bf16.mxu0 %v395
      %855 = vmatmul.mubr.bf16.gmra.mxu0 %v394
      %v856 = vpop.f32.mrf.mxu0
      %v857 = vadd.f32 %v816, %v856
      %v858 = vpop.f32.mrf.mxu0
      %v859 = vpop.f32.mrf.mxu0
      %v860 = vadd.f32 %v819, %v859
      %v861 = vpop.f32.mrf.mxu0
      %862 = vdwg.mxu0
      %863 = vmatprep.subr.bf16.mxu0 0
      %864 = vmatpush1.bf16.msra.mxu0 %v683
      %865 = vmatprep.subr.bf16.mxu0 0
      %866 = vmatpush1.bf16.msra.mxu0 %v682
      %867 = vmatprep.subr.bf16.mxu0 0
      %868 = vmatpush1.bf16.msra.mxu0 %v681
      %869 = vmatprep.subr.bf16.mxu0 0
      %870 = vmatpush1.bf16.msra.mxu0 %v680
      %871 = vmatprep.subr.bf16.mxu0 0
      %872 = vmatpush1.bf16.msra.mxu0 %v679
      %873 = vmatprep.subr.bf16.mxu0 0
      %874 = vmatpush1.bf16.msra.mxu0 %v678
      %875 = vmatprep.subr.bf16.mxu0 0
      %876 = vmatpush1.bf16.msra.mxu0 %v677
      %877 = vmatprep.subr.bf16.mxu0 0
      %878 = vmatpush1.bf16.msra.mxu0 %v676
      %879 = vmatprep.subr.bf16.mxu0 0
      %880 = vmatpush2.bf16.msra.mxu0 0
      %881 = vmatprep.subr.bf16.mxu0 0
      %882 = vmatpush2.bf16.msra.mxu0 0
      %883 = vmatprep.subr.bf16.mxu0 0
      %884 = vmatpush2.bf16.msra.mxu0 0
      %885 = vmatprep.subr.bf16.mxu0 0
      %886 = vmatpush2.bf16.msra.mxu0 0
      %887 = vmatprep.subr.bf16.mxu0 0
      %888 = vmatpush2.bf16.msra.mxu0 0
      %889 = vmatprep.subr.bf16.mxu0 0
      %890 = vmatpush2.bf16.msra.mxu0 0
      %891 = vmatprep.subr.bf16.mxu0 0
      %892 = vmatpush2.bf16.msra.mxu0 0
      %893 = vmatprep.subr.bf16.mxu0 0
      %894 = vmatpush2.bf16.msra.mxu0 0
      %895 = vmatprep.mubr.bf16.mxu0 0
      %896 = vmatmul.mubr.bf16.gmra.mxu0 %v396
      %v897 = vpop.f32.mrf.mxu0
      %v898 = vadd.f32 %v857, %v897
      %v899 = vpop.f32.mrf.mxu0
      %v900 = vpop.f32.mrf.mxu0
      %v901 = vadd.f32 %v860, %v900
      %v902 = vpop.f32.mrf.mxu0
      %903 = vdwg.mxu0
      %p904 = scmp.eq.s32.totalorder %s21, 0
      // Predicated region
      $region33: #{fpa_v2_forward.12} parent=31 // pred_check
        %p905 = pneg %p904
      $region34: #{fpa_v2_forward.12} parent=31 // pred_check_branch
        %907 = sbr.rel (%p905) target = $region36
      $region35: #{fpa_v2_forward.12} parent=31 // pred_region
        %908 = vst [vmem:[#allocation2] sm:$0xff] %v898
        %909 = vst [vmem:[#allocation2 + $0x8] sm:$0xff] %v901
      $region36: #{fpa_v2_forward.12} parent=31 // pred_fallthru
        _
      %p910 = scmp.gt.s32.totalorder %s21, 0
      // Predicated region
      $region37: #{fpa_v2_forward.12} parent=31 // pred_check
        %p911 = pneg %p910
      $region38: #{fpa_v2_forward.12} parent=31 // pred_check_branch
        %913 = sbr.rel (%p911) target = $region40
      $region39: #{fpa_v2_forward.12} parent=31 // pred_region
        %v914 = vld [vmem:[#allocation2] sm:$0xff]
        %v915 = vld [vmem:[#allocation2 + $0x8] sm:$0xff]
        %v916 = vadd.f32 %v914, %v898
        %v917 = vadd.f32 %v915, %v901
        %918 = vst [vmem:[#allocation2] sm:$0xff] %v916
        %919 = vst [vmem:[#allocation2 + $0x8] sm:$0xff] %v917
      $region40: #{fpa_v2_forward.12} parent=31 // pred_fallthru
        _
      // Predicated region
      $region41: #{fpa_v2_forward.12} parent=31 // pred_check
        %p920 = pneg %p904
      $region42: #{fpa_v2_forward.12} parent=31 // pred_check_branch
        %922 = sbr.rel (%p920) target = $region44
      $region43: #{fpa_v2_forward.12} parent=31 // pred_region
        %v923 = vld [vmem:[#allocation2] sm:$0xff]
        %v924 = vld [vmem:[#allocation2 + $0x8] sm:$0xff]
        %v925 = vld [vmem:[%s2] sm:$0xff]
        %v926 = vld [vmem:[%s2 + $0x8] sm:$0xff]
        %928 = vset.pattern.permute.xlu0 0
        %929 = vperm.xlu0 %928, %v925
        %v930 = vpop.permute.xlu0 %929
        %933 = vset.pattern.permute.xlu0 0
        %934 = vperm.xlu0 %933, %v926
        %v935 = vpop.permute.xlu0 %934
        %v937 = vadd.f32 %v923, %v930
        %v938 = vadd.f32 %v924, %v935
        %v939 = vmax.f32 %v937, 0.0
        %v940 = vmax.f32 %v938, 0.0
        %v941 = vpack.c.bf16 %v940, %v939
        %v943 = vunpack.c.l.b16 %v941
        %v944 = vunpack.c.h.b16 %v941
        %v945 = vpack.c.b16 %v943, %v943
        %v946 = vpack.c.b16 %v944, %v944
        %949 = vst [vmem:[%s246] sm:$0xf] %v945
        %950 = vst [vmem:[%s246 + $0x4] sm:$0xf] %v946
      $region44: #{fpa_v2_forward.12} parent=31 // pred_fallthru
        _
      %p951 = scmp.lt.s32.totalorder %s19, 1
      %s952 = scalar_select %p951, %s19, 1
      %p953 = scmp.lt.s32.totalorder %s20, 0
      %s954 = scalar_select %p953, %s20, 0
      %s955 = smul.addr %s952, 2
      %s956 = sadd.s32 %s954, %s955
      %s957 = smul.addr %s956, 4
      %s958 = scalar_lea.vmem %s3, %s957
      // Predicated region
      $region45: #{fpa_v2_forward.12} parent=31 // pred_check
        %p959 = pneg %p130
      $region46: #{fpa_v2_forward.12} parent=31 // pred_check_branch
        %961 = sbr.rel (%p959) target = $region48
      $region47: #{fpa_v2_forward.12} parent=31 // pred_region
        _
      $region48: #{fpa_v2_forward.12} parent=31 // pred_fallthru
        _
    $region32: #{fpa_v2_forward.12} parent=5 // pred_fallthru
      _
    %p962 = scmp.le.s32.totalorder 2, %s9
    // Predicated region
    $region49: #{fpa_v2_forward.12} parent=5 // pred_check
      %p963 = pneg %p962
    $region50: #{fpa_v2_forward.12} parent=5 // pred_check_branch
      %965 = sbr.rel (%p963) target = $region52
    $region51: #{fpa_v2_forward.12} parent=5 // pred_region
      %s966 = ssub.s32 %s9, 2
      // Predicated region
      $region53: #{fpa_v2_forward.12} parent=51 // pred_check
        %p967 = pneg %p136
      $region54: #{fpa_v2_forward.12} parent=51 // pred_check_branch
        %969 = sbr.rel (%p967) target = $region56
      $region55: #{fpa_v2_forward.12} parent=51 // pred_region
        %p970 = scmp.lt.s32.totalorder %s22, 1
        %s971 = scalar_select %p970, %s22, 1
        %p972 = scmp.lt.s32.totalorder %s23, 0
        %s973 = scalar_select %p972, %s23, 0
        %s974 = smul.addr %s971, 2
        %s975 = sadd.s32 %s973, %s974
        %s976 = smul.addr %s975, 4
        %s977 = scalar_lea.vmem %s3, %s976
      $region56: #{fpa_v2_forward.12} parent=51 // pred_fallthru
        _
    $region52: #{fpa_v2_forward.12} parent=5 // pred_fallthru
      _
  $region6: #{fpa_v2_forward.12} parent=0 // loop_footer
    %s13 = sadd.s32 1, %s9
  $region7: #{fpa_v2_forward.12} parent=0 // loop_footer_branch
    %8 = sbr.rel target = $region3
  $region8: #{fpa_v2_forward.12} parent=0 // loop_exit
    _

// kernel: fpa_v2_forward.13
$region0: #{fpa_v2_forward.13}
  #allocation0 [shape = 'u32[]', space=smem, size = 0x4, offset = 0x4, fixed_abs, tag = 'smem constant byte address 0x4 - core index']
  #allocation1 [shape = 'u32[144,128]{1,0:T(1,128)}', space=vmem, size = 0x12000, scoped, tag = 'internal scratch']
  #allocation2 [shape = 'f32[32,128]{1,0:T(8,128)}', space=vmem, size = 0x4000, scoped, tag = 'scratch operand']
  %s0 = inlined_call_operand.vmem [shape: bf16[2,384,128], index: 0, kind: input, shape index: {}]
  %s1 = inlined_call_operand.vmem [shape: bf16[32,384], index: 1, kind: input, shape index: {}]
  %s2 = inlined_call_operand.vmem [shape: f32[32,1], index: 2, kind: input, shape index: {}]
  %s3 = inlined_call_operand.vmem [shape: bf16[2,32,128], index: 3, kind: output, shape index: {}]
  %s4 = sld [smem:[#allocation0]]
  $region57: #{fpa_v2_forward.13} parent=0
    _
  %s6 = ssub.s32 1, %s4
  %s7 = scalar_select 0, %s6, %s4
  loop: start=0, step=1, limit=4
  $region2: #{fpa_v2_forward.13} parent=0 // loop_pre_header
    _
  $region3: #{fpa_v2_forward.13} parent=0 // loop_header
    %s9 = sphi 0, %s13
    %p10 = scmp.ge.s32.totalorder %s9, 4
    %s16 = sphi 0, %s35
    %s17 = sphi 0, %s31
    %s18 = sphi 0, %s27
    %s19 = sphi 0, %s16
    %s20 = sphi 0, %s17
    %s21 = sphi 0, %s18
    %s22 = sphi 0, %s19
    %s23 = sphi 0, %s20
    %s24 = sphi 0, %s21
    %s42 = sphi 0, %s44
    %s45 = sphi 0, %s42
    %s46 = sphi 0, %s45
    %s62 = sphi 0, %s46
    %s68 = sphi 0, %s70
    %s71 = sphi 0, %s68
    %s72 = sphi 0, %s71
    %s88 = sphi 0, %s72
    %s92 = sphi 0, %s92
    %s94 = sphi 0, %s92
    %s95 = sphi 0, %s94
    %s109 = sphi 0, %s95
    %s117 = sphi 0, %s119
    %s120 = sphi 0, %s117
    %s121 = sphi 0, %s120
    %s137 = sphi 0, %s121
  $region4: #{fpa_v2_forward.13} parent=0 // loop_header_branch
    %12 = sbr.rel (%p10) target = $region8
  $region5: #{fpa_v2_forward.13} parent=0 // loop_body
    %s14 = ssub.s32 %s9, 1
    %s15 = ssub.s32 %s9, 2
    %s25 = sadd.s32 1, %s18
    %p26 = scmp.ge.s32.totalorder %s25, 1
    %s27 = scalar_select %p26, 0, %s25
    %s28 = sadd.s32 1, %s17
    %s29 = scalar_select %p26, %s28, %s17
    %p30 = scmp.ge.s32.totalorder %s29, 1
    %s31 = scalar_select %p30, 0, %s29
    %s32 = sadd.s32 1, %s16
    %s33 = scalar_select %p30, %s32, %s16
    %p34 = scmp.ge.s32.totalorder %s33, 2
    %s35 = scalar_select %p34, 0, %s33
    %s36 = ssub.s32 %s16, %s35
    %s37 = ssub.s32 %s18, %s27
    %s38 = sor.u32 %s36, %s37
    %s39 = ssub.s32 %s17, %s31
    %s40 = sor.u32 %s38, %s39
    %p41 = scmp.eq.s32.totalorder %s40, 0
    %s43 = sadd.s32 %s42, 1
    %s44 = scalar_select %p41, %s42, %s43
    %p47 = pneg %p41
    %p48 = scmp.eq.s32.totalorder %s9, 1
    %p49 = por %p47, %p48
    %p50 = scmp.ne.s32.totalorder %s42, %s45
    %p51 = scmp.eq.s32.totalorder %s9, 0
    %p52 = por %p50, %p51
    %p53 = scmp.ne.s32.totalorder %s42, %s45
    %p54 = scmp.eq.s32.totalorder %s14, 1
    %p55 = por %p53, %p54
    %p56 = scmp.ne.s32.totalorder %s45, %s46
    %p57 = scmp.eq.s32.totalorder %s14, 0
    %p58 = por %p56, %p57
    %p59 = scmp.ne.s32.totalorder %s45, %s46
    %p60 = scmp.eq.s32.totalorder %s15, 1
    %p61 = por %p59, %p60
    %p63 = scmp.ne.s32.totalorder %s46, %s62
    %p64 = scmp.eq.s32.totalorder %s15, 0
    %p65 = por %p63, %p64
    %s66 = ssub.s32 %s18, %s27
    %p67 = scmp.eq.s32.totalorder %s66, 0
    %s69 = sadd.s32 %s68, 1
    %s70 = scalar_select %p67, %s68, %s69
    %p73 = pneg %p67
    %p74 = scmp.eq.s32.totalorder %s9, 1
    %p75 = por %p73, %p74
    %p76 = scmp.ne.s32.totalorder %s68, %s71
    %p77 = scmp.eq.s32.totalorder %s9, 0
    %p78 = por %p76, %p77
    %p79 = scmp.ne.s32.totalorder %s68, %s71
    %p80 = scmp.eq.s32.totalorder %s14, 1
    %p81 = por %p79, %p80
    %p82 = scmp.ne.s32.totalorder %s71, %s72
    %p83 = scmp.eq.s32.totalorder %s14, 0
    %p84 = por %p82, %p83
    %p85 = scmp.ne.s32.totalorder %s71, %s72
    %p86 = scmp.eq.s32.totalorder %s15, 1
    %p87 = por %p85, %p86
    %p89 = scmp.ne.s32.totalorder %s72, %s88
    %p90 = scmp.eq.s32.totalorder %s15, 0
    %p91 = por %p89, %p90
    %s93 = sadd.s32 %s92, 1
    %p96 = scmp.eq.s32.totalorder %s9, 1
    %p97 = scmp.ne.s32.totalorder %s92, %s94
    %p98 = scmp.eq.s32.totalorder %s9, 0
    %p99 = por %p97, %p98
    %p100 = scmp.ne.s32.totalorder %s92, %s94
    %p101 = scmp.eq.s32.totalorder %s14, 1
    %p102 = por %p100, %p101
    %p103 = scmp.ne.s32.totalorder %s94, %s95
    %p104 = scmp.eq.s32.totalorder %s14, 0
    %p105 = por %p103, %p104
    %p106 = scmp.ne.s32.totalorder %s94, %s95
    %p107 = scmp.eq.s32.totalorder %s15, 1
    %p108 = por %p106, %p107
    %p110 = scmp.ne.s32.totalorder %s95, %s109
    %p111 = scmp.eq.s32.totalorder %s15, 0
    %p112 = por %p110, %p111
    %s113 = ssub.s32 %s16, %s35
    %s114 = ssub.s32 %s17, %s31
    %s115 = sor.u32 %s113, %s114
    %p116 = scmp.eq.s32.totalorder %s115, 0
    %s118 = sadd.s32 %s117, 1
    %s119 = scalar_select %p116, %s117, %s118
    %p122 = pneg %p116
    %p123 = scmp.eq.s32.totalorder %s9, 1
    %p124 = por %p122, %p123
    %p125 = scmp.ne.s32.totalorder %s117, %s120
    %p126 = scmp.eq.s32.totalorder %s9, 0
    %p127 = por %p125, %p126
    %p128 = scmp.ne.s32.totalorder %s117, %s120
    %p129 = scmp.eq.s32.totalorder %s14, 1
    %p130 = por %p128, %p129
    %p131 = scmp.ne.s32.totalorder %s120, %s121
    %p132 = scmp.eq.s32.totalorder %s14, 0
    %p133 = por %p131, %p132
    %p134 = scmp.ne.s32.totalorder %s120, %s121
    %p135 = scmp.eq.s32.totalorder %s15, 1
    %p136 = por %p134, %p135
    %p138 = scmp.ne.s32.totalorder %s121, %s137
    %p139 = scmp.eq.s32.totalorder %s15, 0
    %p140 = por %p138, %p139
    %p141 = scmp.le.s32.totalorder 1, %s9
    %p142 = scmp.lt.s32.totalorder %s9, 3
    %p143 = pnand %p141, %p142
    %p144 = pneg %p143
    // Predicated region
    $region9: #{fpa_v2_forward.13} parent=5 // pred_check
      _
    $region10: #{fpa_v2_forward.13} parent=5 // pred_check_branch
      %146 = sbr.rel (%p143) target = $region12
    $region11: #{fpa_v2_forward.13} parent=5 // pred_region
      %s147 = ssub.s32 %s9, 1
      // Predicated region
      $region13: #{fpa_v2_forward.13} parent=11 // pred_check
        %p148 = pneg %p84
      $region14: #{fpa_v2_forward.13} parent=11 // pred_check_branch
        %150 = sbr.rel (%p148) target = $region16
      $region15: #{fpa_v2_forward.13} parent=11 // pred_region
        %s151 = smul.u32 3, %s21
        %p152 = scmp.lt.s32.totalorder %s151, 2
        %s153 = scalar_select %p152, %s151, 2
        %s154 = smul.addr %s153, 4
        %s155 = scalar_lea.vmem %s1, %s154
        %s156 = smul.u32 3, %s21
      $region16: #{fpa_v2_forward.13} parent=11 // pred_fallthru
        _
      // Predicated region
      $region17: #{fpa_v2_forward.13} parent=11 // pred_check
        %p157 = pneg %p105
      $region18: #{fpa_v2_forward.13} parent=11 // pred_check_branch
        %159 = sbr.rel (%p157) target = $region20
      $region19: #{fpa_v2_forward.13} parent=11 // pred_region
        _
      $region20: #{fpa_v2_forward.13} parent=11 // pred_fallthru
        _
    $region12: #{fpa_v2_forward.13} parent=5 // pred_fallthru
      _
    %p160 = scmp.lt.s32.totalorder %s9, 2
    // Predicated region
    $region21: #{fpa_v2_forward.13} parent=5 // pred_check
      %p161 = pneg %p160
    $region22: #{fpa_v2_forward.13} parent=5 // pred_check_branch
      %163 = sbr.rel (%p161) target = $region24
    $region23: #{fpa_v2_forward.13} parent=5 // pred_region
      // Predicated region
      $region25: #{fpa_v2_forward.13} parent=23 // pred_check
        %p164 = pneg %p52
      $region26: #{fpa_v2_forward.13} parent=23 // pred_check_branch
        %166 = sbr.rel (%p164) target = $region28
      $region27: #{fpa_v2_forward.13} parent=23 // pred_region
        %s167 = smul.u32 48, %s18
        %p168 = scmp.lt.s32.totalorder %s16, 1
        %s169 = scalar_select %p168, %s16, 1
        %p170 = scmp.lt.s32.totalorder %s167, 47
        %s171 = scalar_select %p170, %s167, 47
        %p172 = scmp.lt.s32.totalorder %s17, 0
        %s173 = scalar_select %p172, %s17, 0
        %s174 = sadd.s32 %s173, %s171
        %s175 = smul.addr %s169, 48
        %s176 = sadd.s32 %s174, %s175
        %s177 = smul.addr %s176, 4
        %s178 = scalar_lea.vmem %s0, %s177
        %s179 = smul.u32 48, %s18
      $region28: #{fpa_v2_forward.13} parent=23 // pred_fallthru
        _
    $region24: #{fpa_v2_forward.13} parent=5 // pred_fallthru
      _
    %p180 = scmp.le.s32.totalorder 1, %s9
    %p181 = scmp.lt.s32.totalorder %s9, 3
    %p182 = pnand %p180, %p181
    %p183 = pneg %p182
    // Predicated region
    $region29: #{fpa_v2_forward.13} parent=5 // pred_check
      _
    $region30: #{fpa_v2_forward.13} parent=5 // pred_check_branch
      %185 = sbr.rel (%p182) target = $region32
    $region31: #{fpa_v2_forward.13} parent=5 // pred_region
      %s186 = ssub.s32 %s9, 1
      %s187 = smul.u32 48, %s21
      %p188 = scmp.lt.s32.totalorder %s19, 1
      %s189 = scalar_select %p188, %s19, 1
      %p190 = scmp.lt.s32.totalorder %s187, 47
      %s191 = scalar_select %p190, %s187, 47
      %p192 = scmp.lt.s32.totalorder %s20, 0
      %s193 = scalar_select %p192, %s20, 0
      %s194 = sadd.s32 %s193, %s191
      %s195 = smul.addr %s189, 48
      %s196 = sadd.s32 %s194, %s195
      %s197 = smul.addr %s196, 4
      %s198 = scalar_lea.vmem %s0, %s197
      %p199 = pneg %p58
      %p200 = pneg %p55
      %s201 = smul.u32 3, %s21
      %p202 = scmp.lt.s32.totalorder %s201, 2
      %s203 = scalar_select %p202, %s201, 2
      %s204 = smul.addr %s203, 4
      %s205 = scalar_lea.vmem %s1, %s204
      %p206 = pneg %p84
      %p207 = pneg %p81
      %p208 = pneg %p105
      %p209 = pneg %p102
      %p210 = pneg %p133
      %p211 = pneg %p130
      %p212 = scmp.lt.s32.totalorder %s19, 1
      %s213 = scalar_select %p212, %s19, 1
      %p214 = scmp.lt.s32.totalorder %s20, 0
      %s215 = scalar_select %p214, %s20, 0
      %s216 = smul.addr %s213, 4
      %s217 = sadd.s32 %s215, %s216
      %s218 = smul.addr %s217, 4
      %s219 = scalar_lea.vmem %s3, %s218
      %s220 = smul.u32 48, %s21
      %p221 = scmp.lt.s32.totalorder %s19, 1
      %s222 = scalar_select %p221, %s19, 1
      %p223 = scmp.lt.s32.totalorder %s220, 47
      %s224 = scalar_select %p223, %s220, 47
      %p225 = scmp.lt.s32.totalorder %s20, 0
      %s226 = scalar_select %p225, %s20, 0
      %s227 = sadd.s32 %s226, %s224
      %s228 = smul.addr %s222, 48
      %s229 = sadd.s32 %s227, %s228
      %s230 = smul.addr %s229, 4
      %s231 = scalar_lea.vmem %s0, %s230
      %s232 = smul.u32 48, %s21
      %s233 = smul.u32 3, %s21
      %p234 = scmp.lt.s32.totalorder %s233, 2
      %s235 = scalar_select %p234, %s233, 2
      %s236 = smul.addr %s235, 4
      %s237 = scalar_lea.vmem %s1, %s236
      %s238 = smul.u32 3, %s21
      %p239 = scmp.lt.s32.totalorder %s19, 1
      %s240 = scalar_select %p239, %s19, 1
      %p241 = scmp.lt.s32.totalorder %s20, 0
      %s242 = scalar_select %p241, %s20, 0
      %s243 = smul.addr %s240, 4
      %s244 = sadd.s32 %s242, %s243
      %s245 = smul.addr %s244, 4
      %s246 = scalar_lea.vmem %s3, %s245
      %v248 = vld [vmem:[%s237] sm:$0xff]
      %v249 = vld [vmem:[%s237 + $0x8] sm:$0xf]
      %v250 = vld [vmem:[%s237 + $0xc] sm:$0xff]
      %v251 = vld [vmem:[%s237 + $0x14] sm:$0xf]
      %v252 = vld [vmem:[%s237 + $0x18] sm:$0xff]
      %v253 = vld [vmem:[%s237 + $0x20] sm:$0xf]
      %v254 = vld [vmem:[%s237 + $0x24] sm:$0xff]
      %v255 = vld [vmem:[%s237 + $0x2c] sm:$0xf]
      %v256 = vld [vmem:[%s231] sm:$0xf]
      %v257 = vld [vmem:[%s231 + $0x4] sm:$0xf]
      %v258 = vld [vmem:[%s231 + $0x8] sm:$0xf]
      %v259 = vld [vmem:[%s231 + $0xc] sm:$0xf]
      %v260 = vld [vmem:[%s231 + $0x10] sm:$0xf]
      %v261 = vld [vmem:[%s231 + $0x14] sm:$0xf]
      %v262 = vld [vmem:[%s231 + $0x18] sm:$0xf]
      %v263 = vld [vmem:[%s231 + $0x1c] sm:$0xf]
      %v264 = vld [vmem:[%s231 + $0x20] sm:$0xf]
      %v265 = vld [vmem:[%s231 + $0x24] sm:$0xf]
      %v266 = vld [vmem:[%s231 + $0x28] sm:$0xf]
      %v267 = vld [vmem:[%s231 + $0x2c] sm:$0xf]
      %v268 = vld [vmem:[%s231 + $0x30] sm:$0xf]
      %v269 = vld [vmem:[%s231 + $0x34] sm:$0xf]
      %v270 = vld [vmem:[%s231 + $0x38] sm:$0xf]
      %v271 = vld [vmem:[%s231 + $0x3c] sm:$0xf]
      %v272 = vld [vmem:[%s231 + $0x40] sm:$0xf]
      %v273 = vld [vmem:[%s231 + $0x44] sm:$0xf]
      %v274 = vld [vmem:[%s231 + $0x48] sm:$0xf]
      %v275 = vld [vmem:[%s231 + $0x4c] sm:$0xf]
      %v276 = vld [vmem:[%s231 + $0x50] sm:$0xf]
      %v277 = vld [vmem:[%s231 + $0x54] sm:$0xf]
      %v278 = vld [vmem:[%s231 + $0x58] sm:$0xf]
      %v279 = vld [vmem:[%s231 + $0x5c] sm:$0xf]
      %v280 = vld [vmem:[%s231 + $0x60] sm:$0xf]
      %v281 = vld [vmem:[%s231 + $0x64] sm:$0xf]
      %v282 = vld [vmem:[%s231 + $0x68] sm:$0xf]
      %v283 = vld [vmem:[%s231 + $0x6c] sm:$0xf]
      %v284 = vld [vmem:[%s231 + $0x70] sm:$0xf]
      %v285 = vld [vmem:[%s231 + $0x74] sm:$0xf]
      %v286 = vld [vmem:[%s231 + $0x78] sm:$0xf]
      %v287 = vld [vmem:[%s231 + $0x7c] sm:$0xf]
      %v288 = vld [vmem:[%s231 + $0x80] sm:$0xf]
      %v289 = vld [vmem:[%s231 + $0x84] sm:$0xf]
      %v290 = vld [vmem:[%s231 + $0x88] sm:$0xf]
      %v291 = vld [vmem:[%s231 + $0x8c] sm:$0xf]
      %v292 = vld [vmem:[%s231 + $0x90] sm:$0xf]
      %v293 = vld [vmem:[%s231 + $0x94] sm:$0xf]
      %v294 = vld [vmem:[%s231 + $0x98] sm:$0xf]
      %v295 = vld [vmem:[%s231 + $0x9c] sm:$0xf]
      %v296 = vld [vmem:[%s231 + $0xa0] sm:$0xf]
      %v297 = vld [vmem:[%s231 + $0xa4] sm:$0xf]
      %v298 = vld [vmem:[%s231 + $0xa8] sm:$0xf]
      %v299 = vld [vmem:[%s231 + $0xac] sm:$0xf]
      %v300 = vld [vmem:[%s231 + $0xb0] sm:$0xf]
      %v301 = vld [vmem:[%s231 + $0xb4] sm:$0xf]
      %v302 = vld [vmem:[%s231 + $0xb8] sm:$0xf]
      %v303 = vld [vmem:[%s231 + $0xbc] sm:$0xf]
      %v312 = vunpack.c.l.b16 %v248
      %v313 = vunpack.c.h.b16 %v248
      %v314 = vunpack.c.l.b16 %v249
      %v315 = vunpack.c.l.b16 %v250
      %v316 = vunpack.c.h.b16 %v250
      %v317 = vunpack.c.l.b16 %v251
      %v318 = vunpack.c.l.b16 %v252
      %v319 = vunpack.c.h.b16 %v252
      %v320 = vunpack.c.l.b16 %v253
      %v321 = vunpack.c.l.b16 %v254
      %v322 = vunpack.c.h.b16 %v254
      %v323 = vunpack.c.l.b16 %v255
      %v324 = vpack.c.b16 %v315, %v312
      %v325 = vpack.c.b16 %v316, %v313
      %v326 = vpack.c.b16 %v317, %v314
      %v327 = vpack.c.b16 %v321, %v318
      %v328 = vpack.c.b16 %v322, %v319
      %v329 = vpack.c.b16 %v323, %v320
      %v384 = vunpack.c.l.b16 %v256
      %v385 = vunpack.c.l.b16 %v257
      %v386 = vunpack.c.l.b16 %v258
      %v387 = vunpack.c.l.b16 %v259
      %v388 = vunpack.c.l.b16 %v260
      %v389 = vunpack.c.l.b16 %v261
      %v390 = vunpack.c.l.b16 %v262
      %v391 = vunpack.c.l.b16 %v263
      %v392 = vunpack.c.l.b16 %v264
      %v393 = vunpack.c.l.b16 %v265
      %v394 = vunpack.c.l.b16 %v266
      %v395 = vunpack.c.l.b16 %v267
      %v396 = vunpack.c.l.b16 %v268
      %v397 = vunpack.c.l.b16 %v269
      %v398 = vunpack.c.l.b16 %v270
      %v399 = vunpack.c.l.b16 %v271
      %v400 = vunpack.c.l.b16 %v272
      %v401 = vunpack.c.l.b16 %v273
      %v402 = vunpack.c.l.b16 %v274
      %v403 = vunpack.c.l.b16 %v275
      %v404 = vunpack.c.l.b16 %v276
      %v405 = vunpack.c.l.b16 %v277
      %v406 = vunpack.c.l.b16 %v278
      %v407 = vunpack.c.l.b16 %v279
      %v408 = vunpack.c.l.b16 %v280
      %v409 = vunpack.c.l.b16 %v281
      %v410 = vunpack.c.l.b16 %v282
      %v411 = vunpack.c.l.b16 %v283
      %v412 = vunpack.c.l.b16 %v284
      %v413 = vunpack.c.l.b16 %v285
      %v414 = vunpack.c.l.b16 %v286
      %v415 = vunpack.c.l.b16 %v287
      %v416 = vunpack.c.l.b16 %v288
      %v417 = vunpack.c.l.b16 %v289
      %v418 = vunpack.c.l.b16 %v290
      %v419 = vunpack.c.l.b16 %v291
      %v420 = vunpack.c.l.b16 %v292
      %v421 = vunpack.c.l.b16 %v293
      %v422 = vunpack.c.l.b16 %v294
      %v423 = vunpack.c.l.b16 %v295
      %v424 = vunpack.c.l.b16 %v296
      %v425 = vunpack.c.l.b16 %v297
      %v426 = vunpack.c.l.b16 %v298
      %v427 = vunpack.c.l.b16 %v299
      %v428 = vunpack.c.l.b16 %v300
      %v429 = vunpack.c.l.b16 %v301
      %v430 = vunpack.c.l.b16 %v302
      %v431 = vunpack.c.l.b16 %v303
      %v432 = vpack.c.b16 %v385, %v384
      %v433 = vpack.c.b16 %v387, %v386
      %v434 = vpack.c.b16 %v389, %v388
      %v435 = vpack.c.b16 %v391, %v390
      %v436 = vpack.c.b16 %v393, %v392
      %v437 = vpack.c.b16 %v395, %v394
      %v438 = vpack.c.b16 %v397, %v396
      %v439 = vpack.c.b16 %v399, %v398
      %v440 = vpack.c.b16 %v401, %v400
      %v441 = vpack.c.b16 %v403, %v402
      %v442 = vpack.c.b16 %v405, %v404
      %v443 = vpack.c.b16 %v407, %v406
      %v444 = vpack.c.b16 %v409, %v408
      %v445 = vpack.c.b16 %v411, %v410
      %v446 = vpack.c.b16 %v413, %v412
      %v447 = vpack.c.b16 %v415, %v414
      %v448 = vpack.c.b16 %v417, %v416
      %v449 = vpack.c.b16 %v419, %v418
      %v450 = vpack.c.b16 %v421, %v420
      %v451 = vpack.c.b16 %v423, %v422
      %v452 = vpack.c.b16 %v425, %v424
      %v453 = vpack.c.b16 %v427, %v426
      %v454 = vpack.c.b16 %v429, %v428
      %v455 = vpack.c.b16 %v431, %v430
      %480 = vmatprep.subr.bf16.mxu0 0
      %481 = vmatpush1.bf16.msra.mxu0 %v439
      %482 = vmatprep.subr.bf16.mxu0 0
      %483 = vmatpush1.bf16.msra.mxu0 %v438
      %484 = vmatprep.subr.bf16.mxu0 0
      %485 = vmatpush1.bf16.msra.mxu0 %v437
      %486 = vmatprep.subr.bf16.mxu0 0
      %487 = vmatpush1.bf16.msra.mxu0 %v436
      %488 = vmatprep.subr.bf16.mxu0 0
      %489 = vmatpush1.bf16.msra.mxu0 %v435
      %490 = vmatprep.subr.bf16.mxu0 0
      %491 = vmatpush1.bf16.msra.mxu0 %v434
      %492 = vmatprep.subr.bf16.mxu0 0
      %493 = vmatpush1.bf16.msra.mxu0 %v433
      %494 = vmatprep.subr.bf16.mxu0 0
      %495 = vmatpush1.bf16.msra.mxu0 %v432
      %496 = vmatprep.subr.bf16.mxu0 0
      %497 = vmatpush2.bf16.msra.mxu0 %v447
      %498 = vmatprep.subr.bf16.mxu0 0
      %499 = vmatpush2.bf16.msra.mxu0 %v446
      %500 = vmatprep.subr.bf16.mxu0 0
      %501 = vmatpush2.bf16.msra.mxu0 %v445
      %502 = vmatprep.subr.bf16.mxu0 0
      %503 = vmatpush2.bf16.msra.mxu0 %v444
      %504 = vmatprep.subr.bf16.mxu0 0
      %505 = vmatpush2.bf16.msra.mxu0 %v443
      %506 = vmatprep.subr.bf16.mxu0 0
      %507 = vmatpush2.bf16.msra.mxu0 %v442
      %508 = vmatprep.subr.bf16.mxu0 0
      %509 = vmatpush2.bf16.msra.mxu0 %v441
      %510 = vmatprep.subr.bf16.mxu0 0
      %511 = vmatpush2.bf16.msra.mxu0 %v440
      %512 = vmatprep.mubr.bf16.mxu0 %v325
      %513 = vmatmul.mubr.bf16.gmra.mxu0 %v324
      %v514 = vpop.f32.mrf.mxu0
      %v515 = vadd.f32 0.0, %v514
      %v516 = vpop.f32.mrf.mxu0
      %v517 = vpop.f32.mrf.mxu0
      %v518 = vadd.f32 0.0, %v517
      %v519 = vpop.f32.mrf.mxu0
      %520 = vmatprep.mubr.bf16.mxu0 %v328
      %521 = vmatmul.mubr.bf16.gmra.mxu0 %v327
      %v522 = vpop.f32.mrf.mxu0
      %v523 = vadd.f32 0.0, %v522
      %v524 = vpop.f32.mrf.mxu0
      %v525 = vpop.f32.mrf.mxu0
      %v526 = vadd.f32 0.0, %v525
      %v527 = vpop.f32.mrf.mxu0
      %528 = vdwg.mxu0
      %529 = vmatprep.subr.bf16.mxu0 0
      %530 = vmatpush1.bf16.msra.mxu0 %v455
      %531 = vmatprep.subr.bf16.mxu0 0
      %532 = vmatpush1.bf16.msra.mxu0 %v454
      %533 = vmatprep.subr.bf16.mxu0 0
      %534 = vmatpush1.bf16.msra.mxu0 %v453
      %535 = vmatprep.subr.bf16.mxu0 0
      %536 = vmatpush1.bf16.msra.mxu0 %v452
      %537 = vmatprep.subr.bf16.mxu0 0
      %538 = vmatpush1.bf16.msra.mxu0 %v451
      %539 = vmatprep.subr.bf16.mxu0 0
      %540 = vmatpush1.bf16.msra.mxu0 %v450
      %541 = vmatprep.subr.bf16.mxu0 0
      %542 = vmatpush1.bf16.msra.mxu0 %v449
      %543 = vmatprep.subr.bf16.mxu0 0
      %544 = vmatpush1.bf16.msra.mxu0 %v448
      %545 = vmatprep.subr.bf16.mxu0 0
      %546 = vmatpush2.bf16.msra.mxu0 0
      %547 = vmatprep.subr.bf16.mxu0 0
      %548 = vmatpush2.bf16.msra.mxu0 0
      %549 = vmatprep.subr.bf16.mxu0 0
      %550 = vmatpush2.bf16.msra.mxu0 0
      %551 = vmatprep.subr.bf16.mxu0 0
      %552 = vmatpush2.bf16.msra.mxu0 0
      %553 = vmatprep.subr.bf16.mxu0 0
      %554 = vmatpush2.bf16.msra.mxu0 0
      %555 = vmatprep.subr.bf16.mxu0 0
      %556 = vmatpush2.bf16.msra.mxu0 0
      %557 = vmatprep.subr.bf16.mxu0 0
      %558 = vmatpush2.bf16.msra.mxu0 0
      %559 = vmatprep.subr.bf16.mxu0 0
      %560 = vmatpush2.bf16.msra.mxu0 0
      %561 = vmatprep.mubr.bf16.mxu0 0
      %562 = vmatmul.mubr.bf16.gmra.mxu0 %v326
      %v563 = vpop.f32.mrf.mxu0
      %v564 = vadd.f32 %v515, %v563
      %v565 = vpop.f32.mrf.mxu0
      %v566 = vpop.f32.mrf.mxu0
      %v567 = vadd.f32 %v518, %v566
      %v568 = vpop.f32.mrf.mxu0
      %569 = vmatprep.mubr.bf16.mxu0 0
      %570 = vmatmul.mubr.bf16.gmra.mxu0 %v329
      %v571 = vpop.f32.mrf.mxu0
      %v572 = vadd.f32 %v523, %v571
      %v573 = vpop.f32.mrf.mxu0
      %v574 = vpop.f32.mrf.mxu0
      %v575 = vadd.f32 %v526, %v574
      %v576 = vpop.f32.mrf.mxu0
      %577 = vdwg.mxu0
      %p578 = scmp.eq.s32.totalorder %s21, 0
      // Predicated region
      $region33: #{fpa_v2_forward.13} parent=31 // pred_check
        %p579 = pneg %p578
      $region34: #{fpa_v2_forward.13} parent=31 // pred_check_branch
        %581 = sbr.rel (%p579) target = $region36
      $region35: #{fpa_v2_forward.13} parent=31 // pred_region
        %582 = vst [vmem:[#allocation2] sm:$0xff] %v564
        %583 = vst [vmem:[#allocation2 + $0x8] sm:$0xff] %v567
        %584 = vst [vmem:[#allocation2 + $0x10] sm:$0xff] %v572
        %585 = vst [vmem:[#allocation2 + $0x18] sm:$0xff] %v575
      $region36: #{fpa_v2_forward.13} parent=31 // pred_fallthru
        _
      %p586 = scmp.gt.s32.totalorder %s21, 0
      // Predicated region
      $region37: #{fpa_v2_forward.13} parent=31 // pred_check
        %p587 = pneg %p586
      $region38: #{fpa_v2_forward.13} parent=31 // pred_check_branch
        %589 = sbr.rel (%p587) target = $region40
      $region39: #{fpa_v2_forward.13} parent=31 // pred_region
        %v590 = vld [vmem:[#allocation2] sm:$0xff]
        %v591 = vld [vmem:[#allocation2 + $0x8] sm:$0xff]
        %v592 = vld [vmem:[#allocation2 + $0x10] sm:$0xff]
        %v593 = vld [vmem:[#allocation2 + $0x18] sm:$0xff]
        %v594 = vadd.f32 %v590, %v564
        %v595 = vadd.f32 %v591, %v567
        %v596 = vadd.f32 %v592, %v572
        %v597 = vadd.f32 %v593, %v575
        %598 = vst [vmem:[#allocation2] sm:$0xff] %v594
        %599 = vst [vmem:[#allocation2 + $0x8] sm:$0xff] %v595
        %600 = vst [vmem:[#allocation2 + $0x10] sm:$0xff] %v596
        %601 = vst [vmem:[#allocation2 + $0x18] sm:$0xff] %v597
      $region40: #{fpa_v2_forward.13} parent=31 // pred_fallthru
        _
      // Predicated region
      $region41: #{fpa_v2_forward.13} parent=31 // pred_check
        %p602 = pneg %p578
      $region42: #{fpa_v2_forward.13} parent=31 // pred_check_branch
        %604 = sbr.rel (%p602) target = $region44
      $region43: #{fpa_v2_forward.13} parent=31 // pred_region
        %v605 = vld [vmem:[#allocation2] sm:$0xff]
        %v606 = vld [vmem:[#allocation2 + $0x8] sm:$0xff]
        %v607 = vld [vmem:[#allocation2 + $0x10] sm:$0xff]
        %v608 = vld [vmem:[#allocation2 + $0x18] sm:$0xff]
        %v609 = vld [vmem:[%s2] sm:$0xff]
        %v610 = vld [vmem:[%s2 + $0x8] sm:$0xff]
        %v611 = vld [vmem:[%s2 + $0x10] sm:$0xff]
        %v612 = vld [vmem:[%s2 + $0x18] sm:$0xff]
        %614 = vset.pattern.permute.xlu0 0
        %615 = vperm.xlu0 %614, %v609
        %v616 = vpop.permute.xlu0 %615
        %619 = vset.pattern.permute.xlu0 0
        %620 = vperm.xlu0 %619, %v610
        %v621 = vpop.permute.xlu0 %620
        %624 = vset.pattern.permute.xlu0 0
        %625 = vperm.xlu0 %624, %v611
        %v626 = vpop.permute.xlu0 %625
        %629 = vset.pattern.permute.xlu0 0
        %630 = vperm.xlu0 %629, %v612
        %v631 = vpop.permute.xlu0 %630
        %v633 = vadd.f32 %v605, %v616
        %v634 = vadd.f32 %v606, %v621
        %v635 = vadd.f32 %v607, %v626
        %v636 = vadd.f32 %v608, %v631
        %v637 = vmax.f32 %v633, 0.0
        %v638 = vmax.f32 %v634, 0.0
        %v639 = vmax.f32 %v635, 0.0
        %v640 = vmax.f32 %v636, 0.0
        %v641 = vpack.c.bf16 %v638, %v637
        %v642 = vpack.c.bf16 %v640, %v639
        %v645 = vunpack.c.l.b16 %v641
        %v646 = vunpack.c.h.b16 %v641
        %v647 = vunpack.c.l.b16 %v642
        %v648 = vunpack.c.h.b16 %v642
        %v649 = vpack.c.b16 %v645, %v645
        %v650 = vpack.c.b16 %v646, %v646
        %v651 = vpack.c.b16 %v647, %v647
        %v652 = vpack.c.b16 %v648, %v648
        %657 = vst [vmem:[%s246] sm:$0xf] %v649
        %658 = vst [vmem:[%s246 + $0x4] sm:$0xf] %v650
        %659 = vst [vmem:[%s246 + $0x8] sm:$0xf] %v651
        %660 = vst [vmem:[%s246 + $0xc] sm:$0xf] %v652
      $region44: #{fpa_v2_forward.13} parent=31 // pred_fallthru
        _
      %p661 = scmp.lt.s32.totalorder %s19, 1
      %s662 = scalar_select %p661, %s19, 1
      %p663 = scmp.lt.s32.totalorder %s20, 0
      %s664 = scalar_select %p663, %s20, 0
      %s665 = smul.addr %s662, 4
      %s666 = sadd.s32 %s664, %s665
      %s667 = smul.addr %s666, 4
      %s668 = scalar_lea.vmem %s3, %s667
      // Predicated region
      $region45: #{fpa_v2_forward.13} parent=31 // pred_check
        %p669 = pneg %p130
      $region46: #{fpa_v2_forward.13} parent=31 // pred_check_branch
        %671 = sbr.rel (%p669) target = $region48
      $region47: #{fpa_v2_forward.13} parent=31 // pred_region
        _
      $region48: #{fpa_v2_forward.13} parent=31 // pred_fallthru
        _
    $region32: #{fpa_v2_forward.13} parent=5 // pred_fallthru
      _
    %p672 = scmp.le.s32.totalorder 2, %s9
    // Predicated region
    $region49: #{fpa_v2_forward.13} parent=5 // pred_check
      %p673 = pneg %p672
    $region50: #{fpa_v2_forward.13} parent=5 // pred_check_branch
      %675 = sbr.rel (%p673) target = $region52
    $region51: #{fpa_v2_forward.13} parent=5 // pred_region
      %s676 = ssub.s32 %s9, 2
      // Predicated region
      $region53: #{fpa_v2_forward.13} parent=51 // pred_check
        %p677 = pneg %p136
      $region54: #{fpa_v2_forward.13} parent=51 // pred_check_branch
        %679 = sbr.rel (%p677) target = $region56
      $region55: #{fpa_v2_forward.13} parent=51 // pred_region
        %p680 = scmp.lt.s32.totalorder %s22, 1
        %s681 = scalar_select %p680, %s22, 1
        %p682 = scmp.lt.s32.totalorder %s23, 0
        %s683 = scalar_select %p682, %s23, 0
        %s684 = smul.addr %s681, 4
        %s685 = sadd.s32 %s683, %s684
        %s686 = smul.addr %s685, 4
        %s687 = scalar_lea.vmem %s3, %s686
      $region56: #{fpa_v2_forward.13} parent=51 // pred_fallthru
        _
    $region52: #{fpa_v2_forward.13} parent=5 // pred_fallthru
      _
  $region6: #{fpa_v2_forward.13} parent=0 // loop_footer
    %s13 = sadd.s32 1, %s9
  $region7: #{fpa_v2_forward.13} parent=0 // loop_footer_branch
    %8 = sbr.rel target = $region3
  $region8: #{fpa_v2_forward.13} parent=0 // loop_exit
    _

// kernel: fpa_v2_forward.14
$region0: #{fpa_v2_forward.14}
  #allocation0 [shape = 'u32[]', space=smem, size = 0x4, offset = 0x4, fixed_abs, tag = 'smem constant byte address 0x4 - core index']
  #allocation1 [shape = 'u32[144,128]{1,0:T(1,128)}', space=vmem, size = 0x12000, scoped, tag = 'internal scratch']
  #allocation2 [shape = 'f32[16,128]{1,0:T(8,128)}', space=vmem, size = 0x2000, scoped, tag = 'scratch operand']
  %s0 = inlined_call_operand.vmem [shape: bf16[2,384,128], index: 0, kind: input, shape index: {}]
  %s1 = inlined_call_operand.vmem [shape: bf16[16,384], index: 1, kind: input, shape index: {}]
  %s2 = inlined_call_operand.vmem [shape: f32[16,1], index: 2, kind: input, shape index: {}]
  %s3 = inlined_call_operand.vmem [shape: bf16[2,16,128], index: 3, kind: output, shape index: {}]
  %s4 = sld [smem:[#allocation0]]
  $region57: #{fpa_v2_forward.14} parent=0
    _
  %s6 = ssub.s32 1, %s4
  %s7 = scalar_select 0, %s6, %s4
  loop: start=0, step=1, limit=4
  $region2: #{fpa_v2_forward.14} parent=0 // loop_pre_header
    _
  $region3: #{fpa_v2_forward.14} parent=0 // loop_header
    %s9 = sphi 0, %s13
    %p10 = scmp.ge.s32.totalorder %s9, 4
    %s16 = sphi 0, %s35
    %s17 = sphi 0, %s31
    %s18 = sphi 0, %s27
    %s19 = sphi 0, %s16
    %s20 = sphi 0, %s17
    %s21 = sphi 0, %s18
    %s22 = sphi 0, %s19
    %s23 = sphi 0, %s20
    %s24 = sphi 0, %s21
    %s42 = sphi 0, %s44
    %s45 = sphi 0, %s42
    %s46 = sphi 0, %s45
    %s62 = sphi 0, %s46
    %s68 = sphi 0, %s70
    %s71 = sphi 0, %s68
    %s72 = sphi 0, %s71
    %s88 = sphi 0, %s72
    %s92 = sphi 0, %s92
    %s94 = sphi 0, %s92
    %s95 = sphi 0, %s94
    %s109 = sphi 0, %s95
    %s117 = sphi 0, %s119
    %s120 = sphi 0, %s117
    %s121 = sphi 0, %s120
    %s137 = sphi 0, %s121
  $region4: #{fpa_v2_forward.14} parent=0 // loop_header_branch
    %12 = sbr.rel (%p10) target = $region8
  $region5: #{fpa_v2_forward.14} parent=0 // loop_body
    %s14 = ssub.s32 %s9, 1
    %s15 = ssub.s32 %s9, 2
    %s25 = sadd.s32 1, %s18
    %p26 = scmp.ge.s32.totalorder %s25, 1
    %s27 = scalar_select %p26, 0, %s25
    %s28 = sadd.s32 1, %s17
    %s29 = scalar_select %p26, %s28, %s17
    %p30 = scmp.ge.s32.totalorder %s29, 1
    %s31 = scalar_select %p30, 0, %s29
    %s32 = sadd.s32 1, %s16
    %s33 = scalar_select %p30, %s32, %s16
    %p34 = scmp.ge.s32.totalorder %s33, 2
    %s35 = scalar_select %p34, 0, %s33
    %s36 = ssub.s32 %s16, %s35
    %s37 = ssub.s32 %s18, %s27
    %s38 = sor.u32 %s36, %s37
    %s39 = ssub.s32 %s17, %s31
    %s40 = sor.u32 %s38, %s39
    %p41 = scmp.eq.s32.totalorder %s40, 0
    %s43 = sadd.s32 %s42, 1
    %s44 = scalar_select %p41, %s42, %s43
    %p47 = pneg %p41
    %p48 = scmp.eq.s32.totalorder %s9, 1
    %p49 = por %p47, %p48
    %p50 = scmp.ne.s32.totalorder %s42, %s45
    %p51 = scmp.eq.s32.totalorder %s9, 0
    %p52 = por %p50, %p51
    %p53 = scmp.ne.s32.totalorder %s42, %s45
    %p54 = scmp.eq.s32.totalorder %s14, 1
    %p55 = por %p53, %p54
    %p56 = scmp.ne.s32.totalorder %s45, %s46
    %p57 = scmp.eq.s32.totalorder %s14, 0
    %p58 = por %p56, %p57
    %p59 = scmp.ne.s32.totalorder %s45, %s46
    %p60 = scmp.eq.s32.totalorder %s15, 1
    %p61 = por %p59, %p60
    %p63 = scmp.ne.s32.totalorder %s46, %s62
    %p64 = scmp.eq.s32.totalorder %s15, 0
    %p65 = por %p63, %p64
    %s66 = ssub.s32 %s18, %s27
    %p67 = scmp.eq.s32.totalorder %s66, 0
    %s69 = sadd.s32 %s68, 1
    %s70 = scalar_select %p67, %s68, %s69
    %p73 = pneg %p67
    %p74 = scmp.eq.s32.totalorder %s9, 1
    %p75 = por %p73, %p74
    %p76 = scmp.ne.s32.totalorder %s68, %s71
    %p77 = scmp.eq.s32.totalorder %s9, 0
    %p78 = por %p76, %p77
    %p79 = scmp.ne.s32.totalorder %s68, %s71
    %p80 = scmp.eq.s32.totalorder %s14, 1
    %p81 = por %p79, %p80
    %p82 = scmp.ne.s32.totalorder %s71, %s72
    %p83 = scmp.eq.s32.totalorder %s14, 0
    %p84 = por %p82, %p83
    %p85 = scmp.ne.s32.totalorder %s71, %s72
    %p86 = scmp.eq.s32.totalorder %s15, 1
    %p87 = por %p85, %p86
    %p89 = scmp.ne.s32.totalorder %s72, %s88
    %p90 = scmp.eq.s32.totalorder %s15, 0
    %p91 = por %p89, %p90
    %s93 = sadd.s32 %s92, 1
    %p96 = scmp.eq.s32.totalorder %s9, 1
    %p97 = scmp.ne.s32.totalorder %s92, %s94
    %p98 = scmp.eq.s32.totalorder %s9, 0
    %p99 = por %p97, %p98
    %p100 = scmp.ne.s32.totalorder %s92, %s94
    %p101 = scmp.eq.s32.totalorder %s14, 1
    %p102 = por %p100, %p101
    %p103 = scmp.ne.s32.totalorder %s94, %s95
    %p104 = scmp.eq.s32.totalorder %s14, 0
    %p105 = por %p103, %p104
    %p106 = scmp.ne.s32.totalorder %s94, %s95
    %p107 = scmp.eq.s32.totalorder %s15, 1
    %p108 = por %p106, %p107
    %p110 = scmp.ne.s32.totalorder %s95, %s109
    %p111 = scmp.eq.s32.totalorder %s15, 0
    %p112 = por %p110, %p111
    %s113 = ssub.s32 %s16, %s35
    %s114 = ssub.s32 %s17, %s31
    %s115 = sor.u32 %s113, %s114
    %p116 = scmp.eq.s32.totalorder %s115, 0
    %s118 = sadd.s32 %s117, 1
    %s119 = scalar_select %p116, %s117, %s118
    %p122 = pneg %p116
    %p123 = scmp.eq.s32.totalorder %s9, 1
    %p124 = por %p122, %p123
    %p125 = scmp.ne.s32.totalorder %s117, %s120
    %p126 = scmp.eq.s32.totalorder %s9, 0
    %p127 = por %p125, %p126
    %p128 = scmp.ne.s32.totalorder %s117, %s120
    %p129 = scmp.eq.s32.totalorder %s14, 1
    %p130 = por %p128, %p129
    %p131 = scmp.ne.s32.totalorder %s120, %s121
    %p132 = scmp.eq.s32.totalorder %s14, 0
    %p133 = por %p131, %p132
    %p134 = scmp.ne.s32.totalorder %s120, %s121
    %p135 = scmp.eq.s32.totalorder %s15, 1
    %p136 = por %p134, %p135
    %p138 = scmp.ne.s32.totalorder %s121, %s137
    %p139 = scmp.eq.s32.totalorder %s15, 0
    %p140 = por %p138, %p139
    %p141 = scmp.le.s32.totalorder 1, %s9
    %p142 = scmp.lt.s32.totalorder %s9, 3
    %p143 = pnand %p141, %p142
    %p144 = pneg %p143
    // Predicated region
    $region9: #{fpa_v2_forward.14} parent=5 // pred_check
      _
    $region10: #{fpa_v2_forward.14} parent=5 // pred_check_branch
      %146 = sbr.rel (%p143) target = $region12
    $region11: #{fpa_v2_forward.14} parent=5 // pred_region
      %s147 = ssub.s32 %s9, 1
      // Predicated region
      $region13: #{fpa_v2_forward.14} parent=11 // pred_check
        %p148 = pneg %p84
      $region14: #{fpa_v2_forward.14} parent=11 // pred_check_branch
        %150 = sbr.rel (%p148) target = $region16
      $region15: #{fpa_v2_forward.14} parent=11 // pred_region
        %s151 = smul.u32 3, %s21
        %p152 = scmp.lt.s32.totalorder %s151, 2
        %s153 = scalar_select %p152, %s151, 2
        %s154 = smul.addr %s153, 4
        %s155 = scalar_lea.vmem %s1, %s154
        %s156 = smul.u32 3, %s21
      $region16: #{fpa_v2_forward.14} parent=11 // pred_fallthru
        _
      // Predicated region
      $region17: #{fpa_v2_forward.14} parent=11 // pred_check
        %p157 = pneg %p105
      $region18: #{fpa_v2_forward.14} parent=11 // pred_check_branch
        %159 = sbr.rel (%p157) target = $region20
      $region19: #{fpa_v2_forward.14} parent=11 // pred_region
        _
      $region20: #{fpa_v2_forward.14} parent=11 // pred_fallthru
        _
    $region12: #{fpa_v2_forward.14} parent=5 // pred_fallthru
      _
    %p160 = scmp.lt.s32.totalorder %s9, 2
    // Predicated region
    $region21: #{fpa_v2_forward.14} parent=5 // pred_check
      %p161 = pneg %p160
    $region22: #{fpa_v2_forward.14} parent=5 // pred_check_branch
      %163 = sbr.rel (%p161) target = $region24
    $region23: #{fpa_v2_forward.14} parent=5 // pred_region
      // Predicated region
      $region25: #{fpa_v2_forward.14} parent=23 // pred_check
        %p164 = pneg %p52
      $region26: #{fpa_v2_forward.14} parent=23 // pred_check_branch
        %166 = sbr.rel (%p164) target = $region28
      $region27: #{fpa_v2_forward.14} parent=23 // pred_region
        %s167 = smul.u32 48, %s18
        %p168 = scmp.lt.s32.totalorder %s16, 1
        %s169 = scalar_select %p168, %s16, 1
        %p170 = scmp.lt.s32.totalorder %s167, 47
        %s171 = scalar_select %p170, %s167, 47
        %p172 = scmp.lt.s32.totalorder %s17, 0
        %s173 = scalar_select %p172, %s17, 0
        %s174 = sadd.s32 %s173, %s171
        %s175 = smul.addr %s169, 48
        %s176 = sadd.s32 %s174, %s175
        %s177 = smul.addr %s176, 4
        %s178 = scalar_lea.vmem %s0, %s177
        %s179 = smul.u32 48, %s18
      $region28: #{fpa_v2_forward.14} parent=23 // pred_fallthru
        _
    $region24: #{fpa_v2_forward.14} parent=5 // pred_fallthru
      _
    %p180 = scmp.le.s32.totalorder 1, %s9
    %p181 = scmp.lt.s32.totalorder %s9, 3
    %p182 = pnand %p180, %p181
    %p183 = pneg %p182
    // Predicated region
    $region29: #{fpa_v2_forward.14} parent=5 // pred_check
      _
    $region30: #{fpa_v2_forward.14} parent=5 // pred_check_branch
      %185 = sbr.rel (%p182) target = $region32
    $region31: #{fpa_v2_forward.14} parent=5 // pred_region
      %s186 = ssub.s32 %s9, 1
      %s187 = smul.u32 48, %s21
      %p188 = scmp.lt.s32.totalorder %s19, 1
      %s189 = scalar_select %p188, %s19, 1
      %p190 = scmp.lt.s32.totalorder %s187, 47
      %s191 = scalar_select %p190, %s187, 47
      %p192 = scmp.lt.s32.totalorder %s20, 0
      %s193 = scalar_select %p192, %s20, 0
      %s194 = sadd.s32 %s193, %s191
      %s195 = smul.addr %s189, 48
      %s196 = sadd.s32 %s194, %s195
      %s197 = smul.addr %s196, 4
      %s198 = scalar_lea.vmem %s0, %s197
      %p199 = pneg %p58
      %p200 = pneg %p55
      %s201 = smul.u32 3, %s21
      %p202 = scmp.lt.s32.totalorder %s201, 2
      %s203 = scalar_select %p202, %s201, 2
      %s204 = smul.addr %s203, 4
      %s205 = scalar_lea.vmem %s1, %s204
      %p206 = pneg %p84
      %p207 = pneg %p81
      %p208 = pneg %p105
      %p209 = pneg %p102
      %p210 = pneg %p133
      %p211 = pneg %p130
      %p212 = scmp.lt.s32.totalorder %s19, 1
      %s213 = scalar_select %p212, %s19, 1
      %p214 = scmp.lt.s32.totalorder %s20, 0
      %s215 = scalar_select %p214, %s20, 0
      %s216 = smul.addr %s213, 2
      %s217 = sadd.s32 %s215, %s216
      %s218 = smul.addr %s217, 4
      %s219 = scalar_lea.vmem %s3, %s218
      %s220 = smul.u32 48, %s21
      %p221 = scmp.lt.s32.totalorder %s19, 1
      %s222 = scalar_select %p221, %s19, 1
      %p223 = scmp.lt.s32.totalorder %s220, 47
      %s224 = scalar_select %p223, %s220, 47
      %p225 = scmp.lt.s32.totalorder %s20, 0
      %s226 = scalar_select %p225, %s20, 0
      %s227 = sadd.s32 %s226, %s224
      %s228 = smul.addr %s222, 48
      %s229 = sadd.s32 %s227, %s228
      %s230 = smul.addr %s229, 4
      %s231 = scalar_lea.vmem %s0, %s230
      %s232 = smul.u32 48, %s21
      %s233 = smul.u32 3, %s21
      %p234 = scmp.lt.s32.totalorder %s233, 2
      %s235 = scalar_select %p234, %s233, 2
      %s236 = smul.addr %s235, 4
      %s237 = scalar_lea.vmem %s1, %s236
      %s238 = smul.u32 3, %s21
      %p239 = scmp.lt.s32.totalorder %s19, 1
      %s240 = scalar_select %p239, %s19, 1
      %p241 = scmp.lt.s32.totalorder %s20, 0
      %s242 = scalar_select %p241, %s20, 0
      %s243 = smul.addr %s240, 2
      %s244 = sadd.s32 %s242, %s243
      %s245 = smul.addr %s244, 4
      %s246 = scalar_lea.vmem %s3, %s245
      %v248 = vld [vmem:[%s237] sm:$0xff]
      %v249 = vld [vmem:[%s237 + $0x8] sm:$0xf]
      %v250 = vld [vmem:[%s237 + $0xc] sm:$0xff]
      %v251 = vld [vmem:[%s237 + $0x14] sm:$0xf]
      %v252 = vld [vmem:[%s231] sm:$0xf]
      %v253 = vld [vmem:[%s231 + $0x4] sm:$0xf]
      %v254 = vld [vmem:[%s231 + $0x8] sm:$0xf]
      %v255 = vld [vmem:[%s231 + $0xc] sm:$0xf]
      %v256 = vld [vmem:[%s231 + $0x10] sm:$0xf]
      %v257 = vld [vmem:[%s231 + $0x14] sm:$0xf]
      %v258 = vld [vmem:[%s231 + $0x18] sm:$0xf]
      %v259 = vld [vmem:[%s231 + $0x1c] sm:$0xf]
      %v260 = vld [vmem:[%s231 + $0x20] sm:$0xf]
      %v261 = vld [vmem:[%s231 + $0x24] sm:$0xf]
      %v262 = vld [vmem:[%s231 + $0x28] sm:$0xf]
      %v263 = vld [vmem:[%s231 + $0x2c] sm:$0xf]
      %v264 = vld [vmem:[%s231 + $0x30] sm:$0xf]
      %v265 = vld [vmem:[%s231 + $0x34] sm:$0xf]
      %v266 = vld [vmem:[%s231 + $0x38] sm:$0xf]
      %v267 = vld [vmem:[%s231 + $0x3c] sm:$0xf]
      %v268 = vld [vmem:[%s231 + $0x40] sm:$0xf]
      %v269 = vld [vmem:[%s231 + $0x44] sm:$0xf]
      %v270 = vld [vmem:[%s231 + $0x48] sm:$0xf]
      %v271 = vld [vmem:[%s231 + $0x4c] sm:$0xf]
      %v272 = vld [vmem:[%s231 + $0x50] sm:$0xf]
      %v273 = vld [vmem:[%s231 + $0x54] sm:$0xf]
      %v274 = vld [vmem:[%s231 + $0x58] sm:$0xf]
      %v275 = vld [vmem:[%s231 + $0x5c] sm:$0xf]
      %v276 = vld [vmem:[%s231 + $0x60] sm:$0xf]
      %v277 = vld [vmem:[%s231 + $0x64] sm:$0xf]
      %v278 = vld [vmem:[%s231 + $0x68] sm:$0xf]
      %v279 = vld [vmem:[%s231 + $0x6c] sm:$0xf]
      %v280 = vld [vmem:[%s231 + $0x70] sm:$0xf]
      %v281 = vld [vmem:[%s231 + $0x74] sm:$0xf]
      %v282 = vld [vmem:[%s231 + $0x78] sm:$0xf]
      %v283 = vld [vmem:[%s231 + $0x7c] sm:$0xf]
      %v284 = vld [vmem:[%s231 + $0x80] sm:$0xf]
      %v285 = vld [vmem:[%s231 + $0x84] sm:$0xf]
      %v286 = vld [vmem:[%s231 + $0x88] sm:$0xf]
      %v287 = vld [vmem:[%s231 + $0x8c] sm:$0xf]
      %v288 = vld [vmem:[%s231 + $0x90] sm:$0xf]
      %v289 = vld [vmem:[%s231 + $0x94] sm:$0xf]
      %v290 = vld [vmem:[%s231 + $0x98] sm:$0xf]
      %v291 = vld [vmem:[%s231 + $0x9c] sm:$0xf]
      %v292 = vld [vmem:[%s231 + $0xa0] sm:$0xf]
      %v293 = vld [vmem:[%s231 + $0xa4] sm:$0xf]
      %v294 = vld [vmem:[%s231 + $0xa8] sm:$0xf]
      %v295 = vld [vmem:[%s231 + $0xac] sm:$0xf]
      %v296 = vld [vmem:[%s231 + $0xb0] sm:$0xf]
      %v297 = vld [vmem:[%s231 + $0xb4] sm:$0xf]
      %v298 = vld [vmem:[%s231 + $0xb8] sm:$0xf]
      %v299 = vld [vmem:[%s231 + $0xbc] sm:$0xf]
      %v304 = vunpack.c.l.b16 %v248
      %v305 = vunpack.c.h.b16 %v248
      %v306 = vunpack.c.l.b16 %v249
      %v307 = vunpack.c.l.b16 %v250
      %v308 = vunpack.c.h.b16 %v250
      %v309 = vunpack.c.l.b16 %v251
      %v310 = vpack.c.b16 %v307, %v304
      %v311 = vpack.c.b16 %v308, %v305
      %v312 = vpack.c.b16 %v309, %v306
      %v364 = vunpack.c.l.b16 %v252
      %v365 = vunpack.c.l.b16 %v253
      %v366 = vunpack.c.l.b16 %v254
      %v367 = vunpack.c.l.b16 %v255
      %v368 = vunpack.c.l.b16 %v256
      %v369 = vunpack.c.l.b16 %v257
      %v370 = vunpack.c.l.b16 %v258
      %v371 = vunpack.c.l.b16 %v259
      %v372 = vunpack.c.l.b16 %v260
      %v373 = vunpack.c.l.b16 %v261
      %v374 = vunpack.c.l.b16 %v262
      %v375 = vunpack.c.l.b16 %v263
      %v376 = vunpack.c.l.b16 %v264
      %v377 = vunpack.c.l.b16 %v265
      %v378 = vunpack.c.l.b16 %v266
      %v379 = vunpack.c.l.b16 %v267
      %v380 = vunpack.c.l.b16 %v268
      %v381 = vunpack.c.l.b16 %v269
      %v382 = vunpack.c.l.b16 %v270
      %v383 = vunpack.c.l.b16 %v271
      %v384 = vunpack.c.l.b16 %v272
      %v385 = vunpack.c.l.b16 %v273
      %v386 = vunpack.c.l.b16 %v274
      %v387 = vunpack.c.l.b16 %v275
      %v388 = vunpack.c.l.b16 %v276
      %v389 = vunpack.c.l.b16 %v277
      %v390 = vunpack.c.l.b16 %v278
      %v391 = vunpack.c.l.b16 %v279
      %v392 = vunpack.c.l.b16 %v280
      %v393 = vunpack.c.l.b16 %v281
      %v394 = vunpack.c.l.b16 %v282
      %v395 = vunpack.c.l.b16 %v283
      %v396 = vunpack.c.l.b16 %v284
      %v397 = vunpack.c.l.b16 %v285
      %v398 = vunpack.c.l.b16 %v286
      %v399 = vunpack.c.l.b16 %v287
      %v400 = vunpack.c.l.b16 %v288
      %v401 = vunpack.c.l.b16 %v289
      %v402 = vunpack.c.l.b16 %v290
      %v403 = vunpack.c.l.b16 %v291
      %v404 = vunpack.c.l.b16 %v292
      %v405 = vunpack.c.l.b16 %v293
      %v406 = vunpack.c.l.b16 %v294
      %v407 = vunpack.c.l.b16 %v295
      %v408 = vunpack.c.l.b16 %v296
      %v409 = vunpack.c.l.b16 %v297
      %v410 = vunpack.c.l.b16 %v298
      %v411 = vunpack.c.l.b16 %v299
      %v412 = vpack.c.b16 %v365, %v364
      %v413 = vpack.c.b16 %v367, %v366
      %v414 = vpack.c.b16 %v369, %v368
      %v415 = vpack.c.b16 %v371, %v370
      %v416 = vpack.c.b16 %v373, %v372
      %v417 = vpack.c.b16 %v375, %v374
      %v418 = vpack.c.b16 %v377, %v376
      %v419 = vpack.c.b16 %v379, %v378
      %v420 = vpack.c.b16 %v381, %v380
      %v421 = vpack.c.b16 %v383, %v382
      %v422 = vpack.c.b16 %v385, %v384
      %v423 = vpack.c.b16 %v387, %v386
      %v424 = vpack.c.b16 %v389, %v388
      %v425 = vpack.c.b16 %v391, %v390
      %v426 = vpack.c.b16 %v393, %v392
      %v427 = vpack.c.b16 %v395, %v394
      %v428 = vpack.c.b16 %v397, %v396
      %v429 = vpack.c.b16 %v399, %v398
      %v430 = vpack.c.b16 %v401, %v400
      %v431 = vpack.c.b16 %v403, %v402
      %v432 = vpack.c.b16 %v405, %v404
      %v433 = vpack.c.b16 %v407, %v406
      %v434 = vpack.c.b16 %v409, %v408
      %v435 = vpack.c.b16 %v411, %v410
      %460 = vmatprep.subr.bf16.mxu0 0
      %461 = vmatpush1.bf16.msra.mxu0 %v419
      %462 = vmatprep.subr.bf16.mxu0 0
      %463 = vmatpush1.bf16.msra.mxu0 %v418
      %464 = vmatprep.subr.bf16.mxu0 0
      %465 = vmatpush1.bf16.msra.mxu0 %v417
      %466 = vmatprep.subr.bf16.mxu0 0
      %467 = vmatpush1.bf16.msra.mxu0 %v416
      %468 = vmatprep.subr.bf16.mxu0 0
      %469 = vmatpush1.bf16.msra.mxu0 %v415
      %470 = vmatprep.subr.bf16.mxu0 0
      %471 = vmatpush1.bf16.msra.mxu0 %v414
      %472 = vmatprep.subr.bf16.mxu0 0
      %473 = vmatpush1.bf16.msra.mxu0 %v413
      %474 = vmatprep.subr.bf16.mxu0 0
      %475 = vmatpush1.bf16.msra.mxu0 %v412
      %476 = vmatprep.subr.bf16.mxu0 0
      %477 = vmatpush2.bf16.msra.mxu0 %v427
      %478 = vmatprep.subr.bf16.mxu0 0
      %479 = vmatpush2.bf16.msra.mxu0 %v426
      %480 = vmatprep.subr.bf16.mxu0 0
      %481 = vmatpush2.bf16.msra.mxu0 %v425
      %482 = vmatprep.subr.bf16.mxu0 0
      %483 = vmatpush2.bf16.msra.mxu0 %v424
      %484 = vmatprep.subr.bf16.mxu0 0
      %485 = vmatpush2.bf16.msra.mxu0 %v423
      %486 = vmatprep.subr.bf16.mxu0 0
      %487 = vmatpush2.bf16.msra.mxu0 %v422
      %488 = vmatprep.subr.bf16.mxu0 0
      %489 = vmatpush2.bf16.msra.mxu0 %v421
      %490 = vmatprep.subr.bf16.mxu0 0
      %491 = vmatpush2.bf16.msra.mxu0 %v420
      %492 = vmatprep.mubr.bf16.mxu0 %v311
      %493 = vmatmul.mubr.bf16.gmra.mxu0 %v310
      %v494 = vpop.f32.mrf.mxu0
      %v495 = vadd.f32 0.0, %v494
      %v496 = vpop.f32.mrf.mxu0
      %v497 = vpop.f32.mrf.mxu0
      %v498 = vadd.f32 0.0, %v497
      %v499 = vpop.f32.mrf.mxu0
      %500 = vdwg.mxu0
      %501 = vmatprep.subr.bf16.mxu0 0
      %502 = vmatpush1.bf16.msra.mxu0 %v435
      %503 = vmatprep.subr.bf16.mxu0 0
      %504 = vmatpush1.bf16.msra.mxu0 %v434
      %505 = vmatprep.subr.bf16.mxu0 0
      %506 = vmatpush1.bf16.msra.mxu0 %v433
      %507 = vmatprep.subr.bf16.mxu0 0
      %508 = vmatpush1.bf16.msra.mxu0 %v432
      %509 = vmatprep.subr.bf16.mxu0 0
      %510 = vmatpush1.bf16.msra.mxu0 %v431
      %511 = vmatprep.subr.bf16.mxu0 0
      %512 = vmatpush1.bf16.msra.mxu0 %v430
      %513 = vmatprep.subr.bf16.mxu0 0
      %514 = vmatpush1.bf16.msra.mxu0 %v429
      %515 = vmatprep.subr.bf16.mxu0 0
      %516 = vmatpush1.bf16.msra.mxu0 %v428
      %517 = vmatprep.subr.bf16.mxu0 0
      %518 = vmatpush2.bf16.msra.mxu0 0
      %519 = vmatprep.subr.bf16.mxu0 0
      %520 = vmatpush2.bf16.msra.mxu0 0
      %521 = vmatprep.subr.bf16.mxu0 0
      %522 = vmatpush2.bf16.msra.mxu0 0
      %523 = vmatprep.subr.bf16.mxu0 0
      %524 = vmatpush2.bf16.msra.mxu0 0
      %525 = vmatprep.subr.bf16.mxu0 0
      %526 = vmatpush2.bf16.msra.mxu0 0
      %527 = vmatprep.subr.bf16.mxu0 0
      %528 = vmatpush2.bf16.msra.mxu0 0
      %529 = vmatprep.subr.bf16.mxu0 0
      %530 = vmatpush2.bf16.msra.mxu0 0
      %531 = vmatprep.subr.bf16.mxu0 0
      %532 = vmatpush2.bf16.msra.mxu0 0
      %533 = vmatprep.mubr.bf16.mxu0 0
      %534 = vmatmul.mubr.bf16.gmra.mxu0 %v312
      %v535 = vpop.f32.mrf.mxu0
      %v536 = vadd.f32 %v495, %v535
      %v537 = vpop.f32.mrf.mxu0
      %v538 = vpop.f32.mrf.mxu0
      %v539 = vadd.f32 %v498, %v538
      %v540 = vpop.f32.mrf.mxu0
      %541 = vdwg.mxu0
      %p542 = scmp.eq.s32.totalorder %s21, 0
      // Predicated region
      $region33: #{fpa_v2_forward.14} parent=31 // pred_check
        %p543 = pneg %p542
      $region34: #{fpa_v2_forward.14} parent=31 // pred_check_branch
        %545 = sbr.rel (%p543) target = $region36
      $region35: #{fpa_v2_forward.14} parent=31 // pred_region
        %546 = vst [vmem:[#allocation2] sm:$0xff] %v536
        %547 = vst [vmem:[#allocation2 + $0x8] sm:$0xff] %v539
      $region36: #{fpa_v2_forward.14} parent=31 // pred_fallthru
        _
      %p548 = scmp.gt.s32.totalorder %s21, 0
      // Predicated region
      $region37: #{fpa_v2_forward.14} parent=31 // pred_check
        %p549 = pneg %p548
      $region38: #{fpa_v2_forward.14} parent=31 // pred_check_branch
        %551 = sbr.rel (%p549) target = $region40
      $region39: #{fpa_v2_forward.14} parent=31 // pred_region
        %v552 = vld [vmem:[#allocation2] sm:$0xff]
        %v553 = vld [vmem:[#allocation2 + $0x8] sm:$0xff]
        %v554 = vadd.f32 %v552, %v536
        %v555 = vadd.f32 %v553, %v539
        %556 = vst [vmem:[#allocation2] sm:$0xff] %v554
        %557 = vst [vmem:[#allocation2 + $0x8] sm:$0xff] %v555
      $region40: #{fpa_v2_forward.14} parent=31 // pred_fallthru
        _
      // Predicated region
      $region41: #{fpa_v2_forward.14} parent=31 // pred_check
        %p558 = pneg %p542
      $region42: #{fpa_v2_forward.14} parent=31 // pred_check_branch
        %560 = sbr.rel (%p558) target = $region44
      $region43: #{fpa_v2_forward.14} parent=31 // pred_region
        %v561 = vld [vmem:[#allocation2] sm:$0xff]
        %v562 = vld [vmem:[#allocation2 + $0x8] sm:$0xff]
        %v563 = vld [vmem:[%s2] sm:$0xff]
        %v564 = vld [vmem:[%s2 + $0x8] sm:$0xff]
        %566 = vset.pattern.permute.xlu0 0
        %567 = vperm.xlu0 %566, %v563
        %v568 = vpop.permute.xlu0 %567
        %571 = vset.pattern.permute.xlu0 0
        %572 = vperm.xlu0 %571, %v564
        %v573 = vpop.permute.xlu0 %572
        %v575 = vadd.f32 %v561, %v568
        %v576 = vadd.f32 %v562, %v573
        %v577 = vmax.f32 %v575, 0.0
        %v578 = vmax.f32 %v576, 0.0
        %v579 = vpack.c.bf16 %v578, %v577
        %v581 = vunpack.c.l.b16 %v579
        %v582 = vunpack.c.h.b16 %v579
        %v583 = vpack.c.b16 %v581, %v581
        %v584 = vpack.c.b16 %v582, %v582
        %587 = vst [vmem:[%s246] sm:$0xf] %v583
        %588 = vst [vmem:[%s246 + $0x4] sm:$0xf] %v584
      $region44: #{fpa_v2_forward.14} parent=31 // pred_fallthru
        _
      %p589 = scmp.lt.s32.totalorder %s19, 1
      %s590 = scalar_select %p589, %s19, 1
      %p591 = scmp.lt.s32.totalorder %s20, 0
      %s592 = scalar_select %p591, %s20, 0
      %s593 = smul.addr %s590, 2
      %s594 = sadd.s32 %s592, %s593
      %s595 = smul.addr %s594, 4
      %s596 = scalar_lea.vmem %s3, %s595
      // Predicated region
      $region45: #{fpa_v2_forward.14} parent=31 // pred_check
        %p597 = pneg %p130
      $region46: #{fpa_v2_forward.14} parent=31 // pred_check_branch
        %599 = sbr.rel (%p597) target = $region48
      $region47: #{fpa_v2_forward.14} parent=31 // pred_region
        _
      $region48: #{fpa_v2_forward.14} parent=31 // pred_fallthru
        _
    $region32: #{fpa_v2_forward.14} parent=5 // pred_fallthru
      _
    %p600 = scmp.le.s32.totalorder 2, %s9
    // Predicated region
    $region49: #{fpa_v2_forward.14} parent=5 // pred_check
      %p601 = pneg %p600
    $region50: #{fpa_v2_forward.14} parent=5 // pred_check_branch
      %603 = sbr.rel (%p601) target = $region52
    $region51: #{fpa_v2_forward.14} parent=5 // pred_region
      %s604 = ssub.s32 %s9, 2
      // Predicated region
      $region53: #{fpa_v2_forward.14} parent=51 // pred_check
        %p605 = pneg %p136
      $region54: #{fpa_v2_forward.14} parent=51 // pred_check_branch
        %607 = sbr.rel (%p605) target = $region56
      $region55: #{fpa_v2_forward.14} parent=51 // pred_region
        %p608 = scmp.lt.s32.totalorder %s22, 1
        %s609 = scalar_select %p608, %s22, 1
        %p610 = scmp.lt.s32.totalorder %s23, 0
        %s611 = scalar_select %p610, %s23, 0
        %s612 = smul.addr %s609, 2
        %s613 = sadd.s32 %s611, %s612
        %s614 = smul.addr %s613, 4
        %s615 = scalar_lea.vmem %s3, %s614
      $region56: #{fpa_v2_forward.14} parent=51 // pred_fallthru
        _
    $region52: #{fpa_v2_forward.14} parent=5 // pred_fallthru
      _
  $region6: #{fpa_v2_forward.14} parent=0 // loop_footer
    %s13 = sadd.s32 1, %s9
  $region7: #{fpa_v2_forward.14} parent=0 // loop_footer_branch
    %8 = sbr.rel target = $region3
  $region8: #{fpa_v2_forward.14} parent=0 // loop_exit
    _

// kernel: fpa_v2_forward.15
$region0: #{fpa_v2_forward.15}
  #allocation0 [shape = 'u32[]', space=smem, size = 0x4, offset = 0x4, fixed_abs, tag = 'smem constant byte address 0x4 - core index']
  #allocation1 [shape = 'u32[144,128]{1,0:T(1,128)}', space=vmem, size = 0x12000, scoped, tag = 'internal scratch']
  %s0 = inlined_call_operand.vmem [shape: bf16[2,16,128], index: 0, kind: input, shape index: {}]
  %s1 = inlined_call_operand.vmem [shape: bf16[2,16,128], index: 1, kind: input, shape index: {}]
  %s2 = inlined_call_operand.vmem [shape: bf16[128,128], index: 2, kind: input, shape index: {}]
  %s3 = inlined_call_operand.vmem [shape: bf16[2,16,128], index: 3, kind: output, shape index: {}]
  %s4 = sld [smem:[#allocation0]]
  $region45: #{fpa_v2_forward.15} parent=0
    _
  %s6 = ssub.s32 1, %s4
  %s7 = scalar_select 0, %s6, %s4
  loop: start=0, step=1, limit=4
  $region2: #{fpa_v2_forward.15} parent=0 // loop_pre_header
    _
  $region3: #{fpa_v2_forward.15} parent=0 // loop_header
    %s9 = sphi 0, %s13
    %p10 = scmp.ge.s32.totalorder %s9, 4
    %s16 = sphi 0, %s28
    %s17 = sphi 0, %s24
    %s18 = sphi 0, %s16
    %s19 = sphi 0, %s17
    %s20 = sphi 0, %s18
    %s21 = sphi 0, %s19
    %s31 = sphi 0, %s33
    %s34 = sphi 0, %s31
    %s35 = sphi 0, %s34
    %s51 = sphi 0, %s35
    %s59 = sphi 0, %s61
    %s62 = sphi 0, %s59
    %s63 = sphi 0, %s62
    %s79 = sphi 0, %s63
    %s85 = sphi 0, %s87
    %s88 = sphi 0, %s85
    %s89 = sphi 0, %s88
    %s105 = sphi 0, %s89
    %s113 = sphi 0, %s115
    %s116 = sphi 0, %s113
    %s117 = sphi 0, %s116
    %s133 = sphi 0, %s117
  $region4: #{fpa_v2_forward.15} parent=0 // loop_header_branch
    %12 = sbr.rel (%p10) target = $region8
  $region5: #{fpa_v2_forward.15} parent=0 // loop_body
    %s14 = ssub.s32 %s9, 1
    %s15 = ssub.s32 %s9, 2
    %s22 = sadd.s32 1, %s17
    %p23 = scmp.ge.s32.totalorder %s22, 1
    %s24 = scalar_select %p23, 0, %s22
    %s25 = sadd.s32 1, %s16
    %s26 = scalar_select %p23, %s25, %s16
    %p27 = scmp.ge.s32.totalorder %s26, 2
    %s28 = scalar_select %p27, 0, %s26
    %s29 = ssub.s32 %s16, %s28
    %p30 = scmp.eq.s32.totalorder %s29, 0
    %s32 = sadd.s32 %s31, 1
    %s33 = scalar_select %p30, %s31, %s32
    %p36 = pneg %p30
    %p37 = scmp.eq.s32.totalorder %s9, 1
    %p38 = por %p36, %p37
    %p39 = scmp.ne.s32.totalorder %s31, %s34
    %p40 = scmp.eq.s32.totalorder %s9, 0
    %p41 = por %p39, %p40
    %p42 = scmp.ne.s32.totalorder %s31, %s34
    %p43 = scmp.eq.s32.totalorder %s14, 1
    %p44 = por %p42, %p43
    %p45 = scmp.ne.s32.totalorder %s34, %s35
    %p46 = scmp.eq.s32.totalorder %s14, 0
    %p47 = por %p45, %p46
    %p48 = scmp.ne.s32.totalorder %s34, %s35
    %p49 = scmp.eq.s32.totalorder %s15, 1
    %p50 = por %p48, %p49
    %p52 = scmp.ne.s32.totalorder %s35, %s51
    %p53 = scmp.eq.s32.totalorder %s15, 0
    %p54 = por %p52, %p53
    %s55 = ssub.s32 %s16, %s28
    %s56 = ssub.s32 %s17, %s24
    %s57 = sor.u32 %s55, %s56
    %p58 = scmp.eq.s32.totalorder %s57, 0
    %s60 = sadd.s32 %s59, 1
    %s61 = scalar_select %p58, %s59, %s60
    %p64 = pneg %p58
    %p65 = scmp.eq.s32.totalorder %s9, 1
    %p66 = por %p64, %p65
    %p67 = scmp.ne.s32.totalorder %s59, %s62
    %p68 = scmp.eq.s32.totalorder %s9, 0
    %p69 = por %p67, %p68
    %p70 = scmp.ne.s32.totalorder %s59, %s62
    %p71 = scmp.eq.s32.totalorder %s14, 1
    %p72 = por %p70, %p71
    %p73 = scmp.ne.s32.totalorder %s62, %s63
    %p74 = scmp.eq.s32.totalorder %s14, 0
    %p75 = por %p73, %p74
    %p76 = scmp.ne.s32.totalorder %s62, %s63
    %p77 = scmp.eq.s32.totalorder %s15, 1
    %p78 = por %p76, %p77
    %p80 = scmp.ne.s32.totalorder %s63, %s79
    %p81 = scmp.eq.s32.totalorder %s15, 0
    %p82 = por %p80, %p81
    %s83 = ssub.s32 %s17, %s24
    %p84 = scmp.eq.s32.totalorder %s83, 0
    %s86 = sadd.s32 %s85, 1
    %s87 = scalar_select %p84, %s85, %s86
    %p90 = pneg %p84
    %p91 = scmp.eq.s32.totalorder %s9, 1
    %p92 = por %p90, %p91
    %p93 = scmp.ne.s32.totalorder %s85, %s88
    %p94 = scmp.eq.s32.totalorder %s9, 0
    %p95 = por %p93, %p94
    %p96 = scmp.ne.s32.totalorder %s85, %s88
    %p97 = scmp.eq.s32.totalorder %s14, 1
    %p98 = por %p96, %p97
    %p99 = scmp.ne.s32.totalorder %s88, %s89
    %p100 = scmp.eq.s32.totalorder %s14, 0
    %p101 = por %p99, %p100
    %p102 = scmp.ne.s32.totalorder %s88, %s89
    %p103 = scmp.eq.s32.totalorder %s15, 1
    %p104 = por %p102, %p103
    %p106 = scmp.ne.s32.totalorder %s89, %s105
    %p107 = scmp.eq.s32.totalorder %s15, 0
    %p108 = por %p106, %p107
    %s109 = ssub.s32 %s16, %s28
    %s110 = ssub.s32 %s17, %s24
    %s111 = sor.u32 %s109, %s110
    %p112 = scmp.eq.s32.totalorder %s111, 0
    %s114 = sadd.s32 %s113, 1
    %s115 = scalar_select %p112, %s113, %s114
    %p118 = pneg %p112
    %p119 = scmp.eq.s32.totalorder %s9, 1
    %p120 = por %p118, %p119
    %p121 = scmp.ne.s32.totalorder %s113, %s116
    %p122 = scmp.eq.s32.totalorder %s9, 0
    %p123 = por %p121, %p122
    %p124 = scmp.ne.s32.totalorder %s113, %s116
    %p125 = scmp.eq.s32.totalorder %s14, 1
    %p126 = por %p124, %p125
    %p127 = scmp.ne.s32.totalorder %s116, %s117
    %p128 = scmp.eq.s32.totalorder %s14, 0
    %p129 = por %p127, %p128
    %p130 = scmp.ne.s32.totalorder %s116, %s117
    %p131 = scmp.eq.s32.totalorder %s15, 1
    %p132 = por %p130, %p131
    %p134 = scmp.ne.s32.totalorder %s117, %s133
    %p135 = scmp.eq.s32.totalorder %s15, 0
    %p136 = por %p134, %p135
    %p137 = scmp.le.s32.totalorder 1, %s9
    %p138 = scmp.lt.s32.totalorder %s9, 3
    %p139 = pnand %p137, %p138
    %p140 = pneg %p139
    // Predicated region
    $region9: #{fpa_v2_forward.15} parent=5 // pred_check
      _
    $region10: #{fpa_v2_forward.15} parent=5 // pred_check_branch
      %142 = sbr.rel (%p139) target = $region12
    $region11: #{fpa_v2_forward.15} parent=5 // pred_region
      %s143 = ssub.s32 %s9, 1
      // Predicated region
      $region13: #{fpa_v2_forward.15} parent=11 // pred_check
        %p144 = pneg %p101
      $region14: #{fpa_v2_forward.15} parent=11 // pred_check_branch
        %146 = sbr.rel (%p144) target = $region16
      $region15: #{fpa_v2_forward.15} parent=11 // pred_region
        %p147 = scmp.lt.s32.totalorder %s19, 0
        %s148 = scalar_select %p147, %s19, 0
        %s149 = smul.addr %s148, 4
        %s150 = scalar_lea.vmem %s2, %s149
      $region16: #{fpa_v2_forward.15} parent=11 // pred_fallthru
        _
    $region12: #{fpa_v2_forward.15} parent=5 // pred_fallthru
      _
    %p151 = scmp.lt.s32.totalorder %s9, 2
    // Predicated region
    $region17: #{fpa_v2_forward.15} parent=5 // pred_check
      %p152 = pneg %p151
    $region18: #{fpa_v2_forward.15} parent=5 // pred_check_branch
      %154 = sbr.rel (%p152) target = $region20
    $region19: #{fpa_v2_forward.15} parent=5 // pred_region
      // Predicated region
      $region21: #{fpa_v2_forward.15} parent=19 // pred_check
        %p155 = pneg %p41
      $region22: #{fpa_v2_forward.15} parent=19 // pred_check_branch
        %157 = sbr.rel (%p155) target = $region24
      $region23: #{fpa_v2_forward.15} parent=19 // pred_region
        %p158 = scmp.lt.s32.totalorder %s16, 1
        %s159 = scalar_select %p158, %s16, 1
        %s160 = smul.addr %s159, 2
        %s161 = smul.addr %s160, 4
        %s162 = scalar_lea.vmem %s0, %s161
      $region24: #{fpa_v2_forward.15} parent=19 // pred_fallthru
        _
      // Predicated region
      $region25: #{fpa_v2_forward.15} parent=19 // pred_check
        %p163 = pneg %p69
      $region26: #{fpa_v2_forward.15} parent=19 // pred_check_branch
        %165 = sbr.rel (%p163) target = $region28
      $region27: #{fpa_v2_forward.15} parent=19 // pred_region
        %p166 = scmp.lt.s32.totalorder %s16, 1
        %s167 = scalar_select %p166, %s16, 1
        %p168 = scmp.lt.s32.totalorder %s17, 0
        %s169 = scalar_select %p168, %s17, 0
        %s170 = smul.addr %s167, 2
        %s171 = sadd.s32 %s169, %s170
        %s172 = smul.addr %s171, 4
        %s173 = scalar_lea.vmem %s1, %s172
      $region28: #{fpa_v2_forward.15} parent=19 // pred_fallthru
        _
    $region20: #{fpa_v2_forward.15} parent=5 // pred_fallthru
      _
    %p174 = scmp.le.s32.totalorder 1, %s9
    %p175 = scmp.lt.s32.totalorder %s9, 3
    %p176 = pnand %p174, %p175
    %p177 = pneg %p176
    // Predicated region
    $region29: #{fpa_v2_forward.15} parent=5 // pred_check
      _
    $region30: #{fpa_v2_forward.15} parent=5 // pred_check_branch
      %179 = sbr.rel (%p176) target = $region32
    $region31: #{fpa_v2_forward.15} parent=5 // pred_region
      %s180 = ssub.s32 %s9, 1
      %p181 = scmp.lt.s32.totalorder %s18, 1
      %s182 = scalar_select %p181, %s18, 1
      %s183 = smul.addr %s182, 2
      %s184 = smul.addr %s183, 4
      %s185 = scalar_lea.vmem %s0, %s184
      %p186 = pneg %p47
      %p187 = pneg %p44
      %p188 = scmp.lt.s32.totalorder %s18, 1
      %s189 = scalar_select %p188, %s18, 1
      %p190 = scmp.lt.s32.totalorder %s19, 0
      %s191 = scalar_select %p190, %s19, 0
      %s192 = smul.addr %s189, 2
      %s193 = sadd.s32 %s191, %s192
      %s194 = smul.addr %s193, 4
      %s195 = scalar_lea.vmem %s1, %s194
      %p196 = pneg %p75
      %p197 = pneg %p72
      %p198 = scmp.lt.s32.totalorder %s19, 0
      %s199 = scalar_select %p198, %s19, 0
      %s200 = smul.addr %s199, 4
      %s201 = scalar_lea.vmem %s2, %s200
      %p202 = pneg %p101
      %p203 = pneg %p98
      %p204 = pneg %p129
      %p205 = pneg %p126
      %p206 = scmp.lt.s32.totalorder %s18, 1
      %s207 = scalar_select %p206, %s18, 1
      %p208 = scmp.lt.s32.totalorder %s19, 0
      %s209 = scalar_select %p208, %s19, 0
      %s210 = smul.addr %s207, 2
      %s211 = sadd.s32 %s209, %s210
      %s212 = smul.addr %s211, 4
      %s213 = scalar_lea.vmem %s3, %s212
      %p214 = scmp.lt.s32.totalorder %s18, 1
      %s215 = scalar_select %p214, %s18, 1
      %s216 = smul.addr %s215, 2
      %s217 = smul.addr %s216, 4
      %s218 = scalar_lea.vmem %s0, %s217
      %p219 = scmp.lt.s32.totalorder %s18, 1
      %s220 = scalar_select %p219, %s18, 1
      %p221 = scmp.lt.s32.totalorder %s19, 0
      %s222 = scalar_select %p221, %s19, 0
      %s223 = smul.addr %s220, 2
      %s224 = sadd.s32 %s222, %s223
      %s225 = smul.addr %s224, 4
      %s226 = scalar_lea.vmem %s1, %s225
      %p227 = scmp.lt.s32.totalorder %s19, 0
      %s228 = scalar_select %p227, %s19, 0
      %s229 = smul.addr %s228, 4
      %s230 = scalar_lea.vmem %s2, %s229
      %p231 = scmp.lt.s32.totalorder %s18, 1
      %s232 = scalar_select %p231, %s18, 1
      %p233 = scmp.lt.s32.totalorder %s19, 0
      %s234 = scalar_select %p233, %s19, 0
      %s235 = smul.addr %s232, 2
      %s236 = sadd.s32 %s234, %s235
      %s237 = smul.addr %s236, 4
      %s238 = scalar_lea.vmem %s3, %s237
      %v240 = vld [vmem:[%s218] sm:$0xf]
      %v241 = vld [vmem:[%s218 + $0x4] sm:$0xf]
      %v242 = vld [vmem:[%s230] sm:$0xf]
      %v243 = vld [vmem:[%s230 + $0x4] sm:$0xf]
      %v244 = vld [vmem:[%s230 + $0x8] sm:$0xf]
      %v245 = vld [vmem:[%s230 + $0xc] sm:$0xf]
      %v246 = vld [vmem:[%s230 + $0x10] sm:$0xf]
      %v247 = vld [vmem:[%s230 + $0x14] sm:$0xf]
      %v248 = vld [vmem:[%s230 + $0x18] sm:$0xf]
      %v249 = vld [vmem:[%s230 + $0x1c] sm:$0xf]
      %v250 = vld [vmem:[%s230 + $0x20] sm:$0xf]
      %v251 = vld [vmem:[%s230 + $0x24] sm:$0xf]
      %v252 = vld [vmem:[%s230 + $0x28] sm:$0xf]
      %v253 = vld [vmem:[%s230 + $0x2c] sm:$0xf]
      %v254 = vld [vmem:[%s230 + $0x30] sm:$0xf]
      %v255 = vld [vmem:[%s230 + $0x34] sm:$0xf]
      %v256 = vld [vmem:[%s230 + $0x38] sm:$0xf]
      %v257 = vld [vmem:[%s230 + $0x3c] sm:$0xf]
      %v260 = vunpack.c.l.b16 %v240
      %v261 = vunpack.c.l.b16 %v241
      %v262 = vpack.c.b16 %v261, %v260
      %v280 = vunpack.c.l.b16 %v242
      %v281 = vunpack.c.l.b16 %v243
      %v282 = vunpack.c.l.b16 %v244
      %v283 = vunpack.c.l.b16 %v245
      %v284 = vunpack.c.l.b16 %v246
      %v285 = vunpack.c.l.b16 %v247
      %v286 = vunpack.c.l.b16 %v248
      %v287 = vunpack.c.l.b16 %v249
      %v288 = vunpack.c.l.b16 %v250
      %v289 = vunpack.c.l.b16 %v251
      %v290 = vunpack.c.l.b16 %v252
      %v291 = vunpack.c.l.b16 %v253
      %v292 = vunpack.c.l.b16 %v254
      %v293 = vunpack.c.l.b16 %v255
      %v294 = vunpack.c.l.b16 %v256
      %v295 = vunpack.c.l.b16 %v257
      %v296 = vpack.c.b16 %v281, %v280
      %v297 = vpack.c.b16 %v283, %v282
      %v298 = vpack.c.b16 %v285, %v284
      %v299 = vpack.c.b16 %v287, %v286
      %v300 = vpack.c.b16 %v289, %v288
      %v301 = vpack.c.b16 %v291, %v290
      %v302 = vpack.c.b16 %v293, %v292
      %v303 = vpack.c.b16 %v295, %v294
      %312 = vmatprep.subr.bf16.mxu0 0
      %313 = vmatpush1.bf16.msra.mxu0 %v303
      %314 = vmatprep.subr.bf16.mxu0 0
      %315 = vmatpush1.bf16.msra.mxu0 %v302
      %316 = vmatprep.subr.bf16.mxu0 0
      %317 = vmatpush1.bf16.msra.mxu0 %v301
      %318 = vmatprep.subr.bf16.mxu0 0
      %319 = vmatpush1.bf16.msra.mxu0 %v300
      %320 = vmatprep.subr.bf16.mxu0 0
      %321 = vmatpush1.bf16.msra.mxu0 %v299
      %322 = vmatprep.subr.bf16.mxu0 0
      %323 = vmatpush1.bf16.msra.mxu0 %v298
      %324 = vmatprep.subr.bf16.mxu0 0
      %325 = vmatpush1.bf16.msra.mxu0 %v297
      %326 = vmatprep.subr.bf16.mxu0 0
      %327 = vmatpush1.bf16.msra.mxu0 %v296
      %328 = vmatprep.subr.bf16.mxu0 0
      %329 = vmatpush2.bf16.msra.mxu0 0
      %330 = vmatprep.subr.bf16.mxu0 0
      %331 = vmatpush2.bf16.msra.mxu0 0
      %332 = vmatprep.subr.bf16.mxu0 0
      %333 = vmatpush2.bf16.msra.mxu0 0
      %334 = vmatprep.subr.bf16.mxu0 0
      %335 = vmatpush2.bf16.msra.mxu0 0
      %336 = vmatprep.subr.bf16.mxu0 0
      %337 = vmatpush2.bf16.msra.mxu0 0
      %338 = vmatprep.subr.bf16.mxu0 0
      %339 = vmatpush2.bf16.msra.mxu0 0
      %340 = vmatprep.subr.bf16.mxu0 0
      %341 = vmatpush2.bf16.msra.mxu0 0
      %342 = vmatprep.subr.bf16.mxu0 0
      %343 = vmatpush2.bf16.msra.mxu0 0
      %344 = vmatprep.mubr.bf16.mxu0 0
      %345 = vmatmul.mubr.bf16.gmra.mxu0 %v262
      %v346 = vpop.f32.mrf.mxu0
      %v347 = vadd.f32 0.0, %v346
      %v348 = vpop.f32.mrf.mxu0
      %v349 = vpop.f32.mrf.mxu0
      %v350 = vadd.f32 0.0, %v349
      %v351 = vpop.f32.mrf.mxu0
      %352 = vdwg.mxu0
      %v353 = vld [vmem:[%s226] sm:$0xf]
      %v354 = vld [vmem:[%s226 + $0x4] sm:$0xf]
      %v355 = vunpack.c.l.bf16 %v353
      %v356 = vunpack.c.l.bf16 %v354
      %v357 = vadd.f32 %v355, %v347
      %v358 = vadd.f32 %v356, %v350
      %v359 = vpack.c.bf16 %v358, %v357
      %v361 = vunpack.c.l.b16 %v359
      %v362 = vunpack.c.h.b16 %v359
      %v363 = vpack.c.b16 %v361, %v361
      %v364 = vpack.c.b16 %v362, %v362
      %367 = vst [vmem:[%s238] sm:$0xf] %v363
      %368 = vst [vmem:[%s238 + $0x4] sm:$0xf] %v364
      %p369 = scmp.lt.s32.totalorder %s18, 1
      %s370 = scalar_select %p369, %s18, 1
      %p371 = scmp.lt.s32.totalorder %s19, 0
      %s372 = scalar_select %p371, %s19, 0
      %s373 = smul.addr %s370, 2
      %s374 = sadd.s32 %s372, %s373
      %s375 = smul.addr %s374, 4
      %s376 = scalar_lea.vmem %s3, %s375
      // Predicated region
      $region33: #{fpa_v2_forward.15} parent=31 // pred_check
        %p377 = pneg %p126
      $region34: #{fpa_v2_forward.15} parent=31 // pred_check_branch
        %379 = sbr.rel (%p377) target = $region36
      $region35: #{fpa_v2_forward.15} parent=31 // pred_region
        _
      $region36: #{fpa_v2_forward.15} parent=31 // pred_fallthru
        _
    $region32: #{fpa_v2_forward.15} parent=5 // pred_fallthru
      _
    %p380 = scmp.le.s32.totalorder 2, %s9
    // Predicated region
    $region37: #{fpa_v2_forward.15} parent=5 // pred_check
      %p381 = pneg %p380
    $region38: #{fpa_v2_forward.15} parent=5 // pred_check_branch
      %383 = sbr.rel (%p381) target = $region40
    $region39: #{fpa_v2_forward.15} parent=5 // pred_region
      %s384 = ssub.s32 %s9, 2
      // Predicated region
      $region41: #{fpa_v2_forward.15} parent=39 // pred_check
        %p385 = pneg %p132
      $region42: #{fpa_v2_forward.15} parent=39 // pred_check_branch
        %387 = sbr.rel (%p385) target = $region44
      $region43: #{fpa_v2_forward.15} parent=39 // pred_region
        %p388 = scmp.lt.s32.totalorder %s20, 1
        %s389 = scalar_select %p388, %s20, 1
        %p390 = scmp.lt.s32.totalorder %s21, 0
        %s391 = scalar_select %p390, %s21, 0
        %s392 = smul.addr %s389, 2
        %s393 = sadd.s32 %s391, %s392
        %s394 = smul.addr %s393, 4
        %s395 = scalar_lea.vmem %s3, %s394
      $region44: #{fpa_v2_forward.15} parent=39 // pred_fallthru
        _
    $region40: #{fpa_v2_forward.15} parent=5 // pred_fallthru
      _
  $region6: #{fpa_v2_forward.15} parent=0 // loop_footer
    %s13 = sadd.s32 1, %s9
  $region7: #{fpa_v2_forward.15} parent=0 // loop_footer_branch
    %8 = sbr.rel target = $region3
  $region8: #{fpa_v2_forward.15} parent=0 // loop_exit
    _

// kernel: fpa_v2_forward.10
$region0: #{fpa_v2_forward.10}
  #allocation0 [shape = 'u32[]', space=smem, size = 0x4, offset = 0x4, fixed_abs, tag = 'smem constant byte address 0x4 - core index']
  #allocation1 [shape = 'u32[144,128]{1,0:T(1,128)}', space=vmem, size = 0x12000, scoped, tag = 'internal scratch']
  #allocation2 [shape = 'f32[16,128]{1,0:T(8,128)}', space=vmem, size = 0x2000, scoped, tag = 'scratch operand']
  %s0 = inlined_call_operand.vmem [shape: bf16[2,1664,128], index: 0, kind: input, shape index: {}]
  %s1 = inlined_call_operand.vmem [shape: bf16[16,1664], index: 1, kind: input, shape index: {}]
  %s2 = inlined_call_operand.vmem [shape: f32[16,1], index: 2, kind: input, shape index: {}]
  %s3 = inlined_call_operand.vmem [shape: bf16[2,16,128], index: 3, kind: output, shape index: {}]
  %s4 = sld [smem:[#allocation0]]
  $region57: #{fpa_v2_forward.10} parent=0
    _
  %s6 = ssub.s32 1, %s4
  %s7 = scalar_select 0, %s6, %s4
  loop: start=0, step=1, limit=4
  $region2: #{fpa_v2_forward.10} parent=0 // loop_pre_header
    _
  $region3: #{fpa_v2_forward.10} parent=0 // loop_header
    %s9 = sphi 0, %s13
    %p10 = scmp.ge.s32.totalorder %s9, 4
    %s16 = sphi 0, %s35
    %s17 = sphi 0, %s31
    %s18 = sphi 0, %s27
    %s19 = sphi 0, %s16
    %s20 = sphi 0, %s17
    %s21 = sphi 0, %s18
    %s22 = sphi 0, %s19
    %s23 = sphi 0, %s20
    %s24 = sphi 0, %s21
    %s42 = sphi 0, %s44
    %s45 = sphi 0, %s42
    %s46 = sphi 0, %s45
    %s62 = sphi 0, %s46
    %s68 = sphi 0, %s70
    %s71 = sphi 0, %s68
    %s72 = sphi 0, %s71
    %s88 = sphi 0, %s72
    %s92 = sphi 0, %s92
    %s94 = sphi 0, %s92
    %s95 = sphi 0, %s94
    %s109 = sphi 0, %s95
    %s117 = sphi 0, %s119
    %s120 = sphi 0, %s117
    %s121 = sphi 0, %s120
    %s137 = sphi 0, %s121
  $region4: #{fpa_v2_forward.10} parent=0 // loop_header_branch
    %12 = sbr.rel (%p10) target = $region8
  $region5: #{fpa_v2_forward.10} parent=0 // loop_body
    %s14 = ssub.s32 %s9, 1
    %s15 = ssub.s32 %s9, 2
    %s25 = sadd.s32 1, %s18
    %p26 = scmp.ge.s32.totalorder %s25, 1
    %s27 = scalar_select %p26, 0, %s25
    %s28 = sadd.s32 1, %s17
    %s29 = scalar_select %p26, %s28, %s17
    %p30 = scmp.ge.s32.totalorder %s29, 1
    %s31 = scalar_select %p30, 0, %s29
    %s32 = sadd.s32 1, %s16
    %s33 = scalar_select %p30, %s32, %s16
    %p34 = scmp.ge.s32.totalorder %s33, 2
    %s35 = scalar_select %p34, 0, %s33
    %s36 = ssub.s32 %s16, %s35
    %s37 = ssub.s32 %s18, %s27
    %s38 = sor.u32 %s36, %s37
    %s39 = ssub.s32 %s17, %s31
    %s40 = sor.u32 %s38, %s39
    %p41 = scmp.eq.s32.totalorder %s40, 0
    %s43 = sadd.s32 %s42, 1
    %s44 = scalar_select %p41, %s42, %s43
    %p47 = pneg %p41
    %p48 = scmp.eq.s32.totalorder %s9, 1
    %p49 = por %p47, %p48
    %p50 = scmp.ne.s32.totalorder %s42, %s45
    %p51 = scmp.eq.s32.totalorder %s9, 0
    %p52 = por %p50, %p51
    %p53 = scmp.ne.s32.totalorder %s42, %s45
    %p54 = scmp.eq.s32.totalorder %s14, 1
    %p55 = por %p53, %p54
    %p56 = scmp.ne.s32.totalorder %s45, %s46
    %p57 = scmp.eq.s32.totalorder %s14, 0
    %p58 = por %p56, %p57
    %p59 = scmp.ne.s32.totalorder %s45, %s46
    %p60 = scmp.eq.s32.totalorder %s15, 1
    %p61 = por %p59, %p60
    %p63 = scmp.ne.s32.totalorder %s46, %s62
    %p64 = scmp.eq.s32.totalorder %s15, 0
    %p65 = por %p63, %p64
    %s66 = ssub.s32 %s18, %s27
    %p67 = scmp.eq.s32.totalorder %s66, 0
    %s69 = sadd.s32 %s68, 1
    %s70 = scalar_select %p67, %s68, %s69
    %p73 = pneg %p67
    %p74 = scmp.eq.s32.totalorder %s9, 1
    %p75 = por %p73, %p74
    %p76 = scmp.ne.s32.totalorder %s68, %s71
    %p77 = scmp.eq.s32.totalorder %s9, 0
    %p78 = por %p76, %p77
    %p79 = scmp.ne.s32.totalorder %s68, %s71
    %p80 = scmp.eq.s32.totalorder %s14, 1
    %p81 = por %p79, %p80
    %p82 = scmp.ne.s32.totalorder %s71, %s72
    %p83 = scmp.eq.s32.totalorder %s14, 0
    %p84 = por %p82, %p83
    %p85 = scmp.ne.s32.totalorder %s71, %s72
    %p86 = scmp.eq.s32.totalorder %s15, 1
    %p87 = por %p85, %p86
    %p89 = scmp.ne.s32.totalorder %s72, %s88
    %p90 = scmp.eq.s32.totalorder %s15, 0
    %p91 = por %p89, %p90
    %s93 = sadd.s32 %s92, 1
    %p96 = scmp.eq.s32.totalorder %s9, 1
    %p97 = scmp.ne.s32.totalorder %s92, %s94
    %p98 = scmp.eq.s32.totalorder %s9, 0
    %p99 = por %p97, %p98
    %p100 = scmp.ne.s32.totalorder %s92, %s94
    %p101 = scmp.eq.s32.totalorder %s14, 1
    %p102 = por %p100, %p101
    %p103 = scmp.ne.s32.totalorder %s94, %s95
    %p104 = scmp.eq.s32.totalorder %s14, 0
    %p105 = por %p103, %p104
    %p106 = scmp.ne.s32.totalorder %s94, %s95
    %p107 = scmp.eq.s32.totalorder %s15, 1
    %p108 = por %p106, %p107
    %p110 = scmp.ne.s32.totalorder %s95, %s109
    %p111 = scmp.eq.s32.totalorder %s15, 0
    %p112 = por %p110, %p111
    %s113 = ssub.s32 %s16, %s35
    %s114 = ssub.s32 %s17, %s31
    %s115 = sor.u32 %s113, %s114
    %p116 = scmp.eq.s32.totalorder %s115, 0
    %s118 = sadd.s32 %s117, 1
    %s119 = scalar_select %p116, %s117, %s118
    %p122 = pneg %p116
    %p123 = scmp.eq.s32.totalorder %s9, 1
    %p124 = por %p122, %p123
    %p125 = scmp.ne.s32.totalorder %s117, %s120
    %p126 = scmp.eq.s32.totalorder %s9, 0
    %p127 = por %p125, %p126
    %p128 = scmp.ne.s32.totalorder %s117, %s120
    %p129 = scmp.eq.s32.totalorder %s14, 1
    %p130 = por %p128, %p129
    %p131 = scmp.ne.s32.totalorder %s120, %s121
    %p132 = scmp.eq.s32.totalorder %s14, 0
    %p133 = por %p131, %p132
    %p134 = scmp.ne.s32.totalorder %s120, %s121
    %p135 = scmp.eq.s32.totalorder %s15, 1
    %p136 = por %p134, %p135
    %p138 = scmp.ne.s32.totalorder %s121, %s137
    %p139 = scmp.eq.s32.totalorder %s15, 0
    %p140 = por %p138, %p139
    %p141 = scmp.le.s32.totalorder 1, %s9
    %p142 = scmp.lt.s32.totalorder %s9, 3
    %p143 = pnand %p141, %p142
    %p144 = pneg %p143
    // Predicated region
    $region9: #{fpa_v2_forward.10} parent=5 // pred_check
      _
    $region10: #{fpa_v2_forward.10} parent=5 // pred_check_branch
      %146 = sbr.rel (%p143) target = $region12
    $region11: #{fpa_v2_forward.10} parent=5 // pred_region
      %s147 = ssub.s32 %s9, 1
      // Predicated region
      $region13: #{fpa_v2_forward.10} parent=11 // pred_check
        %p148 = pneg %p84
      $region14: #{fpa_v2_forward.10} parent=11 // pred_check_branch
        %150 = sbr.rel (%p148) target = $region16
      $region15: #{fpa_v2_forward.10} parent=11 // pred_region
        %s151 = smul.u32 13, %s21
        %p152 = scmp.lt.s32.totalorder %s151, 12
        %s153 = scalar_select %p152, %s151, 12
        %s154 = smul.addr %s153, 4
        %s155 = scalar_lea.vmem %s1, %s154
        %s156 = smul.u32 13, %s21
      $region16: #{fpa_v2_forward.10} parent=11 // pred_fallthru
        _
      // Predicated region
      $region17: #{fpa_v2_forward.10} parent=11 // pred_check
        %p157 = pneg %p105
      $region18: #{fpa_v2_forward.10} parent=11 // pred_check_branch
        %159 = sbr.rel (%p157) target = $region20
      $region19: #{fpa_v2_forward.10} parent=11 // pred_region
        _
      $region20: #{fpa_v2_forward.10} parent=11 // pred_fallthru
        _
    $region12: #{fpa_v2_forward.10} parent=5 // pred_fallthru
      _
    %p160 = scmp.lt.s32.totalorder %s9, 2
    // Predicated region
    $region21: #{fpa_v2_forward.10} parent=5 // pred_check
      %p161 = pneg %p160
    $region22: #{fpa_v2_forward.10} parent=5 // pred_check_branch
      %163 = sbr.rel (%p161) target = $region24
    $region23: #{fpa_v2_forward.10} parent=5 // pred_region
      // Predicated region
      $region25: #{fpa_v2_forward.10} parent=23 // pred_check
        %p164 = pneg %p52
      $region26: #{fpa_v2_forward.10} parent=23 // pred_check_branch
        %166 = sbr.rel (%p164) target = $region28
      $region27: #{fpa_v2_forward.10} parent=23 // pred_region
        %s167 = smul.u32 208, %s18
        %p168 = scmp.lt.s32.totalorder %s16, 1
        %s169 = scalar_select %p168, %s16, 1
        %p170 = scmp.lt.s32.totalorder %s167, 207
        %s171 = scalar_select %p170, %s167, 207
        %p172 = scmp.lt.s32.totalorder %s17, 0
        %s173 = scalar_select %p172, %s17, 0
        %s174 = sadd.s32 %s173, %s171
        %s175 = smul.addr %s169, 208
        %s176 = sadd.s32 %s174, %s175
        %s177 = smul.addr %s176, 4
        %s178 = scalar_lea.vmem %s0, %s177
        %s179 = smul.u32 208, %s18
      $region28: #{fpa_v2_forward.10} parent=23 // pred_fallthru
        _
    $region24: #{fpa_v2_forward.10} parent=5 // pred_fallthru
      _
    %p180 = scmp.le.s32.totalorder 1, %s9
    %p181 = scmp.lt.s32.totalorder %s9, 3
    %p182 = pnand %p180, %p181
    %p183 = pneg %p182
    // Predicated region
    $region29: #{fpa_v2_forward.10} parent=5 // pred_check
      _
    $region30: #{fpa_v2_forward.10} parent=5 // pred_check_branch
      %185 = sbr.rel (%p182) target = $region32
    $region31: #{fpa_v2_forward.10} parent=5 // pred_region
      %s186 = ssub.s32 %s9, 1
      %s187 = smul.u32 208, %s21
      %p188 = scmp.lt.s32.totalorder %s19, 1
      %s189 = scalar_select %p188, %s19, 1
      %p190 = scmp.lt.s32.totalorder %s187, 207
      %s191 = scalar_select %p190, %s187, 207
      %p192 = scmp.lt.s32.totalorder %s20, 0
      %s193 = scalar_select %p192, %s20, 0
      %s194 = sadd.s32 %s193, %s191
      %s195 = smul.addr %s189, 208
      %s196 = sadd.s32 %s194, %s195
      %s197 = smul.addr %s196, 4
      %s198 = scalar_lea.vmem %s0, %s197
      %p199 = pneg %p58
      %p200 = pneg %p55
      %s201 = smul.u32 13, %s21
      %p202 = scmp.lt.s32.totalorder %s201, 12
      %s203 = scalar_select %p202, %s201, 12
      %s204 = smul.addr %s203, 4
      %s205 = scalar_lea.vmem %s1, %s204
      %p206 = pneg %p84
      %p207 = pneg %p81
      %p208 = pneg %p105
      %p209 = pneg %p102
      %p210 = pneg %p133
      %p211 = pneg %p130
      %p212 = scmp.lt.s32.totalorder %s19, 1
      %s213 = scalar_select %p212, %s19, 1
      %p214 = scmp.lt.s32.totalorder %s20, 0
      %s215 = scalar_select %p214, %s20, 0
      %s216 = smul.addr %s213, 2
      %s217 = sadd.s32 %s215, %s216
      %s218 = smul.addr %s217, 4
      %s219 = scalar_lea.vmem %s3, %s218
      %s220 = smul.u32 208, %s21
      %p221 = scmp.lt.s32.totalorder %s19, 1
      %s222 = scalar_select %p221, %s19, 1
      %p223 = scmp.lt.s32.totalorder %s220, 207
      %s224 = scalar_select %p223, %s220, 207
      %p225 = scmp.lt.s32.totalorder %s20, 0
      %s226 = scalar_select %p225, %s20, 0
      %s227 = sadd.s32 %s226, %s224
      %s228 = smul.addr %s222, 208
      %s229 = sadd.s32 %s227, %s228
      %s230 = smul.addr %s229, 4
      %s231 = scalar_lea.vmem %s0, %s230
      %s232 = smul.u32 208, %s21
      %s233 = smul.u32 13, %s21
      %p234 = scmp.lt.s32.totalorder %s233, 12
      %s235 = scalar_select %p234, %s233, 12
      %s236 = smul.addr %s235, 4
      %s237 = scalar_lea.vmem %s1, %s236
      %s238 = smul.u32 13, %s21
      %p239 = scmp.lt.s32.totalorder %s19, 1
      %s240 = scalar_select %p239, %s19, 1
      %p241 = scmp.lt.s32.totalorder %s20, 0
      %s242 = scalar_select %p241, %s20, 0
      %s243 = smul.addr %s240, 2
      %s244 = sadd.s32 %s242, %s243
      %s245 = smul.addr %s244, 4
      %s246 = scalar_lea.vmem %s3, %s245
      %v248 = vld [vmem:[%s237] sm:$0xff]
      %v249 = vld [vmem:[%s237 + $0x8] sm:$0xff]
      %v250 = vld [vmem:[%s237 + $0x10] sm:$0xff]
      %v251 = vld [vmem:[%s237 + $0x18] sm:$0xff]
      %v252 = vld [vmem:[%s237 + $0x20] sm:$0xff]
      %v253 = vld [vmem:[%s237 + $0x28] sm:$0xff]
      %v254 = vld [vmem:[%s237 + $0x30] sm:$0xf]
      %v255 = vld [vmem:[%s237 + $0x34] sm:$0xff]
      %v256 = vld [vmem:[%s237 + $0x3c] sm:$0xff]
      %v257 = vld [vmem:[%s237 + $0x44] sm:$0xff]
      %v258 = vld [vmem:[%s237 + $0x4c] sm:$0xff]
      %v259 = vld [vmem:[%s237 + $0x54] sm:$0xff]
      %v260 = vld [vmem:[%s237 + $0x5c] sm:$0xff]
      %v261 = vld [vmem:[%s237 + $0x64] sm:$0xf]
      %v262 = vld [vmem:[%s231] sm:$0xf]
      %v263 = vld [vmem:[%s231 + $0x4] sm:$0xf]
      %v264 = vld [vmem:[%s231 + $0x8] sm:$0xf]
      %v265 = vld [vmem:[%s231 + $0xc] sm:$0xf]
      %v266 = vld [vmem:[%s231 + $0x10] sm:$0xf]
      %v267 = vld [vmem:[%s231 + $0x14] sm:$0xf]
      %v268 = vld [vmem:[%s231 + $0x18] sm:$0xf]
      %v269 = vld [vmem:[%s231 + $0x1c] sm:$0xf]
      %v270 = vld [vmem:[%s231 + $0x20] sm:$0xf]
      %v271 = vld [vmem:[%s231 + $0x24] sm:$0xf]
      %v272 = vld [vmem:[%s231 + $0x28] sm:$0xf]
      %v273 = vld [vmem:[%s231 + $0x2c] sm:$0xf]
      %v274 = vld [vmem:[%s231 + $0x30] sm:$0xf]
      %v275 = vld [vmem:[%s231 + $0x34] sm:$0xf]
      %v276 = vld [vmem:[%s231 + $0x38] sm:$0xf]
      %v277 = vld [vmem:[%s231 + $0x3c] sm:$0xf]
      %v278 = vld [vmem:[%s231 + $0x40] sm:$0xf]
      %v279 = vld [vmem:[%s231 + $0x44] sm:$0xf]
      %v280 = vld [vmem:[%s231 + $0x48] sm:$0xf]
      %v281 = vld [vmem:[%s231 + $0x4c] sm:$0xf]
      %v282 = vld [vmem:[%s231 + $0x50] sm:$0xf]
      %v283 = vld [vmem:[%s231 + $0x54] sm:$0xf]
      %v284 = vld [vmem:[%s231 + $0x58] sm:$0xf]
      %v285 = vld [vmem:[%s231 + $0x5c] sm:$0xf]
      %v286 = vld [vmem:[%s231 + $0x60] sm:$0xf]
      %v287 = vld [vmem:[%s231 + $0x64] sm:$0xf]
      %v288 = vld [vmem:[%s231 + $0x68] sm:$0xf]
      %v289 = vld [vmem:[%s231 + $0x6c] sm:$0xf]
      %v290 = vld [vmem:[%s231 + $0x70] sm:$0xf]
      %v291 = vld [vmem:[%s231 + $0x74] sm:$0xf]
      %v292 = vld [vmem:[%s231 + $0x78] sm:$0xf]
      %v293 = vld [vmem:[%s231 + $0x7c] sm:$0xf]
      %v294 = vld [vmem:[%s231 + $0x80] sm:$0xf]
      %v295 = vld [vmem:[%s231 + $0x84] sm:$0xf]
      %v296 = vld [vmem:[%s231 + $0x88] sm:$0xf]
      %v297 = vld [vmem:[%s231 + $0x8c] sm:$0xf]
      %v298 = vld [vmem:[%s231 + $0x90] sm:$0xf]
      %v299 = vld [vmem:[%s231 + $0x94] sm:$0xf]
      %v300 = vld [vmem:[%s231 + $0x98] sm:$0xf]
      %v301 = vld [vmem:[%s231 + $0x9c] sm:$0xf]
      %v302 = vld [vmem:[%s231 + $0xa0] sm:$0xf]
      %v303 = vld [vmem:[%s231 + $0xa4] sm:$0xf]
      %v304 = vld [vmem:[%s231 + $0xa8] sm:$0xf]
      %v305 = vld [vmem:[%s231 + $0xac] sm:$0xf]
      %v306 = vld [vmem:[%s231 + $0xb0] sm:$0xf]
      %v307 = vld [vmem:[%s231 + $0xb4] sm:$0xf]
      %v308 = vld [vmem:[%s231 + $0xb8] sm:$0xf]
      %v309 = vld [vmem:[%s231 + $0xbc] sm:$0xf]
      %v310 = vld [vmem:[%s231 + $0xc0] sm:$0xf]
      %v311 = vld [vmem:[%s231 + $0xc4] sm:$0xf]
      %v312 = vld [vmem:[%s231 + $0xc8] sm:$0xf]
      %v313 = vld [vmem:[%s231 + $0xcc] sm:$0xf]
      %v314 = vld [vmem:[%s231 + $0xd0] sm:$0xf]
      %v315 = vld [vmem:[%s231 + $0xd4] sm:$0xf]
      %v316 = vld [vmem:[%s231 + $0xd8] sm:$0xf]
      %v317 = vld [vmem:[%s231 + $0xdc] sm:$0xf]
      %v318 = vld [vmem:[%s231 + $0xe0] sm:$0xf]
      %v319 = vld [vmem:[%s231 + $0xe4] sm:$0xf]
      %v320 = vld [vmem:[%s231 + $0xe8] sm:$0xf]
      %v321 = vld [vmem:[%s231 + $0xec] sm:$0xf]
      %v322 = vld [vmem:[%s231 + $0xf0] sm:$0xf]
      %v323 = vld [vmem:[%s231 + $0xf4] sm:$0xf]
      %v324 = vld [vmem:[%s231 + $0xf8] sm:$0xf]
      %v325 = vld [vmem:[%s231 + $0xfc] sm:$0xf]
      %v326 = vld [vmem:[%s231 + $0x100] sm:$0xf]
      %v327 = vld [vmem:[%s231 + $0x104] sm:$0xf]
      %v328 = vld [vmem:[%s231 + $0x108] sm:$0xf]
      %v329 = vld [vmem:[%s231 + $0x10c] sm:$0xf]
      %v330 = vld [vmem:[%s231 + $0x110] sm:$0xf]
      %v331 = vld [vmem:[%s231 + $0x114] sm:$0xf]
      %v332 = vld [vmem:[%s231 + $0x118] sm:$0xf]
      %v333 = vld [vmem:[%s231 + $0x11c] sm:$0xf]
      %v334 = vld [vmem:[%s231 + $0x120] sm:$0xf]
      %v335 = vld [vmem:[%s231 + $0x124] sm:$0xf]
      %v336 = vld [vmem:[%s231 + $0x128] sm:$0xf]
      %v337 = vld [vmem:[%s231 + $0x12c] sm:$0xf]
      %v338 = vld [vmem:[%s231 + $0x130] sm:$0xf]
      %v339 = vld [vmem:[%s231 + $0x134] sm:$0xf]
      %v340 = vld [vmem:[%s231 + $0x138] sm:$0xf]
      %v341 = vld [vmem:[%s231 + $0x13c] sm:$0xf]
      %v342 = vld [vmem:[%s231 + $0x140] sm:$0xf]
      %v343 = vld [vmem:[%s231 + $0x144] sm:$0xf]
      %v344 = vld [vmem:[%s231 + $0x148] sm:$0xf]
      %v345 = vld [vmem:[%s231 + $0x14c] sm:$0xf]
      %v346 = vld [vmem:[%s231 + $0x150] sm:$0xf]
      %v347 = vld [vmem:[%s231 + $0x154] sm:$0xf]
      %v348 = vld [vmem:[%s231 + $0x158] sm:$0xf]
      %v349 = vld [vmem:[%s231 + $0x15c] sm:$0xf]
      %v350 = vld [vmem:[%s231 + $0x160] sm:$0xf]
      %v351 = vld [vmem:[%s231 + $0x164] sm:$0xf]
      %v352 = vld [vmem:[%s231 + $0x168] sm:$0xf]
      %v353 = vld [vmem:[%s231 + $0x16c] sm:$0xf]
      %v354 = vld [vmem:[%s231 + $0x170] sm:$0xf]
      %v355 = vld [vmem:[%s231 + $0x174] sm:$0xf]
      %v356 = vld [vmem:[%s231 + $0x178] sm:$0xf]
      %v357 = vld [vmem:[%s231 + $0x17c] sm:$0xf]
      %v358 = vld [vmem:[%s231 + $0x180] sm:$0xf]
      %v359 = vld [vmem:[%s231 + $0x184] sm:$0xf]
      %v360 = vld [vmem:[%s231 + $0x188] sm:$0xf]
      %v361 = vld [vmem:[%s231 + $0x18c] sm:$0xf]
      %v362 = vld [vmem:[%s231 + $0x190] sm:$0xf]
      %v363 = vld [vmem:[%s231 + $0x194] sm:$0xf]
      %v364 = vld [vmem:[%s231 + $0x198] sm:$0xf]
      %v365 = vld [vmem:[%s231 + $0x19c] sm:$0xf]
      %v366 = vld [vmem:[%s231 + $0x1a0] sm:$0xf]
      %v367 = vld [vmem:[%s231 + $0x1a4] sm:$0xf]
      %v368 = vld [vmem:[%s231 + $0x1a8] sm:$0xf]
      %v369 = vld [vmem:[%s231 + $0x1ac] sm:$0xf]
      %v370 = vld [vmem:[%s231 + $0x1b0] sm:$0xf]
      %v371 = vld [vmem:[%s231 + $0x1b4] sm:$0xf]
      %v372 = vld [vmem:[%s231 + $0x1b8] sm:$0xf]
      %v373 = vld [vmem:[%s231 + $0x1bc] sm:$0xf]
      %v374 = vld [vmem:[%s231 + $0x1c0] sm:$0xf]
      %v375 = vld [vmem:[%s231 + $0x1c4] sm:$0xf]
      %v376 = vld [vmem:[%s231 + $0x1c8] sm:$0xf]
      %v377 = vld [vmem:[%s231 + $0x1cc] sm:$0xf]
      %v378 = vld [vmem:[%s231 + $0x1d0] sm:$0xf]
      %v379 = vld [vmem:[%s231 + $0x1d4] sm:$0xf]
      %v380 = vld [vmem:[%s231 + $0x1d8] sm:$0xf]
      %v381 = vld [vmem:[%s231 + $0x1dc] sm:$0xf]
      %v382 = vld [vmem:[%s231 + $0x1e0] sm:$0xf]
      %v383 = vld [vmem:[%s231 + $0x1e4] sm:$0xf]
      %v384 = vld [vmem:[%s231 + $0x1e8] sm:$0xf]
      %v385 = vld [vmem:[%s231 + $0x1ec] sm:$0xf]
      %v386 = vld [vmem:[%s231 + $0x1f0] sm:$0xf]
      %v387 = vld [vmem:[%s231 + $0x1f4] sm:$0xf]
      %v388 = vld [vmem:[%s231 + $0x1f8] sm:$0xf]
      %v389 = vld [vmem:[%s231 + $0x1fc] sm:$0xf]
      %v390 = vld [vmem:[%s231 + $0x200] sm:$0xf]
      %v391 = vld [vmem:[%s231 + $0x204] sm:$0xf]
      %v392 = vld [vmem:[%s231 + $0x208] sm:$0xf]
      %v393 = vld [vmem:[%s231 + $0x20c] sm:$0xf]
      %v394 = vld [vmem:[%s231 + $0x210] sm:$0xf]
      %v395 = vld [vmem:[%s231 + $0x214] sm:$0xf]
      %v396 = vld [vmem:[%s231 + $0x218] sm:$0xf]
      %v397 = vld [vmem:[%s231 + $0x21c] sm:$0xf]
      %v398 = vld [vmem:[%s231 + $0x220] sm:$0xf]
      %v399 = vld [vmem:[%s231 + $0x224] sm:$0xf]
      %v400 = vld [vmem:[%s231 + $0x228] sm:$0xf]
      %v401 = vld [vmem:[%s231 + $0x22c] sm:$0xf]
      %v402 = vld [vmem:[%s231 + $0x230] sm:$0xf]
      %v403 = vld [vmem:[%s231 + $0x234] sm:$0xf]
      %v404 = vld [vmem:[%s231 + $0x238] sm:$0xf]
      %v405 = vld [vmem:[%s231 + $0x23c] sm:$0xf]
      %v406 = vld [vmem:[%s231 + $0x240] sm:$0xf]
      %v407 = vld [vmem:[%s231 + $0x244] sm:$0xf]
      %v408 = vld [vmem:[%s231 + $0x248] sm:$0xf]
      %v409 = vld [vmem:[%s231 + $0x24c] sm:$0xf]
      %v410 = vld [vmem:[%s231 + $0x250] sm:$0xf]
      %v411 = vld [vmem:[%s231 + $0x254] sm:$0xf]
      %v412 = vld [vmem:[%s231 + $0x258] sm:$0xf]
      %v413 = vld [vmem:[%s231 + $0x25c] sm:$0xf]
      %v414 = vld [vmem:[%s231 + $0x260] sm:$0xf]
      %v415 = vld [vmem:[%s231 + $0x264] sm:$0xf]
      %v416 = vld [vmem:[%s231 + $0x268] sm:$0xf]
      %v417 = vld [vmem:[%s231 + $0x26c] sm:$0xf]
      %v418 = vld [vmem:[%s231 + $0x270] sm:$0xf]
      %v419 = vld [vmem:[%s231 + $0x274] sm:$0xf]
      %v420 = vld [vmem:[%s231 + $0x278] sm:$0xf]
      %v421 = vld [vmem:[%s231 + $0x27c] sm:$0xf]
      %v422 = vld [vmem:[%s231 + $0x280] sm:$0xf]
      %v423 = vld [vmem:[%s231 + $0x284] sm:$0xf]
      %v424 = vld [vmem:[%s231 + $0x288] sm:$0xf]
      %v425 = vld [vmem:[%s231 + $0x28c] sm:$0xf]
      %v426 = vld [vmem:[%s231 + $0x290] sm:$0xf]
      %v427 = vld [vmem:[%s231 + $0x294] sm:$0xf]
      %v428 = vld [vmem:[%s231 + $0x298] sm:$0xf]
      %v429 = vld [vmem:[%s231 + $0x29c] sm:$0xf]
      %v430 = vld [vmem:[%s231 + $0x2a0] sm:$0xf]
      %v431 = vld [vmem:[%s231 + $0x2a4] sm:$0xf]
      %v432 = vld [vmem:[%s231 + $0x2a8] sm:$0xf]
      %v433 = vld [vmem:[%s231 + $0x2ac] sm:$0xf]
      %v434 = vld [vmem:[%s231 + $0x2b0] sm:$0xf]
      %v435 = vld [vmem:[%s231 + $0x2b4] sm:$0xf]
      %v436 = vld [vmem:[%s231 + $0x2b8] sm:$0xf]
      %v437 = vld [vmem:[%s231 + $0x2bc] sm:$0xf]
      %v438 = vld [vmem:[%s231 + $0x2c0] sm:$0xf]
      %v439 = vld [vmem:[%s231 + $0x2c4] sm:$0xf]
      %v440 = vld [vmem:[%s231 + $0x2c8] sm:$0xf]
      %v441 = vld [vmem:[%s231 + $0x2cc] sm:$0xf]
      %v442 = vld [vmem:[%s231 + $0x2d0] sm:$0xf]
      %v443 = vld [vmem:[%s231 + $0x2d4] sm:$0xf]
      %v444 = vld [vmem:[%s231 + $0x2d8] sm:$0xf]
      %v445 = vld [vmem:[%s231 + $0x2dc] sm:$0xf]
      %v446 = vld [vmem:[%s231 + $0x2e0] sm:$0xf]
      %v447 = vld [vmem:[%s231 + $0x2e4] sm:$0xf]
      %v448 = vld [vmem:[%s231 + $0x2e8] sm:$0xf]
      %v449 = vld [vmem:[%s231 + $0x2ec] sm:$0xf]
      %v450 = vld [vmem:[%s231 + $0x2f0] sm:$0xf]
      %v451 = vld [vmem:[%s231 + $0x2f4] sm:$0xf]
      %v452 = vld [vmem:[%s231 + $0x2f8] sm:$0xf]
      %v453 = vld [vmem:[%s231 + $0x2fc] sm:$0xf]
      %v454 = vld [vmem:[%s231 + $0x300] sm:$0xf]
      %v455 = vld [vmem:[%s231 + $0x304] sm:$0xf]
      %v456 = vld [vmem:[%s231 + $0x308] sm:$0xf]
      %v457 = vld [vmem:[%s231 + $0x30c] sm:$0xf]
      %v458 = vld [vmem:[%s231 + $0x310] sm:$0xf]
      %v459 = vld [vmem:[%s231 + $0x314] sm:$0xf]
      %v460 = vld [vmem:[%s231 + $0x318] sm:$0xf]
      %v461 = vld [vmem:[%s231 + $0x31c] sm:$0xf]
      %v462 = vld [vmem:[%s231 + $0x320] sm:$0xf]
      %v463 = vld [vmem:[%s231 + $0x324] sm:$0xf]
      %v464 = vld [vmem:[%s231 + $0x328] sm:$0xf]
      %v465 = vld [vmem:[%s231 + $0x32c] sm:$0xf]
      %v466 = vld [vmem:[%s231 + $0x330] sm:$0xf]
      %v467 = vld [vmem:[%s231 + $0x334] sm:$0xf]
      %v468 = vld [vmem:[%s231 + $0x338] sm:$0xf]
      %v469 = vld [vmem:[%s231 + $0x33c] sm:$0xf]
      %v484 = vunpack.c.l.b16 %v248
      %v485 = vunpack.c.h.b16 %v248
      %v486 = vunpack.c.l.b16 %v249
      %v487 = vunpack.c.h.b16 %v249
      %v488 = vunpack.c.l.b16 %v250
      %v489 = vunpack.c.h.b16 %v250
      %v490 = vunpack.c.l.b16 %v251
      %v491 = vunpack.c.h.b16 %v251
      %v492 = vunpack.c.l.b16 %v252
      %v493 = vunpack.c.h.b16 %v252
      %v494 = vunpack.c.l.b16 %v253
      %v495 = vunpack.c.h.b16 %v253
      %v496 = vunpack.c.l.b16 %v254
      %v497 = vunpack.c.l.b16 %v255
      %v498 = vunpack.c.h.b16 %v255
      %v499 = vunpack.c.l.b16 %v256
      %v500 = vunpack.c.h.b16 %v256
      %v501 = vunpack.c.l.b16 %v257
      %v502 = vunpack.c.h.b16 %v257
      %v503 = vunpack.c.l.b16 %v258
      %v504 = vunpack.c.h.b16 %v258
      %v505 = vunpack.c.l.b16 %v259
      %v506 = vunpack.c.h.b16 %v259
      %v507 = vunpack.c.l.b16 %v260
      %v508 = vunpack.c.h.b16 %v260
      %v509 = vunpack.c.l.b16 %v261
      %v510 = vpack.c.b16 %v497, %v484
      %v511 = vpack.c.b16 %v498, %v485
      %v512 = vpack.c.b16 %v499, %v486
      %v513 = vpack.c.b16 %v500, %v487
      %v514 = vpack.c.b16 %v501, %v488
      %v515 = vpack.c.b16 %v502, %v489
      %v516 = vpack.c.b16 %v503, %v490
      %v517 = vpack.c.b16 %v504, %v491
      %v518 = vpack.c.b16 %v505, %v492
      %v519 = vpack.c.b16 %v506, %v493
      %v520 = vpack.c.b16 %v507, %v494
      %v521 = vpack.c.b16 %v508, %v495
      %v522 = vpack.c.b16 %v509, %v496
      %v744 = vunpack.c.l.b16 %v262
      %v745 = vunpack.c.l.b16 %v263
      %v746 = vunpack.c.l.b16 %v264
      %v747 = vunpack.c.l.b16 %v265
      %v748 = vunpack.c.l.b16 %v266
      %v749 = vunpack.c.l.b16 %v267
      %v750 = vunpack.c.l.b16 %v268
      %v751 = vunpack.c.l.b16 %v269
      %v752 = vunpack.c.l.b16 %v270
      %v753 = vunpack.c.l.b16 %v271
      %v754 = vunpack.c.l.b16 %v272
      %v755 = vunpack.c.l.b16 %v273
      %v756 = vunpack.c.l.b16 %v274
      %v757 = vunpack.c.l.b16 %v275
      %v758 = vunpack.c.l.b16 %v276
      %v759 = vunpack.c.l.b16 %v277
      %v760 = vunpack.c.l.b16 %v278
      %v761 = vunpack.c.l.b16 %v279
      %v762 = vunpack.c.l.b16 %v280
      %v763 = vunpack.c.l.b16 %v281
      %v764 = vunpack.c.l.b16 %v282
      %v765 = vunpack.c.l.b16 %v283
      %v766 = vunpack.c.l.b16 %v284
      %v767 = vunpack.c.l.b16 %v285
      %v768 = vunpack.c.l.b16 %v286
      %v769 = vunpack.c.l.b16 %v287
      %v770 = vunpack.c.l.b16 %v288
      %v771 = vunpack.c.l.b16 %v289
      %v772 = vunpack.c.l.b16 %v290
      %v773 = vunpack.c.l.b16 %v291
      %v774 = vunpack.c.l.b16 %v292
      %v775 = vunpack.c.l.b16 %v293
      %v776 = vunpack.c.l.b16 %v294
      %v777 = vunpack.c.l.b16 %v295
      %v778 = vunpack.c.l.b16 %v296
      %v779 = vunpack.c.l.b16 %v297
      %v780 = vunpack.c.l.b16 %v298
      %v781 = vunpack.c.l.b16 %v299
      %v782 = vunpack.c.l.b16 %v300
      %v783 = vunpack.c.l.b16 %v301
      %v784 = vunpack.c.l.b16 %v302
      %v785 = vunpack.c.l.b16 %v303
      %v786 = vunpack.c.l.b16 %v304
      %v787 = vunpack.c.l.b16 %v305
      %v788 = vunpack.c.l.b16 %v306
      %v789 = vunpack.c.l.b16 %v307
      %v790 = vunpack.c.l.b16 %v308
      %v791 = vunpack.c.l.b16 %v309
      %v792 = vunpack.c.l.b16 %v310
      %v793 = vunpack.c.l.b16 %v311
      %v794 = vunpack.c.l.b16 %v312
      %v795 = vunpack.c.l.b16 %v313
      %v796 = vunpack.c.l.b16 %v314
      %v797 = vunpack.c.l.b16 %v315
      %v798 = vunpack.c.l.b16 %v316
      %v799 = vunpack.c.l.b16 %v317
      %v800 = vunpack.c.l.b16 %v318
      %v801 = vunpack.c.l.b16 %v319
      %v802 = vunpack.c.l.b16 %v320
      %v803 = vunpack.c.l.b16 %v321
      %v804 = vunpack.c.l.b16 %v322
      %v805 = vunpack.c.l.b16 %v323
      %v806 = vunpack.c.l.b16 %v324
      %v807 = vunpack.c.l.b16 %v325
      %v808 = vunpack.c.l.b16 %v326
      %v809 = vunpack.c.l.b16 %v327
      %v810 = vunpack.c.l.b16 %v328
      %v811 = vunpack.c.l.b16 %v329
      %v812 = vunpack.c.l.b16 %v330
      %v813 = vunpack.c.l.b16 %v331
      %v814 = vunpack.c.l.b16 %v332
      %v815 = vunpack.c.l.b16 %v333
      %v816 = vunpack.c.l.b16 %v334
      %v817 = vunpack.c.l.b16 %v335
      %v818 = vunpack.c.l.b16 %v336
      %v819 = vunpack.c.l.b16 %v337
      %v820 = vunpack.c.l.b16 %v338
      %v821 = vunpack.c.l.b16 %v339
      %v822 = vunpack.c.l.b16 %v340
      %v823 = vunpack.c.l.b16 %v341
      %v824 = vunpack.c.l.b16 %v342
      %v825 = vunpack.c.l.b16 %v343
      %v826 = vunpack.c.l.b16 %v344
      %v827 = vunpack.c.l.b16 %v345
      %v828 = vunpack.c.l.b16 %v346
      %v829 = vunpack.c.l.b16 %v347
      %v830 = vunpack.c.l.b16 %v348
      %v831 = vunpack.c.l.b16 %v349
      %v832 = vunpack.c.l.b16 %v350
      %v833 = vunpack.c.l.b16 %v351
      %v834 = vunpack.c.l.b16 %v352
      %v835 = vunpack.c.l.b16 %v353
      %v836 = vunpack.c.l.b16 %v354
      %v837 = vunpack.c.l.b16 %v355
      %v838 = vunpack.c.l.b16 %v356
      %v839 = vunpack.c.l.b16 %v357
      %v840 = vunpack.c.l.b16 %v358
      %v841 = vunpack.c.l.b16 %v359
      %v842 = vunpack.c.l.b16 %v360
      %v843 = vunpack.c.l.b16 %v361
      %v844 = vunpack.c.l.b16 %v362
      %v845 = vunpack.c.l.b16 %v363
      %v846 = vunpack.c.l.b16 %v364
      %v847 = vunpack.c.l.b16 %v365
      %v848 = vunpack.c.l.b16 %v366
      %v849 = vunpack.c.l.b16 %v367
      %v850 = vunpack.c.l.b16 %v368
      %v851 = vunpack.c.l.b16 %v369
      %v852 = vunpack.c.l.b16 %v370
      %v853 = vunpack.c.l.b16 %v371
      %v854 = vunpack.c.l.b16 %v372
      %v855 = vunpack.c.l.b16 %v373
      %v856 = vunpack.c.l.b16 %v374
      %v857 = vunpack.c.l.b16 %v375
      %v858 = vunpack.c.l.b16 %v376
      %v859 = vunpack.c.l.b16 %v377
      %v860 = vunpack.c.l.b16 %v378
      %v861 = vunpack.c.l.b16 %v379
      %v862 = vunpack.c.l.b16 %v380
      %v863 = vunpack.c.l.b16 %v381
      %v864 = vunpack.c.l.b16 %v382
      %v865 = vunpack.c.l.b16 %v383
      %v866 = vunpack.c.l.b16 %v384
      %v867 = vunpack.c.l.b16 %v385
      %v868 = vunpack.c.l.b16 %v386
      %v869 = vunpack.c.l.b16 %v387
      %v870 = vunpack.c.l.b16 %v388
      %v871 = vunpack.c.l.b16 %v389
      %v872 = vunpack.c.l.b16 %v390
      %v873 = vunpack.c.l.b16 %v391
      %v874 = vunpack.c.l.b16 %v392
      %v875 = vunpack.c.l.b16 %v393
      %v876 = vunpack.c.l.b16 %v394
      %v877 = vunpack.c.l.b16 %v395
      %v878 = vunpack.c.l.b16 %v396
      %v879 = vunpack.c.l.b16 %v397
      %v880 = vunpack.c.l.b16 %v398
      %v881 = vunpack.c.l.b16 %v399
      %v882 = vunpack.c.l.b16 %v400
      %v883 = vunpack.c.l.b16 %v401
      %v884 = vunpack.c.l.b16 %v402
      %v885 = vunpack.c.l.b16 %v403
      %v886 = vunpack.c.l.b16 %v404
      %v887 = vunpack.c.l.b16 %v405
      %v888 = vunpack.c.l.b16 %v406
      %v889 = vunpack.c.l.b16 %v407
      %v890 = vunpack.c.l.b16 %v408
      %v891 = vunpack.c.l.b16 %v409
      %v892 = vunpack.c.l.b16 %v410
      %v893 = vunpack.c.l.b16 %v411
      %v894 = vunpack.c.l.b16 %v412
      %v895 = vunpack.c.l.b16 %v413
      %v896 = vunpack.c.l.b16 %v414
      %v897 = vunpack.c.l.b16 %v415
      %v898 = vunpack.c.l.b16 %v416
      %v899 = vunpack.c.l.b16 %v417
      %v900 = vunpack.c.l.b16 %v418
      %v901 = vunpack.c.l.b16 %v419
      %v902 = vunpack.c.l.b16 %v420
      %v903 = vunpack.c.l.b16 %v421
      %v904 = vunpack.c.l.b16 %v422
      %v905 = vunpack.c.l.b16 %v423
      %v906 = vunpack.c.l.b16 %v424
      %v907 = vunpack.c.l.b16 %v425
      %v908 = vunpack.c.l.b16 %v426
      %v909 = vunpack.c.l.b16 %v427
      %v910 = vunpack.c.l.b16 %v428
      %v911 = vunpack.c.l.b16 %v429
      %v912 = vunpack.c.l.b16 %v430
      %v913 = vunpack.c.l.b16 %v431
      %v914 = vunpack.c.l.b16 %v432
      %v915 = vunpack.c.l.b16 %v433
      %v916 = vunpack.c.l.b16 %v434
      %v917 = vunpack.c.l.b16 %v435
      %v918 = vunpack.c.l.b16 %v436
      %v919 = vunpack.c.l.b16 %v437
      %v920 = vunpack.c.l.b16 %v438
      %v921 = vunpack.c.l.b16 %v439
      %v922 = vunpack.c.l.b16 %v440
      %v923 = vunpack.c.l.b16 %v441
      %v924 = vunpack.c.l.b16 %v442
      %v925 = vunpack.c.l.b16 %v443
      %v926 = vunpack.c.l.b16 %v444
      %v927 = vunpack.c.l.b16 %v445
      %v928 = vunpack.c.l.b16 %v446
      %v929 = vunpack.c.l.b16 %v447
      %v930 = vunpack.c.l.b16 %v448
      %v931 = vunpack.c.l.b16 %v449
      %v932 = vunpack.c.l.b16 %v450
      %v933 = vunpack.c.l.b16 %v451
      %v934 = vunpack.c.l.b16 %v452
      %v935 = vunpack.c.l.b16 %v453
      %v936 = vunpack.c.l.b16 %v454
      %v937 = vunpack.c.l.b16 %v455
      %v938 = vunpack.c.l.b16 %v456
      %v939 = vunpack.c.l.b16 %v457
      %v940 = vunpack.c.l.b16 %v458
      %v941 = vunpack.c.l.b16 %v459
      %v942 = vunpack.c.l.b16 %v460
      %v943 = vunpack.c.l.b16 %v461
      %v944 = vunpack.c.l.b16 %v462
      %v945 = vunpack.c.l.b16 %v463
      %v946 = vunpack.c.l.b16 %v464
      %v947 = vunpack.c.l.b16 %v465
      %v948 = vunpack.c.l.b16 %v466
      %v949 = vunpack.c.l.b16 %v467
      %v950 = vunpack.c.l.b16 %v468
      %v951 = vunpack.c.l.b16 %v469
      %v952 = vpack.c.b16 %v745, %v744
      %v953 = vpack.c.b16 %v747, %v746
      %v954 = vpack.c.b16 %v749, %v748
      %v955 = vpack.c.b16 %v751, %v750
      %v956 = vpack.c.b16 %v753, %v752
      %v957 = vpack.c.b16 %v755, %v754
      %v958 = vpack.c.b16 %v757, %v756
      %v959 = vpack.c.b16 %v759, %v758
      %v960 = vpack.c.b16 %v761, %v760
      %v961 = vpack.c.b16 %v763, %v762
      %v962 = vpack.c.b16 %v765, %v764
      %v963 = vpack.c.b16 %v767, %v766
      %v964 = vpack.c.b16 %v769, %v768
      %v965 = vpack.c.b16 %v771, %v770
      %v966 = vpack.c.b16 %v773, %v772
      %v967 = vpack.c.b16 %v775, %v774
      %v968 = vpack.c.b16 %v777, %v776
      %v969 = vpack.c.b16 %v779, %v778
      %v970 = vpack.c.b16 %v781, %v780
      %v971 = vpack.c.b16 %v783, %v782
      %v972 = vpack.c.b16 %v785, %v784
      %v973 = vpack.c.b16 %v787, %v786
      %v974 = vpack.c.b16 %v789, %v788
      %v975 = vpack.c.b16 %v791, %v790
      %v976 = vpack.c.b16 %v793, %v792
      %v977 = vpack.c.b16 %v795, %v794
      %v978 = vpack.c.b16 %v797, %v796
      %v979 = vpack.c.b16 %v799, %v798
      %v980 = vpack.c.b16 %v801, %v800
      %v981 = vpack.c.b16 %v803, %v802
      %v982 = vpack.c.b16 %v805, %v804
      %v983 = vpack.c.b16 %v807, %v806
      %v984 = vpack.c.b16 %v809, %v808
      %v985 = vpack.c.b16 %v811, %v810
      %v986 = vpack.c.b16 %v813, %v812
      %v987 = vpack.c.b16 %v815, %v814
      %v988 = vpack.c.b16 %v817, %v816
      %v989 = vpack.c.b16 %v819, %v818
      %v990 = vpack.c.b16 %v821, %v820
      %v991 = vpack.c.b16 %v823, %v822
      %v992 = vpack.c.b16 %v825, %v824
      %v993 = vpack.c.b16 %v827, %v826
      %v994 = vpack.c.b16 %v829, %v828
      %v995 = vpack.c.b16 %v831, %v830
      %v996 = vpack.c.b16 %v833, %v832
      %v997 = vpack.c.b16 %v835, %v834
      %v998 = vpack.c.b16 %v837, %v836
      %v999 = vpack.c.b16 %v839, %v838
      %v1000 = vpack.c.b16 %v841, %v840
      %v1001 = vpack.c.b16 %v843, %v842
      %v1002 = vpack.c.b16 %v845, %v844
      %v1003 = vpack.c.b16 %v847, %v846
      %v1004 = vpack.c.b16 %v849, %v848
      %v1005 = vpack.c.b16 %v851, %v850
      %v1006 = vpack.c.b16 %v853, %v852
      %v1007 = vpack.c.b16 %v855, %v854
      %v1008 = vpack.c.b16 %v857, %v856
      %v1009 = vpack.c.b16 %v859, %v858
      %v1010 = vpack.c.b16 %v861, %v860
      %v1011 = vpack.c.b16 %v863, %v862
      %v1012 = vpack.c.b16 %v865, %v864
      %v1013 = vpack.c.b16 %v867, %v866
      %v1014 = vpack.c.b16 %v869, %v868
      %v1015 = vpack.c.b16 %v871, %v870
      %v1016 = vpack.c.b16 %v873, %v872
      %v1017 = vpack.c.b16 %v875, %v874
      %v1018 = vpack.c.b16 %v877, %v876
      %v1019 = vpack.c.b16 %v879, %v878
      %v1020 = vpack.c.b16 %v881, %v880
      %v1021 = vpack.c.b16 %v883, %v882
      %v1022 = vpack.c.b16 %v885, %v884
      %v1023 = vpack.c.b16 %v887, %v886
      %v1024 = vpack.c.b16 %v889, %v888
      %v1025 = vpack.c.b16 %v891, %v890
      %v1026 = vpack.c.b16 %v893, %v892
      %v1027 = vpack.c.b16 %v895, %v894
      %v1028 = vpack.c.b16 %v897, %v896
      %v1029 = vpack.c.b16 %v899, %v898
      %v1030 = vpack.c.b16 %v901, %v900
      %v1031 = vpack.c.b16 %v903, %v902
      %v1032 = vpack.c.b16 %v905, %v904
      %v1033 = vpack.c.b16 %v907, %v906
      %v1034 = vpack.c.b16 %v909, %v908
      %v1035 = vpack.c.b16 %v911, %v910
      %v1036 = vpack.c.b16 %v913, %v912
      %v1037 = vpack.c.b16 %v915, %v914
      %v1038 = vpack.c.b16 %v917, %v916
      %v1039 = vpack.c.b16 %v919, %v918
      %v1040 = vpack.c.b16 %v921, %v920
      %v1041 = vpack.c.b16 %v923, %v922
      %v1042 = vpack.c.b16 %v925, %v924
      %v1043 = vpack.c.b16 %v927, %v926
      %v1044 = vpack.c.b16 %v929, %v928
      %v1045 = vpack.c.b16 %v931, %v930
      %v1046 = vpack.c.b16 %v933, %v932
      %v1047 = vpack.c.b16 %v935, %v934
      %v1048 = vpack.c.b16 %v937, %v936
      %v1049 = vpack.c.b16 %v939, %v938
      %v1050 = vpack.c.b16 %v941, %v940
      %v1051 = vpack.c.b16 %v943, %v942
      %v1052 = vpack.c.b16 %v945, %v944
      %v1053 = vpack.c.b16 %v947, %v946
      %v1054 = vpack.c.b16 %v949, %v948
      %v1055 = vpack.c.b16 %v951, %v950
      %1160 = vmatprep.subr.bf16.mxu0 0
      %1161 = vmatpush1.bf16.msra.mxu0 %v959
      %1162 = vmatprep.subr.bf16.mxu0 0
      %1163 = vmatpush1.bf16.msra.mxu0 %v958
      %1164 = vmatprep.subr.bf16.mxu0 0
      %1165 = vmatpush1.bf16.msra.mxu0 %v957
      %1166 = vmatprep.subr.bf16.mxu0 0
      %1167 = vmatpush1.bf16.msra.mxu0 %v956
      %1168 = vmatprep.subr.bf16.mxu0 0
      %1169 = vmatpush1.bf16.msra.mxu0 %v955
      %1170 = vmatprep.subr.bf16.mxu0 0
      %1171 = vmatpush1.bf16.msra.mxu0 %v954
      %1172 = vmatprep.subr.bf16.mxu0 0
      %1173 = vmatpush1.bf16.msra.mxu0 %v953
      %1174 = vmatprep.subr.bf16.mxu0 0
      %1175 = vmatpush1.bf16.msra.mxu0 %v952
      %1176 = vmatprep.subr.bf16.mxu0 0
      %1177 = vmatpush2.bf16.msra.mxu0 %v967
      %1178 = vmatprep.subr.bf16.mxu0 0
      %1179 = vmatpush2.bf16.msra.mxu0 %v966
      %1180 = vmatprep.subr.bf16.mxu0 0
      %1181 = vmatpush2.bf16.msra.mxu0 %v965
      %1182 = vmatprep.subr.bf16.mxu0 0
      %1183 = vmatpush2.bf16.msra.mxu0 %v964
      %1184 = vmatprep.subr.bf16.mxu0 0
      %1185 = vmatpush2.bf16.msra.mxu0 %v963
      %1186 = vmatprep.subr.bf16.mxu0 0
      %1187 = vmatpush2.bf16.msra.mxu0 %v962
      %1188 = vmatprep.subr.bf16.mxu0 0
      %1189 = vmatpush2.bf16.msra.mxu0 %v961
      %1190 = vmatprep.subr.bf16.mxu0 0
      %1191 = vmatpush2.bf16.msra.mxu0 %v960
      %1192 = vmatprep.mubr.bf16.mxu0 %v511
      %1193 = vmatmul.mubr.bf16.gmra.mxu0 %v510
      %v1194 = vpop.f32.mrf.mxu0
      %v1195 = vadd.f32 0.0, %v1194
      %v1196 = vpop.f32.mrf.mxu0
      %v1197 = vpop.f32.mrf.mxu0
      %v1198 = vadd.f32 0.0, %v1197
      %v1199 = vpop.f32.mrf.mxu0
      %1200 = vdwg.mxu0
      %1201 = vmatprep.subr.bf16.mxu0 0
      %1202 = vmatpush1.bf16.msra.mxu0 %v975
      %1203 = vmatprep.subr.bf16.mxu0 0
      %1204 = vmatpush1.bf16.msra.mxu0 %v974
      %1205 = vmatprep.subr.bf16.mxu0 0
      %1206 = vmatpush1.bf16.msra.mxu0 %v973
      %1207 = vmatprep.subr.bf16.mxu0 0
      %1208 = vmatpush1.bf16.msra.mxu0 %v972
      %1209 = vmatprep.subr.bf16.mxu0 0
      %1210 = vmatpush1.bf16.msra.mxu0 %v971
      %1211 = vmatprep.subr.bf16.mxu0 0
      %1212 = vmatpush1.bf16.msra.mxu0 %v970
      %1213 = vmatprep.subr.bf16.mxu0 0
      %1214 = vmatpush1.bf16.msra.mxu0 %v969
      %1215 = vmatprep.subr.bf16.mxu0 0
      %1216 = vmatpush1.bf16.msra.mxu0 %v968
      %1217 = vmatprep.subr.bf16.mxu0 0
      %1218 = vmatpush2.bf16.msra.mxu0 %v983
      %1219 = vmatprep.subr.bf16.mxu0 0
      %1220 = vmatpush2.bf16.msra.mxu0 %v982
      %1221 = vmatprep.subr.bf16.mxu0 0
      %1222 = vmatpush2.bf16.msra.mxu0 %v981
      %1223 = vmatprep.subr.bf16.mxu0 0
      %1224 = vmatpush2.bf16.msra.mxu0 %v980
      %1225 = vmatprep.subr.bf16.mxu0 0
      %1226 = vmatpush2.bf16.msra.mxu0 %v979
      %1227 = vmatprep.subr.bf16.mxu0 0
      %1228 = vmatpush2.bf16.msra.mxu0 %v978
      %1229 = vmatprep.subr.bf16.mxu0 0
      %1230 = vmatpush2.bf16.msra.mxu0 %v977
      %1231 = vmatprep.subr.bf16.mxu0 0
      %1232 = vmatpush2.bf16.msra.mxu0 %v976
      %1233 = vmatprep.mubr.bf16.mxu0 %v513
      %1234 = vmatmul.mubr.bf16.gmra.mxu0 %v512
      %v1235 = vpop.f32.mrf.mxu0
      %v1236 = vadd.f32 %v1195, %v1235
      %v1237 = vpop.f32.mrf.mxu0
      %v1238 = vpop.f32.mrf.mxu0
      %v1239 = vadd.f32 %v1198, %v1238
      %v1240 = vpop.f32.mrf.mxu0
      %1241 = vdwg.mxu0
      %1242 = vmatprep.subr.bf16.mxu0 0
      %1243 = vmatpush1.bf16.msra.mxu0 %v991
      %1244 = vmatprep.subr.bf16.mxu0 0
      %1245 = vmatpush1.bf16.msra.mxu0 %v990
      %1246 = vmatprep.subr.bf16.mxu0 0
      %1247 = vmatpush1.bf16.msra.mxu0 %v989
      %1248 = vmatprep.subr.bf16.mxu0 0
      %1249 = vmatpush1.bf16.msra.mxu0 %v988
      %1250 = vmatprep.subr.bf16.mxu0 0
      %1251 = vmatpush1.bf16.msra.mxu0 %v987
      %1252 = vmatprep.subr.bf16.mxu0 0
      %1253 = vmatpush1.bf16.msra.mxu0 %v986
      %1254 = vmatprep.subr.bf16.mxu0 0
      %1255 = vmatpush1.bf16.msra.mxu0 %v985
      %1256 = vmatprep.subr.bf16.mxu0 0
      %1257 = vmatpush1.bf16.msra.mxu0 %v984
      %1258 = vmatprep.subr.bf16.mxu0 0
      %1259 = vmatpush2.bf16.msra.mxu0 %v999
      %1260 = vmatprep.subr.bf16.mxu0 0
      %1261 = vmatpush2.bf16.msra.mxu0 %v998
      %1262 = vmatprep.subr.bf16.mxu0 0
      %1263 = vmatpush2.bf16.msra.mxu0 %v997
      %1264 = vmatprep.subr.bf16.mxu0 0
      %1265 = vmatpush2.bf16.msra.mxu0 %v996
      %1266 = vmatprep.subr.bf16.mxu0 0
      %1267 = vmatpush2.bf16.msra.mxu0 %v995
      %1268 = vmatprep.subr.bf16.mxu0 0
      %1269 = vmatpush2.bf16.msra.mxu0 %v994
      %1270 = vmatprep.subr.bf16.mxu0 0
      %1271 = vmatpush2.bf16.msra.mxu0 %v993
      %1272 = vmatprep.subr.bf16.mxu0 0
      %1273 = vmatpush2.bf16.msra.mxu0 %v992
      %1274 = vmatprep.mubr.bf16.mxu0 %v515
      %1275 = vmatmul.mubr.bf16.gmra.mxu0 %v514
      %v1276 = vpop.f32.mrf.mxu0
      %v1277 = vadd.f32 %v1236, %v1276
      %v1278 = vpop.f32.mrf.mxu0
      %v1279 = vpop.f32.mrf.mxu0
      %v1280 = vadd.f32 %v1239, %v1279
      %v1281 = vpop.f32.mrf.mxu0
      %1282 = vdwg.mxu0
      %1283 = vmatprep.subr.bf16.mxu0 0
      %1284 = vmatpush1.bf16.msra.mxu0 %v1007
      %1285 = vmatprep.subr.bf16.mxu0 0
      %1286 = vmatpush1.bf16.msra.mxu0 %v1006
      %1287 = vmatprep.subr.bf16.mxu0 0
      %1288 = vmatpush1.bf16.msra.mxu0 %v1005
      %1289 = vmatprep.subr.bf16.mxu0 0
      %1290 = vmatpush1.bf16.msra.mxu0 %v1004
      %1291 = vmatprep.subr.bf16.mxu0 0
      %1292 = vmatpush1.bf16.msra.mxu0 %v1003
      %1293 = vmatprep.subr.bf16.mxu0 0
      %1294 = vmatpush1.bf16.msra.mxu0 %v1002
      %1295 = vmatprep.subr.bf16.mxu0 0
      %1296 = vmatpush1.bf16.msra.mxu0 %v1001
      %1297 = vmatprep.subr.bf16.mxu0 0
      %1298 = vmatpush1.bf16.msra.mxu0 %v1000
      %1299 = vmatprep.subr.bf16.mxu0 0
      %1300 = vmatpush2.bf16.msra.mxu0 %v1015
      %1301 = vmatprep.subr.bf16.mxu0 0
      %1302 = vmatpush2.bf16.msra.mxu0 %v1014
      %1303 = vmatprep.subr.bf16.mxu0 0
      %1304 = vmatpush2.bf16.msra.mxu0 %v1013
      %1305 = vmatprep.subr.bf16.mxu0 0
      %1306 = vmatpush2.bf16.msra.mxu0 %v1012
      %1307 = vmatprep.subr.bf16.mxu0 0
      %1308 = vmatpush2.bf16.msra.mxu0 %v1011
      %1309 = vmatprep.subr.bf16.mxu0 0
      %1310 = vmatpush2.bf16.msra.mxu0 %v1010
      %1311 = vmatprep.subr.bf16.mxu0 0
      %1312 = vmatpush2.bf16.msra.mxu0 %v1009
      %1313 = vmatprep.subr.bf16.mxu0 0
      %1314 = vmatpush2.bf16.msra.mxu0 %v1008
      %1315 = vmatprep.mubr.bf16.mxu0 %v517
      %1316 = vmatmul.mubr.bf16.gmra.mxu0 %v516
      %v1317 = vpop.f32.mrf.mxu0
      %v1318 = vadd.f32 %v1277, %v1317
      %v1319 = vpop.f32.mrf.mxu0
      %v1320 = vpop.f32.mrf.mxu0
      %v1321 = vadd.f32 %v1280, %v1320
      %v1322 = vpop.f32.mrf.mxu0
      %1323 = vdwg.mxu0
      %1324 = vmatprep.subr.bf16.mxu0 0
      %1325 = vmatpush1.bf16.msra.mxu0 %v1023
      %1326 = vmatprep.subr.bf16.mxu0 0
      %1327 = vmatpush1.bf16.msra.mxu0 %v1022
      %1328 = vmatprep.subr.bf16.mxu0 0
      %1329 = vmatpush1.bf16.msra.mxu0 %v1021
      %1330 = vmatprep.subr.bf16.mxu0 0
      %1331 = vmatpush1.bf16.msra.mxu0 %v1020
      %1332 = vmatprep.subr.bf16.mxu0 0
      %1333 = vmatpush1.bf16.msra.mxu0 %v1019
      %1334 = vmatprep.subr.bf16.mxu0 0
      %1335 = vmatpush1.bf16.msra.mxu0 %v1018
      %1336 = vmatprep.subr.bf16.mxu0 0
      %1337 = vmatpush1.bf16.msra.mxu0 %v1017
      %1338 = vmatprep.subr.bf16.mxu0 0
      %1339 = vmatpush1.bf16.msra.mxu0 %v1016
      %1340 = vmatprep.subr.bf16.mxu0 0
      %1341 = vmatpush2.bf16.msra.mxu0 %v1031
      %1342 = vmatprep.subr.bf16.mxu0 0
      %1343 = vmatpush2.bf16.msra.mxu0 %v1030
      %1344 = vmatprep.subr.bf16.mxu0 0
      %1345 = vmatpush2.bf16.msra.mxu0 %v1029
      %1346 = vmatprep.subr.bf16.mxu0 0
      %1347 = vmatpush2.bf16.msra.mxu0 %v1028
      %1348 = vmatprep.subr.bf16.mxu0 0
      %1349 = vmatpush2.bf16.msra.mxu0 %v1027
      %1350 = vmatprep.subr.bf16.mxu0 0
      %1351 = vmatpush2.bf16.msra.mxu0 %v1026
      %1352 = vmatprep.subr.bf16.mxu0 0
      %1353 = vmatpush2.bf16.msra.mxu0 %v1025
      %1354 = vmatprep.subr.bf16.mxu0 0
      %1355 = vmatpush2.bf16.msra.mxu0 %v1024
      %1356 = vmatprep.mubr.bf16.mxu0 %v519
      %1357 = vmatmul.mubr.bf16.gmra.mxu0 %v518
      %v1358 = vpop.f32.mrf.mxu0
      %v1359 = vadd.f32 %v1318, %v1358
      %v1360 = vpop.f32.mrf.mxu0
      %v1361 = vpop.f32.mrf.mxu0
      %v1362 = vadd.f32 %v1321, %v1361
      %v1363 = vpop.f32.mrf.mxu0
      %1364 = vdwg.mxu0
      %1365 = vmatprep.subr.bf16.mxu0 0
      %1366 = vmatpush1.bf16.msra.mxu0 %v1039
      %1367 = vmatprep.subr.bf16.mxu0 0
      %1368 = vmatpush1.bf16.msra.mxu0 %v1038
      %1369 = vmatprep.subr.bf16.mxu0 0
      %1370 = vmatpush1.bf16.msra.mxu0 %v1037
      %1371 = vmatprep.subr.bf16.mxu0 0
      %1372 = vmatpush1.bf16.msra.mxu0 %v1036
      %1373 = vmatprep.subr.bf16.mxu0 0
      %1374 = vmatpush1.bf16.msra.mxu0 %v1035
      %1375 = vmatprep.subr.bf16.mxu0 0
      %1376 = vmatpush1.bf16.msra.mxu0 %v1034
      %1377 = vmatprep.subr.bf16.mxu0 0
      %1378 = vmatpush1.bf16.msra.mxu0 %v1033
      %1379 = vmatprep.subr.bf16.mxu0 0
      %1380 = vmatpush1.bf16.msra.mxu0 %v1032
      %1381 = vmatprep.subr.bf16.mxu0 0
      %1382 = vmatpush2.bf16.msra.mxu0 %v1047
      %1383 = vmatprep.subr.bf16.mxu0 0
      %1384 = vmatpush2.bf16.msra.mxu0 %v1046
      %1385 = vmatprep.subr.bf16.mxu0 0
      %1386 = vmatpush2.bf16.msra.mxu0 %v1045
      %1387 = vmatprep.subr.bf16.mxu0 0
      %1388 = vmatpush2.bf16.msra.mxu0 %v1044
      %1389 = vmatprep.subr.bf16.mxu0 0
      %1390 = vmatpush2.bf16.msra.mxu0 %v1043
      %1391 = vmatprep.subr.bf16.mxu0 0
      %1392 = vmatpush2.bf16.msra.mxu0 %v1042
      %1393 = vmatprep.subr.bf16.mxu0 0
      %1394 = vmatpush2.bf16.msra.mxu0 %v1041
      %1395 = vmatprep.subr.bf16.mxu0 0
      %1396 = vmatpush2.bf16.msra.mxu0 %v1040
      %1397 = vmatprep.mubr.bf16.mxu0 %v521
      %1398 = vmatmul.mubr.bf16.gmra.mxu0 %v520
      %v1399 = vpop.f32.mrf.mxu0
      %v1400 = vadd.f32 %v1359, %v1399
      %v1401 = vpop.f32.mrf.mxu0
      %v1402 = vpop.f32.mrf.mxu0
      %v1403 = vadd.f32 %v1362, %v1402
      %v1404 = vpop.f32.mrf.mxu0
      %1405 = vdwg.mxu0
      %1406 = vmatprep.subr.bf16.mxu0 0
      %1407 = vmatpush1.bf16.msra.mxu0 %v1055
      %1408 = vmatprep.subr.bf16.mxu0 0
      %1409 = vmatpush1.bf16.msra.mxu0 %v1054
      %1410 = vmatprep.subr.bf16.mxu0 0
      %1411 = vmatpush1.bf16.msra.mxu0 %v1053
      %1412 = vmatprep.subr.bf16.mxu0 0
      %1413 = vmatpush1.bf16.msra.mxu0 %v1052
      %1414 = vmatprep.subr.bf16.mxu0 0
      %1415 = vmatpush1.bf16.msra.mxu0 %v1051
      %1416 = vmatprep.subr.bf16.mxu0 0
      %1417 = vmatpush1.bf16.msra.mxu0 %v1050
      %1418 = vmatprep.subr.bf16.mxu0 0
      %1419 = vmatpush1.bf16.msra.mxu0 %v1049
      %1420 = vmatprep.subr.bf16.mxu0 0
      %1421 = vmatpush1.bf16.msra.mxu0 %v1048
      %1422 = vmatprep.subr.bf16.mxu0 0
      %1423 = vmatpush2.bf16.msra.mxu0 0
      %1424 = vmatprep.subr.bf16.mxu0 0
      %1425 = vmatpush2.bf16.msra.mxu0 0
      %1426 = vmatprep.subr.bf16.mxu0 0
      %1427 = vmatpush2.bf16.msra.mxu0 0
      %1428 = vmatprep.subr.bf16.mxu0 0
      %1429 = vmatpush2.bf16.msra.mxu0 0
      %1430 = vmatprep.subr.bf16.mxu0 0
      %1431 = vmatpush2.bf16.msra.mxu0 0
      %1432 = vmatprep.subr.bf16.mxu0 0
      %1433 = vmatpush2.bf16.msra.mxu0 0
      %1434 = vmatprep.subr.bf16.mxu0 0
      %1435 = vmatpush2.bf16.msra.mxu0 0
      %1436 = vmatprep.subr.bf16.mxu0 0
      %1437 = vmatpush2.bf16.msra.mxu0 0
      %1438 = vmatprep.mubr.bf16.mxu0 0
      %1439 = vmatmul.mubr.bf16.gmra.mxu0 %v522
      %v1440 = vpop.f32.mrf.mxu0
      %v1441 = vadd.f32 %v1400, %v1440
      %v1442 = vpop.f32.mrf.mxu0
      %v1443 = vpop.f32.mrf.mxu0
      %v1444 = vadd.f32 %v1403, %v1443
      %v1445 = vpop.f32.mrf.mxu0
      %1446 = vdwg.mxu0
      %p1447 = scmp.eq.s32.totalorder %s21, 0
      // Predicated region
      $region33: #{fpa_v2_forward.10} parent=31 // pred_check
        %p1448 = pneg %p1447
      $region34: #{fpa_v2_forward.10} parent=31 // pred_check_branch
        %1450 = sbr.rel (%p1448) target = $region36
      $region35: #{fpa_v2_forward.10} parent=31 // pred_region
        %1451 = vst [vmem:[#allocation2] sm:$0xff] %v1441
        %1452 = vst [vmem:[#allocation2 + $0x8] sm:$0xff] %v1444
      $region36: #{fpa_v2_forward.10} parent=31 // pred_fallthru
        _
      %p1453 = scmp.gt.s32.totalorder %s21, 0
      // Predicated region
      $region37: #{fpa_v2_forward.10} parent=31 // pred_check
        %p1454 = pneg %p1453
      $region38: #{fpa_v2_forward.10} parent=31 // pred_check_branch
        %1456 = sbr.rel (%p1454) target = $region40
      $region39: #{fpa_v2_forward.10} parent=31 // pred_region
        %v1457 = vld [vmem:[#allocation2] sm:$0xff]
        %v1458 = vld [vmem:[#allocation2 + $0x8] sm:$0xff]
        %v1459 = vadd.f32 %v1457, %v1441
        %v1460 = vadd.f32 %v1458, %v1444
        %1461 = vst [vmem:[#allocation2] sm:$0xff] %v1459
        %1462 = vst [vmem:[#allocation2 + $0x8] sm:$0xff] %v1460
      $region40: #{fpa_v2_forward.10} parent=31 // pred_fallthru
        _
      // Predicated region
      $region41: #{fpa_v2_forward.10} parent=31 // pred_check
        %p1463 = pneg %p1447
      $region42: #{fpa_v2_forward.10} parent=31 // pred_check_branch
        %1465 = sbr.rel (%p1463) target = $region44
      $region43: #{fpa_v2_forward.10} parent=31 // pred_region
        %v1466 = vld [vmem:[#allocation2] sm:$0xff]
        %v1467 = vld [vmem:[#allocation2 + $0x8] sm:$0xff]
        %v1468 = vld [vmem:[%s2] sm:$0xff]
        %v1469 = vld [vmem:[%s2 + $0x8] sm:$0xff]
        %1471 = vset.pattern.permute.xlu0 0
        %1472 = vperm.xlu0 %1471, %v1468
        %v1473 = vpop.permute.xlu0 %1472
        %1476 = vset.pattern.permute.xlu0 0
        %1477 = vperm.xlu0 %1476, %v1469
        %v1478 = vpop.permute.xlu0 %1477
        %v1480 = vadd.f32 %v1466, %v1473
        %v1481 = vadd.f32 %v1467, %v1478
        %v1482 = vmax.f32 %v1480, 0.0
        %v1483 = vmax.f32 %v1481, 0.0
        %v1484 = vpack.c.bf16 %v1483, %v1482
        %v1486 = vunpack.c.l.b16 %v1484
        %v1487 = vunpack.c.h.b16 %v1484
        %v1488 = vpack.c.b16 %v1486, %v1486
        %v1489 = vpack.c.b16 %v1487, %v1487
        %1492 = vst [vmem:[%s246] sm:$0xf] %v1488
        %1493 = vst [vmem:[%s246 + $0x4] sm:$0xf] %v1489
      $region44: #{fpa_v2_forward.10} parent=31 // pred_fallthru
        _
      %p1494 = scmp.lt.s32.totalorder %s19, 1
      %s1495 = scalar_select %p1494, %s19, 1
      %p1496 = scmp.lt.s32.totalorder %s20, 0
      %s1497 = scalar_select %p1496, %s20, 0
      %s1498 = smul.addr %s1495, 2
      %s1499 = sadd.s32 %s1497, %s1498
      %s1500 = smul.addr %s1499, 4
      %s1501 = scalar_lea.vmem %s3, %s1500
      // Predicated region
      $region45: #{fpa_v2_forward.10} parent=31 // pred_check
        %p1502 = pneg %p130
      $region46: #{fpa_v2_forward.10} parent=31 // pred_check_branch
        %1504 = sbr.rel (%p1502) target = $region48
      $region47: #{fpa_v2_forward.10} parent=31 // pred_region
        _
      $region48: #{fpa_v2_forward.10} parent=31 // pred_fallthru
        _
    $region32: #{fpa_v2_forward.10} parent=5 // pred_fallthru
      _
    %p1505 = scmp.le.s32.totalorder 2, %s9
    // Predicated region
    $region49: #{fpa_v2_forward.10} parent=5 // pred_check
      %p1506 = pneg %p1505
    $region50: #{fpa_v2_forward.10} parent=5 // pred_check_branch
      %1508 = sbr.rel (%p1506) target = $region52
    $region51: #{fpa_v2_forward.10} parent=5 // pred_region
      %s1509 = ssub.s32 %s9, 2
      // Predicated region
      $region53: #{fpa_v2_forward.10} parent=51 // pred_check
        %p1510 = pneg %p136
      $region54: #{fpa_v2_forward.10} parent=51 // pred_check_branch
        %1512 = sbr.rel (%p1510) target = $region56
      $region55: #{fpa_v2_forward.10} parent=51 // pred_region
        %p1513 = scmp.lt.s32.totalorder %s22, 1
        %s1514 = scalar_select %p1513, %s22, 1
        %p1515 = scmp.lt.s32.totalorder %s23, 0
        %s1516 = scalar_select %p1515, %s23, 0
        %s1517 = smul.addr %s1514, 2
        %s1518 = sadd.s32 %s1516, %s1517
        %s1519 = smul.addr %s1518, 4
        %s1520 = scalar_lea.vmem %s3, %s1519
      $region56: #{fpa_v2_forward.10} parent=51 // pred_fallthru
        _
    $region52: #{fpa_v2_forward.10} parent=5 // pred_fallthru
      _
  $region6: #{fpa_v2_forward.10} parent=0 // loop_footer
    %s13 = sadd.s32 1, %s9
  $region7: #{fpa_v2_forward.10} parent=0 // loop_footer_branch
    %8 = sbr.rel target = $region3
  $region8: #{fpa_v2_forward.10} parent=0 // loop_exit
    _

// kernel: fpa_v2_forward.17
$region0: #{fpa_v2_forward.17}
  #allocation0 [shape = 'u32[]', space=smem, size = 0x4, offset = 0x4, fixed_abs, tag = 'smem constant byte address 0x4 - core index']
  #allocation1 [shape = 'u32[144,128]{1,0:T(1,128)}', space=vmem, size = 0x12000, scoped, tag = 'internal scratch']
  %s0 = inlined_call_operand.vmem [shape: bf16[2,32,256], index: 0, kind: input, shape index: {}]
  %s1 = inlined_call_operand.vmem [shape: bf16[2,16,128], index: 1, kind: input, shape index: {}]
  %s2 = inlined_call_operand.vmem [shape: f32[2,16,1], index: 2, kind: input, shape index: {}]
  %s3 = inlined_call_operand.vmem [shape: bf16[16,32], index: 3, kind: input, shape index: {}]
  %s4 = inlined_call_operand.vmem [shape: f32[16,1], index: 4, kind: input, shape index: {}]
  %s5 = inlined_call_operand.vmem [shape: bf16[128,256], index: 5, kind: input, shape index: {}]
  %s6 = inlined_call_operand.vmem [shape: f32[2,16,256], index: 6, kind: output, shape index: {}]
  %s7 = sld [smem:[#allocation0]]
  $region57: #{fpa_v2_forward.17} parent=0
    _
  %s9 = ssub.s32 1, %s7
  %s10 = scalar_select 0, %s9, %s7
  loop: start=0, step=1, limit=4
  $region2: #{fpa_v2_forward.17} parent=0 // loop_pre_header
    _
  $region3: #{fpa_v2_forward.17} parent=0 // loop_header
    %s12 = sphi 0, %s16
    %p13 = scmp.ge.s32.totalorder %s12, 4
    %s19 = sphi 0, %s31
    %s20 = sphi 0, %s27
    %s21 = sphi 0, %s19
    %s22 = sphi 0, %s20
    %s23 = sphi 0, %s21
    %s24 = sphi 0, %s22
    %s36 = sphi 0, %s38
    %s39 = sphi 0, %s36
    %s40 = sphi 0, %s39
    %s56 = sphi 0, %s40
    %s62 = sphi 0, %s64
    %s65 = sphi 0, %s62
    %s66 = sphi 0, %s65
    %s82 = sphi 0, %s66
    %s88 = sphi 0, %s90
    %s91 = sphi 0, %s88
    %s92 = sphi 0, %s91
    %s108 = sphi 0, %s92
    %s112 = sphi 0, %s112
    %s114 = sphi 0, %s112
    %s115 = sphi 0, %s114
    %s129 = sphi 0, %s115
    %s133 = sphi 0, %s133
    %s135 = sphi 0, %s133
    %s136 = sphi 0, %s135
    %s150 = sphi 0, %s136
    %s156 = sphi 0, %s158
    %s159 = sphi 0, %s156
    %s160 = sphi 0, %s159
    %s176 = sphi 0, %s160
    %s184 = sphi 0, %s186
    %s187 = sphi 0, %s184
    %s188 = sphi 0, %s187
    %s204 = sphi 0, %s188
  $region4: #{fpa_v2_forward.17} parent=0 // loop_header_branch
    %15 = sbr.rel (%p13) target = $region8
  $region5: #{fpa_v2_forward.17} parent=0 // loop_body
    %s17 = ssub.s32 %s12, 1
    %s18 = ssub.s32 %s12, 2
    %s25 = sadd.s32 1, %s20
    %p26 = scmp.ge.s32.totalorder %s25, 1
    %s27 = scalar_select %p26, 0, %s25
    %s28 = sadd.s32 1, %s19
    %s29 = scalar_select %p26, %s28, %s19
    %p30 = scmp.ge.s32.totalorder %s29, 2
    %s31 = scalar_select %p30, 0, %s29
    %s32 = ssub.s32 %s19, %s31
    %s33 = ssub.s32 %s20, %s27
    %s34 = sor.u32 %s32, %s33
    %p35 = scmp.eq.s32.totalorder %s34, 0
    %s37 = sadd.s32 %s36, 1
    %s38 = scalar_select %p35, %s36, %s37
    %p41 = pneg %p35
    %p42 = scmp.eq.s32.totalorder %s12, 1
    %p43 = por %p41, %p42
    %p44 = scmp.ne.s32.totalorder %s36, %s39
    %p45 = scmp.eq.s32.totalorder %s12, 0
    %p46 = por %p44, %p45
    %p47 = scmp.ne.s32.totalorder %s36, %s39
    %p48 = scmp.eq.s32.totalorder %s17, 1
    %p49 = por %p47, %p48
    %p50 = scmp.ne.s32.totalorder %s39, %s40
    %p51 = scmp.eq.s32.totalorder %s17, 0
    %p52 = por %p50, %p51
    %p53 = scmp.ne.s32.totalorder %s39, %s40
    %p54 = scmp.eq.s32.totalorder %s18, 1
    %p55 = por %p53, %p54
    %p57 = scmp.ne.s32.totalorder %s40, %s56
    %p58 = scmp.eq.s32.totalorder %s18, 0
    %p59 = por %p57, %p58
    %s60 = ssub.s32 %s19, %s31
    %p61 = scmp.eq.s32.totalorder %s60, 0
    %s63 = sadd.s32 %s62, 1
    %s64 = scalar_select %p61, %s62, %s63
    %p67 = pneg %p61
    %p68 = scmp.eq.s32.totalorder %s12, 1
    %p69 = por %p67, %p68
    %p70 = scmp.ne.s32.totalorder %s62, %s65
    %p71 = scmp.eq.s32.totalorder %s12, 0
    %p72 = por %p70, %p71
    %p73 = scmp.ne.s32.totalorder %s62, %s65
    %p74 = scmp.eq.s32.totalorder %s17, 1
    %p75 = por %p73, %p74
    %p76 = scmp.ne.s32.totalorder %s65, %s66
    %p77 = scmp.eq.s32.totalorder %s17, 0
    %p78 = por %p76, %p77
    %p79 = scmp.ne.s32.totalorder %s65, %s66
    %p80 = scmp.eq.s32.totalorder %s18, 1
    %p81 = por %p79, %p80
    %p83 = scmp.ne.s32.totalorder %s66, %s82
    %p84 = scmp.eq.s32.totalorder %s18, 0
    %p85 = por %p83, %p84
    %s86 = ssub.s32 %s19, %s31
    %p87 = scmp.eq.s32.totalorder %s86, 0
    %s89 = sadd.s32 %s88, 1
    %s90 = scalar_select %p87, %s88, %s89
    %p93 = pneg %p87
    %p94 = scmp.eq.s32.totalorder %s12, 1
    %p95 = por %p93, %p94
    %p96 = scmp.ne.s32.totalorder %s88, %s91
    %p97 = scmp.eq.s32.totalorder %s12, 0
    %p98 = por %p96, %p97
    %p99 = scmp.ne.s32.totalorder %s88, %s91
    %p100 = scmp.eq.s32.totalorder %s17, 1
    %p101 = por %p99, %p100
    %p102 = scmp.ne.s32.totalorder %s91, %s92
    %p103 = scmp.eq.s32.totalorder %s17, 0
    %p104 = por %p102, %p103
    %p105 = scmp.ne.s32.totalorder %s91, %s92
    %p106 = scmp.eq.s32.totalorder %s18, 1
    %p107 = por %p105, %p106
    %p109 = scmp.ne.s32.totalorder %s92, %s108
    %p110 = scmp.eq.s32.totalorder %s18, 0
    %p111 = por %p109, %p110
    %s113 = sadd.s32 %s112, 1
    %p116 = scmp.eq.s32.totalorder %s12, 1
    %p117 = scmp.ne.s32.totalorder %s112, %s114
    %p118 = scmp.eq.s32.totalorder %s12, 0
    %p119 = por %p117, %p118
    %p120 = scmp.ne.s32.totalorder %s112, %s114
    %p121 = scmp.eq.s32.totalorder %s17, 1
    %p122 = por %p120, %p121
    %p123 = scmp.ne.s32.totalorder %s114, %s115
    %p124 = scmp.eq.s32.totalorder %s17, 0
    %p125 = por %p123, %p124
    %p126 = scmp.ne.s32.totalorder %s114, %s115
    %p127 = scmp.eq.s32.totalorder %s18, 1
    %p128 = por %p126, %p127
    %p130 = scmp.ne.s32.totalorder %s115, %s129
    %p131 = scmp.eq.s32.totalorder %s18, 0
    %p132 = por %p130, %p131
    %s134 = sadd.s32 %s133, 1
    %p137 = scmp.eq.s32.totalorder %s12, 1
    %p138 = scmp.ne.s32.totalorder %s133, %s135
    %p139 = scmp.eq.s32.totalorder %s12, 0
    %p140 = por %p138, %p139
    %p141 = scmp.ne.s32.totalorder %s133, %s135
    %p142 = scmp.eq.s32.totalorder %s17, 1
    %p143 = por %p141, %p142
    %p144 = scmp.ne.s32.totalorder %s135, %s136
    %p145 = scmp.eq.s32.totalorder %s17, 0
    %p146 = por %p144, %p145
    %p147 = scmp.ne.s32.totalorder %s135, %s136
    %p148 = scmp.eq.s32.totalorder %s18, 1
    %p149 = por %p147, %p148
    %p151 = scmp.ne.s32.totalorder %s136, %s150
    %p152 = scmp.eq.s32.totalorder %s18, 0
    %p153 = por %p151, %p152
    %s154 = ssub.s32 %s20, %s27
    %p155 = scmp.eq.s32.totalorder %s154, 0
    %s157 = sadd.s32 %s156, 1
    %s158 = scalar_select %p155, %s156, %s157
    %p161 = pneg %p155
    %p162 = scmp.eq.s32.totalorder %s12, 1
    %p163 = por %p161, %p162
    %p164 = scmp.ne.s32.totalorder %s156, %s159
    %p165 = scmp.eq.s32.totalorder %s12, 0
    %p166 = por %p164, %p165
    %p167 = scmp.ne.s32.totalorder %s156, %s159
    %p168 = scmp.eq.s32.totalorder %s17, 1
    %p169 = por %p167, %p168
    %p170 = scmp.ne.s32.totalorder %s159, %s160
    %p171 = scmp.eq.s32.totalorder %s17, 0
    %p172 = por %p170, %p171
    %p173 = scmp.ne.s32.totalorder %s159, %s160
    %p174 = scmp.eq.s32.totalorder %s18, 1
    %p175 = por %p173, %p174
    %p177 = scmp.ne.s32.totalorder %s160, %s176
    %p178 = scmp.eq.s32.totalorder %s18, 0
    %p179 = por %p177, %p178
    %s180 = ssub.s32 %s19, %s31
    %s181 = ssub.s32 %s20, %s27
    %s182 = sor.u32 %s180, %s181
    %p183 = scmp.eq.s32.totalorder %s182, 0
    %s185 = sadd.s32 %s184, 1
    %s186 = scalar_select %p183, %s184, %s185
    %p189 = pneg %p183
    %p190 = scmp.eq.s32.totalorder %s12, 1
    %p191 = por %p189, %p190
    %p192 = scmp.ne.s32.totalorder %s184, %s187
    %p193 = scmp.eq.s32.totalorder %s12, 0
    %p194 = por %p192, %p193
    %p195 = scmp.ne.s32.totalorder %s184, %s187
    %p196 = scmp.eq.s32.totalorder %s17, 1
    %p197 = por %p195, %p196
    %p198 = scmp.ne.s32.totalorder %s187, %s188
    %p199 = scmp.eq.s32.totalorder %s17, 0
    %p200 = por %p198, %p199
    %p201 = scmp.ne.s32.totalorder %s187, %s188
    %p202 = scmp.eq.s32.totalorder %s18, 1
    %p203 = por %p201, %p202
    %p205 = scmp.ne.s32.totalorder %s188, %s204
    %p206 = scmp.eq.s32.totalorder %s18, 0
    %p207 = por %p205, %p206
    %p208 = scmp.le.s32.totalorder 1, %s12
    %p209 = scmp.lt.s32.totalorder %s12, 3
    %p210 = pnand %p208, %p209
    %p211 = pneg %p210
    // Predicated region
    $region9: #{fpa_v2_forward.17} parent=5 // pred_check
      _
    $region10: #{fpa_v2_forward.17} parent=5 // pred_check_branch
      %213 = sbr.rel (%p210) target = $region12
    $region11: #{fpa_v2_forward.17} parent=5 // pred_region
      %s214 = ssub.s32 %s12, 1
      // Predicated region
      $region13: #{fpa_v2_forward.17} parent=11 // pred_check
        %p215 = pneg %p125
      $region14: #{fpa_v2_forward.17} parent=11 // pred_check_branch
        %217 = sbr.rel (%p215) target = $region16
      $region15: #{fpa_v2_forward.17} parent=11 // pred_region
        _
      $region16: #{fpa_v2_forward.17} parent=11 // pred_fallthru
        _
      // Predicated region
      $region17: #{fpa_v2_forward.17} parent=11 // pred_check
        %p218 = pneg %p146
      $region18: #{fpa_v2_forward.17} parent=11 // pred_check_branch
        %220 = sbr.rel (%p218) target = $region20
      $region19: #{fpa_v2_forward.17} parent=11 // pred_region
        _
      $region20: #{fpa_v2_forward.17} parent=11 // pred_fallthru
        _
      // Predicated region
      $region21: #{fpa_v2_forward.17} parent=11 // pred_check
        %p221 = pneg %p172
      $region22: #{fpa_v2_forward.17} parent=11 // pred_check_branch
        %223 = sbr.rel (%p221) target = $region24
      $region23: #{fpa_v2_forward.17} parent=11 // pred_region
        %s224 = smul.u32 2, %s22
        %p225 = scmp.lt.s32.totalorder %s224, 1
        %s226 = scalar_select %p225, %s224, 1
        %s227 = smul.addr %s226, 4
        %s228 = scalar_lea.vmem %s5, %s227
        %s229 = smul.u32 2, %s22
      $region24: #{fpa_v2_forward.17} parent=11 // pred_fallthru
        _
    $region12: #{fpa_v2_forward.17} parent=5 // pred_fallthru
      _
    %p230 = scmp.lt.s32.totalorder %s12, 2
    // Predicated region
    $region25: #{fpa_v2_forward.17} parent=5 // pred_check
      %p231 = pneg %p230
    $region26: #{fpa_v2_forward.17} parent=5 // pred_check_branch
      %233 = sbr.rel (%p231) target = $region28
    $region27: #{fpa_v2_forward.17} parent=5 // pred_region
      // Predicated region
      $region29: #{fpa_v2_forward.17} parent=27 // pred_check
        %p234 = pneg %p46
      $region30: #{fpa_v2_forward.17} parent=27 // pred_check_branch
        %236 = sbr.rel (%p234) target = $region32
      $region31: #{fpa_v2_forward.17} parent=27 // pred_region
        %s237 = smul.u32 2, %s20
        %p238 = scmp.lt.s32.totalorder %s19, 1
        %s239 = scalar_select %p238, %s19, 1
        %p240 = scmp.lt.s32.totalorder %s237, 1
        %s241 = scalar_select %p240, %s237, 1
        %s242 = smul.addr %s239, 8
        %s243 = sadd.s32 %s241, %s242
        %s244 = smul.addr %s243, 4
        %s245 = scalar_lea.vmem %s0, %s244
        %s246 = smul.u32 2, %s20
      $region32: #{fpa_v2_forward.17} parent=27 // pred_fallthru
        _
      // Predicated region
      $region33: #{fpa_v2_forward.17} parent=27 // pred_check
        %p247 = pneg %p72
      $region34: #{fpa_v2_forward.17} parent=27 // pred_check_branch
        %249 = sbr.rel (%p247) target = $region36
      $region35: #{fpa_v2_forward.17} parent=27 // pred_region
        %p250 = scmp.lt.s32.totalorder %s19, 1
        %s251 = scalar_select %p250, %s19, 1
        %s252 = smul.addr %s251, 2
        %s253 = smul.addr %s252, 4
        %s254 = scalar_lea.vmem %s1, %s253
      $region36: #{fpa_v2_forward.17} parent=27 // pred_fallthru
        _
      // Predicated region
      $region37: #{fpa_v2_forward.17} parent=27 // pred_check
        %p255 = pneg %p98
      $region38: #{fpa_v2_forward.17} parent=27 // pred_check_branch
        %257 = sbr.rel (%p255) target = $region40
      $region39: #{fpa_v2_forward.17} parent=27 // pred_region
        %p258 = scmp.lt.s32.totalorder %s19, 1
        %s259 = scalar_select %p258, %s19, 1
        %s260 = smul.addr %s259, 2
        %s261 = smul.addr %s260, 8
        %s262 = scalar_lea.vmem %s2, %s261
      $region40: #{fpa_v2_forward.17} parent=27 // pred_fallthru
        _
    $region28: #{fpa_v2_forward.17} parent=5 // pred_fallthru
      _
    %p263 = scmp.le.s32.totalorder 1, %s12
    %p264 = scmp.lt.s32.totalorder %s12, 3
    %p265 = pnand %p263, %p264
    %p266 = pneg %p265
    // Predicated region
    $region41: #{fpa_v2_forward.17} parent=5 // pred_check
      _
    $region42: #{fpa_v2_forward.17} parent=5 // pred_check_branch
      %268 = sbr.rel (%p265) target = $region44
    $region43: #{fpa_v2_forward.17} parent=5 // pred_region
      %s269 = ssub.s32 %s12, 1
      %s270 = smul.u32 2, %s22
      %p271 = scmp.lt.s32.totalorder %s21, 1
      %s272 = scalar_select %p271, %s21, 1
      %p273 = scmp.lt.s32.totalorder %s270, 1
      %s274 = scalar_select %p273, %s270, 1
      %s275 = smul.addr %s272, 8
      %s276 = sadd.s32 %s274, %s275
      %s277 = smul.addr %s276, 4
      %s278 = scalar_lea.vmem %s0, %s277
      %p279 = pneg %p52
      %p280 = pneg %p49
      %p281 = scmp.lt.s32.totalorder %s21, 1
      %s282 = scalar_select %p281, %s21, 1
      %s283 = smul.addr %s282, 2
      %s284 = smul.addr %s283, 4
      %s285 = scalar_lea.vmem %s1, %s284
      %p286 = pneg %p78
      %p287 = pneg %p75
      %p288 = scmp.lt.s32.totalorder %s21, 1
      %s289 = scalar_select %p288, %s21, 1
      %s290 = smul.addr %s289, 2
      %s291 = smul.addr %s290, 8
      %s292 = scalar_lea.vmem %s2, %s291
      %p293 = pneg %p104
      %p294 = pneg %p101
      %p295 = pneg %p125
      %p296 = pneg %p122
      %p297 = pneg %p146
      %p298 = pneg %p143
      %s299 = smul.u32 2, %s22
      %p300 = scmp.lt.s32.totalorder %s299, 1
      %s301 = scalar_select %p300, %s299, 1
      %s302 = smul.addr %s301, 4
      %s303 = scalar_lea.vmem %s5, %s302
      %p304 = pneg %p172
      %p305 = pneg %p169
      %p306 = pneg %p200
      %p307 = pneg %p197
      %s308 = smul.u32 2, %s22
      %p309 = scmp.lt.s32.totalorder %s21, 1
      %s310 = scalar_select %p309, %s21, 1
      %p311 = scmp.lt.s32.totalorder %s308, 1
      %s312 = scalar_select %p311, %s308, 1
      %s313 = smul.addr %s310, 4
      %s314 = sadd.s32 %s312, %s313
      %s315 = smul.addr %s314, 8
      %s316 = scalar_lea.vmem %s6, %s315
      %s317 = smul.u32 2, %s22
      %p318 = scmp.lt.s32.totalorder %s21, 1
      %s319 = scalar_select %p318, %s21, 1
      %p320 = scmp.lt.s32.totalorder %s317, 1
      %s321 = scalar_select %p320, %s317, 1
      %s322 = smul.addr %s319, 8
      %s323 = sadd.s32 %s321, %s322
      %s324 = smul.addr %s323, 4
      %s325 = scalar_lea.vmem %s0, %s324
      %s326 = smul.u32 2, %s22
      %p327 = scmp.lt.s32.totalorder %s21, 1
      %s328 = scalar_select %p327, %s21, 1
      %s329 = smul.addr %s328, 2
      %s330 = smul.addr %s329, 4
      %s331 = scalar_lea.vmem %s1, %s330
      %p332 = scmp.lt.s32.totalorder %s21, 1
      %s333 = scalar_select %p332, %s21, 1
      %s334 = smul.addr %s333, 2
      %s335 = smul.addr %s334, 8
      %s336 = scalar_lea.vmem %s2, %s335
      %s337 = smul.u32 2, %s22
      %p338 = scmp.lt.s32.totalorder %s337, 1
      %s339 = scalar_select %p338, %s337, 1
      %s340 = smul.addr %s339, 4
      %s341 = scalar_lea.vmem %s5, %s340
      %s342 = smul.u32 2, %s22
      %s343 = smul.u32 2, %s22
      %p344 = scmp.lt.s32.totalorder %s21, 1
      %s345 = scalar_select %p344, %s21, 1
      %p346 = scmp.lt.s32.totalorder %s343, 1
      %s347 = scalar_select %p346, %s343, 1
      %s348 = smul.addr %s345, 4
      %s349 = sadd.s32 %s347, %s348
      %s350 = smul.addr %s349, 8
      %s351 = scalar_lea.vmem %s6, %s350
      %s352 = smul.u32 2, %s22
      %v354 = vld [vmem:[%s325] sm:$0xff]
      %v355 = vld [vmem:[%s325 + $0x8] sm:$0xff]
      %v356 = vld [vmem:[%s325 + $0x10] sm:$0xff]
      %v357 = vld [vmem:[%s325 + $0x18] sm:$0xff]
      %v358 = vld [vmem:[%s3] sm:$0xf]
      %v359 = vld [vmem:[%s3 + $0x4] sm:$0xf]
      %v360 = vld [vmem:[%s4] sm:$0xff]
      %v361 = vld [vmem:[%s4 + $0x8] sm:$0xff]
      %363 = vset.pattern.permute.xlu0 0
      %364 = vperm.xlu0 %363, %v360
      %v365 = vpop.permute.xlu0 %364
      %368 = vset.pattern.permute.xlu0 0
      %369 = vperm.xlu0 %368, %v361
      %v370 = vpop.permute.xlu0 %369
      %v374 = vunpack.c.l.b16 %v358
      %v375 = vunpack.c.l.b16 %v359
      %v376 = vpack.c.b16 %v375, %v374
      %v381 = vunpack.c.l.b16 %v354
      %v382 = vunpack.c.h.b16 %v354
      %v383 = vunpack.c.l.b16 %v355
      %v384 = vunpack.c.h.b16 %v355
      %v385 = vunpack.c.l.b16 %v356
      %v386 = vunpack.c.h.b16 %v356
      %v387 = vunpack.c.l.b16 %v357
      %v388 = vunpack.c.h.b16 %v357
      %v389 = vpack.c.b16 %v383, %v381
      %v390 = vpack.c.b16 %v384, %v382
      %v391 = vpack.c.b16 %v387, %v385
      %v392 = vpack.c.b16 %v388, %v386
      %vm397 = vcmask 261120
      %v399 = vsel %vm397, %v376, 0
      %401 = vmatprep.subr.bf16.mxu0 0
      %402 = vmatpush1.bf16.msra.mxu0 0
      %403 = vmatprep.subr.bf16.mxu0 0
      %404 = vmatpush1.bf16.msra.mxu0 0
      %405 = vmatprep.subr.bf16.mxu0 0
      %406 = vmatpush1.bf16.msra.mxu0 0
      %407 = vmatprep.subr.bf16.mxu0 0
      %408 = vmatpush1.bf16.msra.mxu0 0
      %409 = vmatprep.subr.bf16.mxu0 0
      %410 = vmatpush1.bf16.msra.mxu0 0
      %411 = vmatprep.subr.bf16.mxu0 0
      %412 = vmatpush1.bf16.msra.mxu0 0
      %413 = vmatprep.subr.bf16.mxu0 %v392
      %414 = vmatpush1.bf16.msra.mxu0 %v391
      %415 = vmatprep.subr.bf16.mxu0 %v390
      %416 = vmatpush1.bf16.msra.mxu0 %v389
      %417 = vmatprep.subr.bf16.mxu0 0
      %418 = vmatpush2.bf16.msra.mxu0 0
      %419 = vmatprep.subr.bf16.mxu0 0
      %420 = vmatpush2.bf16.msra.mxu0 0
      %421 = vmatprep.subr.bf16.mxu0 0
      %422 = vmatpush2.bf16.msra.mxu0 0
      %423 = vmatprep.subr.bf16.mxu0 0
      %424 = vmatpush2.bf16.msra.mxu0 0
      %425 = vmatprep.subr.bf16.mxu0 0
      %426 = vmatpush2.bf16.msra.mxu0 0
      %427 = vmatprep.subr.bf16.mxu0 0
      %428 = vmatpush2.bf16.msra.mxu0 0
      %429 = vmatprep.subr.bf16.mxu0 0
      %430 = vmatpush2.bf16.msra.mxu0 0
      %431 = vmatprep.subr.bf16.mxu0 0
      %432 = vmatpush2.bf16.msra.mxu0 0
      %433 = vmatprep.mubr.bf16.mxu0 0
      %434 = vmatmul.mubr.bf16.gmra.mxu0 %v399
      %v435 = vpop.f32.mrf.mxu0
      %v436 = vadd.f32 %v365, %v435
      %v437 = vpop.f32.mrf.mxu0
      %v438 = vadd.f32 %v365, %v437
      %v439 = vpop.f32.mrf.mxu0
      %v440 = vadd.f32 %v370, %v439
      %v441 = vpop.f32.mrf.mxu0
      %v442 = vadd.f32 %v370, %v441
      %443 = vdwg.mxu0
      %v444 = vmax.f32 %v436, 0.0
      %v445 = vmax.f32 %v438, 0.0
      %v446 = vmax.f32 %v440, 0.0
      %v447 = vmax.f32 %v442, 0.0
      %v448 = vld [vmem:[%s331] sm:$0xf]
      %v449 = vld [vmem:[%s331 + $0x4] sm:$0xf]
      %v450 = vld [vmem:[%s341] sm:$0xff]
      %v451 = vld [vmem:[%s341 + $0x8] sm:$0xff]
      %v452 = vld [vmem:[%s341 + $0x10] sm:$0xff]
      %v453 = vld [vmem:[%s341 + $0x18] sm:$0xff]
      %v454 = vld [vmem:[%s341 + $0x20] sm:$0xff]
      %v455 = vld [vmem:[%s341 + $0x28] sm:$0xff]
      %v456 = vld [vmem:[%s341 + $0x30] sm:$0xff]
      %v457 = vld [vmem:[%s341 + $0x38] sm:$0xff]
      %v458 = vld [vmem:[%s341 + $0x40] sm:$0xff]
      %v459 = vld [vmem:[%s341 + $0x48] sm:$0xff]
      %v460 = vld [vmem:[%s341 + $0x50] sm:$0xff]
      %v461 = vld [vmem:[%s341 + $0x58] sm:$0xff]
      %v462 = vld [vmem:[%s341 + $0x60] sm:$0xff]
      %v463 = vld [vmem:[%s341 + $0x68] sm:$0xff]
      %v464 = vld [vmem:[%s341 + $0x70] sm:$0xff]
      %v465 = vld [vmem:[%s341 + $0x78] sm:$0xff]
      %v468 = vunpack.c.l.b16 %v448
      %v469 = vunpack.c.l.b16 %v449
      %v470 = vpack.c.b16 %v469, %v468
      %v488 = vunpack.c.l.b16 %v450
      %v489 = vunpack.c.h.b16 %v450
      %v490 = vunpack.c.l.b16 %v451
      %v491 = vunpack.c.h.b16 %v451
      %v492 = vunpack.c.l.b16 %v452
      %v493 = vunpack.c.h.b16 %v452
      %v494 = vunpack.c.l.b16 %v453
      %v495 = vunpack.c.h.b16 %v453
      %v496 = vunpack.c.l.b16 %v454
      %v497 = vunpack.c.h.b16 %v454
      %v498 = vunpack.c.l.b16 %v455
      %v499 = vunpack.c.h.b16 %v455
      %v500 = vunpack.c.l.b16 %v456
      %v501 = vunpack.c.h.b16 %v456
      %v502 = vunpack.c.l.b16 %v457
      %v503 = vunpack.c.h.b16 %v457
      %v504 = vunpack.c.l.b16 %v458
      %v505 = vunpack.c.h.b16 %v458
      %v506 = vunpack.c.l.b16 %v459
      %v507 = vunpack.c.h.b16 %v459
      %v508 = vunpack.c.l.b16 %v460
      %v509 = vunpack.c.h.b16 %v460
      %v510 = vunpack.c.l.b16 %v461
      %v511 = vunpack.c.h.b16 %v461
      %v512 = vunpack.c.l.b16 %v462
      %v513 = vunpack.c.h.b16 %v462
      %v514 = vunpack.c.l.b16 %v463
      %v515 = vunpack.c.h.b16 %v463
      %v516 = vunpack.c.l.b16 %v464
      %v517 = vunpack.c.h.b16 %v464
      %v518 = vunpack.c.l.b16 %v465
      %v519 = vunpack.c.h.b16 %v465
      %v520 = vpack.c.b16 %v490, %v488
      %v521 = vpack.c.b16 %v491, %v489
      %v522 = vpack.c.b16 %v494, %v492
      %v523 = vpack.c.b16 %v495, %v493
      %v524 = vpack.c.b16 %v498, %v496
      %v525 = vpack.c.b16 %v499, %v497
      %v526 = vpack.c.b16 %v502, %v500
      %v527 = vpack.c.b16 %v503, %v501
      %v528 = vpack.c.b16 %v506, %v504
      %v529 = vpack.c.b16 %v507, %v505
      %v530 = vpack.c.b16 %v510, %v508
      %v531 = vpack.c.b16 %v511, %v509
      %v532 = vpack.c.b16 %v514, %v512
      %v533 = vpack.c.b16 %v515, %v513
      %v534 = vpack.c.b16 %v518, %v516
      %v535 = vpack.c.b16 %v519, %v517
      %552 = vmatprep.subr.bf16.mxu0 %v535
      %553 = vmatpush1.bf16.msra.mxu0 %v534
      %554 = vmatprep.subr.bf16.mxu0 %v533
      %555 = vmatpush1.bf16.msra.mxu0 %v532
      %556 = vmatprep.subr.bf16.mxu0 %v531
      %557 = vmatpush1.bf16.msra.mxu0 %v530
      %558 = vmatprep.subr.bf16.mxu0 %v529
      %559 = vmatpush1.bf16.msra.mxu0 %v528
      %560 = vmatprep.subr.bf16.mxu0 %v527
      %561 = vmatpush1.bf16.msra.mxu0 %v526
      %562 = vmatprep.subr.bf16.mxu0 %v525
      %563 = vmatpush1.bf16.msra.mxu0 %v524
      %564 = vmatprep.subr.bf16.mxu0 %v523
      %565 = vmatpush1.bf16.msra.mxu0 %v522
      %566 = vmatprep.subr.bf16.mxu0 %v521
      %567 = vmatpush1.bf16.msra.mxu0 %v520
      %568 = vmatprep.subr.bf16.mxu0 0
      %569 = vmatpush2.bf16.msra.mxu0 0
      %570 = vmatprep.subr.bf16.mxu0 0
      %571 = vmatpush2.bf16.msra.mxu0 0
      %572 = vmatprep.subr.bf16.mxu0 0
      %573 = vmatpush2.bf16.msra.mxu0 0
      %574 = vmatprep.subr.bf16.mxu0 0
      %575 = vmatpush2.bf16.msra.mxu0 0
      %576 = vmatprep.subr.bf16.mxu0 0
      %577 = vmatpush2.bf16.msra.mxu0 0
      %578 = vmatprep.subr.bf16.mxu0 0
      %579 = vmatpush2.bf16.msra.mxu0 0
      %580 = vmatprep.subr.bf16.mxu0 0
      %581 = vmatpush2.bf16.msra.mxu0 0
      %582 = vmatprep.subr.bf16.mxu0 0
      %583 = vmatpush2.bf16.msra.mxu0 0
      %584 = vmatprep.mubr.bf16.mxu0 0
      %585 = vmatmul.mubr.bf16.gmra.mxu0 %v470
      %v586 = vpop.f32.mrf.mxu0
      %v587 = vadd.f32 0.0, %v586
      %v588 = vpop.f32.mrf.mxu0
      %v589 = vadd.f32 0.0, %v588
      %v590 = vpop.f32.mrf.mxu0
      %v591 = vadd.f32 0.0, %v590
      %v592 = vpop.f32.mrf.mxu0
      %v593 = vadd.f32 0.0, %v592
      %594 = vdwg.mxu0
      %v595 = vmul.f32 %v444, %v587
      %v596 = vmul.f32 %v445, %v589
      %v597 = vmul.f32 %v446, %v591
      %v598 = vmul.f32 %v447, %v593
      %v599 = vld [vmem:[%s336] sm:$0xff]
      %v600 = vld [vmem:[%s336 + $0x8] sm:$0xff]
      %602 = vset.pattern.permute.xlu0 0
      %603 = vperm.xlu0 %602, %v599
      %v604 = vpop.permute.xlu0 %603
      %607 = vset.pattern.permute.xlu0 0
      %608 = vperm.xlu0 %607, %v600
      %v609 = vpop.permute.xlu0 %608
      %v611 = vadd.f32 %v595, %v604
      %v612 = vadd.f32 %v596, %v604
      %v613 = vadd.f32 %v597, %v609
      %v614 = vadd.f32 %v598, %v609
      %615 = vst [vmem:[%s351] sm:$0xff] %v611
      %616 = vst [vmem:[%s351 + $0x8] sm:$0xff] %v612
      %617 = vst [vmem:[%s351 + $0x10] sm:$0xff] %v613
      %618 = vst [vmem:[%s351 + $0x18] sm:$0xff] %v614
      %s619 = smul.u32 2, %s22
      %p620 = scmp.lt.s32.totalorder %s21, 1
      %s621 = scalar_select %p620, %s21, 1
      %p622 = scmp.lt.s32.totalorder %s619, 1
      %s623 = scalar_select %p622, %s619, 1
      %s624 = smul.addr %s621, 4
      %s625 = sadd.s32 %s623, %s624
      %s626 = smul.addr %s625, 8
      %s627 = scalar_lea.vmem %s6, %s626
      // Predicated region
      $region45: #{fpa_v2_forward.17} parent=43 // pred_check
        %p628 = pneg %p197
      $region46: #{fpa_v2_forward.17} parent=43 // pred_check_branch
        %630 = sbr.rel (%p628) target = $region48
      $region47: #{fpa_v2_forward.17} parent=43 // pred_region
        %s631 = smul.u32 2, %s22
      $region48: #{fpa_v2_forward.17} parent=43 // pred_fallthru
        _
    $region44: #{fpa_v2_forward.17} parent=5 // pred_fallthru
      _
    %p632 = scmp.le.s32.totalorder 2, %s12
    // Predicated region
    $region49: #{fpa_v2_forward.17} parent=5 // pred_check
      %p633 = pneg %p632
    $region50: #{fpa_v2_forward.17} parent=5 // pred_check_branch
      %635 = sbr.rel (%p633) target = $region52
    $region51: #{fpa_v2_forward.17} parent=5 // pred_region
      %s636 = ssub.s32 %s12, 2
      // Predicated region
      $region53: #{fpa_v2_forward.17} parent=51 // pred_check
        %p637 = pneg %p203
      $region54: #{fpa_v2_forward.17} parent=51 // pred_check_branch
        %639 = sbr.rel (%p637) target = $region56
      $region55: #{fpa_v2_forward.17} parent=51 // pred_region
        %s640 = smul.u32 2, %s24
        %p641 = scmp.lt.s32.totalorder %s23, 1
        %s642 = scalar_select %p641, %s23, 1
        %p643 = scmp.lt.s32.totalorder %s640, 1
        %s644 = scalar_select %p643, %s640, 1
        %s645 = smul.addr %s642, 4
        %s646 = sadd.s32 %s644, %s645
        %s647 = smul.addr %s646, 8
        %s648 = scalar_lea.vmem %s6, %s647
      $region56: #{fpa_v2_forward.17} parent=51 // pred_fallthru
        _
    $region52: #{fpa_v2_forward.17} parent=5 // pred_fallthru
      _
  $region6: #{fpa_v2_forward.17} parent=0 // loop_footer
    %s16 = sadd.s32 1, %s12
  $region7: #{fpa_v2_forward.17} parent=0 // loop_footer_branch
    %11 = sbr.rel target = $region3
  $region8: #{fpa_v2_forward.17} parent=0 // loop_exit
    _

</llo_original>
